<compile_context>
chip_gen: v6e
topology: v6e:2x2x1
jax: 0.10.0
libtpu: 0.0.40
codegen_flags: <defaults>
</compile_context>

<pallas_src>
import jax
import jax.numpy as jnp
from jax.experimental import pallas as pl
from jax.experimental.pallas import tpu as pltpu


def _tcl_pass1_kernel(x_ref, wf_ref, bf_ref, w1_ref, b1_ref, w2_ref, b2_ref,
                      v_ref, stats_ref, pad_ref, patch_ref):
    """One image per grid step: fusion conv3x3 + residual + 1x1 conv + 3x3 conv,
    plus one-pass BatchNorm partial statistics (sum, sum of squares)."""
    Hp2, Wp2, C = pad_ref.shape
    H, W = Hp2 - 2, Wp2 - 2
    HW = H * W
    NEG = jnp.float32(0.01)

    def lrelu(t):
        return jnp.where(t >= 0, t, t * NEG)

    # Zero only the 1-pixel halo of the padded scratch (the interior is fully
    # overwritten before every use).  Re-done each grid step so every core's
    # private scratch is initialised even when the batch axis is split across
    # TensorCores (megacore-safe).
    zrow = jnp.zeros((1, Wp2, C), jnp.bfloat16)
    zcol = jnp.zeros((H, 1, C), jnp.bfloat16)
    pad_ref[0:1, :, :] = zrow
    pad_ref[H + 1:H + 2, :, :] = zrow
    pad_ref[1:H + 1, 0:1, :] = zcol
    pad_ref[1:H + 1, W + 1:W + 2, :] = zcol

    def conv3x3(inp_hwc_bf16, w_ref, bias_1c):
        # 3x3 conv as a single im2col matmul: patches (HW, 9C) @ weight (9C, C).
        pad_ref[1:H + 1, 1:W + 1, :] = inp_hwc_bf16
        for dy in range(3):
            for dx in range(3):
                k = dy * 3 + dx
                patch_ref[:, k * C:(k + 1) * C] = (
                    pad_ref[dy:dy + H, dx:dx + W, :].reshape(HW, C))
        acc = jnp.dot(patch_ref[...], w_ref[...],
                      preferred_element_type=jnp.float32)
        return acc + bias_1c                               # (HW, C) f32

    x_rows = x_ref[0]                                      # (HW, C) f32
    bf = bf_ref[...]                                       # hoisted (1, C)
    b1 = b1_ref[...]
    b2 = b2_ref[...]

    # ---- fusion branch + residual:  t = x + LeakyReLU(conv3x3(x)) ----------
    fuse = lrelu(conv3x3(x_rows.astype(jnp.bfloat16).reshape(H, W, C),
                         wf_ref, bf))
    t = x_rows + fuse                                      # (HW, C) f32

    # ---- process: 1x1 conv == channel matmul (MXU) --------------------------
    u = jnp.dot(t.astype(jnp.bfloat16), w1_ref[...],
                preferred_element_type=jnp.float32) + b1

    # ---- process: 3x3 conv (pre-BatchNorm activations) ----------------------
    v = conv3x3(u.astype(jnp.bfloat16).reshape(H, W, C), w2_ref, b2)
    v_ref[0] = v

    # ---- one-pass BN partial statistics for this image ----------------------
    s1 = jnp.sum(v, axis=0, keepdims=True)                 # (1, C)
    s2 = jnp.sum(v * v, axis=0, keepdims=True)             # (1, C)
    stats_ref[0] = jnp.concatenate([s1, s2], axis=0)       # (2, C)


def _tcl_pass2_kernel(v_ref, scale_ref, shift_ref, o_ref):
    """Lane-dense BatchNorm affine + LeakyReLU on (rows, W*C) slabs."""
    y = v_ref[...] * scale_ref[...] + shift_ref[...]
    o_ref[...] = jnp.where(y >= 0, y, y * jnp.float32(0.01))


def tcl_block_forward(x_nchw, params):
    """x_nchw: (N, C, H, W) float32 (PyTorch layout). Returns (N, C, H, W)."""
    x = jnp.transpose(x_nchw, (0, 2, 3, 1)).astype(jnp.float32)   # NHWC
    N, H, W, C = x.shape
    HW, WC, KC = H * W, W * C, 9 * C

    # weights reshaped for im2col (row index = (dy*3+dx)*C + cin), bf16 for the
    # MXU; biases and BN affine params stay f32.
    wf = params['wf'].reshape(KC, C).astype(jnp.bfloat16)
    w1 = params['w1'].astype(jnp.bfloat16)
    w2 = params['w2'].reshape(KC, C).astype(jnp.bfloat16)
    bf = params['bf'].reshape(1, C).astype(jnp.float32)
    b1 = params['b1'].reshape(1, C).astype(jnp.float32)
    b2 = params['b2'].reshape(1, C).astype(jnp.float32)
    gamma = params['gamma'].reshape(C).astype(jnp.float32)
    beta = params['beta'].reshape(C).astype(jnp.float32)

    cparams = pltpu.CompilerParams(
        dimension_semantics=("parallel",),
        vmem_limit_bytes=32 * 1024 * 1024)

    # ---- pass 1: convs + residual + per-image BN partial stats --------------
    x_rows = x.reshape(N, HW, C)                 # contiguous (free) reshape
    v, stats = pl.pallas_call(
        _tcl_pass1_kernel,
        out_shape=(jax.ShapeDtypeStruct((N, HW, C), jnp.float32),
                   jax.ShapeDtypeStruct((N, 2, C), jnp.float32)),
        grid=(N,),
        in_specs=[
            pl.BlockSpec((1, HW, C), lambda n: (n, 0, 0)),   # x (one image)
            pl.BlockSpec((KC, C), lambda n: (0, 0)),         # fusion 3x3 weight
            pl.BlockSpec((1, C), lambda n: (0, 0)),          # fusion bias
            pl.BlockSpec((C, C), lambda n: (0, 0)),          # 1x1 weight
            pl.BlockSpec((1, C), lambda n: (0, 0)),          # 1x1 bias
            pl.BlockSpec((KC, C), lambda n: (0, 0)),         # process 3x3 weight
            pl.BlockSpec((1, C), lambda n: (0, 0)),          # process 3x3 bias
        ],
        out_specs=(
            pl.BlockSpec((1, HW, C), lambda n: (n, 0, 0)),   # pre-BN activations
            pl.BlockSpec((1, 2, C), lambda n: (n, 0, 0)),    # per-image sum/sumsq
        ),
        scratch_shapes=[
            pltpu.VMEM((H + 2, W + 2, C), jnp.bfloat16),     # zero-padded input
            pltpu.VMEM((HW, KC), jnp.bfloat16),              # im2col patches
        ],
        compiler_params=cparams,
    )(x_rows, wf, bf, w1, b1, w2, b2)

    # ---- glue: per-channel BN finalize (O(C) scalar work, global stats) -----
    cnt = jnp.float32(N * H * W)
    mean = jnp.sum(stats[:, 0, :], axis=0) / cnt
    var = jnp.sum(stats[:, 1, :], axis=0) / cnt - mean * mean   # biased (train)
    scale = gamma * jax.lax.rsqrt(var + jnp.float32(1e-5))
    shift = beta - mean * scale
    scale_l = jnp.tile(scale.reshape(1, C), (1, W))             # (1, W*C)
    shift_l = jnp.tile(shift.reshape(1, C), (1, W))

    # ---- pass 2: BN affine + LeakyReLU over lane-dense (rows, W*C) slabs ----
    rows = N * H
    rb = 8 if rows % 8 == 0 else rows
    v_lane = v.reshape(rows, WC)                 # contiguous (free) reshape
    y = pl.pallas_call(
        _tcl_pass2_kernel,
        out_shape=jax.ShapeDtypeStruct((rows, WC), jnp.float32),
        grid=(rows // rb,),
        in_specs=[
            pl.BlockSpec((rb, WC), lambda i: (i, 0)),
            pl.BlockSpec((1, WC), lambda i: (0, 0)),
            pl.BlockSpec((1, WC), lambda i: (0, 0)),
        ],
        out_specs=pl.BlockSpec((rb, WC), lambda i: (i, 0)),
        compiler_params=cparams,
    )(v_lane, scale_l, shift_l)

    return jnp.transpose(y.reshape(N, H, W, C), (0, 3, 1, 2))    # back to NCHW


# ---------------- pure-JAX reference (for correctness check) -----------------
def tcl_block_reference(x_nchw, params, mxu_bf16=True):
    """mxu_bf16=True mirrors the kernel's MXU precision (bf16 conv operands,
    f32 accumulation); mxu_bf16=False is the full-f32 reference."""
    x = jnp.transpose(x_nchw, (0, 2, 3, 1)).astype(jnp.float32)
    C = x.shape[-1]

    def conv(inp, w, b, pad):
        lhs = inp.astype(jnp.bfloat16) if mxu_bf16 else inp
        rhs = w.astype(jnp.bfloat16) if mxu_bf16 else w
        y = jax.lax.conv_general_dilated(
            lhs, rhs, window_strides=(1, 1),
            padding=[(pad, pad), (pad, pad)],
            dimension_numbers=('NHWC', 'HWIO', 'NHWC'),
            preferred_element_type=jnp.float32)
        return y + b.reshape(1, 1, 1, -1)

    def lrelu(v):
        return jnp.where(v >= 0, v, 0.01 * v)

    fuse = lrelu(conv(x, params['wf'], params['bf'], 1))
    t = x + fuse
    u = conv(t, params['w1'].reshape(1, 1, C, C), params['b1'], 0)
    v = conv(u, params['w2'], params['b2'], 1)
    mean = jnp.mean(v, axis=(0, 1, 2), keepdims=True)
    var = jnp.mean((v - mean) ** 2, axis=(0, 1, 2), keepdims=True)
    bn = (v - mean) * jax.lax.rsqrt(var + 1e-5) \
        * params['gamma'].reshape(1, 1, 1, -1) + params['beta'].reshape(1, 1, 1, -1)
    return jnp.transpose(lrelu(bn), (0, 3, 1, 2))


if __name__ == "__main__":
    # residual add requires input_channels == output_channels;
    # C=8, W=16 -> lane width W*C = 128 (fully dense vst in pass 2).
    N, C, H, W = 2, 8, 16, 16
    key = jax.random.PRNGKey(0)
    ks = jax.random.split(key, 9)
    params = {
        'wf': jax.random.normal(ks[0], (3, 3, C, C), jnp.float32) * 0.1,  # fusion 3x3
        'bf': jax.random.normal(ks[1], (1, C), jnp.float32) * 0.1,
        'w1': jax.random.normal(ks[2], (C, C), jnp.float32) * 0.1,        # process 1x1
        'b1': jax.random.normal(ks[3], (1, C), jnp.float32) * 0.1,
        'w2': jax.random.normal(ks[4], (3, 3, C, C), jnp.float32) * 0.1,  # process 3x3
        'b2': jax.random.normal(ks[5], (1, C), jnp.float32) * 0.1,
        'gamma': 1.0 + jax.random.normal(ks[6], (1, C), jnp.float32) * 0.1,
        'beta': jax.random.normal(ks[7], (1, C), jnp.float32) * 0.1,
    }
    x = jax.random.normal(ks[8], (N, C, H, W), jnp.float32)

    out = jax.jit(tcl_block_forward)(x, params)
    out = jax.block_until_ready(out)
    assert out.shape == (N, C, H, W)

    ref_bf16 = tcl_block_reference(x, params, mxu_bf16=True)
    ref_f32 = tcl_block_reference(x, params, mxu_bf16=False)
    err_bf16 = float(jnp.max(jnp.abs(out - ref_bf16)))
    err_f32 = float(jnp.max(jnp.abs(out - ref_f32)))
    assert jnp.allclose(out, ref_bf16, atol=2e-2, rtol=2e-2), \
        f"mismatch vs bf16-matmul reference, max abs err {err_bf16}"
    assert jnp.allclose(out, ref_f32, atol=1e-1, rtol=1e-1), \
        f"mismatch vs f32 reference, max abs err {err_f32}"
    print("KERNEL_OK")
</pallas_src>

<mosaic_0001>
module attributes {stable_mosaic.version = 11 : i64} {
  func.func @_tcl_pass2_kernel(%arg0: i32, %arg1: memref<8x128xf32, #tpu.memory_space<vmem>>, %arg2: memref<1x128xf32, #tpu.memory_space<vmem>>, %arg3: memref<1x128xf32, #tpu.memory_space<vmem>>, %arg4: memref<8x128xf32, #tpu.memory_space<vmem>>) attributes {dimension_semantics = [#tpu.dimension_semantics<parallel>], iteration_bounds = array<i64: 4>, scalar_prefetch = 0 : i64, scratch_operands = 0 : i64, tpu.core_type = #tpu.core_type<tc>, window_params = [{transform_indices = @transform_0, window_bounds = array<i64: 8, 128>}, {pipeline_mode = #tpu.pipeline_mode<synchronous>, transform_indices = @transform_1, window_bounds = array<i64: 1, 128>}, {pipeline_mode = #tpu.pipeline_mode<synchronous>, transform_indices = @transform_2, window_bounds = array<i64: 1, 128>}, {transform_indices = @transform_3, window_bounds = array<i64: 8, 128>}]} {
    %c0 = arith.constant 0 : index
    %c0_0 = arith.constant 0 : index
    %0 = vector.load %arg1[%c0, %c0_0] : memref<8x128xf32, #tpu.memory_space<vmem>>, vector<8x128xf32>
    %c0_1 = arith.constant 0 : index
    %c0_2 = arith.constant 0 : index
    %1 = vector.load %arg2[%c0_1, %c0_2] : memref<1x128xf32, #tpu.memory_space<vmem>>, vector<1x128xf32>
    %2 = vector.broadcast %1 : vector<1x128xf32> to vector<8x128xf32>
    %3 = arith.mulf %0, %2 : vector<8x128xf32>
    %c0_3 = arith.constant 0 : index
    %c0_4 = arith.constant 0 : index
    %4 = vector.load %arg3[%c0_3, %c0_4] : memref<1x128xf32, #tpu.memory_space<vmem>>, vector<1x128xf32>
    %5 = vector.broadcast %4 : vector<1x128xf32> to vector<8x128xf32>
    %6 = arith.addf %3, %5 : vector<8x128xf32>
    %cst = arith.constant 0.000000e+00 : f32
    %7 = vector.broadcast %cst : f32 to vector<8x128xf32>
    %8 = arith.cmpf oge, %6, %7 : vector<8x128xf32>
    %cst_5 = arith.constant 0.00999999977 : f32
    %9 = vector.broadcast %cst_5 : f32 to vector<8x128xf32>
    %10 = arith.mulf %6, %9 : vector<8x128xf32>
    %11 = arith.select %8, %6, %10 : vector<8x128xi1>, vector<8x128xf32>
    %c0_6 = arith.constant 0 : index
    %c0_7 = arith.constant 0 : index
    %12 = vector.load %arg4[%c0_6, %c0_7] : memref<8x128xf32, #tpu.memory_space<vmem>>, vector<8x128xf32>
    tpu.vector_store %arg4[%c0_6, %c0_7], %11 {strides = array<i32>} : memref<8x128xf32, #tpu.memory_space<vmem>>, vector<8x128xf32>,
    return
  }
  func.func @transform_0(%arg0: i32) -> (i32, i32) {
    %c0_i32 = arith.constant 0 : i32
    %c0_i32_0 = arith.constant 0 : i32
    return %arg0, %c0_i32 : i32, i32
  }
  func.func @transform_1(%arg0: i32) -> (i32, i32) {
    %c0_i32 = arith.constant 0 : i32
    %c0_i32_0 = arith.constant 0 : i32
    %c0_i32_1 = arith.constant 0 : i32
    return %c0_i32, %c0_i32_0 : i32, i32
  }
  func.func @transform_2(%arg0: i32) -> (i32, i32) {
    %c0_i32 = arith.constant 0 : i32
    %c0_i32_0 = arith.constant 0 : i32
    %c0_i32_1 = arith.constant 0 : i32
    return %c0_i32, %c0_i32_0 : i32, i32
  }
  func.func @transform_3(%arg0: i32) -> (i32, i32) {
    %c0_i32 = arith.constant 0 : i32
    %c0_i32_0 = arith.constant 0 : i32
    return %arg0, %c0_i32 : i32, i32
  }
}

module attributes {stable_mosaic.version = 11 : i64} {
  func.func @_tcl_pass1_kernel(%arg0: i32, %arg1: memref<1x256x8xf32, #tpu.memory_space<vmem>>, %arg2: memref<72x8xbf16, #tpu.memory_space<vmem>>, %arg3: memref<1x8xf32, #tpu.memory_space<vmem>>, %arg4: memref<8x8xbf16, #tpu.memory_space<vmem>>, %arg5: memref<1x8xf32, #tpu.memory_space<vmem>>, %arg6: memref<72x8xbf16, #tpu.memory_space<vmem>>, %arg7: memref<1x8xf32, #tpu.memory_space<vmem>>, %arg8: memref<1x256x8xf32, #tpu.memory_space<vmem>>, %arg9: memref<1x2x8xf32, #tpu.memory_space<vmem>>, %arg10: memref<18x18x8xbf16, #tpu.memory_space<vmem>>, %arg11: memref<256x72xbf16, #tpu.memory_space<vmem>>) attributes {dimension_semantics = [#tpu.dimension_semantics<parallel>], iteration_bounds = array<i64: 2>, scalar_prefetch = 0 : i64, scratch_operands = 2 : i64, tpu.core_type = #tpu.core_type<tc>, window_params = [{transform_indices = @transform_0, window_bounds = array<i64: 1, 256, 8>}, {pipeline_mode = #tpu.pipeline_mode<synchronous>, transform_indices = @transform_1, window_bounds = array<i64: 72, 8>}, {pipeline_mode = #tpu.pipeline_mode<synchronous>, transform_indices = @transform_2, window_bounds = array<i64: 1, 8>}, {pipeline_mode = #tpu.pipeline_mode<synchronous>, transform_indices = @transform_3, window_bounds = array<i64: 8, 8>}, {pipeline_mode = #tpu.pipeline_mode<synchronous>, transform_indices = @transform_4, window_bounds = array<i64: 1, 8>}, {pipeline_mode = #tpu.pipeline_mode<synchronous>, transform_indices = @transform_5, window_bounds = array<i64: 72, 8>}, {pipeline_mode = #tpu.pipeline_mode<synchronous>, transform_indices = @transform_6, window_bounds = array<i64: 1, 8>}, {transform_indices = @transform_7, window_bounds = array<i64: 1, 256, 8>}, {transform_indices = @transform_8, window_bounds = array<i64: 1, 2, 8>}]} {
    %cst = arith.constant 0.000000e+00 : bf16
    %0 = vector.broadcast %cst : bf16 to vector<1x18x8xbf16>
    %cst_0 = arith.constant 0.000000e+00 : bf16
    %1 = vector.broadcast %cst_0 : bf16 to vector<16x1x8xbf16>
    %c0 = arith.constant 0 : index
    %c0_1 = arith.constant 0 : index
    %c0_2 = arith.constant 0 : index
    %2 = vector.load %arg10[%c0, %c0_1, %c0_2] : memref<18x18x8xbf16, #tpu.memory_space<vmem>>, vector<1x18x8xbf16>
    tpu.vector_store %arg10[%c0, %c0_1, %c0_2], %0 {strides = array<i32>} : memref<18x18x8xbf16, #tpu.memory_space<vmem>>, vector<1x18x8xbf16>,
    %c17 = arith.constant 17 : index
    %c0_3 = arith.constant 0 : index
    %c0_4 = arith.constant 0 : index
    %3 = vector.load %arg10[%c17, %c0_3, %c0_4] : memref<18x18x8xbf16, #tpu.memory_space<vmem>>, vector<1x18x8xbf16>
    tpu.vector_store %arg10[%c17, %c0_3, %c0_4], %0 {strides = array<i32>} : memref<18x18x8xbf16, #tpu.memory_space<vmem>>, vector<1x18x8xbf16>,
    %c1 = arith.constant 1 : index
    %c0_5 = arith.constant 0 : index
    %c0_6 = arith.constant 0 : index
    %4 = vector.load %arg10[%c1, %c0_5, %c0_6] : memref<18x18x8xbf16, #tpu.memory_space<vmem>>, vector<16x1x8xbf16>
    tpu.vector_store %arg10[%c1, %c0_5, %c0_6], %1 {strides = array<i32>} : memref<18x18x8xbf16, #tpu.memory_space<vmem>>, vector<16x1x8xbf16>,
    %c1_7 = arith.constant 1 : index
    %c17_8 = arith.constant 17 : index
    %c0_9 = arith.constant 0 : index
    %5 = vector.load %arg10[%c1_7, %c17_8, %c0_9] : memref<18x18x8xbf16, #tpu.memory_space<vmem>>, vector<16x1x8xbf16>
    tpu.vector_store %arg10[%c1_7, %c17_8, %c0_9], %1 {strides = array<i32>} : memref<18x18x8xbf16, #tpu.memory_space<vmem>>, vector<16x1x8xbf16>,
    %c0_10 = arith.constant 0 : index
    %c0_11 = arith.constant 0 : index
    %c0_12 = arith.constant 0 : index
    %6 = vector.load %arg1[%c0_10, %c0_11, %c0_12] : memref<1x256x8xf32, #tpu.memory_space<vmem>>, vector<1x256x8xf32>
    %7 = vector.shape_cast %6 : vector<1x256x8xf32> to vector<256x8xf32>
    %c0_13 = arith.constant 0 : index
    %c0_14 = arith.constant 0 : index
    %8 = vector.load %arg3[%c0_13, %c0_14] : memref<1x8xf32, #tpu.memory_space<vmem>>, vector<1x8xf32>
    %c0_15 = arith.constant 0 : index
    %c0_16 = arith.constant 0 : index
    %9 = vector.load %arg5[%c0_15, %c0_16] : memref<1x8xf32, #tpu.memory_space<vmem>>, vector<1x8xf32>
    %c0_17 = arith.constant 0 : index
    %c0_18 = arith.constant 0 : index
    %10 = vector.load %arg7[%c0_17, %c0_18] : memref<1x8xf32, #tpu.memory_space<vmem>>, vector<1x8xf32>
    %11 = arith.truncf %7 : vector<256x8xf32> to vector<256x8xbf16>
    %12 = vector.shape_cast %11 : vector<256x8xbf16> to vector<16x16x8xbf16>
    %c1_19 = arith.constant 1 : index
    %c1_20 = arith.constant 1 : index
    %c0_21 = arith.constant 0 : index
    %13 = vector.load %arg10[%c1_19, %c1_20, %c0_21] : memref<18x18x8xbf16, #tpu.memory_space<vmem>>, vector<16x16x8xbf16>
    tpu.vector_store %arg10[%c1_19, %c1_20, %c0_21], %12 {strides = array<i32>} : memref<18x18x8xbf16, #tpu.memory_space<vmem>>, vector<16x16x8xbf16>,
    %c0_22 = arith.constant 0 : index
    %c0_23 = arith.constant 0 : index
    %c0_24 = arith.constant 0 : index
    %14 = vector.load %arg10[%c0_22, %c0_23, %c0_24] : memref<18x18x8xbf16, #tpu.memory_space<vmem>>, vector<16x16x8xbf16>
    %15 = vector.shape_cast %14 : vector<16x16x8xbf16> to vector<256x8xbf16>
    %c0_25 = arith.constant 0 : index
    %c0_26 = arith.constant 0 : index
    %16 = vector.load %arg11[%c0_25, %c0_26] : memref<256x72xbf16, #tpu.memory_space<vmem>>, vector<256x8xbf16>
    tpu.vector_store %arg11[%c0_25, %c0_26], %15 {strides = array<i32>} : memref<256x72xbf16, #tpu.memory_space<vmem>>, vector<256x8xbf16>,
    %c0_27 = arith.constant 0 : index
    %c1_28 = arith.constant 1 : index
    %c0_29 = arith.constant 0 : index
    %17 = vector.load %arg10[%c0_27, %c1_28, %c0_29] : memref<18x18x8xbf16, #tpu.memory_space<vmem>>, vector<16x16x8xbf16>
    %18 = vector.shape_cast %17 : vector<16x16x8xbf16> to vector<256x8xbf16>
    %c0_30 = arith.constant 0 : index
    %c8 = arith.constant 8 : index
    %19 = vector.load %arg11[%c0_30, %c8] : memref<256x72xbf16, #tpu.memory_space<vmem>>, vector<256x8xbf16>
    tpu.vector_store %arg11[%c0_30, %c8], %18 {strides = array<i32>} : memref<256x72xbf16, #tpu.memory_space<vmem>>, vector<256x8xbf16>,
    %c0_31 = arith.constant 0 : index
    %c2 = arith.constant 2 : index
    %c0_32 = arith.constant 0 : index
    %20 = vector.load %arg10[%c0_31, %c2, %c0_32] : memref<18x18x8xbf16, #tpu.memory_space<vmem>>, vector<16x16x8xbf16>
    %21 = vector.shape_cast %20 : vector<16x16x8xbf16> to vector<256x8xbf16>
    %c0_33 = arith.constant 0 : index
    %c16 = arith.constant 16 : index
    %22 = vector.load %arg11[%c0_33, %c16] : memref<256x72xbf16, #tpu.memory_space<vmem>>, vector<256x8xbf16>
    tpu.vector_store %arg11[%c0_33, %c16], %21 {strides = array<i32>} : memref<256x72xbf16, #tpu.memory_space<vmem>>, vector<256x8xbf16>,
    %c1_34 = arith.constant 1 : index
    %c0_35 = arith.constant 0 : index
    %c0_36 = arith.constant 0 : index
    %23 = vector.load %arg10[%c1_34, %c0_35, %c0_36] : memref<18x18x8xbf16, #tpu.memory_space<vmem>>, vector<16x16x8xbf16>
    %24 = vector.shape_cast %23 : vector<16x16x8xbf16> to vector<256x8xbf16>
    %c0_37 = arith.constant 0 : index
    %c24 = arith.constant 24 : index
    %25 = vector.load %arg11[%c0_37, %c24] : memref<256x72xbf16, #tpu.memory_space<vmem>>, vector<256x8xbf16>
    tpu.vector_store %arg11[%c0_37, %c24], %24 {strides = array<i32>} : memref<256x72xbf16, #tpu.memory_space<vmem>>, vector<256x8xbf16>,
    %c1_38 = arith.constant 1 : index
    %c1_39 = arith.constant 1 : index
    %c0_40 = arith.constant 0 : index
    %26 = vector.load %arg10[%c1_38, %c1_39, %c0_40] : memref<18x18x8xbf16, #tpu.memory_space<vmem>>, vector<16x16x8xbf16>
    %27 = vector.shape_cast %26 : vector<16x16x8xbf16> to vector<256x8xbf16>
    %c0_41 = arith.constant 0 : index
    %c32 = arith.constant 32 : index
    %28 = vector.load %arg11[%c0_41, %c32] : memref<256x72xbf16, #tpu.memory_space<vmem>>, vector<256x8xbf16>
    tpu.vector_store %arg11[%c0_41, %c32], %27 {strides = array<i32>} : memref<256x72xbf16, #tpu.memory_space<vmem>>, vector<256x8xbf16>,
    %c1_42 = arith.constant 1 : index
    %c2_43 = arith.constant 2 : index
    %c0_44 = arith.constant 0 : index
    %29 = vector.load %arg10[%c1_42, %c2_43, %c0_44] : memref<18x18x8xbf16, #tpu.memory_space<vmem>>, vector<16x16x8xbf16>
    %30 = vector.shape_cast %29 : vector<16x16x8xbf16> to vector<256x8xbf16>
    %c0_45 = arith.constant 0 : index
    %c40 = arith.constant 40 : index
    %31 = vector.load %arg11[%c0_45, %c40] : memref<256x72xbf16, #tpu.memory_space<vmem>>, vector<256x8xbf16>
    tpu.vector_store %arg11[%c0_45, %c40], %30 {strides = array<i32>} : memref<256x72xbf16, #tpu.memory_space<vmem>>, vector<256x8xbf16>,
    %c2_46 = arith.constant 2 : index
    %c0_47 = arith.constant 0 : index
    %c0_48 = arith.constant 0 : index
    %32 = vector.load %arg10[%c2_46, %c0_47, %c0_48] : memref<18x18x8xbf16, #tpu.memory_space<vmem>>, vector<16x16x8xbf16>
    %33 = vector.shape_cast %32 : vector<16x16x8xbf16> to vector<256x8xbf16>
    %c0_49 = arith.constant 0 : index
    %c48 = arith.constant 48 : index
    %34 = vector.load %arg11[%c0_49, %c48] : memref<256x72xbf16, #tpu.memory_space<vmem>>, vector<256x8xbf16>
    tpu.vector_store %arg11[%c0_49, %c48], %33 {strides = array<i32>} : memref<256x72xbf16, #tpu.memory_space<vmem>>, vector<256x8xbf16>,
    %c2_50 = arith.constant 2 : index
    %c1_51 = arith.constant 1 : index
    %c0_52 = arith.constant 0 : index
    %35 = vector.load %arg10[%c2_50, %c1_51, %c0_52] : memref<18x18x8xbf16, #tpu.memory_space<vmem>>, vector<16x16x8xbf16>
    %36 = vector.shape_cast %35 : vector<16x16x8xbf16> to vector<256x8xbf16>
    %c0_53 = arith.constant 0 : index
    %c56 = arith.constant 56 : index
    %37 = vector.load %arg11[%c0_53, %c56] : memref<256x72xbf16, #tpu.memory_space<vmem>>, vector<256x8xbf16>
    tpu.vector_store %arg11[%c0_53, %c56], %36 {strides = array<i32>} : memref<256x72xbf16, #tpu.memory_space<vmem>>, vector<256x8xbf16>,
    %c2_54 = arith.constant 2 : index
    %c2_55 = arith.constant 2 : index
    %c0_56 = arith.constant 0 : index
    %38 = vector.load %arg10[%c2_54, %c2_55, %c0_56] : memref<18x18x8xbf16, #tpu.memory_space<vmem>>, vector<16x16x8xbf16>
    %39 = vector.shape_cast %38 : vector<16x16x8xbf16> to vector<256x8xbf16>
    %c0_57 = arith.constant 0 : index
    %c64 = arith.constant 64 : index
    %40 = vector.load %arg11[%c0_57, %c64] : memref<256x72xbf16, #tpu.memory_space<vmem>>, vector<256x8xbf16>
    tpu.vector_store %arg11[%c0_57, %c64], %39 {strides = array<i32>} : memref<256x72xbf16, #tpu.memory_space<vmem>>, vector<256x8xbf16>,
    %c0_58 = arith.constant 0 : index
    %c0_59 = arith.constant 0 : index
    %41 = vector.load %arg11[%c0_58, %c0_59] : memref<256x72xbf16, #tpu.memory_space<vmem>>, vector<256x72xbf16>
    %c0_60 = arith.constant 0 : index
    %c0_61 = arith.constant 0 : index
    %42 = vector.load %arg2[%c0_60, %c0_61] : memref<72x8xbf16, #tpu.memory_space<vmem>>, vector<72x8xbf16>
    %cst_62 = arith.constant dense<0.000000e+00> : vector<256x8xf32>
    %43 = tpu.matmul %41, %42, %cst_62 {dimension_numbers = #tpu.dot_dimension_numbers<[1], [0], [0], [1], [0, 0, 1, 1], [], []>} : vector<256x72xbf16>, vector<72x8xbf16>, vector<256x8xf32> -> vector<256x8xf32>
    %44 = vector.broadcast %8 : vector<1x8xf32> to vector<256x8xf32>
    %45 = arith.addf %43, %44 : vector<256x8xf32>
    %cst_63 = arith.constant 0.000000e+00 : f32
    %46 = vector.broadcast %cst_63 : f32 to vector<256x8xf32>
    %47 = arith.cmpf oge, %45, %46 : vector<256x8xf32>
    %cst_64 = arith.constant 0.00999999977 : f32
    %48 = vector.broadcast %cst_64 : f32 to vector<256x8xf32>
    %49 = arith.mulf %45, %48 : vector<256x8xf32>
    %50 = arith.select %47, %45, %49 : vector<256x8xi1>, vector<256x8xf32>
    %51 = arith.addf %7, %50 : vector<256x8xf32>
    %52 = arith.truncf %51 : vector<256x8xf32> to vector<256x8xbf16>
    %c0_65 = arith.constant 0 : index
    %c0_66 = arith.constant 0 : index
    %53 = vector.load %arg4[%c0_65, %c0_66] : memref<8x8xbf16, #tpu.memory_space<vmem>>, vector<8x8xbf16>
    %cst_67 = arith.constant dense<0.000000e+00> : vector<256x8xf32>
    %54 = tpu.matmul %52, %53, %cst_67 {dimension_numbers = #tpu.dot_dimension_numbers<[1], [0], [0], [1], [0, 0, 1, 1], [], []>} : vector<256x8xbf16>, vector<8x8xbf16>, vector<256x8xf32> -> vector<256x8xf32>
    %55 = vector.broadcast %9 : vector<1x8xf32> to vector<256x8xf32>
    %56 = arith.addf %54, %55 : vector<256x8xf32>
    %57 = arith.truncf %56 : vector<256x8xf32> to vector<256x8xbf16>
    %58 = vector.shape_cast %57 : vector<256x8xbf16> to vector<16x16x8xbf16>
    %c1_68 = arith.constant 1 : index
    %c1_69 = arith.constant 1 : index
    %c0_70 = arith.constant 0 : index
    %59 = vector.load %arg10[%c1_68, %c1_69, %c0_70] : memref<18x18x8xbf16, #tpu.memory_space<vmem>>, vector<16x16x8xbf16>
    tpu.vector_store %arg10[%c1_68, %c1_69, %c0_70], %58 {strides = array<i32>} : memref<18x18x8xbf16, #tpu.memory_space<vmem>>, vector<16x16x8xbf16>,
    %c0_71 = arith.constant 0 : index
    %c0_72 = arith.constant 0 : index
    %c0_73 = arith.constant 0 : index
    %60 = vector.load %arg10[%c0_71, %c0_72, %c0_73] : memref<18x18x8xbf16, #tpu.memory_space<vmem>>, vector<16x16x8xbf16>
    %61 = vector.shape_cast %60 : vector<16x16x8xbf16> to vector<256x8xbf16>
    %c0_74 = arith.constant 0 : index
    %c0_75 = arith.constant 0 : index
    %62 = vector.load %arg11[%c0_74, %c0_75] : memref<256x72xbf16, #tpu.memory_space<vmem>>, vector<256x8xbf16>
    tpu.vector_store %arg11[%c0_74, %c0_75], %61 {strides = array<i32>} : memref<256x72xbf16, #tpu.memory_space<vmem>>, vector<256x8xbf16>,
    %c0_76 = arith.constant 0 : index
    %c1_77 = arith.constant 1 : index
    %c0_78 = arith.constant 0 : index
    %63 = vector.load %arg10[%c0_76, %c1_77, %c0_78] : memref<18x18x8xbf16, #tpu.memory_space<vmem>>, vector<16x16x8xbf16>
    %64 = vector.shape_cast %63 : vector<16x16x8xbf16> to vector<256x8xbf16>
    %c0_79 = arith.constant 0 : index
    %c8_80 = arith.constant 8 : index
    %65 = vector.load %arg11[%c0_79, %c8_80] : memref<256x72xbf16, #tpu.memory_space<vmem>>, vector<256x8xbf16>
    tpu.vector_store %arg11[%c0_79, %c8_80], %64 {strides = array<i32>} : memref<256x72xbf16, #tpu.memory_space<vmem>>, vector<256x8xbf16>,
    %c0_81 = arith.constant 0 : index
    %c2_82 = arith.constant 2 : index
    %c0_83 = arith.constant 0 : index
    %66 = vector.load %arg10[%c0_81, %c2_82, %c0_83] : memref<18x18x8xbf16, #tpu.memory_space<vmem>>, vector<16x16x8xbf16>
    %67 = vector.shape_cast %66 : vector<16x16x8xbf16> to vector<256x8xbf16>
    %c0_84 = arith.constant 0 : index
    %c16_85 = arith.constant 16 : index
    %68 = vector.load %arg11[%c0_84, %c16_85] : memref<256x72xbf16, #tpu.memory_space<vmem>>, vector<256x8xbf16>
    tpu.vector_store %arg11[%c0_84, %c16_85], %67 {strides = array<i32>} : memref<256x72xbf16, #tpu.memory_space<vmem>>, vector<256x8xbf16>,
    %c1_86 = arith.constant 1 : index
    %c0_87 = arith.constant 0 : index
    %c0_88 = arith.constant 0 : index
    %69 = vector.load %arg10[%c1_86, %c0_87, %c0_88] : memref<18x18x8xbf16, #tpu.memory_space<vmem>>, vector<16x16x8xbf16>
    %70 = vector.shape_cast %69 : vector<16x16x8xbf16> to vector<256x8xbf16>
    %c0_89 = arith.constant 0 : index
    %c24_90 = arith.constant 24 : index
    %71 = vector.load %arg11[%c0_89, %c24_90] : memref<256x72xbf16, #tpu.memory_space<vmem>>, vector<256x8xbf16>
    tpu.vector_store %arg11[%c0_89, %c24_90], %70 {strides = array<i32>} : memref<256x72xbf16, #tpu.memory_space<vmem>>, vector<256x8xbf16>,
    %c1_91 = arith.constant 1 : index
    %c1_92 = arith.constant 1 : index
    %c0_93 = arith.constant 0 : index
    %72 = vector.load %arg10[%c1_91, %c1_92, %c0_93] : memref<18x18x8xbf16, #tpu.memory_space<vmem>>, vector<16x16x8xbf16>
    %73 = vector.shape_cast %72 : vector<16x16x8xbf16> to vector<256x8xbf16>
    %c0_94 = arith.constant 0 : index
    %c32_95 = arith.constant 32 : index
    %74 = vector.load %arg11[%c0_94, %c32_95] : memref<256x72xbf16, #tpu.memory_space<vmem>>, vector<256x8xbf16>
    tpu.vector_store %arg11[%c0_94, %c32_95], %73 {strides = array<i32>} : memref<256x72xbf16, #tpu.memory_space<vmem>>, vector<256x8xbf16>,
    %c1_96 = arith.constant 1 : index
    %c2_97 = arith.constant 2 : index
    %c0_98 = arith.constant 0 : index
    %75 = vector.load %arg10[%c1_96, %c2_97, %c0_98] : memref<18x18x8xbf16, #tpu.memory_space<vmem>>, vector<16x16x8xbf16>
    %76 = vector.shape_cast %75 : vector<16x16x8xbf16> to vector<256x8xbf16>
    %c0_99 = arith.constant 0 : index
    %c40_100 = arith.constant 40 : index
    %77 = vector.load %arg11[%c0_99, %c40_100] : memref<256x72xbf16, #tpu.memory_space<vmem>>, vector<256x8xbf16>
    tpu.vector_store %arg11[%c0_99, %c40_100], %76 {strides = array<i32>} : memref<256x72xbf16, #tpu.memory_space<vmem>>, vector<256x8xbf16>,
    %c2_101 = arith.constant 2 : index
    %c0_102 = arith.constant 0 : index
    %c0_103 = arith.constant 0 : index
    %78 = vector.load %arg10[%c2_101, %c0_102, %c0_103] : memref<18x18x8xbf16, #tpu.memory_space<vmem>>, vector<16x16x8xbf16>
    %79 = vector.shape_cast %78 : vector<16x16x8xbf16> to vector<256x8xbf16>
    %c0_104 = arith.constant 0 : index
    %c48_105 = arith.constant 48 : index
    %80 = vector.load %arg11[%c0_104, %c48_105] : memref<256x72xbf16, #tpu.memory_space<vmem>>, vector<256x8xbf16>
    tpu.vector_store %arg11[%c0_104, %c48_105], %79 {strides = array<i32>} : memref<256x72xbf16, #tpu.memory_space<vmem>>, vector<256x8xbf16>,
    %c2_106 = arith.constant 2 : index
    %c1_107 = arith.constant 1 : index
    %c0_108 = arith.constant 0 : index
    %81 = vector.load %arg10[%c2_106, %c1_107, %c0_108] : memref<18x18x8xbf16, #tpu.memory_space<vmem>>, vector<16x16x8xbf16>
    %82 = vector.shape_cast %81 : vector<16x16x8xbf16> to vector<256x8xbf16>
    %c0_109 = arith.constant 0 : index
    %c56_110 = arith.constant 56 : index
    %83 = vector.load %arg11[%c0_109, %c56_110] : memref<256x72xbf16, #tpu.memory_space<vmem>>, vector<256x8xbf16>
    tpu.vector_store %arg11[%c0_109, %c56_110], %82 {strides = array<i32>} : memref<256x72xbf16, #tpu.memory_space<vmem>>, vector<256x8xbf16>,
    %c2_111 = arith.constant 2 : index
    %c2_112 = arith.constant 2 : index
    %c0_113 = arith.constant 0 : index
    %84 = vector.load %arg10[%c2_111, %c2_112, %c0_113] : memref<18x18x8xbf16, #tpu.memory_space<vmem>>, vector<16x16x8xbf16>
    %85 = vector.shape_cast %84 : vector<16x16x8xbf16> to vector<256x8xbf16>
    %c0_114 = arith.constant 0 : index
    %c64_115 = arith.constant 64 : index
    %86 = vector.load %arg11[%c0_114, %c64_115] : memref<256x72xbf16, #tpu.memory_space<vmem>>, vector<256x8xbf16>
    tpu.vector_store %arg11[%c0_114, %c64_115], %85 {strides = array<i32>} : memref<256x72xbf16, #tpu.memory_space<vmem>>, vector<256x8xbf16>,
    %c0_116 = arith.constant 0 : index
    %c0_117 = arith.constant 0 : index
    %87 = vector.load %arg11[%c0_116, %c0_117] : memref<256x72xbf16, #tpu.memory_space<vmem>>, vector<256x72xbf16>
    %c0_118 = arith.constant 0 : index
    %c0_119 = arith.constant 0 : index
    %88 = vector.load %arg6[%c0_118, %c0_119] : memref<72x8xbf16, #tpu.memory_space<vmem>>, vector<72x8xbf16>
    %cst_120 = arith.constant dense<0.000000e+00> : vector<256x8xf32>
    %89 = tpu.matmul %87, %88, %cst_120 {dimension_numbers = #tpu.dot_dimension_numbers<[1], [0], [0], [1], [0, 0, 1, 1], [], []>} : vector<256x72xbf16>, vector<72x8xbf16>, vector<256x8xf32> -> vector<256x8xf32>
    %90 = vector.broadcast %10 : vector<1x8xf32> to vector<256x8xf32>
    %91 = arith.addf %89, %90 : vector<256x8xf32>
    %c0_121 = arith.constant 0 : index
    %c0_122 = arith.constant 0 : index
    %c0_123 = arith.constant 0 : index
    %92 = vector.load %arg8[%c0_121, %c0_122, %c0_123] : memref<1x256x8xf32, #tpu.memory_space<vmem>>, vector<1x256x8xf32>
    %93 = vector.shape_cast %92 : vector<1x256x8xf32> to vector<256x8xf32>
    %94 = vector.shape_cast %91 : vector<256x8xf32> to vector<1x256x8xf32>
    tpu.vector_store %arg8[%c0_121, %c0_122, %c0_123], %94 {strides = array<i32>} : memref<1x256x8xf32, #tpu.memory_space<vmem>>, vector<1x256x8xf32>,
    %cst_124 = arith.constant dense<0.000000e+00> : vector<8xf32>
    %95 = vector.multi_reduction <add>, %91, %cst_124 [0] : vector<256x8xf32> to vector<8xf32>
    %96 = vector.shape_cast %95 : vector<8xf32> to vector<1x8xf32>
    %97 = arith.mulf %91, %91 : vector<256x8xf32>
    %cst_125 = arith.constant dense<0.000000e+00> : vector<8xf32>
    %98 = vector.multi_reduction <add>, %97, %cst_125 [0] : vector<256x8xf32> to vector<8xf32>
    %99 = vector.shape_cast %98 : vector<8xf32> to vector<1x8xf32>
    %100 = tpu.concatenate %96, %99 in 0 : vector<1x8xf32>, vector<1x8xf32> -> vector<2x8xf32>
    %c0_126 = arith.constant 0 : index
    %c0_127 = arith.constant 0 : index
    %c0_128 = arith.constant 0 : index
    %101 = vector.load %arg9[%c0_126, %c0_127, %c0_128] : memref<1x2x8xf32, #tpu.memory_space<vmem>>, vector<1x2x8xf32>
    %102 = vector.shape_cast %101 : vector<1x2x8xf32> to vector<2x8xf32>
    %103 = vector.shape_cast %100 : vector<2x8xf32> to vector<1x2x8xf32>
    tpu.vector_store %arg9[%c0_126, %c0_127, %c0_128], %103 {strides = array<i32>} : memref<1x2x8xf32, #tpu.memory_space<vmem>>, vector<1x2x8xf32>,
    return
  }
  func.func @transform_0(%arg0: i32) -> (i32, i32, i32) {
    %c0_i32 = arith.constant 0 : i32
    %c0_i32_0 = arith.constant 0 : i32
    %c0_i32_1 = arith.constant 0 : i32
    return %arg0, %c0_i32, %c0_i32_0 : i32, i32, i32
  }
  func.func @transform_1(%arg0: i32) -> (i32, i32) {
    %c0_i32 = arith.constant 0 : i32
    %c0_i32_0 = arith.constant 0 : i32
    %c0_i32_1 = arith.constant 0 : i32
    return %c0_i32, %c0_i32_0 : i32, i32
  }
  func.func @transform_2(%arg0: i32) -> (i32, i32) {
    %c0_i32 = arith.constant 0 : i32
    %c0_i32_0 = arith.constant 0 : i32
    %c0_i32_1 = arith.constant 0 : i32
    return %c0_i32, %c0_i32_0 : i32, i32
  }
  func.func @transform_3(%arg0: i32) -> (i32, i32) {
    %c0_i32 = arith.constant 0 : i32
    %c0_i32_0 = arith.constant 0 : i32
    %c0_i32_1 = arith.constant 0 : i32
    return %c0_i32, %c0_i32_0 : i32, i32
  }
  func.func @transform_4(%arg0: i32) -> (i32, i32) {
    %c0_i32 = arith.constant 0 : i32
    %c0_i32_0 = arith.constant 0 : i32
    %c0_i32_1 = arith.constant 0 : i32
    return %c0_i32, %c0_i32_0 : i32, i32
  }
  func.func @transform_5(%arg0: i32) -> (i32, i32) {
    %c0_i32 = arith.constant 0 : i32
    %c0_i32_0 = arith.constant 0 : i32
    %c0_i32_1 = arith.constant 0 : i32
    return %c0_i32, %c0_i32_0 : i32, i32
  }
  func.func @transform_6(%arg0: i32) -> (i32, i32) {
    %c0_i32 = arith.constant 0 : i32
    %c0_i32_0 = arith.constant 0 : i32
    %c0_i32_1 = arith.constant 0 : i32
    return %c0_i32, %c0_i32_0 : i32, i32
  }
  func.func @transform_7(%arg0: i32) -> (i32, i32, i32) {
    %c0_i32 = arith.constant 0 : i32
    %c0_i32_0 = arith.constant 0 : i32
    %c0_i32_1 = arith.constant 0 : i32
    return %arg0, %c0_i32, %c0_i32_0 : i32, i32, i32
  }
  func.func @transform_8(%arg0: i32) -> (i32, i32, i32) {
    %c0_i32 = arith.constant 0 : i32
    %c0_i32_0 = arith.constant 0 : i32
    %c0_i32_1 = arith.constant 0 : i32
    return %arg0, %c0_i32, %c0_i32_0 : i32, i32, i32
  }
}

</mosaic_0001>

<llo_original>
// kernel: tcl_block_forward.3
$region0: #{tcl_block_forward.3}
  #allocation0 [shape = 'u32[]', space=smem, size = 0x4, offset = 0x4, fixed_abs, tag = 'smem constant byte address 0x4 - core index']
  #allocation1 [shape = 'u32[144,128]{1,0:T(1,128)}', space=vmem, size = 0x12000, scoped, tag = 'internal scratch']
  %s0 = inlined_call_operand.vmem [shape: f32[32,128], index: 0, kind: input, shape index: {}]
  %s1 = inlined_call_operand.vmem [shape: f32[1,128], index: 1, kind: input, shape index: {}]
  %s2 = inlined_call_operand.vmem [shape: f32[1,128], index: 2, kind: input, shape index: {}]
  %s3 = inlined_call_operand.vmem [shape: f32[32,128], index: 3, kind: output, shape index: {}]
  %s4 = sld [smem:[#allocation0]]
  $region45: #{tcl_block_forward.3} parent=0
    _
  %s6 = ssub.s32 1, %s4
  %s7 = scalar_select 0, %s6, %s4
  loop: start=0, step=1, limit=6
  $region2: #{tcl_block_forward.3} parent=0 // loop_pre_header
    _
  $region3: #{tcl_block_forward.3} parent=0 // loop_header
    %s9 = sphi 0, %s13
    %p10 = scmp.ge.s32.totalorder %s9, 6
    %s19 = sphi 0, %s21
    %s22 = sphi 0, %s19
    %s23 = sphi 0, %s22
    %s39 = sphi 0, %s23
    %s43 = sphi 0, %s43
    %s45 = sphi 0, %s43
    %s46 = sphi 0, %s45
    %s60 = sphi 0, %s46
    %s64 = sphi 0, %s64
    %s66 = sphi 0, %s64
    %s67 = sphi 0, %s66
    %s81 = sphi 0, %s67
    %s87 = sphi 0, %s89
    %s90 = sphi 0, %s87
    %s91 = sphi 0, %s90
    %s107 = sphi 0, %s91
  $region4: #{tcl_block_forward.3} parent=0 // loop_header_branch
    %12 = sbr.rel (%p10) target = $region8
  $region5: #{tcl_block_forward.3} parent=0 // loop_body
    %s14 = ssub.s32 %s9, 1
    %s15 = ssub.s32 %s9, 2
    %s16 = sadd.s32 %s9, 1
    %s17 = ssub.s32 %s9, %s16
    %p18 = scmp.eq.s32.totalorder %s17, 0
    %s20 = sadd.s32 %s19, 1
    %s21 = scalar_select %p18, %s19, %s20
    %p24 = pneg %p18
    %p25 = scmp.eq.s32.totalorder %s9, 3
    %p26 = por %p24, %p25
    %p27 = scmp.ne.s32.totalorder %s19, %s22
    %p28 = scmp.eq.s32.totalorder %s9, 0
    %p29 = por %p27, %p28
    %p30 = scmp.ne.s32.totalorder %s19, %s22
    %p31 = scmp.eq.s32.totalorder %s14, 3
    %p32 = por %p30, %p31
    %p33 = scmp.ne.s32.totalorder %s22, %s23
    %p34 = scmp.eq.s32.totalorder %s14, 0
    %p35 = por %p33, %p34
    %p36 = scmp.ne.s32.totalorder %s22, %s23
    %p37 = scmp.eq.s32.totalorder %s15, 3
    %p38 = por %p36, %p37
    %p40 = scmp.ne.s32.totalorder %s23, %s39
    %p41 = scmp.eq.s32.totalorder %s15, 0
    %p42 = por %p40, %p41
    %s44 = sadd.s32 %s43, 1
    %p47 = scmp.eq.s32.totalorder %s9, 3
    %p48 = scmp.ne.s32.totalorder %s43, %s45
    %p49 = scmp.eq.s32.totalorder %s9, 0
    %p50 = por %p48, %p49
    %p51 = scmp.ne.s32.totalorder %s43, %s45
    %p52 = scmp.eq.s32.totalorder %s14, 3
    %p53 = por %p51, %p52
    %p54 = scmp.ne.s32.totalorder %s45, %s46
    %p55 = scmp.eq.s32.totalorder %s14, 0
    %p56 = por %p54, %p55
    %p57 = scmp.ne.s32.totalorder %s45, %s46
    %p58 = scmp.eq.s32.totalorder %s15, 3
    %p59 = por %p57, %p58
    %p61 = scmp.ne.s32.totalorder %s46, %s60
    %p62 = scmp.eq.s32.totalorder %s15, 0
    %p63 = por %p61, %p62
    %s65 = sadd.s32 %s64, 1
    %p68 = scmp.eq.s32.totalorder %s9, 3
    %p69 = scmp.ne.s32.totalorder %s64, %s66
    %p70 = scmp.eq.s32.totalorder %s9, 0
    %p71 = por %p69, %p70
    %p72 = scmp.ne.s32.totalorder %s64, %s66
    %p73 = scmp.eq.s32.totalorder %s14, 3
    %p74 = por %p72, %p73
    %p75 = scmp.ne.s32.totalorder %s66, %s67
    %p76 = scmp.eq.s32.totalorder %s14, 0
    %p77 = por %p75, %p76
    %p78 = scmp.ne.s32.totalorder %s66, %s67
    %p79 = scmp.eq.s32.totalorder %s15, 3
    %p80 = por %p78, %p79
    %p82 = scmp.ne.s32.totalorder %s67, %s81
    %p83 = scmp.eq.s32.totalorder %s15, 0
    %p84 = por %p82, %p83
    %s85 = ssub.s32 %s9, %s16
    %p86 = scmp.eq.s32.totalorder %s85, 0
    %s88 = sadd.s32 %s87, 1
    %s89 = scalar_select %p86, %s87, %s88
    %p92 = pneg %p86
    %p93 = scmp.eq.s32.totalorder %s9, 3
    %p94 = por %p92, %p93
    %p95 = scmp.ne.s32.totalorder %s87, %s90
    %p96 = scmp.eq.s32.totalorder %s9, 0
    %p97 = por %p95, %p96
    %p98 = scmp.ne.s32.totalorder %s87, %s90
    %p99 = scmp.eq.s32.totalorder %s14, 3
    %p100 = por %p98, %p99
    %p101 = scmp.ne.s32.totalorder %s90, %s91
    %p102 = scmp.eq.s32.totalorder %s14, 0
    %p103 = por %p101, %p102
    %p104 = scmp.ne.s32.totalorder %s90, %s91
    %p105 = scmp.eq.s32.totalorder %s15, 3
    %p106 = por %p104, %p105
    %p108 = scmp.ne.s32.totalorder %s91, %s107
    %p109 = scmp.eq.s32.totalorder %s15, 0
    %p110 = por %p108, %p109
    %p111 = scmp.le.s32.totalorder 1, %s9
    %p112 = scmp.lt.s32.totalorder %s9, 5
    %p113 = pnand %p111, %p112
    %p114 = pneg %p113
    // Predicated region
    $region9: #{tcl_block_forward.3} parent=5 // pred_check
      _
    $region10: #{tcl_block_forward.3} parent=5 // pred_check_branch
      %116 = sbr.rel (%p113) target = $region12
    $region11: #{tcl_block_forward.3} parent=5 // pred_region
      %s117 = ssub.s32 %s9, 1
      // Predicated region
      $region13: #{tcl_block_forward.3} parent=11 // pred_check
        %p118 = pneg %p56
      $region14: #{tcl_block_forward.3} parent=11 // pred_check_branch
        %120 = sbr.rel (%p118) target = $region16
      $region15: #{tcl_block_forward.3} parent=11 // pred_region
        _
      $region16: #{tcl_block_forward.3} parent=11 // pred_fallthru
        _
      // Predicated region
      $region17: #{tcl_block_forward.3} parent=11 // pred_check
        %p121 = pneg %p77
      $region18: #{tcl_block_forward.3} parent=11 // pred_check_branch
        %123 = sbr.rel (%p121) target = $region20
      $region19: #{tcl_block_forward.3} parent=11 // pred_region
        _
      $region20: #{tcl_block_forward.3} parent=11 // pred_fallthru
        _
    $region12: #{tcl_block_forward.3} parent=5 // pred_fallthru
      _
    %p124 = scmp.lt.s32.totalorder %s9, 4
    // Predicated region
    $region21: #{tcl_block_forward.3} parent=5 // pred_check
      %p125 = pneg %p124
    $region22: #{tcl_block_forward.3} parent=5 // pred_check_branch
      %127 = sbr.rel (%p125) target = $region24
    $region23: #{tcl_block_forward.3} parent=5 // pred_region
      // Predicated region
      $region25: #{tcl_block_forward.3} parent=23 // pred_check
        %p128 = pneg %p29
      $region26: #{tcl_block_forward.3} parent=23 // pred_check_branch
        %130 = sbr.rel (%p128) target = $region28
      $region27: #{tcl_block_forward.3} parent=23 // pred_region
        %p131 = scmp.lt.s32.totalorder %s9, 3
        %s132 = scalar_select %p131, %s9, 3
        %s133 = smul.addr %s132, 8
        %s134 = scalar_lea.vmem %s0, %s133
      $region28: #{tcl_block_forward.3} parent=23 // pred_fallthru
        _
    $region24: #{tcl_block_forward.3} parent=5 // pred_fallthru
      _
    %p135 = scmp.le.s32.totalorder 1, %s9
    %p136 = scmp.lt.s32.totalorder %s9, 5
    %p137 = pnand %p135, %p136
    %p138 = pneg %p137
    // Predicated region
    $region29: #{tcl_block_forward.3} parent=5 // pred_check
      _
    $region30: #{tcl_block_forward.3} parent=5 // pred_check_branch
      %140 = sbr.rel (%p137) target = $region32
    $region31: #{tcl_block_forward.3} parent=5 // pred_region
      %s141 = ssub.s32 %s9, 1
      %p142 = scmp.lt.s32.totalorder %s14, 3
      %s143 = scalar_select %p142, %s14, 3
      %s144 = smul.addr %s143, 8
      %s145 = scalar_lea.vmem %s0, %s144
      %p146 = pneg %p35
      %p147 = pneg %p32
      %p148 = pneg %p56
      %p149 = pneg %p53
      %p150 = pneg %p77
      %p151 = pneg %p74
      %p152 = pneg %p103
      %p153 = pneg %p100
      %p154 = scmp.lt.s32.totalorder %s14, 3
      %s155 = scalar_select %p154, %s14, 3
      %s156 = smul.addr %s155, 8
      %s157 = scalar_lea.vmem %s3, %s156
      %p158 = scmp.lt.s32.totalorder %s14, 3
      %s159 = scalar_select %p158, %s14, 3
      %s160 = smul.addr %s159, 8
      %s161 = scalar_lea.vmem %s0, %s160
      %p162 = scmp.lt.s32.totalorder %s14, 3
      %s163 = scalar_select %p162, %s14, 3
      %s164 = smul.addr %s163, 8
      %s165 = scalar_lea.vmem %s3, %s164
      %v166 = vld [vmem:[%s161] sm:$0xff]
      %v167 = vld [vmem:[%s1] sm:$0x1]
      %v169 = vlaneseq
      %v170 = vshrl.u32 %v169, 7
      %v171 = vsub.s32 0, %v170
      %v172 = vrot.slane %v167, %v171
      %v174 = vmul.f32 %v166, %v172
      %v175 = vld [vmem:[%s2] sm:$0x1]
      %v177 = vlaneseq
      %v178 = vshrl.u32 %v177, 7
      %v179 = vsub.s32 0, %v178
      %v180 = vrot.slane %v175, %v179
      %v182 = vadd.f32 %v174, %v180
      %vm183 = vcmp.ge.f32.partialorder %v182, 0.0
      %v184 = vmul.f32 %v182, 0.01
      %v185 = vsel %vm183, %v182, %v184
      %186 = vst [vmem:[%s165] sm:$0xff] %v185
      %p187 = scmp.lt.s32.totalorder %s14, 3
      %s188 = scalar_select %p187, %s14, 3
      %s189 = smul.addr %s188, 8
      %s190 = scalar_lea.vmem %s3, %s189
      // Predicated region
      $region33: #{tcl_block_forward.3} parent=31 // pred_check
        %p191 = pneg %p100
      $region34: #{tcl_block_forward.3} parent=31 // pred_check_branch
        %193 = sbr.rel (%p191) target = $region36
      $region35: #{tcl_block_forward.3} parent=31 // pred_region
        _
      $region36: #{tcl_block_forward.3} parent=31 // pred_fallthru
        _
    $region32: #{tcl_block_forward.3} parent=5 // pred_fallthru
      _
    %p194 = scmp.le.s32.totalorder 2, %s9
    // Predicated region
    $region37: #{tcl_block_forward.3} parent=5 // pred_check
      %p195 = pneg %p194
    $region38: #{tcl_block_forward.3} parent=5 // pred_check_branch
      %197 = sbr.rel (%p195) target = $region40
    $region39: #{tcl_block_forward.3} parent=5 // pred_region
      %s198 = ssub.s32 %s9, 2
      // Predicated region
      $region41: #{tcl_block_forward.3} parent=39 // pred_check
        %p199 = pneg %p106
      $region42: #{tcl_block_forward.3} parent=39 // pred_check_branch
        %201 = sbr.rel (%p199) target = $region44
      $region43: #{tcl_block_forward.3} parent=39 // pred_region
        %p202 = scmp.lt.s32.totalorder %s15, 3
        %s203 = scalar_select %p202, %s15, 3
        %s204 = smul.addr %s203, 8
        %s205 = scalar_lea.vmem %s3, %s204
      $region44: #{tcl_block_forward.3} parent=39 // pred_fallthru
        _
    $region40: #{tcl_block_forward.3} parent=5 // pred_fallthru
      _
  $region6: #{tcl_block_forward.3} parent=0 // loop_footer
    %s13 = sadd.s32 1, %s9
  $region7: #{tcl_block_forward.3} parent=0 // loop_footer_branch
    %8 = sbr.rel target = $region3
  $region8: #{tcl_block_forward.3} parent=0 // loop_exit
    _

// kernel: tcl_block_forward.2
$region0: #{tcl_block_forward.2}
  #allocation0 [shape = 'u32[]', space=smem, size = 0x4, offset = 0x4, fixed_abs, tag = 'smem constant byte address 0x4 - core index']
  #allocation1 [shape = 'u32[144,128]{1,0:T(1,128)}', space=vmem, size = 0x12000, scoped, tag = 'internal scratch']
  #allocation2 [shape = 'bf16[18,18,8]{2,1,0:T(8,128)(2,1)}', space=vmem, size = 0x1b000, scoped, tag = 'scratch operand']
  #allocation3 [shape = 'bf16[256,72]{1,0:T(8,128)(2,1)}', space=vmem, size = 0x10000, scoped, tag = 'scratch operand']
  %s0 = inlined_call_operand.vmem [shape: f32[2,256,8], index: 0, kind: input, shape index: {}]
  %s1 = inlined_call_operand.vmem [shape: bf16[72,8], index: 1, kind: input, shape index: {}]
  %s2 = inlined_call_operand.vmem [shape: f32[1,8], index: 2, kind: input, shape index: {}]
  %s3 = inlined_call_operand.vmem [shape: bf16[8,8], index: 3, kind: input, shape index: {}]
  %s4 = inlined_call_operand.vmem [shape: f32[1,8], index: 4, kind: input, shape index: {}]
  %s5 = inlined_call_operand.vmem [shape: bf16[72,8], index: 5, kind: input, shape index: {}]
  %s6 = inlined_call_operand.vmem [shape: f32[1,8], index: 6, kind: input, shape index: {}]
  %s7 = inlined_call_operand.vmem [shape: f32[2,256,8], index: 7, kind: output, shape index: {0}]
  %s8 = inlined_call_operand.vmem [shape: f32[2,2,8], index: 8, kind: output, shape index: {1}]
  %9 = xla_tuple %s7, %s8
  %s10 = sld [smem:[#allocation0]]
  $region69: #{tcl_block_forward.2} parent=0
    _
  %s12 = ssub.s32 1, %s10
  %s13 = scalar_select 0, %s12, %s10
  loop: start=0, step=1, limit=4
  $region2: #{tcl_block_forward.2} parent=0 // loop_pre_header
    _
  $region3: #{tcl_block_forward.2} parent=0 // loop_header
    %s15 = sphi 0, %s19
    %p16 = scmp.ge.s32.totalorder %s15, 4
    %s25 = sphi 0, %s27
    %s28 = sphi 0, %s25
    %s29 = sphi 0, %s28
    %s45 = sphi 0, %s29
    %s49 = sphi 0, %s49
    %s51 = sphi 0, %s49
    %s52 = sphi 0, %s51
    %s66 = sphi 0, %s52
    %s70 = sphi 0, %s70
    %s72 = sphi 0, %s70
    %s73 = sphi 0, %s72
    %s87 = sphi 0, %s73
    %s91 = sphi 0, %s91
    %s93 = sphi 0, %s91
    %s94 = sphi 0, %s93
    %s108 = sphi 0, %s94
    %s112 = sphi 0, %s112
    %s114 = sphi 0, %s112
    %s115 = sphi 0, %s114
    %s129 = sphi 0, %s115
    %s133 = sphi 0, %s133
    %s135 = sphi 0, %s133
    %s136 = sphi 0, %s135
    %s150 = sphi 0, %s136
    %s154 = sphi 0, %s154
    %s156 = sphi 0, %s154
    %s157 = sphi 0, %s156
    %s171 = sphi 0, %s157
    %s177 = sphi 0, %s179
    %s180 = sphi 0, %s177
    %s181 = sphi 0, %s180
    %s197 = sphi 0, %s181
    %s203 = sphi 0, %s205
    %s206 = sphi 0, %s203
    %s207 = sphi 0, %s206
    %s223 = sphi 0, %s207
  $region4: #{tcl_block_forward.2} parent=0 // loop_header_branch
    %18 = sbr.rel (%p16) target = $region8
  $region5: #{tcl_block_forward.2} parent=0 // loop_body
    %s20 = ssub.s32 %s15, 1
    %s21 = ssub.s32 %s15, 2
    %s22 = sadd.s32 %s15, 1
    %s23 = ssub.s32 %s15, %s22
    %p24 = scmp.eq.s32.totalorder %s23, 0
    %s26 = sadd.s32 %s25, 1
    %s27 = scalar_select %p24, %s25, %s26
    %p30 = pneg %p24
    %p31 = scmp.eq.s32.totalorder %s15, 1
    %p32 = por %p30, %p31
    %p33 = scmp.ne.s32.totalorder %s25, %s28
    %p34 = scmp.eq.s32.totalorder %s15, 0
    %p35 = por %p33, %p34
    %p36 = scmp.ne.s32.totalorder %s25, %s28
    %p37 = scmp.eq.s32.totalorder %s20, 1
    %p38 = por %p36, %p37
    %p39 = scmp.ne.s32.totalorder %s28, %s29
    %p40 = scmp.eq.s32.totalorder %s20, 0
    %p41 = por %p39, %p40
    %p42 = scmp.ne.s32.totalorder %s28, %s29
    %p43 = scmp.eq.s32.totalorder %s21, 1
    %p44 = por %p42, %p43
    %p46 = scmp.ne.s32.totalorder %s29, %s45
    %p47 = scmp.eq.s32.totalorder %s21, 0
    %p48 = por %p46, %p47
    %s50 = sadd.s32 %s49, 1
    %p53 = scmp.eq.s32.totalorder %s15, 1
    %p54 = scmp.ne.s32.totalorder %s49, %s51
    %p55 = scmp.eq.s32.totalorder %s15, 0
    %p56 = por %p54, %p55
    %p57 = scmp.ne.s32.totalorder %s49, %s51
    %p58 = scmp.eq.s32.totalorder %s20, 1
    %p59 = por %p57, %p58
    %p60 = scmp.ne.s32.totalorder %s51, %s52
    %p61 = scmp.eq.s32.totalorder %s20, 0
    %p62 = por %p60, %p61
    %p63 = scmp.ne.s32.totalorder %s51, %s52
    %p64 = scmp.eq.s32.totalorder %s21, 1
    %p65 = por %p63, %p64
    %p67 = scmp.ne.s32.totalorder %s52, %s66
    %p68 = scmp.eq.s32.totalorder %s21, 0
    %p69 = por %p67, %p68
    %s71 = sadd.s32 %s70, 1
    %p74 = scmp.eq.s32.totalorder %s15, 1
    %p75 = scmp.ne.s32.totalorder %s70, %s72
    %p76 = scmp.eq.s32.totalorder %s15, 0
    %p77 = por %p75, %p76
    %p78 = scmp.ne.s32.totalorder %s70, %s72
    %p79 = scmp.eq.s32.totalorder %s20, 1
    %p80 = por %p78, %p79
    %p81 = scmp.ne.s32.totalorder %s72, %s73
    %p82 = scmp.eq.s32.totalorder %s20, 0
    %p83 = por %p81, %p82
    %p84 = scmp.ne.s32.totalorder %s72, %s73
    %p85 = scmp.eq.s32.totalorder %s21, 1
    %p86 = por %p84, %p85
    %p88 = scmp.ne.s32.totalorder %s73, %s87
    %p89 = scmp.eq.s32.totalorder %s21, 0
    %p90 = por %p88, %p89
    %s92 = sadd.s32 %s91, 1
    %p95 = scmp.eq.s32.totalorder %s15, 1
    %p96 = scmp.ne.s32.totalorder %s91, %s93
    %p97 = scmp.eq.s32.totalorder %s15, 0
    %p98 = por %p96, %p97
    %p99 = scmp.ne.s32.totalorder %s91, %s93
    %p100 = scmp.eq.s32.totalorder %s20, 1
    %p101 = por %p99, %p100
    %p102 = scmp.ne.s32.totalorder %s93, %s94
    %p103 = scmp.eq.s32.totalorder %s20, 0
    %p104 = por %p102, %p103
    %p105 = scmp.ne.s32.totalorder %s93, %s94
    %p106 = scmp.eq.s32.totalorder %s21, 1
    %p107 = por %p105, %p106
    %p109 = scmp.ne.s32.totalorder %s94, %s108
    %p110 = scmp.eq.s32.totalorder %s21, 0
    %p111 = por %p109, %p110
    %s113 = sadd.s32 %s112, 1
    %p116 = scmp.eq.s32.totalorder %s15, 1
    %p117 = scmp.ne.s32.totalorder %s112, %s114
    %p118 = scmp.eq.s32.totalorder %s15, 0
    %p119 = por %p117, %p118
    %p120 = scmp.ne.s32.totalorder %s112, %s114
    %p121 = scmp.eq.s32.totalorder %s20, 1
    %p122 = por %p120, %p121
    %p123 = scmp.ne.s32.totalorder %s114, %s115
    %p124 = scmp.eq.s32.totalorder %s20, 0
    %p125 = por %p123, %p124
    %p126 = scmp.ne.s32.totalorder %s114, %s115
    %p127 = scmp.eq.s32.totalorder %s21, 1
    %p128 = por %p126, %p127
    %p130 = scmp.ne.s32.totalorder %s115, %s129
    %p131 = scmp.eq.s32.totalorder %s21, 0
    %p132 = por %p130, %p131
    %s134 = sadd.s32 %s133, 1
    %p137 = scmp.eq.s32.totalorder %s15, 1
    %p138 = scmp.ne.s32.totalorder %s133, %s135
    %p139 = scmp.eq.s32.totalorder %s15, 0
    %p140 = por %p138, %p139
    %p141 = scmp.ne.s32.totalorder %s133, %s135
    %p142 = scmp.eq.s32.totalorder %s20, 1
    %p143 = por %p141, %p142
    %p144 = scmp.ne.s32.totalorder %s135, %s136
    %p145 = scmp.eq.s32.totalorder %s20, 0
    %p146 = por %p144, %p145
    %p147 = scmp.ne.s32.totalorder %s135, %s136
    %p148 = scmp.eq.s32.totalorder %s21, 1
    %p149 = por %p147, %p148
    %p151 = scmp.ne.s32.totalorder %s136, %s150
    %p152 = scmp.eq.s32.totalorder %s21, 0
    %p153 = por %p151, %p152
    %s155 = sadd.s32 %s154, 1
    %p158 = scmp.eq.s32.totalorder %s15, 1
    %p159 = scmp.ne.s32.totalorder %s154, %s156
    %p160 = scmp.eq.s32.totalorder %s15, 0
    %p161 = por %p159, %p160
    %p162 = scmp.ne.s32.totalorder %s154, %s156
    %p163 = scmp.eq.s32.totalorder %s20, 1
    %p164 = por %p162, %p163
    %p165 = scmp.ne.s32.totalorder %s156, %s157
    %p166 = scmp.eq.s32.totalorder %s20, 0
    %p167 = por %p165, %p166
    %p168 = scmp.ne.s32.totalorder %s156, %s157
    %p169 = scmp.eq.s32.totalorder %s21, 1
    %p170 = por %p168, %p169
    %p172 = scmp.ne.s32.totalorder %s157, %s171
    %p173 = scmp.eq.s32.totalorder %s21, 0
    %p174 = por %p172, %p173
    %s175 = ssub.s32 %s15, %s22
    %p176 = scmp.eq.s32.totalorder %s175, 0
    %s178 = sadd.s32 %s177, 1
    %s179 = scalar_select %p176, %s177, %s178
    %p182 = pneg %p176
    %p183 = scmp.eq.s32.totalorder %s15, 1
    %p184 = por %p182, %p183
    %p185 = scmp.ne.s32.totalorder %s177, %s180
    %p186 = scmp.eq.s32.totalorder %s15, 0
    %p187 = por %p185, %p186
    %p188 = scmp.ne.s32.totalorder %s177, %s180
    %p189 = scmp.eq.s32.totalorder %s20, 1
    %p190 = por %p188, %p189
    %p191 = scmp.ne.s32.totalorder %s180, %s181
    %p192 = scmp.eq.s32.totalorder %s20, 0
    %p193 = por %p191, %p192
    %p194 = scmp.ne.s32.totalorder %s180, %s181
    %p195 = scmp.eq.s32.totalorder %s21, 1
    %p196 = por %p194, %p195
    %p198 = scmp.ne.s32.totalorder %s181, %s197
    %p199 = scmp.eq.s32.totalorder %s21, 0
    %p200 = por %p198, %p199
    %s201 = ssub.s32 %s15, %s22
    %p202 = scmp.eq.s32.totalorder %s201, 0
    %s204 = sadd.s32 %s203, 1
    %s205 = scalar_select %p202, %s203, %s204
    %p208 = pneg %p202
    %p209 = scmp.eq.s32.totalorder %s15, 1
    %p210 = por %p208, %p209
    %p211 = scmp.ne.s32.totalorder %s203, %s206
    %p212 = scmp.eq.s32.totalorder %s15, 0
    %p213 = por %p211, %p212
    %p214 = scmp.ne.s32.totalorder %s203, %s206
    %p215 = scmp.eq.s32.totalorder %s20, 1
    %p216 = por %p214, %p215
    %p217 = scmp.ne.s32.totalorder %s206, %s207
    %p218 = scmp.eq.s32.totalorder %s20, 0
    %p219 = por %p217, %p218
    %p220 = scmp.ne.s32.totalorder %s206, %s207
    %p221 = scmp.eq.s32.totalorder %s21, 1
    %p222 = por %p220, %p221
    %p224 = scmp.ne.s32.totalorder %s207, %s223
    %p225 = scmp.eq.s32.totalorder %s21, 0
    %p226 = por %p224, %p225
    %p227 = scmp.le.s32.totalorder 1, %s15
    %p228 = scmp.lt.s32.totalorder %s15, 3
    %p229 = pnand %p227, %p228
    %p230 = pneg %p229
    // Predicated region
    $region9: #{tcl_block_forward.2} parent=5 // pred_check
      _
    $region10: #{tcl_block_forward.2} parent=5 // pred_check_branch
      %232 = sbr.rel (%p229) target = $region12
    $region11: #{tcl_block_forward.2} parent=5 // pred_region
      %s233 = ssub.s32 %s15, 1
      // Predicated region
      $region13: #{tcl_block_forward.2} parent=11 // pred_check
        %p234 = pneg %p62
      $region14: #{tcl_block_forward.2} parent=11 // pred_check_branch
        %236 = sbr.rel (%p234) target = $region16
      $region15: #{tcl_block_forward.2} parent=11 // pred_region
        _
      $region16: #{tcl_block_forward.2} parent=11 // pred_fallthru
        _
      // Predicated region
      $region17: #{tcl_block_forward.2} parent=11 // pred_check
        %p237 = pneg %p83
      $region18: #{tcl_block_forward.2} parent=11 // pred_check_branch
        %239 = sbr.rel (%p237) target = $region20
      $region19: #{tcl_block_forward.2} parent=11 // pred_region
        _
      $region20: #{tcl_block_forward.2} parent=11 // pred_fallthru
        _
      // Predicated region
      $region21: #{tcl_block_forward.2} parent=11 // pred_check
        %p240 = pneg %p104
      $region22: #{tcl_block_forward.2} parent=11 // pred_check_branch
        %242 = sbr.rel (%p240) target = $region24
      $region23: #{tcl_block_forward.2} parent=11 // pred_region
        _
      $region24: #{tcl_block_forward.2} parent=11 // pred_fallthru
        _
      // Predicated region
      $region25: #{tcl_block_forward.2} parent=11 // pred_check
        %p243 = pneg %p125
      $region26: #{tcl_block_forward.2} parent=11 // pred_check_branch
        %245 = sbr.rel (%p243) target = $region28
      $region27: #{tcl_block_forward.2} parent=11 // pred_region
        _
      $region28: #{tcl_block_forward.2} parent=11 // pred_fallthru
        _
      // Predicated region
      $region29: #{tcl_block_forward.2} parent=11 // pred_check
        %p246 = pneg %p146
      $region30: #{tcl_block_forward.2} parent=11 // pred_check_branch
        %248 = sbr.rel (%p246) target = $region32
      $region31: #{tcl_block_forward.2} parent=11 // pred_region
        _
      $region32: #{tcl_block_forward.2} parent=11 // pred_fallthru
        _
      // Predicated region
      $region33: #{tcl_block_forward.2} parent=11 // pred_check
        %p249 = pneg %p167
      $region34: #{tcl_block_forward.2} parent=11 // pred_check_branch
        %251 = sbr.rel (%p249) target = $region36
      $region35: #{tcl_block_forward.2} parent=11 // pred_region
        _
      $region36: #{tcl_block_forward.2} parent=11 // pred_fallthru
        _
    $region12: #{tcl_block_forward.2} parent=5 // pred_fallthru
      _
    %p252 = scmp.lt.s32.totalorder %s15, 2
    // Predicated region
    $region37: #{tcl_block_forward.2} parent=5 // pred_check
      %p253 = pneg %p252
    $region38: #{tcl_block_forward.2} parent=5 // pred_check_branch
      %255 = sbr.rel (%p253) target = $region40
    $region39: #{tcl_block_forward.2} parent=5 // pred_region
      // Predicated region
      $region41: #{tcl_block_forward.2} parent=39 // pred_check
        %p256 = pneg %p35
      $region42: #{tcl_block_forward.2} parent=39 // pred_check_branch
        %258 = sbr.rel (%p256) target = $region44
      $region43: #{tcl_block_forward.2} parent=39 // pred_region
        %p259 = scmp.lt.s32.totalorder %s15, 1
        %s260 = scalar_select %p259, %s15, 1
        %s261 = smul.addr %s260, 32
        %s262 = smul.addr %s261, 8
        %s263 = scalar_lea.vmem %s0, %s262
      $region44: #{tcl_block_forward.2} parent=39 // pred_fallthru
        _
    $region40: #{tcl_block_forward.2} parent=5 // pred_fallthru
      _
    %p264 = scmp.le.s32.totalorder 1, %s15
    %p265 = scmp.lt.s32.totalorder %s15, 3
    %p266 = pnand %p264, %p265
    %p267 = pneg %p266
    // Predicated region
    $region45: #{tcl_block_forward.2} parent=5 // pred_check
      _
    $region46: #{tcl_block_forward.2} parent=5 // pred_check_branch
      %269 = sbr.rel (%p266) target = $region48
    $region47: #{tcl_block_forward.2} parent=5 // pred_region
      %s270 = ssub.s32 %s15, 1
      %p271 = scmp.lt.s32.totalorder %s20, 1
      %s272 = scalar_select %p271, %s20, 1
      %s273 = smul.addr %s272, 32
      %s274 = smul.addr %s273, 8
      %s275 = scalar_lea.vmem %s0, %s274
      %p276 = pneg %p41
      %p277 = pneg %p38
      %p278 = pneg %p62
      %p279 = pneg %p59
      %p280 = pneg %p83
      %p281 = pneg %p80
      %p282 = pneg %p104
      %p283 = pneg %p101
      %p284 = pneg %p125
      %p285 = pneg %p122
      %p286 = pneg %p146
      %p287 = pneg %p143
      %p288 = pneg %p167
      %p289 = pneg %p164
      %p290 = pneg %p193
      %p291 = pneg %p190
      %p292 = scmp.lt.s32.totalorder %s20, 1
      %s293 = scalar_select %p292, %s20, 1
      %s294 = smul.addr %s293, 32
      %s295 = smul.addr %s294, 8
      %s296 = scalar_lea.vmem %s7, %s295
      %p297 = pneg %p219
      %p298 = pneg %p216
      %p299 = scmp.lt.s32.totalorder %s20, 1
      %s300 = scalar_select %p299, %s20, 1
      %s301 = smul.addr %s300, 2
      %s302 = scalar_lea.vmem %s8, %s301
      %p303 = scmp.lt.s32.totalorder %s20, 1
      %s304 = scalar_select %p303, %s20, 1
      %s305 = smul.addr %s304, 32
      %s306 = smul.addr %s305, 8
      %s307 = scalar_lea.vmem %s0, %s306
      %p308 = scmp.lt.s32.totalorder %s20, 1
      %s309 = scalar_select %p308, %s20, 1
      %s310 = smul.addr %s309, 32
      %s311 = smul.addr %s310, 8
      %s312 = scalar_lea.vmem %s7, %s311
      %p313 = scmp.lt.s32.totalorder %s20, 1
      %s314 = scalar_select %p313, %s20, 1
      %s315 = smul.addr %s314, 2
      %s316 = scalar_lea.vmem %s8, %s315
      %vm318 = vcmask 60416
      %319 = vst.msk [vmem:[#allocation2] sm:$0xf] %vm318, 0
      %320 = vst.msk [vmem:[#allocation2 + $0x4] sm:$0xf] %vm318, 0
      %vm321 = vcmask 57344
      %322 = vst.msk [vmem:[#allocation2 + $0x8] sm:$0x1] %vm321, 0
      %s323 = scalar_lea.vmem [#allocation2], 204
      %324 = vst.msk [vmem:[%s323] sm:$0xf] %vm318, 0
      %325 = vst.msk [vmem:[%s323 + $0x4] sm:$0xf] %vm318, 0
      %326 = vst.msk [vmem:[%s323 + $0x8] sm:$0x1] %vm321, 0
      %s327 = scalar_lea.vmem [#allocation2], 12
      %vm328 = vcmask 57344
      %vm329 = vsmask.f32 256
      %vm330 = vmand %vm328, %vm329
      %v331 = vld [vmem:[%s327] sm:$0x1]
      %v332 = vsel %vm330, 0, %v331
      %333 = vst [vmem:[%s327] sm:$0x1] %v332
      %v334 = vld [vmem:[%s327 + $0xc] sm:$0x1]
      %v335 = vsel %vm330, 0, %v334
      %336 = vst [vmem:[%s327 + $0xc] sm:$0x1] %v335
      %v337 = vld [vmem:[%s327 + $0x18] sm:$0x1]
      %v338 = vsel %vm330, 0, %v337
      %339 = vst [vmem:[%s327 + $0x18] sm:$0x1] %v338
      %v340 = vld [vmem:[%s327 + $0x24] sm:$0x1]
      %v341 = vsel %vm330, 0, %v340
      %342 = vst [vmem:[%s327 + $0x24] sm:$0x1] %v341
      %v343 = vld [vmem:[%s327 + $0x30] sm:$0x1]
      %v344 = vsel %vm330, 0, %v343
      %345 = vst [vmem:[%s327 + $0x30] sm:$0x1] %v344
      %v346 = vld [vmem:[%s327 + $0x3c] sm:$0x1]
      %v347 = vsel %vm330, 0, %v346
      %348 = vst [vmem:[%s327 + $0x3c] sm:$0x1] %v347
      %v349 = vld [vmem:[%s327 + $0x48] sm:$0x1]
      %v350 = vsel %vm330, 0, %v349
      %351 = vst [vmem:[%s327 + $0x48] sm:$0x1] %v350
      %v352 = vld [vmem:[%s327 + $0x54] sm:$0x1]
      %v353 = vsel %vm330, 0, %v352
      %354 = vst [vmem:[%s327 + $0x54] sm:$0x1] %v353
      %v355 = vld [vmem:[%s327 + $0x60] sm:$0x1]
      %v356 = vsel %vm330, 0, %v355
      %357 = vst [vmem:[%s327 + $0x60] sm:$0x1] %v356
      %v358 = vld [vmem:[%s327 + $0x6c] sm:$0x1]
      %v359 = vsel %vm330, 0, %v358
      %360 = vst [vmem:[%s327 + $0x6c] sm:$0x1] %v359
      %v361 = vld [vmem:[%s327 + $0x78] sm:$0x1]
      %v362 = vsel %vm330, 0, %v361
      %363 = vst [vmem:[%s327 + $0x78] sm:$0x1] %v362
      %v364 = vld [vmem:[%s327 + $0x84] sm:$0x1]
      %v365 = vsel %vm330, 0, %v364
      %366 = vst [vmem:[%s327 + $0x84] sm:$0x1] %v365
      %v367 = vld [vmem:[%s327 + $0x90] sm:$0x1]
      %v368 = vsel %vm330, 0, %v367
      %369 = vst [vmem:[%s327 + $0x90] sm:$0x1] %v368
      %v370 = vld [vmem:[%s327 + $0x9c] sm:$0x1]
      %v371 = vsel %vm330, 0, %v370
      %372 = vst [vmem:[%s327 + $0x9c] sm:$0x1] %v371
      %v373 = vld [vmem:[%s327 + $0xa8] sm:$0x1]
      %v374 = vsel %vm330, 0, %v373
      %375 = vst [vmem:[%s327 + $0xa8] sm:$0x1] %v374
      %v376 = vld [vmem:[%s327 + $0xb4] sm:$0x1]
      %v377 = vsel %vm330, 0, %v376
      %378 = vst [vmem:[%s327 + $0xb4] sm:$0x1] %v377
      %vm379 = vsmask.f32 7938
      %vm380 = vmand %vm328, %vm379
      %v381 = vld [vmem:[%s327 + $0x8] sm:$0x1]
      %v382 = vsel %vm380, 0, %v381
      %383 = vst [vmem:[%s327 + $0x8] sm:$0x1] %v382
      %v384 = vld [vmem:[%s327 + $0x14] sm:$0x1]
      %v385 = vsel %vm380, 0, %v384
      %386 = vst [vmem:[%s327 + $0x14] sm:$0x1] %v385
      %v387 = vld [vmem:[%s327 + $0x20] sm:$0x1]
      %v388 = vsel %vm380, 0, %v387
      %389 = vst [vmem:[%s327 + $0x20] sm:$0x1] %v388
      %v390 = vld [vmem:[%s327 + $0x2c] sm:$0x1]
      %v391 = vsel %vm380, 0, %v390
      %392 = vst [vmem:[%s327 + $0x2c] sm:$0x1] %v391
      %v393 = vld [vmem:[%s327 + $0x38] sm:$0x1]
      %v394 = vsel %vm380, 0, %v393
      %395 = vst [vmem:[%s327 + $0x38] sm:$0x1] %v394
      %v396 = vld [vmem:[%s327 + $0x44] sm:$0x1]
      %v397 = vsel %vm380, 0, %v396
      %398 = vst [vmem:[%s327 + $0x44] sm:$0x1] %v397
      %v399 = vld [vmem:[%s327 + $0x50] sm:$0x1]
      %v400 = vsel %vm380, 0, %v399
      %401 = vst [vmem:[%s327 + $0x50] sm:$0x1] %v400
      %v402 = vld [vmem:[%s327 + $0x5c] sm:$0x1]
      %v403 = vsel %vm380, 0, %v402
      %404 = vst [vmem:[%s327 + $0x5c] sm:$0x1] %v403
      %v405 = vld [vmem:[%s327 + $0x68] sm:$0x1]
      %v406 = vsel %vm380, 0, %v405
      %407 = vst [vmem:[%s327 + $0x68] sm:$0x1] %v406
      %v408 = vld [vmem:[%s327 + $0x74] sm:$0x1]
      %v409 = vsel %vm380, 0, %v408
      %410 = vst [vmem:[%s327 + $0x74] sm:$0x1] %v409
      %v411 = vld [vmem:[%s327 + $0x80] sm:$0x1]
      %v412 = vsel %vm380, 0, %v411
      %413 = vst [vmem:[%s327 + $0x80] sm:$0x1] %v412
      %v414 = vld [vmem:[%s327 + $0x8c] sm:$0x1]
      %v415 = vsel %vm380, 0, %v414
      %416 = vst [vmem:[%s327 + $0x8c] sm:$0x1] %v415
      %v417 = vld [vmem:[%s327 + $0x98] sm:$0x1]
      %v418 = vsel %vm380, 0, %v417
      %419 = vst [vmem:[%s327 + $0x98] sm:$0x1] %v418
      %v420 = vld [vmem:[%s327 + $0xa4] sm:$0x1]
      %v421 = vsel %vm380, 0, %v420
      %422 = vst [vmem:[%s327 + $0xa4] sm:$0x1] %v421
      %v423 = vld [vmem:[%s327 + $0xb0] sm:$0x1]
      %v424 = vsel %vm380, 0, %v423
      %425 = vst [vmem:[%s327 + $0xb0] sm:$0x1] %v424
      %v426 = vld [vmem:[%s327 + $0xbc] sm:$0x1]
      %v427 = vsel %vm380, 0, %v426
      %428 = vst [vmem:[%s327 + $0xbc] sm:$0x1] %v427
      %v429 = vld [vmem:[%s307] sm:$0xff]
      %v430 = vld [vmem:[%s307 + $0x8] sm:$0xff]
      %v431 = vld [vmem:[%s307 + $0x10] sm:$0xff]
      %v432 = vld [vmem:[%s307 + $0x18] sm:$0xff]
      %v433 = vld [vmem:[%s307 + $0x20] sm:$0xff]
      %v434 = vld [vmem:[%s307 + $0x28] sm:$0xff]
      %v435 = vld [vmem:[%s307 + $0x30] sm:$0xff]
      %v436 = vld [vmem:[%s307 + $0x38] sm:$0xff]
      %v437 = vld [vmem:[%s307 + $0x40] sm:$0xff]
      %v438 = vld [vmem:[%s307 + $0x48] sm:$0xff]
      %v439 = vld [vmem:[%s307 + $0x50] sm:$0xff]
      %v440 = vld [vmem:[%s307 + $0x58] sm:$0xff]
      %v441 = vld [vmem:[%s307 + $0x60] sm:$0xff]
      %v442 = vld [vmem:[%s307 + $0x68] sm:$0xff]
      %v443 = vld [vmem:[%s307 + $0x70] sm:$0xff]
      %v444 = vld [vmem:[%s307 + $0x78] sm:$0xff]
      %v445 = vld [vmem:[%s307 + $0x80] sm:$0xff]
      %v446 = vld [vmem:[%s307 + $0x88] sm:$0xff]
      %v447 = vld [vmem:[%s307 + $0x90] sm:$0xff]
      %v448 = vld [vmem:[%s307 + $0x98] sm:$0xff]
      %v449 = vld [vmem:[%s307 + $0xa0] sm:$0xff]
      %v450 = vld [vmem:[%s307 + $0xa8] sm:$0xff]
      %v451 = vld [vmem:[%s307 + $0xb0] sm:$0xff]
      %v452 = vld [vmem:[%s307 + $0xb8] sm:$0xff]
      %v453 = vld [vmem:[%s307 + $0xc0] sm:$0xff]
      %v454 = vld [vmem:[%s307 + $0xc8] sm:$0xff]
      %v455 = vld [vmem:[%s307 + $0xd0] sm:$0xff]
      %v456 = vld [vmem:[%s307 + $0xd8] sm:$0xff]
      %v457 = vld [vmem:[%s307 + $0xe0] sm:$0xff]
      %v458 = vld [vmem:[%s307 + $0xe8] sm:$0xff]
      %v459 = vld [vmem:[%s307 + $0xf0] sm:$0xff]
      %v460 = vld [vmem:[%s307 + $0xf8] sm:$0xff]
      %v461 = vld [vmem:[%s2] sm:$0x1]
      %v462 = vld [vmem:[%s4] sm:$0x1]
      %v463 = vld [vmem:[%s6] sm:$0x1]
      %v464 = vpack.c.bf16 %v430, %v429
      %v465 = vpack.c.bf16 %v432, %v431
      %v466 = vpack.c.bf16 %v434, %v433
      %v467 = vpack.c.bf16 %v436, %v435
      %v468 = vpack.c.bf16 %v438, %v437
      %v469 = vpack.c.bf16 %v440, %v439
      %v470 = vpack.c.bf16 %v442, %v441
      %v471 = vpack.c.bf16 %v444, %v443
      %v472 = vpack.c.bf16 %v446, %v445
      %v473 = vpack.c.bf16 %v448, %v447
      %v474 = vpack.c.bf16 %v450, %v449
      %v475 = vpack.c.bf16 %v452, %v451
      %v476 = vpack.c.bf16 %v454, %v453
      %v477 = vpack.c.bf16 %v456, %v455
      %v478 = vpack.c.bf16 %v458, %v457
      %v479 = vpack.c.bf16 %v460, %v459
      %v496 = vunpack.c.l.b16 %v464
      %v497 = vunpack.c.h.b16 %v464
      %v498 = vunpack.c.l.b16 %v465
      %v499 = vunpack.c.h.b16 %v465
      %v500 = vunpack.c.l.b16 %v466
      %v501 = vunpack.c.h.b16 %v466
      %v502 = vunpack.c.l.b16 %v467
      %v503 = vunpack.c.h.b16 %v467
      %v504 = vunpack.c.l.b16 %v468
      %v505 = vunpack.c.h.b16 %v468
      %v506 = vunpack.c.l.b16 %v469
      %v507 = vunpack.c.h.b16 %v469
      %v508 = vunpack.c.l.b16 %v470
      %v509 = vunpack.c.h.b16 %v470
      %v510 = vunpack.c.l.b16 %v471
      %v511 = vunpack.c.h.b16 %v471
      %v512 = vunpack.c.l.b16 %v472
      %v513 = vunpack.c.h.b16 %v472
      %v514 = vunpack.c.l.b16 %v473
      %v515 = vunpack.c.h.b16 %v473
      %v516 = vunpack.c.l.b16 %v474
      %v517 = vunpack.c.h.b16 %v474
      %v518 = vunpack.c.l.b16 %v475
      %v519 = vunpack.c.h.b16 %v475
      %v520 = vunpack.c.l.b16 %v476
      %v521 = vunpack.c.h.b16 %v476
      %v522 = vunpack.c.l.b16 %v477
      %v523 = vunpack.c.h.b16 %v477
      %v524 = vunpack.c.l.b16 %v478
      %v525 = vunpack.c.h.b16 %v478
      %v526 = vunpack.c.l.b16 %v479
      %v527 = vunpack.c.h.b16 %v479
      %v528 = vpack.c.b16 %v496, %v496
      %v529 = vpack.c.b16 %v497, %v497
      %v530 = vpack.c.b16 %v498, %v498
      %v531 = vpack.c.b16 %v499, %v499
      %v532 = vpack.c.b16 %v500, %v500
      %v533 = vpack.c.b16 %v501, %v501
      %v534 = vpack.c.b16 %v502, %v502
      %v535 = vpack.c.b16 %v503, %v503
      %v536 = vpack.c.b16 %v504, %v504
      %v537 = vpack.c.b16 %v505, %v505
      %v538 = vpack.c.b16 %v506, %v506
      %v539 = vpack.c.b16 %v507, %v507
      %v540 = vpack.c.b16 %v508, %v508
      %v541 = vpack.c.b16 %v509, %v509
      %v542 = vpack.c.b16 %v510, %v510
      %v543 = vpack.c.b16 %v511, %v511
      %v544 = vpack.c.b16 %v512, %v512
      %v545 = vpack.c.b16 %v513, %v513
      %v546 = vpack.c.b16 %v514, %v514
      %v547 = vpack.c.b16 %v515, %v515
      %v548 = vpack.c.b16 %v516, %v516
      %v549 = vpack.c.b16 %v517, %v517
      %v550 = vpack.c.b16 %v518, %v518
      %v551 = vpack.c.b16 %v519, %v519
      %v552 = vpack.c.b16 %v520, %v520
      %v553 = vpack.c.b16 %v521, %v521
      %v554 = vpack.c.b16 %v522, %v522
      %v555 = vpack.c.b16 %v523, %v523
      %v556 = vpack.c.b16 %v524, %v524
      %v557 = vpack.c.b16 %v525, %v525
      %v558 = vpack.c.b16 %v526, %v526
      %v559 = vpack.c.b16 %v527, %v527
      %vm560 = vsmask.f32 4368
      %vm561 = vmor %vm329, %vm560
      %v563 = vshrl.u32 %v528, 16
      %v565 = vrot.slane %v563, 7
      %v566 = vshll.u32 %v528, 16
      %v568 = vor.u32 %v565, %v566
      %v569 = vrot.slane %v565, 4
      %v571 = vshrl.u32 %v529, 16
      %v573 = vrot.slane %v571, 7
      %v574 = vshll.u32 %v529, 16
      %v576 = vor.u32 %v573, %v574
      %v577 = vsel %vm561, %v569, %v576
      %v578 = vrot.slane %v573, 4
      %v580 = vshrl.u32 %v530, 16
      %v582 = vrot.slane %v580, 7
      %v583 = vshll.u32 %v530, 16
      %v585 = vor.u32 %v582, %v583
      %v586 = vrot.slane %v582, 4
      %v588 = vshrl.u32 %v531, 16
      %v590 = vrot.slane %v588, 7
      %v591 = vshll.u32 %v531, 16
      %v593 = vor.u32 %v590, %v591
      %v594 = vsel %vm561, %v586, %v593
      %v595 = vrot.slane %v590, 4
      %v597 = vshrl.u32 %v532, 16
      %v599 = vrot.slane %v597, 7
      %v600 = vshll.u32 %v532, 16
      %v602 = vor.u32 %v599, %v600
      %v603 = vrot.slane %v599, 4
      %v605 = vshrl.u32 %v533, 16
      %v607 = vrot.slane %v605, 7
      %v608 = vshll.u32 %v533, 16
      %v610 = vor.u32 %v607, %v608
      %v611 = vsel %vm561, %v603, %v610
      %v612 = vrot.slane %v607, 4
      %v614 = vshrl.u32 %v534, 16
      %v616 = vrot.slane %v614, 7
      %v617 = vshll.u32 %v534, 16
      %v619 = vor.u32 %v616, %v617
      %v620 = vrot.slane %v616, 4
      %v622 = vshrl.u32 %v535, 16
      %v624 = vrot.slane %v622, 7
      %v625 = vshll.u32 %v535, 16
      %v627 = vor.u32 %v624, %v625
      %v628 = vsel %vm561, %v620, %v627
      %v629 = vrot.slane %v624, 4
      %v631 = vshrl.u32 %v536, 16
      %v633 = vrot.slane %v631, 7
      %v634 = vshll.u32 %v536, 16
      %v636 = vor.u32 %v633, %v634
      %v637 = vrot.slane %v633, 4
      %v639 = vshrl.u32 %v537, 16
      %v641 = vrot.slane %v639, 7
      %v642 = vshll.u32 %v537, 16
      %v644 = vor.u32 %v641, %v642
      %v645 = vsel %vm561, %v637, %v644
      %v646 = vrot.slane %v641, 4
      %v648 = vshrl.u32 %v538, 16
      %v650 = vrot.slane %v648, 7
      %v651 = vshll.u32 %v538, 16
      %v653 = vor.u32 %v650, %v651
      %v654 = vrot.slane %v650, 4
      %v656 = vshrl.u32 %v539, 16
      %v658 = vrot.slane %v656, 7
      %v659 = vshll.u32 %v539, 16
      %v661 = vor.u32 %v658, %v659
      %v662 = vsel %vm561, %v654, %v661
      %v663 = vrot.slane %v658, 4
      %v665 = vshrl.u32 %v540, 16
      %v667 = vrot.slane %v665, 7
      %v668 = vshll.u32 %v540, 16
      %v670 = vor.u32 %v667, %v668
      %v671 = vrot.slane %v667, 4
      %v673 = vshrl.u32 %v541, 16
      %v675 = vrot.slane %v673, 7
      %v676 = vshll.u32 %v541, 16
      %v678 = vor.u32 %v675, %v676
      %v679 = vsel %vm561, %v671, %v678
      %v680 = vrot.slane %v675, 4
      %v682 = vshrl.u32 %v542, 16
      %v684 = vrot.slane %v682, 7
      %v685 = vshll.u32 %v542, 16
      %v687 = vor.u32 %v684, %v685
      %v688 = vrot.slane %v684, 4
      %v690 = vshrl.u32 %v543, 16
      %v692 = vrot.slane %v690, 7
      %v693 = vshll.u32 %v543, 16
      %v695 = vor.u32 %v692, %v693
      %v696 = vsel %vm561, %v688, %v695
      %v697 = vrot.slane %v692, 4
      %v699 = vshrl.u32 %v544, 16
      %v701 = vrot.slane %v699, 7
      %v702 = vshll.u32 %v544, 16
      %v704 = vor.u32 %v701, %v702
      %v705 = vrot.slane %v701, 4
      %v707 = vshrl.u32 %v545, 16
      %v709 = vrot.slane %v707, 7
      %v710 = vshll.u32 %v545, 16
      %v712 = vor.u32 %v709, %v710
      %v713 = vsel %vm561, %v705, %v712
      %v714 = vrot.slane %v709, 4
      %v716 = vshrl.u32 %v546, 16
      %v718 = vrot.slane %v716, 7
      %v719 = vshll.u32 %v546, 16
      %v721 = vor.u32 %v718, %v719
      %v722 = vrot.slane %v718, 4
      %v724 = vshrl.u32 %v547, 16
      %v726 = vrot.slane %v724, 7
      %v727 = vshll.u32 %v547, 16
      %v729 = vor.u32 %v726, %v727
      %v730 = vsel %vm561, %v722, %v729
      %v731 = vrot.slane %v726, 4
      %v733 = vshrl.u32 %v548, 16
      %v735 = vrot.slane %v733, 7
      %v736 = vshll.u32 %v548, 16
      %v738 = vor.u32 %v735, %v736
      %v739 = vrot.slane %v735, 4
      %v741 = vshrl.u32 %v549, 16
      %v743 = vrot.slane %v741, 7
      %v744 = vshll.u32 %v549, 16
      %v746 = vor.u32 %v743, %v744
      %v747 = vsel %vm561, %v739, %v746
      %v748 = vrot.slane %v743, 4
      %v750 = vshrl.u32 %v550, 16
      %v752 = vrot.slane %v750, 7
      %v753 = vshll.u32 %v550, 16
      %v755 = vor.u32 %v752, %v753
      %v756 = vrot.slane %v752, 4
      %v758 = vshrl.u32 %v551, 16
      %v760 = vrot.slane %v758, 7
      %v761 = vshll.u32 %v551, 16
      %v763 = vor.u32 %v760, %v761
      %v764 = vsel %vm561, %v756, %v763
      %v765 = vrot.slane %v760, 4
      %v767 = vshrl.u32 %v552, 16
      %v769 = vrot.slane %v767, 7
      %v770 = vshll.u32 %v552, 16
      %v772 = vor.u32 %v769, %v770
      %v773 = vrot.slane %v769, 4
      %v775 = vshrl.u32 %v553, 16
      %v777 = vrot.slane %v775, 7
      %v778 = vshll.u32 %v553, 16
      %v780 = vor.u32 %v777, %v778
      %v781 = vsel %vm561, %v773, %v780
      %v782 = vrot.slane %v777, 4
      %v784 = vshrl.u32 %v554, 16
      %v786 = vrot.slane %v784, 7
      %v787 = vshll.u32 %v554, 16
      %v789 = vor.u32 %v786, %v787
      %v790 = vrot.slane %v786, 4
      %v792 = vshrl.u32 %v555, 16
      %v794 = vrot.slane %v792, 7
      %v795 = vshll.u32 %v555, 16
      %v797 = vor.u32 %v794, %v795
      %v798 = vsel %vm561, %v790, %v797
      %v799 = vrot.slane %v794, 4
      %v801 = vshrl.u32 %v556, 16
      %v803 = vrot.slane %v801, 7
      %v804 = vshll.u32 %v556, 16
      %v806 = vor.u32 %v803, %v804
      %v807 = vrot.slane %v803, 4
      %v809 = vshrl.u32 %v557, 16
      %v811 = vrot.slane %v809, 7
      %v812 = vshll.u32 %v557, 16
      %v814 = vor.u32 %v811, %v812
      %v815 = vsel %vm561, %v807, %v814
      %v816 = vrot.slane %v811, 4
      %v818 = vshrl.u32 %v558, 16
      %v820 = vrot.slane %v818, 7
      %v821 = vshll.u32 %v558, 16
      %v823 = vor.u32 %v820, %v821
      %v824 = vrot.slane %v820, 4
      %v826 = vshrl.u32 %v559, 16
      %v828 = vrot.slane %v826, 7
      %v829 = vshll.u32 %v559, 16
      %v831 = vor.u32 %v828, %v829
      %v832 = vsel %vm561, %v824, %v831
      %v833 = vrot.slane %v828, 4
      %vm882 = vcmask 60416
      %vm883 = vmand %vm882, %vm379
      %v884 = vld [vmem:[%s327] sm:$0xf]
      %v885 = vsel %vm883, %v568, %v884
      %886 = vst [vmem:[%s327] sm:$0xf] %v885
      %887 = vst.msk [vmem:[%s327 + $0x4] sm:$0xf] %vm318, %v577
      %v888 = vld [vmem:[%s327 + $0x8] sm:$0x1]
      %v889 = vsel %vm330, %v578, %v888
      %890 = vst [vmem:[%s327 + $0x8] sm:$0x1] %v889
      %v891 = vld [vmem:[%s327 + $0xc] sm:$0xf]
      %v892 = vsel %vm883, %v585, %v891
      %893 = vst [vmem:[%s327 + $0xc] sm:$0xf] %v892
      %894 = vst.msk [vmem:[%s327 + $0x10] sm:$0xf] %vm318, %v594
      %v895 = vld [vmem:[%s327 + $0x14] sm:$0x1]
      %v896 = vsel %vm330, %v595, %v895
      %897 = vst [vmem:[%s327 + $0x14] sm:$0x1] %v896
      %v898 = vld [vmem:[%s327 + $0x18] sm:$0xf]
      %v899 = vsel %vm883, %v602, %v898
      %900 = vst [vmem:[%s327 + $0x18] sm:$0xf] %v899
      %901 = vst.msk [vmem:[%s327 + $0x1c] sm:$0xf] %vm318, %v611
      %v902 = vld [vmem:[%s327 + $0x20] sm:$0x1]
      %v903 = vsel %vm330, %v612, %v902
      %904 = vst [vmem:[%s327 + $0x20] sm:$0x1] %v903
      %v905 = vld [vmem:[%s327 + $0x24] sm:$0xf]
      %v906 = vsel %vm883, %v619, %v905
      %907 = vst [vmem:[%s327 + $0x24] sm:$0xf] %v906
      %908 = vst.msk [vmem:[%s327 + $0x28] sm:$0xf] %vm318, %v628
      %v909 = vld [vmem:[%s327 + $0x2c] sm:$0x1]
      %v910 = vsel %vm330, %v629, %v909
      %911 = vst [vmem:[%s327 + $0x2c] sm:$0x1] %v910
      %v912 = vld [vmem:[%s327 + $0x30] sm:$0xf]
      %v913 = vsel %vm883, %v636, %v912
      %914 = vst [vmem:[%s327 + $0x30] sm:$0xf] %v913
      %915 = vst.msk [vmem:[%s327 + $0x34] sm:$0xf] %vm318, %v645
      %v916 = vld [vmem:[%s327 + $0x38] sm:$0x1]
      %v917 = vsel %vm330, %v646, %v916
      %918 = vst [vmem:[%s327 + $0x38] sm:$0x1] %v917
      %v919 = vld [vmem:[%s327 + $0x3c] sm:$0xf]
      %v920 = vsel %vm883, %v653, %v919
      %921 = vst [vmem:[%s327 + $0x3c] sm:$0xf] %v920
      %922 = vst.msk [vmem:[%s327 + $0x40] sm:$0xf] %vm318, %v662
      %v923 = vld [vmem:[%s327 + $0x44] sm:$0x1]
      %v924 = vsel %vm330, %v663, %v923
      %925 = vst [vmem:[%s327 + $0x44] sm:$0x1] %v924
      %v926 = vld [vmem:[%s327 + $0x48] sm:$0xf]
      %v927 = vsel %vm883, %v670, %v926
      %928 = vst [vmem:[%s327 + $0x48] sm:$0xf] %v927
      %929 = vst.msk [vmem:[%s327 + $0x4c] sm:$0xf] %vm318, %v679
      %v930 = vld [vmem:[%s327 + $0x50] sm:$0x1]
      %v931 = vsel %vm330, %v680, %v930
      %932 = vst [vmem:[%s327 + $0x50] sm:$0x1] %v931
      %v933 = vld [vmem:[%s327 + $0x54] sm:$0xf]
      %v934 = vsel %vm883, %v687, %v933
      %935 = vst [vmem:[%s327 + $0x54] sm:$0xf] %v934
      %936 = vst.msk [vmem:[%s327 + $0x58] sm:$0xf] %vm318, %v696
      %v937 = vld [vmem:[%s327 + $0x5c] sm:$0x1]
      %v938 = vsel %vm330, %v697, %v937
      %939 = vst [vmem:[%s327 + $0x5c] sm:$0x1] %v938
      %v940 = vld [vmem:[%s327 + $0x60] sm:$0xf]
      %v941 = vsel %vm883, %v704, %v940
      %942 = vst [vmem:[%s327 + $0x60] sm:$0xf] %v941
      %943 = vst.msk [vmem:[%s327 + $0x64] sm:$0xf] %vm318, %v713
      %v944 = vld [vmem:[%s327 + $0x68] sm:$0x1]
      %v945 = vsel %vm330, %v714, %v944
      %946 = vst [vmem:[%s327 + $0x68] sm:$0x1] %v945
      %v947 = vld [vmem:[%s327 + $0x6c] sm:$0xf]
      %v948 = vsel %vm883, %v721, %v947
      %949 = vst [vmem:[%s327 + $0x6c] sm:$0xf] %v948
      %950 = vst.msk [vmem:[%s327 + $0x70] sm:$0xf] %vm318, %v730
      %v951 = vld [vmem:[%s327 + $0x74] sm:$0x1]
      %v952 = vsel %vm330, %v731, %v951
      %953 = vst [vmem:[%s327 + $0x74] sm:$0x1] %v952
      %v954 = vld [vmem:[%s327 + $0x78] sm:$0xf]
      %v955 = vsel %vm883, %v738, %v954
      %956 = vst [vmem:[%s327 + $0x78] sm:$0xf] %v955
      %957 = vst.msk [vmem:[%s327 + $0x7c] sm:$0xf] %vm318, %v747
      %v958 = vld [vmem:[%s327 + $0x80] sm:$0x1]
      %v959 = vsel %vm330, %v748, %v958
      %960 = vst [vmem:[%s327 + $0x80] sm:$0x1] %v959
      %v961 = vld [vmem:[%s327 + $0x84] sm:$0xf]
      %v962 = vsel %vm883, %v755, %v961
      %963 = vst [vmem:[%s327 + $0x84] sm:$0xf] %v962
      %964 = vst.msk [vmem:[%s327 + $0x88] sm:$0xf] %vm318, %v764
      %v965 = vld [vmem:[%s327 + $0x8c] sm:$0x1]
      %v966 = vsel %vm330, %v765, %v965
      %967 = vst [vmem:[%s327 + $0x8c] sm:$0x1] %v966
      %v968 = vld [vmem:[%s327 + $0x90] sm:$0xf]
      %v969 = vsel %vm883, %v772, %v968
      %970 = vst [vmem:[%s327 + $0x90] sm:$0xf] %v969
      %971 = vst.msk [vmem:[%s327 + $0x94] sm:$0xf] %vm318, %v781
      %v972 = vld [vmem:[%s327 + $0x98] sm:$0x1]
      %v973 = vsel %vm330, %v782, %v972
      %974 = vst [vmem:[%s327 + $0x98] sm:$0x1] %v973
      %v975 = vld [vmem:[%s327 + $0x9c] sm:$0xf]
      %v976 = vsel %vm883, %v789, %v975
      %977 = vst [vmem:[%s327 + $0x9c] sm:$0xf] %v976
      %978 = vst.msk [vmem:[%s327 + $0xa0] sm:$0xf] %vm318, %v798
      %v979 = vld [vmem:[%s327 + $0xa4] sm:$0x1]
      %v980 = vsel %vm330, %v799, %v979
      %981 = vst [vmem:[%s327 + $0xa4] sm:$0x1] %v980
      %v982 = vld [vmem:[%s327 + $0xa8] sm:$0xf]
      %v983 = vsel %vm883, %v806, %v982
      %984 = vst [vmem:[%s327 + $0xa8] sm:$0xf] %v983
      %985 = vst.msk [vmem:[%s327 + $0xac] sm:$0xf] %vm318, %v815
      %v986 = vld [vmem:[%s327 + $0xb0] sm:$0x1]
      %v987 = vsel %vm330, %v816, %v986
      %988 = vst [vmem:[%s327 + $0xb0] sm:$0x1] %v987
      %v989 = vld [vmem:[%s327 + $0xb4] sm:$0xf]
      %v990 = vsel %vm883, %v823, %v989
      %991 = vst [vmem:[%s327 + $0xb4] sm:$0xf] %v990
      %992 = vst.msk [vmem:[%s327 + $0xb8] sm:$0xf] %vm318, %v832
      %v993 = vld [vmem:[%s327 + $0xbc] sm:$0x1]
      %v994 = vsel %vm330, %v833, %v993
      %995 = vst [vmem:[%s327 + $0xbc] sm:$0x1] %v994
      %v996 = vld [vmem:[#allocation2] sm:$0xf]
      %v997 = vld [vmem:[#allocation2 + $0x4] sm:$0xf]
      %v998 = vld [vmem:[#allocation2 + $0xc] sm:$0xf]
      %v999 = vld [vmem:[#allocation2 + $0x10] sm:$0xf]
      %v1000 = vld [vmem:[#allocation2 + $0x18] sm:$0xf]
      %v1001 = vld [vmem:[#allocation2 + $0x1c] sm:$0xf]
      %v1002 = vld [vmem:[#allocation2 + $0x24] sm:$0xf]
      %v1003 = vld [vmem:[#allocation2 + $0x28] sm:$0xf]
      %v1004 = vld [vmem:[#allocation2 + $0x30] sm:$0xf]
      %v1005 = vld [vmem:[#allocation2 + $0x34] sm:$0xf]
      %v1006 = vld [vmem:[#allocation2 + $0x3c] sm:$0xf]
      %v1007 = vld [vmem:[#allocation2 + $0x40] sm:$0xf]
      %v1008 = vld [vmem:[#allocation2 + $0x48] sm:$0xf]
      %v1009 = vld [vmem:[#allocation2 + $0x4c] sm:$0xf]
      %v1010 = vld [vmem:[#allocation2 + $0x54] sm:$0xf]
      %v1011 = vld [vmem:[#allocation2 + $0x58] sm:$0xf]
      %v1012 = vld [vmem:[#allocation2 + $0x60] sm:$0xf]
      %v1013 = vld [vmem:[#allocation2 + $0x64] sm:$0xf]
      %v1014 = vld [vmem:[#allocation2 + $0x6c] sm:$0xf]
      %v1015 = vld [vmem:[#allocation2 + $0x70] sm:$0xf]
      %v1016 = vld [vmem:[#allocation2 + $0x78] sm:$0xf]
      %v1017 = vld [vmem:[#allocation2 + $0x7c] sm:$0xf]
      %v1018 = vld [vmem:[#allocation2 + $0x84] sm:$0xf]
      %v1019 = vld [vmem:[#allocation2 + $0x88] sm:$0xf]
      %v1020 = vld [vmem:[#allocation2 + $0x90] sm:$0xf]
      %v1021 = vld [vmem:[#allocation2 + $0x94] sm:$0xf]
      %v1022 = vld [vmem:[#allocation2 + $0x9c] sm:$0xf]
      %v1023 = vld [vmem:[#allocation2 + $0xa0] sm:$0xf]
      %v1024 = vld [vmem:[#allocation2 + $0xa8] sm:$0xf]
      %v1025 = vld [vmem:[#allocation2 + $0xac] sm:$0xf]
      %v1026 = vld [vmem:[#allocation2 + $0xb4] sm:$0xf]
      %v1027 = vld [vmem:[#allocation2 + $0xb8] sm:$0xf]
      %1028 = vst.msk [vmem:[#allocation3] sm:$0xf] %vm318, %v996
      %1029 = vst.msk [vmem:[#allocation3 + $0x4] sm:$0xf] %vm318, %v997
      %1030 = vst.msk [vmem:[#allocation3 + $0x8] sm:$0xf] %vm318, %v998
      %1031 = vst.msk [vmem:[#allocation3 + $0xc] sm:$0xf] %vm318, %v999
      %1032 = vst.msk [vmem:[#allocation3 + $0x10] sm:$0xf] %vm318, %v1000
      %1033 = vst.msk [vmem:[#allocation3 + $0x14] sm:$0xf] %vm318, %v1001
      %1034 = vst.msk [vmem:[#allocation3 + $0x18] sm:$0xf] %vm318, %v1002
      %1035 = vst.msk [vmem:[#allocation3 + $0x1c] sm:$0xf] %vm318, %v1003
      %1036 = vst.msk [vmem:[#allocation3 + $0x20] sm:$0xf] %vm318, %v1004
      %1037 = vst.msk [vmem:[#allocation3 + $0x24] sm:$0xf] %vm318, %v1005
      %1038 = vst.msk [vmem:[#allocation3 + $0x28] sm:$0xf] %vm318, %v1006
      %1039 = vst.msk [vmem:[#allocation3 + $0x2c] sm:$0xf] %vm318, %v1007
      %1040 = vst.msk [vmem:[#allocation3 + $0x30] sm:$0xf] %vm318, %v1008
      %1041 = vst.msk [vmem:[#allocation3 + $0x34] sm:$0xf] %vm318, %v1009
      %1042 = vst.msk [vmem:[#allocation3 + $0x38] sm:$0xf] %vm318, %v1010
      %1043 = vst.msk [vmem:[#allocation3 + $0x3c] sm:$0xf] %vm318, %v1011
      %1044 = vst.msk [vmem:[#allocation3 + $0x40] sm:$0xf] %vm318, %v1012
      %1045 = vst.msk [vmem:[#allocation3 + $0x44] sm:$0xf] %vm318, %v1013
      %1046 = vst.msk [vmem:[#allocation3 + $0x48] sm:$0xf] %vm318, %v1014
      %1047 = vst.msk [vmem:[#allocation3 + $0x4c] sm:$0xf] %vm318, %v1015
      %1048 = vst.msk [vmem:[#allocation3 + $0x50] sm:$0xf] %vm318, %v1016
      %1049 = vst.msk [vmem:[#allocation3 + $0x54] sm:$0xf] %vm318, %v1017
      %1050 = vst.msk [vmem:[#allocation3 + $0x58] sm:$0xf] %vm318, %v1018
      %1051 = vst.msk [vmem:[#allocation3 + $0x5c] sm:$0xf] %vm318, %v1019
      %1052 = vst.msk [vmem:[#allocation3 + $0x60] sm:$0xf] %vm318, %v1020
      %1053 = vst.msk [vmem:[#allocation3 + $0x64] sm:$0xf] %vm318, %v1021
      %1054 = vst.msk [vmem:[#allocation3 + $0x68] sm:$0xf] %vm318, %v1022
      %1055 = vst.msk [vmem:[#allocation3 + $0x6c] sm:$0xf] %vm318, %v1023
      %1056 = vst.msk [vmem:[#allocation3 + $0x70] sm:$0xf] %vm318, %v1024
      %1057 = vst.msk [vmem:[#allocation3 + $0x74] sm:$0xf] %vm318, %v1025
      %1058 = vst.msk [vmem:[#allocation3 + $0x78] sm:$0xf] %vm318, %v1026
      %1059 = vst.msk [vmem:[#allocation3 + $0x7c] sm:$0xf] %vm318, %v1027
      %v1060 = vld [vmem:[#allocation2] sm:$0xf]
      %v1061 = vld [vmem:[#allocation2 + $0x4] sm:$0xf]
      %v1062 = vld [vmem:[#allocation2 + $0x8] sm:$0x1]
      %v1063 = vld [vmem:[#allocation2 + $0xc] sm:$0xf]
      %v1064 = vld [vmem:[#allocation2 + $0x10] sm:$0xf]
      %v1065 = vld [vmem:[#allocation2 + $0x14] sm:$0x1]
      %v1066 = vld [vmem:[#allocation2 + $0x18] sm:$0xf]
      %v1067 = vld [vmem:[#allocation2 + $0x1c] sm:$0xf]
      %v1068 = vld [vmem:[#allocation2 + $0x20] sm:$0x1]
      %v1069 = vld [vmem:[#allocation2 + $0x24] sm:$0xf]
      %v1070 = vld [vmem:[#allocation2 + $0x28] sm:$0xf]
      %v1071 = vld [vmem:[#allocation2 + $0x2c] sm:$0x1]
      %v1072 = vld [vmem:[#allocation2 + $0x30] sm:$0xf]
      %v1073 = vld [vmem:[#allocation2 + $0x34] sm:$0xf]
      %v1074 = vld [vmem:[#allocation2 + $0x38] sm:$0x1]
      %v1075 = vld [vmem:[#allocation2 + $0x3c] sm:$0xf]
      %v1076 = vld [vmem:[#allocation2 + $0x40] sm:$0xf]
      %v1077 = vld [vmem:[#allocation2 + $0x44] sm:$0x1]
      %v1078 = vld [vmem:[#allocation2 + $0x48] sm:$0xf]
      %v1079 = vld [vmem:[#allocation2 + $0x4c] sm:$0xf]
      %v1080 = vld [vmem:[#allocation2 + $0x50] sm:$0x1]
      %v1081 = vld [vmem:[#allocation2 + $0x54] sm:$0xf]
      %v1082 = vld [vmem:[#allocation2 + $0x58] sm:$0xf]
      %v1083 = vld [vmem:[#allocation2 + $0x5c] sm:$0x1]
      %v1084 = vld [vmem:[#allocation2 + $0x60] sm:$0xf]
      %v1085 = vld [vmem:[#allocation2 + $0x64] sm:$0xf]
      %v1086 = vld [vmem:[#allocation2 + $0x68] sm:$0x1]
      %v1087 = vld [vmem:[#allocation2 + $0x6c] sm:$0xf]
      %v1088 = vld [vmem:[#allocation2 + $0x70] sm:$0xf]
      %v1089 = vld [vmem:[#allocation2 + $0x74] sm:$0x1]
      %v1090 = vld [vmem:[#allocation2 + $0x78] sm:$0xf]
      %v1091 = vld [vmem:[#allocation2 + $0x7c] sm:$0xf]
      %v1092 = vld [vmem:[#allocation2 + $0x80] sm:$0x1]
      %v1093 = vld [vmem:[#allocation2 + $0x84] sm:$0xf]
      %v1094 = vld [vmem:[#allocation2 + $0x88] sm:$0xf]
      %v1095 = vld [vmem:[#allocation2 + $0x8c] sm:$0x1]
      %v1096 = vld [vmem:[#allocation2 + $0x90] sm:$0xf]
      %v1097 = vld [vmem:[#allocation2 + $0x94] sm:$0xf]
      %v1098 = vld [vmem:[#allocation2 + $0x98] sm:$0x1]
      %v1099 = vld [vmem:[#allocation2 + $0x9c] sm:$0xf]
      %v1100 = vld [vmem:[#allocation2 + $0xa0] sm:$0xf]
      %v1101 = vld [vmem:[#allocation2 + $0xa4] sm:$0x1]
      %v1102 = vld [vmem:[#allocation2 + $0xa8] sm:$0xf]
      %v1103 = vld [vmem:[#allocation2 + $0xac] sm:$0xf]
      %v1104 = vld [vmem:[#allocation2 + $0xb0] sm:$0x1]
      %v1105 = vld [vmem:[#allocation2 + $0xb4] sm:$0xf]
      %v1106 = vld [vmem:[#allocation2 + $0xb8] sm:$0xf]
      %v1107 = vld [vmem:[#allocation2 + $0xbc] sm:$0x1]
      %vm1108 = vsmask.f32 3328
      %vm1109 = vsmask.f32 7440
      %vm1110 = vmor %vm1108, %vm1109
      %v1112 = vshrl.u32 %v1060, 16
      %v1114 = vrot.slane %v1112, 4
      %v1115 = vshll.u32 %v1060, 16
      %v1117 = vrot.slane %v1115, 5
      %v1118 = vor.u32 %v1114, %v1117
      %v1119 = vrot.slane %v1118, 4
      %v1121 = vshll.u32 %v1061, 16
      %v1123 = vrot.slane %v1121, 5
      %v1124 = vsel %vm1110, %v1119, %v1123
      %v1125 = vshrl.u32 %v1061, 16
      %v1127 = vrot.slane %v1125, 4
      %v1128 = vor.u32 %v1127, %v1123
      %v1129 = vrot.slane %v1128, 4
      %v1131 = vshll.u32 %v1062, 16
      %v1133 = vrot.slane %v1131, 5
      %v1134 = vsel %vm1110, %v1129, %v1133
      %v1136 = vshrl.u32 %v1063, 16
      %v1138 = vrot.slane %v1136, 4
      %v1139 = vshll.u32 %v1063, 16
      %v1141 = vrot.slane %v1139, 5
      %v1142 = vor.u32 %v1138, %v1141
      %v1143 = vrot.slane %v1142, 4
      %v1145 = vshll.u32 %v1064, 16
      %v1147 = vrot.slane %v1145, 5
      %v1148 = vsel %vm1110, %v1143, %v1147
      %v1149 = vshrl.u32 %v1064, 16
      %v1151 = vrot.slane %v1149, 4
      %v1152 = vor.u32 %v1151, %v1147
      %v1153 = vrot.slane %v1152, 4
      %v1155 = vshll.u32 %v1065, 16
      %v1157 = vrot.slane %v1155, 5
      %v1158 = vsel %vm1110, %v1153, %v1157
      %v1160 = vshrl.u32 %v1066, 16
      %v1162 = vrot.slane %v1160, 4
      %v1163 = vshll.u32 %v1066, 16
      %v1165 = vrot.slane %v1163, 5
      %v1166 = vor.u32 %v1162, %v1165
      %v1167 = vrot.slane %v1166, 4
      %v1169 = vshll.u32 %v1067, 16
      %v1171 = vrot.slane %v1169, 5
      %v1172 = vsel %vm1110, %v1167, %v1171
      %v1173 = vshrl.u32 %v1067, 16
      %v1175 = vrot.slane %v1173, 4
      %v1176 = vor.u32 %v1175, %v1171
      %v1177 = vrot.slane %v1176, 4
      %v1179 = vshll.u32 %v1068, 16
      %v1181 = vrot.slane %v1179, 5
      %v1182 = vsel %vm1110, %v1177, %v1181
      %v1184 = vshrl.u32 %v1069, 16
      %v1186 = vrot.slane %v1184, 4
      %v1187 = vshll.u32 %v1069, 16
      %v1189 = vrot.slane %v1187, 5
      %v1190 = vor.u32 %v1186, %v1189
      %v1191 = vrot.slane %v1190, 4
      %v1193 = vshll.u32 %v1070, 16
      %v1195 = vrot.slane %v1193, 5
      %v1196 = vsel %vm1110, %v1191, %v1195
      %v1197 = vshrl.u32 %v1070, 16
      %v1199 = vrot.slane %v1197, 4
      %v1200 = vor.u32 %v1199, %v1195
      %v1201 = vrot.slane %v1200, 4
      %v1203 = vshll.u32 %v1071, 16
      %v1205 = vrot.slane %v1203, 5
      %v1206 = vsel %vm1110, %v1201, %v1205
      %v1208 = vshrl.u32 %v1072, 16
      %v1210 = vrot.slane %v1208, 4
      %v1211 = vshll.u32 %v1072, 16
      %v1213 = vrot.slane %v1211, 5
      %v1214 = vor.u32 %v1210, %v1213
      %v1215 = vrot.slane %v1214, 4
      %v1217 = vshll.u32 %v1073, 16
      %v1219 = vrot.slane %v1217, 5
      %v1220 = vsel %vm1110, %v1215, %v1219
      %v1221 = vshrl.u32 %v1073, 16
      %v1223 = vrot.slane %v1221, 4
      %v1224 = vor.u32 %v1223, %v1219
      %v1225 = vrot.slane %v1224, 4
      %v1227 = vshll.u32 %v1074, 16
      %v1229 = vrot.slane %v1227, 5
      %v1230 = vsel %vm1110, %v1225, %v1229
      %v1232 = vshrl.u32 %v1075, 16
      %v1234 = vrot.slane %v1232, 4
      %v1235 = vshll.u32 %v1075, 16
      %v1237 = vrot.slane %v1235, 5
      %v1238 = vor.u32 %v1234, %v1237
      %v1239 = vrot.slane %v1238, 4
      %v1241 = vshll.u32 %v1076, 16
      %v1243 = vrot.slane %v1241, 5
      %v1244 = vsel %vm1110, %v1239, %v1243
      %v1245 = vshrl.u32 %v1076, 16
      %v1247 = vrot.slane %v1245, 4
      %v1248 = vor.u32 %v1247, %v1243
      %v1249 = vrot.slane %v1248, 4
      %v1251 = vshll.u32 %v1077, 16
      %v1253 = vrot.slane %v1251, 5
      %v1254 = vsel %vm1110, %v1249, %v1253
      %v1256 = vshrl.u32 %v1078, 16
      %v1258 = vrot.slane %v1256, 4
      %v1259 = vshll.u32 %v1078, 16
      %v1261 = vrot.slane %v1259, 5
      %v1262 = vor.u32 %v1258, %v1261
      %v1263 = vrot.slane %v1262, 4
      %v1265 = vshll.u32 %v1079, 16
      %v1267 = vrot.slane %v1265, 5
      %v1268 = vsel %vm1110, %v1263, %v1267
      %v1269 = vshrl.u32 %v1079, 16
      %v1271 = vrot.slane %v1269, 4
      %v1272 = vor.u32 %v1271, %v1267
      %v1273 = vrot.slane %v1272, 4
      %v1275 = vshll.u32 %v1080, 16
      %v1277 = vrot.slane %v1275, 5
      %v1278 = vsel %vm1110, %v1273, %v1277
      %v1280 = vshrl.u32 %v1081, 16
      %v1282 = vrot.slane %v1280, 4
      %v1283 = vshll.u32 %v1081, 16
      %v1285 = vrot.slane %v1283, 5
      %v1286 = vor.u32 %v1282, %v1285
      %v1287 = vrot.slane %v1286, 4
      %v1289 = vshll.u32 %v1082, 16
      %v1291 = vrot.slane %v1289, 5
      %v1292 = vsel %vm1110, %v1287, %v1291
      %v1293 = vshrl.u32 %v1082, 16
      %v1295 = vrot.slane %v1293, 4
      %v1296 = vor.u32 %v1295, %v1291
      %v1297 = vrot.slane %v1296, 4
      %v1299 = vshll.u32 %v1083, 16
      %v1301 = vrot.slane %v1299, 5
      %v1302 = vsel %vm1110, %v1297, %v1301
      %v1304 = vshrl.u32 %v1084, 16
      %v1306 = vrot.slane %v1304, 4
      %v1307 = vshll.u32 %v1084, 16
      %v1309 = vrot.slane %v1307, 5
      %v1310 = vor.u32 %v1306, %v1309
      %v1311 = vrot.slane %v1310, 4
      %v1313 = vshll.u32 %v1085, 16
      %v1315 = vrot.slane %v1313, 5
      %v1316 = vsel %vm1110, %v1311, %v1315
      %v1317 = vshrl.u32 %v1085, 16
      %v1319 = vrot.slane %v1317, 4
      %v1320 = vor.u32 %v1319, %v1315
      %v1321 = vrot.slane %v1320, 4
      %v1323 = vshll.u32 %v1086, 16
      %v1325 = vrot.slane %v1323, 5
      %v1326 = vsel %vm1110, %v1321, %v1325
      %v1328 = vshrl.u32 %v1087, 16
      %v1330 = vrot.slane %v1328, 4
      %v1331 = vshll.u32 %v1087, 16
      %v1333 = vrot.slane %v1331, 5
      %v1334 = vor.u32 %v1330, %v1333
      %v1335 = vrot.slane %v1334, 4
      %v1337 = vshll.u32 %v1088, 16
      %v1339 = vrot.slane %v1337, 5
      %v1340 = vsel %vm1110, %v1335, %v1339
      %v1341 = vshrl.u32 %v1088, 16
      %v1343 = vrot.slane %v1341, 4
      %v1344 = vor.u32 %v1343, %v1339
      %v1345 = vrot.slane %v1344, 4
      %v1347 = vshll.u32 %v1089, 16
      %v1349 = vrot.slane %v1347, 5
      %v1350 = vsel %vm1110, %v1345, %v1349
      %v1352 = vshrl.u32 %v1090, 16
      %v1354 = vrot.slane %v1352, 4
      %v1355 = vshll.u32 %v1090, 16
      %v1357 = vrot.slane %v1355, 5
      %v1358 = vor.u32 %v1354, %v1357
      %v1359 = vrot.slane %v1358, 4
      %v1361 = vshll.u32 %v1091, 16
      %v1363 = vrot.slane %v1361, 5
      %v1364 = vsel %vm1110, %v1359, %v1363
      %v1365 = vshrl.u32 %v1091, 16
      %v1367 = vrot.slane %v1365, 4
      %v1368 = vor.u32 %v1367, %v1363
      %v1369 = vrot.slane %v1368, 4
      %v1371 = vshll.u32 %v1092, 16
      %v1373 = vrot.slane %v1371, 5
      %v1374 = vsel %vm1110, %v1369, %v1373
      %v1376 = vshrl.u32 %v1093, 16
      %v1378 = vrot.slane %v1376, 4
      %v1379 = vshll.u32 %v1093, 16
      %v1381 = vrot.slane %v1379, 5
      %v1382 = vor.u32 %v1378, %v1381
      %v1383 = vrot.slane %v1382, 4
      %v1385 = vshll.u32 %v1094, 16
      %v1387 = vrot.slane %v1385, 5
      %v1388 = vsel %vm1110, %v1383, %v1387
      %v1389 = vshrl.u32 %v1094, 16
      %v1391 = vrot.slane %v1389, 4
      %v1392 = vor.u32 %v1391, %v1387
      %v1393 = vrot.slane %v1392, 4
      %v1395 = vshll.u32 %v1095, 16
      %v1397 = vrot.slane %v1395, 5
      %v1398 = vsel %vm1110, %v1393, %v1397
      %v1400 = vshrl.u32 %v1096, 16
      %v1402 = vrot.slane %v1400, 4
      %v1403 = vshll.u32 %v1096, 16
      %v1405 = vrot.slane %v1403, 5
      %v1406 = vor.u32 %v1402, %v1405
      %v1407 = vrot.slane %v1406, 4
      %v1409 = vshll.u32 %v1097, 16
      %v1411 = vrot.slane %v1409, 5
      %v1412 = vsel %vm1110, %v1407, %v1411
      %v1413 = vshrl.u32 %v1097, 16
      %v1415 = vrot.slane %v1413, 4
      %v1416 = vor.u32 %v1415, %v1411
      %v1417 = vrot.slane %v1416, 4
      %v1419 = vshll.u32 %v1098, 16
      %v1421 = vrot.slane %v1419, 5
      %v1422 = vsel %vm1110, %v1417, %v1421
      %v1424 = vshrl.u32 %v1099, 16
      %v1426 = vrot.slane %v1424, 4
      %v1427 = vshll.u32 %v1099, 16
      %v1429 = vrot.slane %v1427, 5
      %v1430 = vor.u32 %v1426, %v1429
      %v1431 = vrot.slane %v1430, 4
      %v1433 = vshll.u32 %v1100, 16
      %v1435 = vrot.slane %v1433, 5
      %v1436 = vsel %vm1110, %v1431, %v1435
      %v1437 = vshrl.u32 %v1100, 16
      %v1439 = vrot.slane %v1437, 4
      %v1440 = vor.u32 %v1439, %v1435
      %v1441 = vrot.slane %v1440, 4
      %v1443 = vshll.u32 %v1101, 16
      %v1445 = vrot.slane %v1443, 5
      %v1446 = vsel %vm1110, %v1441, %v1445
      %v1448 = vshrl.u32 %v1102, 16
      %v1450 = vrot.slane %v1448, 4
      %v1451 = vshll.u32 %v1102, 16
      %v1453 = vrot.slane %v1451, 5
      %v1454 = vor.u32 %v1450, %v1453
      %v1455 = vrot.slane %v1454, 4
      %v1457 = vshll.u32 %v1103, 16
      %v1459 = vrot.slane %v1457, 5
      %v1460 = vsel %vm1110, %v1455, %v1459
      %v1461 = vshrl.u32 %v1103, 16
      %v1463 = vrot.slane %v1461, 4
      %v1464 = vor.u32 %v1463, %v1459
      %v1465 = vrot.slane %v1464, 4
      %v1467 = vshll.u32 %v1104, 16
      %v1469 = vrot.slane %v1467, 5
      %v1470 = vsel %vm1110, %v1465, %v1469
      %v1472 = vshrl.u32 %v1105, 16
      %v1474 = vrot.slane %v1472, 4
      %v1475 = vshll.u32 %v1105, 16
      %v1477 = vrot.slane %v1475, 5
      %v1478 = vor.u32 %v1474, %v1477
      %v1479 = vrot.slane %v1478, 4
      %v1481 = vshll.u32 %v1106, 16
      %v1483 = vrot.slane %v1481, 5
      %v1484 = vsel %vm1110, %v1479, %v1483
      %v1485 = vshrl.u32 %v1106, 16
      %v1487 = vrot.slane %v1485, 4
      %v1488 = vor.u32 %v1487, %v1483
      %v1489 = vrot.slane %v1488, 4
      %v1491 = vshll.u32 %v1107, 16
      %v1493 = vrot.slane %v1491, 5
      %v1494 = vsel %vm1110, %v1489, %v1493
      %1495 = vrot.lane.b32.xlu0 %v1124, 8
      %v1496 = vpop.permute.xlu0 %1495
      %1497 = vrot.lane.b32.xlu0 %v1134, 8
      %v1498 = vpop.permute.xlu0 %1497
      %1499 = vrot.lane.b32.xlu0 %v1148, 8
      %v1500 = vpop.permute.xlu0 %1499
      %1501 = vrot.lane.b32.xlu0 %v1158, 8
      %v1502 = vpop.permute.xlu0 %1501
      %1503 = vrot.lane.b32.xlu0 %v1172, 8
      %v1504 = vpop.permute.xlu0 %1503
      %1505 = vrot.lane.b32.xlu0 %v1182, 8
      %v1506 = vpop.permute.xlu0 %1505
      %1507 = vrot.lane.b32.xlu0 %v1196, 8
      %v1508 = vpop.permute.xlu0 %1507
      %1509 = vrot.lane.b32.xlu0 %v1206, 8
      %v1510 = vpop.permute.xlu0 %1509
      %1511 = vrot.lane.b32.xlu0 %v1220, 8
      %v1512 = vpop.permute.xlu0 %1511
      %1513 = vrot.lane.b32.xlu0 %v1230, 8
      %v1514 = vpop.permute.xlu0 %1513
      %1515 = vrot.lane.b32.xlu0 %v1244, 8
      %v1516 = vpop.permute.xlu0 %1515
      %1517 = vrot.lane.b32.xlu0 %v1254, 8
      %v1518 = vpop.permute.xlu0 %1517
      %1519 = vrot.lane.b32.xlu0 %v1268, 8
      %v1520 = vpop.permute.xlu0 %1519
      %1521 = vrot.lane.b32.xlu0 %v1278, 8
      %v1522 = vpop.permute.xlu0 %1521
      %1523 = vrot.lane.b32.xlu0 %v1292, 8
      %v1524 = vpop.permute.xlu0 %1523
      %1525 = vrot.lane.b32.xlu0 %v1302, 8
      %v1526 = vpop.permute.xlu0 %1525
      %1527 = vrot.lane.b32.xlu0 %v1316, 8
      %v1528 = vpop.permute.xlu0 %1527
      %1529 = vrot.lane.b32.xlu0 %v1326, 8
      %v1530 = vpop.permute.xlu0 %1529
      %1531 = vrot.lane.b32.xlu0 %v1340, 8
      %v1532 = vpop.permute.xlu0 %1531
      %1533 = vrot.lane.b32.xlu0 %v1350, 8
      %v1534 = vpop.permute.xlu0 %1533
      %1535 = vrot.lane.b32.xlu0 %v1364, 8
      %v1536 = vpop.permute.xlu0 %1535
      %1537 = vrot.lane.b32.xlu0 %v1374, 8
      %v1538 = vpop.permute.xlu0 %1537
      %1539 = vrot.lane.b32.xlu0 %v1388, 8
      %v1540 = vpop.permute.xlu0 %1539
      %1541 = vrot.lane.b32.xlu0 %v1398, 8
      %v1542 = vpop.permute.xlu0 %1541
      %1543 = vrot.lane.b32.xlu0 %v1412, 8
      %v1544 = vpop.permute.xlu0 %1543
      %1545 = vrot.lane.b32.xlu0 %v1422, 8
      %v1546 = vpop.permute.xlu0 %1545
      %1547 = vrot.lane.b32.xlu0 %v1436, 8
      %v1548 = vpop.permute.xlu0 %1547
      %1549 = vrot.lane.b32.xlu0 %v1446, 8
      %v1550 = vpop.permute.xlu0 %1549
      %1551 = vrot.lane.b32.xlu0 %v1460, 8
      %v1552 = vpop.permute.xlu0 %1551
      %1553 = vrot.lane.b32.xlu0 %v1470, 8
      %v1554 = vpop.permute.xlu0 %1553
      %1555 = vrot.lane.b32.xlu0 %v1484, 8
      %v1556 = vpop.permute.xlu0 %1555
      %1557 = vrot.lane.b32.xlu0 %v1494, 8
      %v1558 = vpop.permute.xlu0 %1557
      %vm1591 = vcmask 126016
      %1592 = vst.msk [vmem:[#allocation3] sm:$0xf] %vm1591, %v1496
      %1593 = vst.msk [vmem:[#allocation3 + $0x4] sm:$0xf] %vm1591, %v1498
      %1594 = vst.msk [vmem:[#allocation3 + $0x8] sm:$0xf] %vm1591, %v1500
      %1595 = vst.msk [vmem:[#allocation3 + $0xc] sm:$0xf] %vm1591, %v1502
      %1596 = vst.msk [vmem:[#allocation3 + $0x10] sm:$0xf] %vm1591, %v1504
      %1597 = vst.msk [vmem:[#allocation3 + $0x14] sm:$0xf] %vm1591, %v1506
      %1598 = vst.msk [vmem:[#allocation3 + $0x18] sm:$0xf] %vm1591, %v1508
      %1599 = vst.msk [vmem:[#allocation3 + $0x1c] sm:$0xf] %vm1591, %v1510
      %1600 = vst.msk [vmem:[#allocation3 + $0x20] sm:$0xf] %vm1591, %v1512
      %1601 = vst.msk [vmem:[#allocation3 + $0x24] sm:$0xf] %vm1591, %v1514
      %1602 = vst.msk [vmem:[#allocation3 + $0x28] sm:$0xf] %vm1591, %v1516
      %1603 = vst.msk [vmem:[#allocation3 + $0x2c] sm:$0xf] %vm1591, %v1518
      %1604 = vst.msk [vmem:[#allocation3 + $0x30] sm:$0xf] %vm1591, %v1520
      %1605 = vst.msk [vmem:[#allocation3 + $0x34] sm:$0xf] %vm1591, %v1522
      %1606 = vst.msk [vmem:[#allocation3 + $0x38] sm:$0xf] %vm1591, %v1524
      %1607 = vst.msk [vmem:[#allocation3 + $0x3c] sm:$0xf] %vm1591, %v1526
      %1608 = vst.msk [vmem:[#allocation3 + $0x40] sm:$0xf] %vm1591, %v1528
      %1609 = vst.msk [vmem:[#allocation3 + $0x44] sm:$0xf] %vm1591, %v1530
      %1610 = vst.msk [vmem:[#allocation3 + $0x48] sm:$0xf] %vm1591, %v1532
      %1611 = vst.msk [vmem:[#allocation3 + $0x4c] sm:$0xf] %vm1591, %v1534
      %1612 = vst.msk [vmem:[#allocation3 + $0x50] sm:$0xf] %vm1591, %v1536
      %1613 = vst.msk [vmem:[#allocation3 + $0x54] sm:$0xf] %vm1591, %v1538
      %1614 = vst.msk [vmem:[#allocation3 + $0x58] sm:$0xf] %vm1591, %v1540
      %1615 = vst.msk [vmem:[#allocation3 + $0x5c] sm:$0xf] %vm1591, %v1542
      %1616 = vst.msk [vmem:[#allocation3 + $0x60] sm:$0xf] %vm1591, %v1544
      %1617 = vst.msk [vmem:[#allocation3 + $0x64] sm:$0xf] %vm1591, %v1546
      %1618 = vst.msk [vmem:[#allocation3 + $0x68] sm:$0xf] %vm1591, %v1548
      %1619 = vst.msk [vmem:[#allocation3 + $0x6c] sm:$0xf] %vm1591, %v1550
      %1620 = vst.msk [vmem:[#allocation3 + $0x70] sm:$0xf] %vm1591, %v1552
      %1621 = vst.msk [vmem:[#allocation3 + $0x74] sm:$0xf] %vm1591, %v1554
      %1622 = vst.msk [vmem:[#allocation3 + $0x78] sm:$0xf] %vm1591, %v1556
      %1623 = vst.msk [vmem:[#allocation3 + $0x7c] sm:$0xf] %vm1591, %v1558
      %v1624 = vld [vmem:[#allocation2] sm:$0xe]
      %v1625 = vld [vmem:[#allocation2 + $0x4] sm:$0xf]
      %v1626 = vld [vmem:[#allocation2 + $0x8] sm:$0x1]
      %v1627 = vld [vmem:[#allocation2 + $0xc] sm:$0xe]
      %v1628 = vld [vmem:[#allocation2 + $0x10] sm:$0xf]
      %v1629 = vld [vmem:[#allocation2 + $0x14] sm:$0x1]
      %v1630 = vld [vmem:[#allocation2 + $0x18] sm:$0xe]
      %v1631 = vld [vmem:[#allocation2 + $0x1c] sm:$0xf]
      %v1632 = vld [vmem:[#allocation2 + $0x20] sm:$0x1]
      %v1633 = vld [vmem:[#allocation2 + $0x24] sm:$0xe]
      %v1634 = vld [vmem:[#allocation2 + $0x28] sm:$0xf]
      %v1635 = vld [vmem:[#allocation2 + $0x2c] sm:$0x1]
      %v1636 = vld [vmem:[#allocation2 + $0x30] sm:$0xe]
      %v1637 = vld [vmem:[#allocation2 + $0x34] sm:$0xf]
      %v1638 = vld [vmem:[#allocation2 + $0x38] sm:$0x1]
      %v1639 = vld [vmem:[#allocation2 + $0x3c] sm:$0xe]
      %v1640 = vld [vmem:[#allocation2 + $0x40] sm:$0xf]
      %v1641 = vld [vmem:[#allocation2 + $0x44] sm:$0x1]
      %v1642 = vld [vmem:[#allocation2 + $0x48] sm:$0xe]
      %v1643 = vld [vmem:[#allocation2 + $0x4c] sm:$0xf]
      %v1644 = vld [vmem:[#allocation2 + $0x50] sm:$0x1]
      %v1645 = vld [vmem:[#allocation2 + $0x54] sm:$0xe]
      %v1646 = vld [vmem:[#allocation2 + $0x58] sm:$0xf]
      %v1647 = vld [vmem:[#allocation2 + $0x5c] sm:$0x1]
      %v1648 = vld [vmem:[#allocation2 + $0x60] sm:$0xe]
      %v1649 = vld [vmem:[#allocation2 + $0x64] sm:$0xf]
      %v1650 = vld [vmem:[#allocation2 + $0x68] sm:$0x1]
      %v1651 = vld [vmem:[#allocation2 + $0x6c] sm:$0xe]
      %v1652 = vld [vmem:[#allocation2 + $0x70] sm:$0xf]
      %v1653 = vld [vmem:[#allocation2 + $0x74] sm:$0x1]
      %v1654 = vld [vmem:[#allocation2 + $0x78] sm:$0xe]
      %v1655 = vld [vmem:[#allocation2 + $0x7c] sm:$0xf]
      %v1656 = vld [vmem:[#allocation2 + $0x80] sm:$0x1]
      %v1657 = vld [vmem:[#allocation2 + $0x84] sm:$0xe]
      %v1658 = vld [vmem:[#allocation2 + $0x88] sm:$0xf]
      %v1659 = vld [vmem:[#allocation2 + $0x8c] sm:$0x1]
      %v1660 = vld [vmem:[#allocation2 + $0x90] sm:$0xe]
      %v1661 = vld [vmem:[#allocation2 + $0x94] sm:$0xf]
      %v1662 = vld [vmem:[#allocation2 + $0x98] sm:$0x1]
      %v1663 = vld [vmem:[#allocation2 + $0x9c] sm:$0xe]
      %v1664 = vld [vmem:[#allocation2 + $0xa0] sm:$0xf]
      %v1665 = vld [vmem:[#allocation2 + $0xa4] sm:$0x1]
      %v1666 = vld [vmem:[#allocation2 + $0xa8] sm:$0xe]
      %v1667 = vld [vmem:[#allocation2 + $0xac] sm:$0xf]
      %v1668 = vld [vmem:[#allocation2 + $0xb0] sm:$0x1]
      %v1669 = vld [vmem:[#allocation2 + $0xb4] sm:$0xe]
      %v1670 = vld [vmem:[#allocation2 + $0xb8] sm:$0xf]
      %v1671 = vld [vmem:[#allocation2 + $0xbc] sm:$0x1]
      %vm1720 = vcmask 1042432
      %vm1721 = vcmask 1046532
      %vm1722 = vmor %vm1720, %vm1721
      %v1723 = vrot.slane %v1624, 5
      %v1724 = vrot.slane %v1723, 4
      %v1725 = vrot.slane %v1625, 5
      %v1726 = vsel %vm1722, %v1724, %v1725
      %v1727 = vrot.slane %v1725, 4
      %v1728 = vrot.slane %v1626, 5
      %v1729 = vsel %vm1722, %v1727, %v1728
      %v1730 = vrot.slane %v1627, 5
      %v1731 = vrot.slane %v1730, 4
      %v1732 = vrot.slane %v1628, 5
      %v1733 = vsel %vm1722, %v1731, %v1732
      %v1734 = vrot.slane %v1732, 4
      %v1735 = vrot.slane %v1629, 5
      %v1736 = vsel %vm1722, %v1734, %v1735
      %v1737 = vrot.slane %v1630, 5
      %v1738 = vrot.slane %v1737, 4
      %v1739 = vrot.slane %v1631, 5
      %v1740 = vsel %vm1722, %v1738, %v1739
      %v1741 = vrot.slane %v1739, 4
      %v1742 = vrot.slane %v1632, 5
      %v1743 = vsel %vm1722, %v1741, %v1742
      %v1744 = vrot.slane %v1633, 5
      %v1745 = vrot.slane %v1744, 4
      %v1746 = vrot.slane %v1634, 5
      %v1747 = vsel %vm1722, %v1745, %v1746
      %v1748 = vrot.slane %v1746, 4
      %v1749 = vrot.slane %v1635, 5
      %v1750 = vsel %vm1722, %v1748, %v1749
      %v1751 = vrot.slane %v1636, 5
      %v1752 = vrot.slane %v1751, 4
      %v1753 = vrot.slane %v1637, 5
      %v1754 = vsel %vm1722, %v1752, %v1753
      %v1755 = vrot.slane %v1753, 4
      %v1756 = vrot.slane %v1638, 5
      %v1757 = vsel %vm1722, %v1755, %v1756
      %v1758 = vrot.slane %v1639, 5
      %v1759 = vrot.slane %v1758, 4
      %v1760 = vrot.slane %v1640, 5
      %v1761 = vsel %vm1722, %v1759, %v1760
      %v1762 = vrot.slane %v1760, 4
      %v1763 = vrot.slane %v1641, 5
      %v1764 = vsel %vm1722, %v1762, %v1763
      %v1765 = vrot.slane %v1642, 5
      %v1766 = vrot.slane %v1765, 4
      %v1767 = vrot.slane %v1643, 5
      %v1768 = vsel %vm1722, %v1766, %v1767
      %v1769 = vrot.slane %v1767, 4
      %v1770 = vrot.slane %v1644, 5
      %v1771 = vsel %vm1722, %v1769, %v1770
      %v1772 = vrot.slane %v1645, 5
      %v1773 = vrot.slane %v1772, 4
      %v1774 = vrot.slane %v1646, 5
      %v1775 = vsel %vm1722, %v1773, %v1774
      %v1776 = vrot.slane %v1774, 4
      %v1777 = vrot.slane %v1647, 5
      %v1778 = vsel %vm1722, %v1776, %v1777
      %v1779 = vrot.slane %v1648, 5
      %v1780 = vrot.slane %v1779, 4
      %v1781 = vrot.slane %v1649, 5
      %v1782 = vsel %vm1722, %v1780, %v1781
      %v1783 = vrot.slane %v1781, 4
      %v1784 = vrot.slane %v1650, 5
      %v1785 = vsel %vm1722, %v1783, %v1784
      %v1786 = vrot.slane %v1651, 5
      %v1787 = vrot.slane %v1786, 4
      %v1788 = vrot.slane %v1652, 5
      %v1789 = vsel %vm1722, %v1787, %v1788
      %v1790 = vrot.slane %v1788, 4
      %v1791 = vrot.slane %v1653, 5
      %v1792 = vsel %vm1722, %v1790, %v1791
      %v1793 = vrot.slane %v1654, 5
      %v1794 = vrot.slane %v1793, 4
      %v1795 = vrot.slane %v1655, 5
      %v1796 = vsel %vm1722, %v1794, %v1795
      %v1797 = vrot.slane %v1795, 4
      %v1798 = vrot.slane %v1656, 5
      %v1799 = vsel %vm1722, %v1797, %v1798
      %v1800 = vrot.slane %v1657, 5
      %v1801 = vrot.slane %v1800, 4
      %v1802 = vrot.slane %v1658, 5
      %v1803 = vsel %vm1722, %v1801, %v1802
      %v1804 = vrot.slane %v1802, 4
      %v1805 = vrot.slane %v1659, 5
      %v1806 = vsel %vm1722, %v1804, %v1805
      %v1807 = vrot.slane %v1660, 5
      %v1808 = vrot.slane %v1807, 4
      %v1809 = vrot.slane %v1661, 5
      %v1810 = vsel %vm1722, %v1808, %v1809
      %v1811 = vrot.slane %v1809, 4
      %v1812 = vrot.slane %v1662, 5
      %v1813 = vsel %vm1722, %v1811, %v1812
      %v1814 = vrot.slane %v1663, 5
      %v1815 = vrot.slane %v1814, 4
      %v1816 = vrot.slane %v1664, 5
      %v1817 = vsel %vm1722, %v1815, %v1816
      %v1818 = vrot.slane %v1816, 4
      %v1819 = vrot.slane %v1665, 5
      %v1820 = vsel %vm1722, %v1818, %v1819
      %v1821 = vrot.slane %v1666, 5
      %v1822 = vrot.slane %v1821, 4
      %v1823 = vrot.slane %v1667, 5
      %v1824 = vsel %vm1722, %v1822, %v1823
      %v1825 = vrot.slane %v1823, 4
      %v1826 = vrot.slane %v1668, 5
      %v1827 = vsel %vm1722, %v1825, %v1826
      %v1828 = vrot.slane %v1669, 5
      %v1829 = vrot.slane %v1828, 4
      %v1830 = vrot.slane %v1670, 5
      %v1831 = vsel %vm1722, %v1829, %v1830
      %v1832 = vrot.slane %v1830, 4
      %v1833 = vrot.slane %v1671, 5
      %v1834 = vsel %vm1722, %v1832, %v1833
      %1835 = vrot.lane.b32.xlu0 %v1726, 16
      %v1836 = vpop.permute.xlu0 %1835
      %1837 = vrot.lane.b32.xlu0 %v1729, 16
      %v1838 = vpop.permute.xlu0 %1837
      %1839 = vrot.lane.b32.xlu0 %v1733, 16
      %v1840 = vpop.permute.xlu0 %1839
      %1841 = vrot.lane.b32.xlu0 %v1736, 16
      %v1842 = vpop.permute.xlu0 %1841
      %1843 = vrot.lane.b32.xlu0 %v1740, 16
      %v1844 = vpop.permute.xlu0 %1843
      %1845 = vrot.lane.b32.xlu0 %v1743, 16
      %v1846 = vpop.permute.xlu0 %1845
      %1847 = vrot.lane.b32.xlu0 %v1747, 16
      %v1848 = vpop.permute.xlu0 %1847
      %1849 = vrot.lane.b32.xlu0 %v1750, 16
      %v1850 = vpop.permute.xlu0 %1849
      %1851 = vrot.lane.b32.xlu0 %v1754, 16
      %v1852 = vpop.permute.xlu0 %1851
      %1853 = vrot.lane.b32.xlu0 %v1757, 16
      %v1854 = vpop.permute.xlu0 %1853
      %1855 = vrot.lane.b32.xlu0 %v1761, 16
      %v1856 = vpop.permute.xlu0 %1855
      %1857 = vrot.lane.b32.xlu0 %v1764, 16
      %v1858 = vpop.permute.xlu0 %1857
      %1859 = vrot.lane.b32.xlu0 %v1768, 16
      %v1860 = vpop.permute.xlu0 %1859
      %1861 = vrot.lane.b32.xlu0 %v1771, 16
      %v1862 = vpop.permute.xlu0 %1861
      %1863 = vrot.lane.b32.xlu0 %v1775, 16
      %v1864 = vpop.permute.xlu0 %1863
      %1865 = vrot.lane.b32.xlu0 %v1778, 16
      %v1866 = vpop.permute.xlu0 %1865
      %1867 = vrot.lane.b32.xlu0 %v1782, 16
      %v1868 = vpop.permute.xlu0 %1867
      %1869 = vrot.lane.b32.xlu0 %v1785, 16
      %v1870 = vpop.permute.xlu0 %1869
      %1871 = vrot.lane.b32.xlu0 %v1789, 16
      %v1872 = vpop.permute.xlu0 %1871
      %1873 = vrot.lane.b32.xlu0 %v1792, 16
      %v1874 = vpop.permute.xlu0 %1873
      %1875 = vrot.lane.b32.xlu0 %v1796, 16
      %v1876 = vpop.permute.xlu0 %1875
      %1877 = vrot.lane.b32.xlu0 %v1799, 16
      %v1878 = vpop.permute.xlu0 %1877
      %1879 = vrot.lane.b32.xlu0 %v1803, 16
      %v1880 = vpop.permute.xlu0 %1879
      %1881 = vrot.lane.b32.xlu0 %v1806, 16
      %v1882 = vpop.permute.xlu0 %1881
      %1883 = vrot.lane.b32.xlu0 %v1810, 16
      %v1884 = vpop.permute.xlu0 %1883
      %1885 = vrot.lane.b32.xlu0 %v1813, 16
      %v1886 = vpop.permute.xlu0 %1885
      %1887 = vrot.lane.b32.xlu0 %v1817, 16
      %v1888 = vpop.permute.xlu0 %1887
      %1889 = vrot.lane.b32.xlu0 %v1820, 16
      %v1890 = vpop.permute.xlu0 %1889
      %1891 = vrot.lane.b32.xlu0 %v1824, 16
      %v1892 = vpop.permute.xlu0 %1891
      %1893 = vrot.lane.b32.xlu0 %v1827, 16
      %v1894 = vpop.permute.xlu0 %1893
      %1895 = vrot.lane.b32.xlu0 %v1831, 16
      %v1896 = vpop.permute.xlu0 %1895
      %1897 = vrot.lane.b32.xlu0 %v1834, 16
      %v1898 = vpop.permute.xlu0 %1897
      %vm1931 = vcmask 191616
      %1932 = vst.msk [vmem:[#allocation3] sm:$0xf] %vm1931, %v1836
      %1933 = vst.msk [vmem:[#allocation3 + $0x4] sm:$0xf] %vm1931, %v1838
      %1934 = vst.msk [vmem:[#allocation3 + $0x8] sm:$0xf] %vm1931, %v1840
      %1935 = vst.msk [vmem:[#allocation3 + $0xc] sm:$0xf] %vm1931, %v1842
      %1936 = vst.msk [vmem:[#allocation3 + $0x10] sm:$0xf] %vm1931, %v1844
      %1937 = vst.msk [vmem:[#allocation3 + $0x14] sm:$0xf] %vm1931, %v1846
      %1938 = vst.msk [vmem:[#allocation3 + $0x18] sm:$0xf] %vm1931, %v1848
      %1939 = vst.msk [vmem:[#allocation3 + $0x1c] sm:$0xf] %vm1931, %v1850
      %1940 = vst.msk [vmem:[#allocation3 + $0x20] sm:$0xf] %vm1931, %v1852
      %1941 = vst.msk [vmem:[#allocation3 + $0x24] sm:$0xf] %vm1931, %v1854
      %1942 = vst.msk [vmem:[#allocation3 + $0x28] sm:$0xf] %vm1931, %v1856
      %1943 = vst.msk [vmem:[#allocation3 + $0x2c] sm:$0xf] %vm1931, %v1858
      %1944 = vst.msk [vmem:[#allocation3 + $0x30] sm:$0xf] %vm1931, %v1860
      %1945 = vst.msk [vmem:[#allocation3 + $0x34] sm:$0xf] %vm1931, %v1862
      %1946 = vst.msk [vmem:[#allocation3 + $0x38] sm:$0xf] %vm1931, %v1864
      %1947 = vst.msk [vmem:[#allocation3 + $0x3c] sm:$0xf] %vm1931, %v1866
      %1948 = vst.msk [vmem:[#allocation3 + $0x40] sm:$0xf] %vm1931, %v1868
      %1949 = vst.msk [vmem:[#allocation3 + $0x44] sm:$0xf] %vm1931, %v1870
      %1950 = vst.msk [vmem:[#allocation3 + $0x48] sm:$0xf] %vm1931, %v1872
      %1951 = vst.msk [vmem:[#allocation3 + $0x4c] sm:$0xf] %vm1931, %v1874
      %1952 = vst.msk [vmem:[#allocation3 + $0x50] sm:$0xf] %vm1931, %v1876
      %1953 = vst.msk [vmem:[#allocation3 + $0x54] sm:$0xf] %vm1931, %v1878
      %1954 = vst.msk [vmem:[#allocation3 + $0x58] sm:$0xf] %vm1931, %v1880
      %1955 = vst.msk [vmem:[#allocation3 + $0x5c] sm:$0xf] %vm1931, %v1882
      %1956 = vst.msk [vmem:[#allocation3 + $0x60] sm:$0xf] %vm1931, %v1884
      %1957 = vst.msk [vmem:[#allocation3 + $0x64] sm:$0xf] %vm1931, %v1886
      %1958 = vst.msk [vmem:[#allocation3 + $0x68] sm:$0xf] %vm1931, %v1888
      %1959 = vst.msk [vmem:[#allocation3 + $0x6c] sm:$0xf] %vm1931, %v1890
      %1960 = vst.msk [vmem:[#allocation3 + $0x70] sm:$0xf] %vm1931, %v1892
      %1961 = vst.msk [vmem:[#allocation3 + $0x74] sm:$0xf] %vm1931, %v1894
      %1962 = vst.msk [vmem:[#allocation3 + $0x78] sm:$0xf] %vm1931, %v1896
      %1963 = vst.msk [vmem:[#allocation3 + $0x7c] sm:$0xf] %vm1931, %v1898
      %v1964 = vld [vmem:[%s327] sm:$0xf]
      %v1965 = vld [vmem:[%s327 + $0x4] sm:$0xf]
      %v1966 = vld [vmem:[%s327 + $0xc] sm:$0xf]
      %v1967 = vld [vmem:[%s327 + $0x10] sm:$0xf]
      %v1968 = vld [vmem:[%s327 + $0x18] sm:$0xf]
      %v1969 = vld [vmem:[%s327 + $0x1c] sm:$0xf]
      %v1970 = vld [vmem:[%s327 + $0x24] sm:$0xf]
      %v1971 = vld [vmem:[%s327 + $0x28] sm:$0xf]
      %v1972 = vld [vmem:[%s327 + $0x30] sm:$0xf]
      %v1973 = vld [vmem:[%s327 + $0x34] sm:$0xf]
      %v1974 = vld [vmem:[%s327 + $0x3c] sm:$0xf]
      %v1975 = vld [vmem:[%s327 + $0x40] sm:$0xf]
      %v1976 = vld [vmem:[%s327 + $0x48] sm:$0xf]
      %v1977 = vld [vmem:[%s327 + $0x4c] sm:$0xf]
      %v1978 = vld [vmem:[%s327 + $0x54] sm:$0xf]
      %v1979 = vld [vmem:[%s327 + $0x58] sm:$0xf]
      %v1980 = vld [vmem:[%s327 + $0x60] sm:$0xf]
      %v1981 = vld [vmem:[%s327 + $0x64] sm:$0xf]
      %v1982 = vld [vmem:[%s327 + $0x6c] sm:$0xf]
      %v1983 = vld [vmem:[%s327 + $0x70] sm:$0xf]
      %v1984 = vld [vmem:[%s327 + $0x78] sm:$0xf]
      %v1985 = vld [vmem:[%s327 + $0x7c] sm:$0xf]
      %v1986 = vld [vmem:[%s327 + $0x84] sm:$0xf]
      %v1987 = vld [vmem:[%s327 + $0x88] sm:$0xf]
      %v1988 = vld [vmem:[%s327 + $0x90] sm:$0xf]
      %v1989 = vld [vmem:[%s327 + $0x94] sm:$0xf]
      %v1990 = vld [vmem:[%s327 + $0x9c] sm:$0xf]
      %v1991 = vld [vmem:[%s327 + $0xa0] sm:$0xf]
      %v1992 = vld [vmem:[%s327 + $0xa8] sm:$0xf]
      %v1993 = vld [vmem:[%s327 + $0xac] sm:$0xf]
      %v1994 = vld [vmem:[%s327 + $0xb4] sm:$0xf]
      %v1995 = vld [vmem:[%s327 + $0xb8] sm:$0xf]
      %2028 = vrot.lane.b32.xlu0 %v1964, 24
      %v2029 = vpop.permute.xlu0 %2028
      %2030 = vrot.lane.b32.xlu0 %v1965, 24
      %v2031 = vpop.permute.xlu0 %2030
      %2032 = vrot.lane.b32.xlu0 %v1966, 24
      %v2033 = vpop.permute.xlu0 %2032
      %2034 = vrot.lane.b32.xlu0 %v1967, 24
      %v2035 = vpop.permute.xlu0 %2034
      %2036 = vrot.lane.b32.xlu0 %v1968, 24
      %v2037 = vpop.permute.xlu0 %2036
      %2038 = vrot.lane.b32.xlu0 %v1969, 24
      %v2039 = vpop.permute.xlu0 %2038
      %2040 = vrot.lane.b32.xlu0 %v1970, 24
      %v2041 = vpop.permute.xlu0 %2040
      %2042 = vrot.lane.b32.xlu0 %v1971, 24
      %v2043 = vpop.permute.xlu0 %2042
      %2044 = vrot.lane.b32.xlu0 %v1972, 24
      %v2045 = vpop.permute.xlu0 %2044
      %2046 = vrot.lane.b32.xlu0 %v1973, 24
      %v2047 = vpop.permute.xlu0 %2046
      %2048 = vrot.lane.b32.xlu0 %v1974, 24
      %v2049 = vpop.permute.xlu0 %2048
      %2050 = vrot.lane.b32.xlu0 %v1975, 24
      %v2051 = vpop.permute.xlu0 %2050
      %2052 = vrot.lane.b32.xlu0 %v1976, 24
      %v2053 = vpop.permute.xlu0 %2052
      %2054 = vrot.lane.b32.xlu0 %v1977, 24
      %v2055 = vpop.permute.xlu0 %2054
      %2056 = vrot.lane.b32.xlu0 %v1978, 24
      %v2057 = vpop.permute.xlu0 %2056
      %2058 = vrot.lane.b32.xlu0 %v1979, 24
      %v2059 = vpop.permute.xlu0 %2058
      %2060 = vrot.lane.b32.xlu0 %v1980, 24
      %v2061 = vpop.permute.xlu0 %2060
      %2062 = vrot.lane.b32.xlu0 %v1981, 24
      %v2063 = vpop.permute.xlu0 %2062
      %2064 = vrot.lane.b32.xlu0 %v1982, 24
      %v2065 = vpop.permute.xlu0 %2064
      %2066 = vrot.lane.b32.xlu0 %v1983, 24
      %v2067 = vpop.permute.xlu0 %2066
      %2068 = vrot.lane.b32.xlu0 %v1984, 24
      %v2069 = vpop.permute.xlu0 %2068
      %2070 = vrot.lane.b32.xlu0 %v1985, 24
      %v2071 = vpop.permute.xlu0 %2070
      %2072 = vrot.lane.b32.xlu0 %v1986, 24
      %v2073 = vpop.permute.xlu0 %2072
      %2074 = vrot.lane.b32.xlu0 %v1987, 24
      %v2075 = vpop.permute.xlu0 %2074
      %2076 = vrot.lane.b32.xlu0 %v1988, 24
      %v2077 = vpop.permute.xlu0 %2076
      %2078 = vrot.lane.b32.xlu0 %v1989, 24
      %v2079 = vpop.permute.xlu0 %2078
      %2080 = vrot.lane.b32.xlu0 %v1990, 24
      %v2081 = vpop.permute.xlu0 %2080
      %2082 = vrot.lane.b32.xlu0 %v1991, 24
      %v2083 = vpop.permute.xlu0 %2082
      %2084 = vrot.lane.b32.xlu0 %v1992, 24
      %v2085 = vpop.permute.xlu0 %2084
      %2086 = vrot.lane.b32.xlu0 %v1993, 24
      %v2087 = vpop.permute.xlu0 %2086
      %2088 = vrot.lane.b32.xlu0 %v1994, 24
      %v2089 = vpop.permute.xlu0 %2088
      %2090 = vrot.lane.b32.xlu0 %v1995, 24
      %v2091 = vpop.permute.xlu0 %2090
      %vm2124 = vcmask 257216
      %2125 = vst.msk [vmem:[#allocation3] sm:$0xf] %vm2124, %v2029
      %2126 = vst.msk [vmem:[#allocation3 + $0x4] sm:$0xf] %vm2124, %v2031
      %2127 = vst.msk [vmem:[#allocation3 + $0x8] sm:$0xf] %vm2124, %v2033
      %2128 = vst.msk [vmem:[#allocation3 + $0xc] sm:$0xf] %vm2124, %v2035
      %2129 = vst.msk [vmem:[#allocation3 + $0x10] sm:$0xf] %vm2124, %v2037
      %2130 = vst.msk [vmem:[#allocation3 + $0x14] sm:$0xf] %vm2124, %v2039
      %2131 = vst.msk [vmem:[#allocation3 + $0x18] sm:$0xf] %vm2124, %v2041
      %2132 = vst.msk [vmem:[#allocation3 + $0x1c] sm:$0xf] %vm2124, %v2043
      %2133 = vst.msk [vmem:[#allocation3 + $0x20] sm:$0xf] %vm2124, %v2045
      %2134 = vst.msk [vmem:[#allocation3 + $0x24] sm:$0xf] %vm2124, %v2047
      %2135 = vst.msk [vmem:[#allocation3 + $0x28] sm:$0xf] %vm2124, %v2049
      %2136 = vst.msk [vmem:[#allocation3 + $0x2c] sm:$0xf] %vm2124, %v2051
      %2137 = vst.msk [vmem:[#allocation3 + $0x30] sm:$0xf] %vm2124, %v2053
      %2138 = vst.msk [vmem:[#allocation3 + $0x34] sm:$0xf] %vm2124, %v2055
      %2139 = vst.msk [vmem:[#allocation3 + $0x38] sm:$0xf] %vm2124, %v2057
      %2140 = vst.msk [vmem:[#allocation3 + $0x3c] sm:$0xf] %vm2124, %v2059
      %2141 = vst.msk [vmem:[#allocation3 + $0x40] sm:$0xf] %vm2124, %v2061
      %2142 = vst.msk [vmem:[#allocation3 + $0x44] sm:$0xf] %vm2124, %v2063
      %2143 = vst.msk [vmem:[#allocation3 + $0x48] sm:$0xf] %vm2124, %v2065
      %2144 = vst.msk [vmem:[#allocation3 + $0x4c] sm:$0xf] %vm2124, %v2067
      %2145 = vst.msk [vmem:[#allocation3 + $0x50] sm:$0xf] %vm2124, %v2069
      %2146 = vst.msk [vmem:[#allocation3 + $0x54] sm:$0xf] %vm2124, %v2071
      %2147 = vst.msk [vmem:[#allocation3 + $0x58] sm:$0xf] %vm2124, %v2073
      %2148 = vst.msk [vmem:[#allocation3 + $0x5c] sm:$0xf] %vm2124, %v2075
      %2149 = vst.msk [vmem:[#allocation3 + $0x60] sm:$0xf] %vm2124, %v2077
      %2150 = vst.msk [vmem:[#allocation3 + $0x64] sm:$0xf] %vm2124, %v2079
      %2151 = vst.msk [vmem:[#allocation3 + $0x68] sm:$0xf] %vm2124, %v2081
      %2152 = vst.msk [vmem:[#allocation3 + $0x6c] sm:$0xf] %vm2124, %v2083
      %2153 = vst.msk [vmem:[#allocation3 + $0x70] sm:$0xf] %vm2124, %v2085
      %2154 = vst.msk [vmem:[#allocation3 + $0x74] sm:$0xf] %vm2124, %v2087
      %2155 = vst.msk [vmem:[#allocation3 + $0x78] sm:$0xf] %vm2124, %v2089
      %2156 = vst.msk [vmem:[#allocation3 + $0x7c] sm:$0xf] %vm2124, %v2091
      %v2157 = vld [vmem:[%s327] sm:$0xf]
      %v2158 = vld [vmem:[%s327 + $0x4] sm:$0xf]
      %v2159 = vld [vmem:[%s327 + $0x8] sm:$0x1]
      %v2160 = vld [vmem:[%s327 + $0xc] sm:$0xf]
      %v2161 = vld [vmem:[%s327 + $0x10] sm:$0xf]
      %v2162 = vld [vmem:[%s327 + $0x14] sm:$0x1]
      %v2163 = vld [vmem:[%s327 + $0x18] sm:$0xf]
      %v2164 = vld [vmem:[%s327 + $0x1c] sm:$0xf]
      %v2165 = vld [vmem:[%s327 + $0x20] sm:$0x1]
      %v2166 = vld [vmem:[%s327 + $0x24] sm:$0xf]
      %v2167 = vld [vmem:[%s327 + $0x28] sm:$0xf]
      %v2168 = vld [vmem:[%s327 + $0x2c] sm:$0x1]
      %v2169 = vld [vmem:[%s327 + $0x30] sm:$0xf]
      %v2170 = vld [vmem:[%s327 + $0x34] sm:$0xf]
      %v2171 = vld [vmem:[%s327 + $0x38] sm:$0x1]
      %v2172 = vld [vmem:[%s327 + $0x3c] sm:$0xf]
      %v2173 = vld [vmem:[%s327 + $0x40] sm:$0xf]
      %v2174 = vld [vmem:[%s327 + $0x44] sm:$0x1]
      %v2175 = vld [vmem:[%s327 + $0x48] sm:$0xf]
      %v2176 = vld [vmem:[%s327 + $0x4c] sm:$0xf]
      %v2177 = vld [vmem:[%s327 + $0x50] sm:$0x1]
      %v2178 = vld [vmem:[%s327 + $0x54] sm:$0xf]
      %v2179 = vld [vmem:[%s327 + $0x58] sm:$0xf]
      %v2180 = vld [vmem:[%s327 + $0x5c] sm:$0x1]
      %v2181 = vld [vmem:[%s327 + $0x60] sm:$0xf]
      %v2182 = vld [vmem:[%s327 + $0x64] sm:$0xf]
      %v2183 = vld [vmem:[%s327 + $0x68] sm:$0x1]
      %v2184 = vld [vmem:[%s327 + $0x6c] sm:$0xf]
      %v2185 = vld [vmem:[%s327 + $0x70] sm:$0xf]
      %v2186 = vld [vmem:[%s327 + $0x74] sm:$0x1]
      %v2187 = vld [vmem:[%s327 + $0x78] sm:$0xf]
      %v2188 = vld [vmem:[%s327 + $0x7c] sm:$0xf]
      %v2189 = vld [vmem:[%s327 + $0x80] sm:$0x1]
      %v2190 = vld [vmem:[%s327 + $0x84] sm:$0xf]
      %v2191 = vld [vmem:[%s327 + $0x88] sm:$0xf]
      %v2192 = vld [vmem:[%s327 + $0x8c] sm:$0x1]
      %v2193 = vld [vmem:[%s327 + $0x90] sm:$0xf]
      %v2194 = vld [vmem:[%s327 + $0x94] sm:$0xf]
      %v2195 = vld [vmem:[%s327 + $0x98] sm:$0x1]
      %v2196 = vld [vmem:[%s327 + $0x9c] sm:$0xf]
      %v2197 = vld [vmem:[%s327 + $0xa0] sm:$0xf]
      %v2198 = vld [vmem:[%s327 + $0xa4] sm:$0x1]
      %v2199 = vld [vmem:[%s327 + $0xa8] sm:$0xf]
      %v2200 = vld [vmem:[%s327 + $0xac] sm:$0xf]
      %v2201 = vld [vmem:[%s327 + $0xb0] sm:$0x1]
      %v2202 = vld [vmem:[%s327 + $0xb4] sm:$0xf]
      %v2203 = vld [vmem:[%s327 + $0xb8] sm:$0xf]
      %v2204 = vld [vmem:[%s327 + $0xbc] sm:$0x1]
      %v2206 = vshrl.u32 %v2157, 16
      %v2208 = vrot.slane %v2206, 4
      %v2209 = vshll.u32 %v2157, 16
      %v2211 = vrot.slane %v2209, 5
      %v2212 = vor.u32 %v2208, %v2211
      %v2213 = vrot.slane %v2212, 4
      %v2215 = vshll.u32 %v2158, 16
      %v2217 = vrot.slane %v2215, 5
      %v2218 = vsel %vm1110, %v2213, %v2217
      %v2219 = vshrl.u32 %v2158, 16
      %v2221 = vrot.slane %v2219, 4
      %v2222 = vor.u32 %v2221, %v2217
      %v2223 = vrot.slane %v2222, 4
      %v2225 = vshll.u32 %v2159, 16
      %v2227 = vrot.slane %v2225, 5
      %v2228 = vsel %vm1110, %v2223, %v2227
      %v2230 = vshrl.u32 %v2160, 16
      %v2232 = vrot.slane %v2230, 4
      %v2233 = vshll.u32 %v2160, 16
      %v2235 = vrot.slane %v2233, 5
      %v2236 = vor.u32 %v2232, %v2235
      %v2237 = vrot.slane %v2236, 4
      %v2239 = vshll.u32 %v2161, 16
      %v2241 = vrot.slane %v2239, 5
      %v2242 = vsel %vm1110, %v2237, %v2241
      %v2243 = vshrl.u32 %v2161, 16
      %v2245 = vrot.slane %v2243, 4
      %v2246 = vor.u32 %v2245, %v2241
      %v2247 = vrot.slane %v2246, 4
      %v2249 = vshll.u32 %v2162, 16
      %v2251 = vrot.slane %v2249, 5
      %v2252 = vsel %vm1110, %v2247, %v2251
      %v2254 = vshrl.u32 %v2163, 16
      %v2256 = vrot.slane %v2254, 4
      %v2257 = vshll.u32 %v2163, 16
      %v2259 = vrot.slane %v2257, 5
      %v2260 = vor.u32 %v2256, %v2259
      %v2261 = vrot.slane %v2260, 4
      %v2263 = vshll.u32 %v2164, 16
      %v2265 = vrot.slane %v2263, 5
      %v2266 = vsel %vm1110, %v2261, %v2265
      %v2267 = vshrl.u32 %v2164, 16
      %v2269 = vrot.slane %v2267, 4
      %v2270 = vor.u32 %v2269, %v2265
      %v2271 = vrot.slane %v2270, 4
      %v2273 = vshll.u32 %v2165, 16
      %v2275 = vrot.slane %v2273, 5
      %v2276 = vsel %vm1110, %v2271, %v2275
      %v2278 = vshrl.u32 %v2166, 16
      %v2280 = vrot.slane %v2278, 4
      %v2281 = vshll.u32 %v2166, 16
      %v2283 = vrot.slane %v2281, 5
      %v2284 = vor.u32 %v2280, %v2283
      %v2285 = vrot.slane %v2284, 4
      %v2287 = vshll.u32 %v2167, 16
      %v2289 = vrot.slane %v2287, 5
      %v2290 = vsel %vm1110, %v2285, %v2289
      %v2291 = vshrl.u32 %v2167, 16
      %v2293 = vrot.slane %v2291, 4
      %v2294 = vor.u32 %v2293, %v2289
      %v2295 = vrot.slane %v2294, 4
      %v2297 = vshll.u32 %v2168, 16
      %v2299 = vrot.slane %v2297, 5
      %v2300 = vsel %vm1110, %v2295, %v2299
      %v2302 = vshrl.u32 %v2169, 16
      %v2304 = vrot.slane %v2302, 4
      %v2305 = vshll.u32 %v2169, 16
      %v2307 = vrot.slane %v2305, 5
      %v2308 = vor.u32 %v2304, %v2307
      %v2309 = vrot.slane %v2308, 4
      %v2311 = vshll.u32 %v2170, 16
      %v2313 = vrot.slane %v2311, 5
      %v2314 = vsel %vm1110, %v2309, %v2313
      %v2315 = vshrl.u32 %v2170, 16
      %v2317 = vrot.slane %v2315, 4
      %v2318 = vor.u32 %v2317, %v2313
      %v2319 = vrot.slane %v2318, 4
      %v2321 = vshll.u32 %v2171, 16
      %v2323 = vrot.slane %v2321, 5
      %v2324 = vsel %vm1110, %v2319, %v2323
      %v2326 = vshrl.u32 %v2172, 16
      %v2328 = vrot.slane %v2326, 4
      %v2329 = vshll.u32 %v2172, 16
      %v2331 = vrot.slane %v2329, 5
      %v2332 = vor.u32 %v2328, %v2331
      %v2333 = vrot.slane %v2332, 4
      %v2335 = vshll.u32 %v2173, 16
      %v2337 = vrot.slane %v2335, 5
      %v2338 = vsel %vm1110, %v2333, %v2337
      %v2339 = vshrl.u32 %v2173, 16
      %v2341 = vrot.slane %v2339, 4
      %v2342 = vor.u32 %v2341, %v2337
      %v2343 = vrot.slane %v2342, 4
      %v2345 = vshll.u32 %v2174, 16
      %v2347 = vrot.slane %v2345, 5
      %v2348 = vsel %vm1110, %v2343, %v2347
      %v2350 = vshrl.u32 %v2175, 16
      %v2352 = vrot.slane %v2350, 4
      %v2353 = vshll.u32 %v2175, 16
      %v2355 = vrot.slane %v2353, 5
      %v2356 = vor.u32 %v2352, %v2355
      %v2357 = vrot.slane %v2356, 4
      %v2359 = vshll.u32 %v2176, 16
      %v2361 = vrot.slane %v2359, 5
      %v2362 = vsel %vm1110, %v2357, %v2361
      %v2363 = vshrl.u32 %v2176, 16
      %v2365 = vrot.slane %v2363, 4
      %v2366 = vor.u32 %v2365, %v2361
      %v2367 = vrot.slane %v2366, 4
      %v2369 = vshll.u32 %v2177, 16
      %v2371 = vrot.slane %v2369, 5
      %v2372 = vsel %vm1110, %v2367, %v2371
      %v2374 = vshrl.u32 %v2178, 16
      %v2376 = vrot.slane %v2374, 4
      %v2377 = vshll.u32 %v2178, 16
      %v2379 = vrot.slane %v2377, 5
      %v2380 = vor.u32 %v2376, %v2379
      %v2381 = vrot.slane %v2380, 4
      %v2383 = vshll.u32 %v2179, 16
      %v2385 = vrot.slane %v2383, 5
      %v2386 = vsel %vm1110, %v2381, %v2385
      %v2387 = vshrl.u32 %v2179, 16
      %v2389 = vrot.slane %v2387, 4
      %v2390 = vor.u32 %v2389, %v2385
      %v2391 = vrot.slane %v2390, 4
      %v2393 = vshll.u32 %v2180, 16
      %v2395 = vrot.slane %v2393, 5
      %v2396 = vsel %vm1110, %v2391, %v2395
      %v2398 = vshrl.u32 %v2181, 16
      %v2400 = vrot.slane %v2398, 4
      %v2401 = vshll.u32 %v2181, 16
      %v2403 = vrot.slane %v2401, 5
      %v2404 = vor.u32 %v2400, %v2403
      %v2405 = vrot.slane %v2404, 4
      %v2407 = vshll.u32 %v2182, 16
      %v2409 = vrot.slane %v2407, 5
      %v2410 = vsel %vm1110, %v2405, %v2409
      %v2411 = vshrl.u32 %v2182, 16
      %v2413 = vrot.slane %v2411, 4
      %v2414 = vor.u32 %v2413, %v2409
      %v2415 = vrot.slane %v2414, 4
      %v2417 = vshll.u32 %v2183, 16
      %v2419 = vrot.slane %v2417, 5
      %v2420 = vsel %vm1110, %v2415, %v2419
      %v2422 = vshrl.u32 %v2184, 16
      %v2424 = vrot.slane %v2422, 4
      %v2425 = vshll.u32 %v2184, 16
      %v2427 = vrot.slane %v2425, 5
      %v2428 = vor.u32 %v2424, %v2427
      %v2429 = vrot.slane %v2428, 4
      %v2431 = vshll.u32 %v2185, 16
      %v2433 = vrot.slane %v2431, 5
      %v2434 = vsel %vm1110, %v2429, %v2433
      %v2435 = vshrl.u32 %v2185, 16
      %v2437 = vrot.slane %v2435, 4
      %v2438 = vor.u32 %v2437, %v2433
      %v2439 = vrot.slane %v2438, 4
      %v2441 = vshll.u32 %v2186, 16
      %v2443 = vrot.slane %v2441, 5
      %v2444 = vsel %vm1110, %v2439, %v2443
      %v2446 = vshrl.u32 %v2187, 16
      %v2448 = vrot.slane %v2446, 4
      %v2449 = vshll.u32 %v2187, 16
      %v2451 = vrot.slane %v2449, 5
      %v2452 = vor.u32 %v2448, %v2451
      %v2453 = vrot.slane %v2452, 4
      %v2455 = vshll.u32 %v2188, 16
      %v2457 = vrot.slane %v2455, 5
      %v2458 = vsel %vm1110, %v2453, %v2457
      %v2459 = vshrl.u32 %v2188, 16
      %v2461 = vrot.slane %v2459, 4
      %v2462 = vor.u32 %v2461, %v2457
      %v2463 = vrot.slane %v2462, 4
      %v2465 = vshll.u32 %v2189, 16
      %v2467 = vrot.slane %v2465, 5
      %v2468 = vsel %vm1110, %v2463, %v2467
      %v2470 = vshrl.u32 %v2190, 16
      %v2472 = vrot.slane %v2470, 4
      %v2473 = vshll.u32 %v2190, 16
      %v2475 = vrot.slane %v2473, 5
      %v2476 = vor.u32 %v2472, %v2475
      %v2477 = vrot.slane %v2476, 4
      %v2479 = vshll.u32 %v2191, 16
      %v2481 = vrot.slane %v2479, 5
      %v2482 = vsel %vm1110, %v2477, %v2481
      %v2483 = vshrl.u32 %v2191, 16
      %v2485 = vrot.slane %v2483, 4
      %v2486 = vor.u32 %v2485, %v2481
      %v2487 = vrot.slane %v2486, 4
      %v2489 = vshll.u32 %v2192, 16
      %v2491 = vrot.slane %v2489, 5
      %v2492 = vsel %vm1110, %v2487, %v2491
      %v2494 = vshrl.u32 %v2193, 16
      %v2496 = vrot.slane %v2494, 4
      %v2497 = vshll.u32 %v2193, 16
      %v2499 = vrot.slane %v2497, 5
      %v2500 = vor.u32 %v2496, %v2499
      %v2501 = vrot.slane %v2500, 4
      %v2503 = vshll.u32 %v2194, 16
      %v2505 = vrot.slane %v2503, 5
      %v2506 = vsel %vm1110, %v2501, %v2505
      %v2507 = vshrl.u32 %v2194, 16
      %v2509 = vrot.slane %v2507, 4
      %v2510 = vor.u32 %v2509, %v2505
      %v2511 = vrot.slane %v2510, 4
      %v2513 = vshll.u32 %v2195, 16
      %v2515 = vrot.slane %v2513, 5
      %v2516 = vsel %vm1110, %v2511, %v2515
      %v2518 = vshrl.u32 %v2196, 16
      %v2520 = vrot.slane %v2518, 4
      %v2521 = vshll.u32 %v2196, 16
      %v2523 = vrot.slane %v2521, 5
      %v2524 = vor.u32 %v2520, %v2523
      %v2525 = vrot.slane %v2524, 4
      %v2527 = vshll.u32 %v2197, 16
      %v2529 = vrot.slane %v2527, 5
      %v2530 = vsel %vm1110, %v2525, %v2529
      %v2531 = vshrl.u32 %v2197, 16
      %v2533 = vrot.slane %v2531, 4
      %v2534 = vor.u32 %v2533, %v2529
      %v2535 = vrot.slane %v2534, 4
      %v2537 = vshll.u32 %v2198, 16
      %v2539 = vrot.slane %v2537, 5
      %v2540 = vsel %vm1110, %v2535, %v2539
      %v2542 = vshrl.u32 %v2199, 16
      %v2544 = vrot.slane %v2542, 4
      %v2545 = vshll.u32 %v2199, 16
      %v2547 = vrot.slane %v2545, 5
      %v2548 = vor.u32 %v2544, %v2547
      %v2549 = vrot.slane %v2548, 4
      %v2551 = vshll.u32 %v2200, 16
      %v2553 = vrot.slane %v2551, 5
      %v2554 = vsel %vm1110, %v2549, %v2553
      %v2555 = vshrl.u32 %v2200, 16
      %v2557 = vrot.slane %v2555, 4
      %v2558 = vor.u32 %v2557, %v2553
      %v2559 = vrot.slane %v2558, 4
      %v2561 = vshll.u32 %v2201, 16
      %v2563 = vrot.slane %v2561, 5
      %v2564 = vsel %vm1110, %v2559, %v2563
      %v2566 = vshrl.u32 %v2202, 16
      %v2568 = vrot.slane %v2566, 4
      %v2569 = vshll.u32 %v2202, 16
      %v2571 = vrot.slane %v2569, 5
      %v2572 = vor.u32 %v2568, %v2571
      %v2573 = vrot.slane %v2572, 4
      %v2575 = vshll.u32 %v2203, 16
      %v2577 = vrot.slane %v2575, 5
      %v2578 = vsel %vm1110, %v2573, %v2577
      %v2579 = vshrl.u32 %v2203, 16
      %v2581 = vrot.slane %v2579, 4
      %v2582 = vor.u32 %v2581, %v2577
      %v2583 = vrot.slane %v2582, 4
      %v2585 = vshll.u32 %v2204, 16
      %v2587 = vrot.slane %v2585, 5
      %v2588 = vsel %vm1110, %v2583, %v2587
      %2589 = vrot.lane.b32.xlu0 %v2218, 32
      %v2590 = vpop.permute.xlu0 %2589
      %2591 = vrot.lane.b32.xlu0 %v2228, 32
      %v2592 = vpop.permute.xlu0 %2591
      %2593 = vrot.lane.b32.xlu0 %v2242, 32
      %v2594 = vpop.permute.xlu0 %2593
      %2595 = vrot.lane.b32.xlu0 %v2252, 32
      %v2596 = vpop.permute.xlu0 %2595
      %2597 = vrot.lane.b32.xlu0 %v2266, 32
      %v2598 = vpop.permute.xlu0 %2597
      %2599 = vrot.lane.b32.xlu0 %v2276, 32
      %v2600 = vpop.permute.xlu0 %2599
      %2601 = vrot.lane.b32.xlu0 %v2290, 32
      %v2602 = vpop.permute.xlu0 %2601
      %2603 = vrot.lane.b32.xlu0 %v2300, 32
      %v2604 = vpop.permute.xlu0 %2603
      %2605 = vrot.lane.b32.xlu0 %v2314, 32
      %v2606 = vpop.permute.xlu0 %2605
      %2607 = vrot.lane.b32.xlu0 %v2324, 32
      %v2608 = vpop.permute.xlu0 %2607
      %2609 = vrot.lane.b32.xlu0 %v2338, 32
      %v2610 = vpop.permute.xlu0 %2609
      %2611 = vrot.lane.b32.xlu0 %v2348, 32
      %v2612 = vpop.permute.xlu0 %2611
      %2613 = vrot.lane.b32.xlu0 %v2362, 32
      %v2614 = vpop.permute.xlu0 %2613
      %2615 = vrot.lane.b32.xlu0 %v2372, 32
      %v2616 = vpop.permute.xlu0 %2615
      %2617 = vrot.lane.b32.xlu0 %v2386, 32
      %v2618 = vpop.permute.xlu0 %2617
      %2619 = vrot.lane.b32.xlu0 %v2396, 32
      %v2620 = vpop.permute.xlu0 %2619
      %2621 = vrot.lane.b32.xlu0 %v2410, 32
      %v2622 = vpop.permute.xlu0 %2621
      %2623 = vrot.lane.b32.xlu0 %v2420, 32
      %v2624 = vpop.permute.xlu0 %2623
      %2625 = vrot.lane.b32.xlu0 %v2434, 32
      %v2626 = vpop.permute.xlu0 %2625
      %2627 = vrot.lane.b32.xlu0 %v2444, 32
      %v2628 = vpop.permute.xlu0 %2627
      %2629 = vrot.lane.b32.xlu0 %v2458, 32
      %v2630 = vpop.permute.xlu0 %2629
      %2631 = vrot.lane.b32.xlu0 %v2468, 32
      %v2632 = vpop.permute.xlu0 %2631
      %2633 = vrot.lane.b32.xlu0 %v2482, 32
      %v2634 = vpop.permute.xlu0 %2633
      %2635 = vrot.lane.b32.xlu0 %v2492, 32
      %v2636 = vpop.permute.xlu0 %2635
      %2637 = vrot.lane.b32.xlu0 %v2506, 32
      %v2638 = vpop.permute.xlu0 %2637
      %2639 = vrot.lane.b32.xlu0 %v2516, 32
      %v2640 = vpop.permute.xlu0 %2639
      %2641 = vrot.lane.b32.xlu0 %v2530, 32
      %v2642 = vpop.permute.xlu0 %2641
      %2643 = vrot.lane.b32.xlu0 %v2540, 32
      %v2644 = vpop.permute.xlu0 %2643
      %2645 = vrot.lane.b32.xlu0 %v2554, 32
      %v2646 = vpop.permute.xlu0 %2645
      %2647 = vrot.lane.b32.xlu0 %v2564, 32
      %v2648 = vpop.permute.xlu0 %2647
      %2649 = vrot.lane.b32.xlu0 %v2578, 32
      %v2650 = vpop.permute.xlu0 %2649
      %2651 = vrot.lane.b32.xlu0 %v2588, 32
      %v2652 = vpop.permute.xlu0 %2651
      %vm2685 = vcmask 322816
      %2686 = vst.msk [vmem:[#allocation3] sm:$0xf] %vm2685, %v2590
      %2687 = vst.msk [vmem:[#allocation3 + $0x4] sm:$0xf] %vm2685, %v2592
      %2688 = vst.msk [vmem:[#allocation3 + $0x8] sm:$0xf] %vm2685, %v2594
      %2689 = vst.msk [vmem:[#allocation3 + $0xc] sm:$0xf] %vm2685, %v2596
      %2690 = vst.msk [vmem:[#allocation3 + $0x10] sm:$0xf] %vm2685, %v2598
      %2691 = vst.msk [vmem:[#allocation3 + $0x14] sm:$0xf] %vm2685, %v2600
      %2692 = vst.msk [vmem:[#allocation3 + $0x18] sm:$0xf] %vm2685, %v2602
      %2693 = vst.msk [vmem:[#allocation3 + $0x1c] sm:$0xf] %vm2685, %v2604
      %2694 = vst.msk [vmem:[#allocation3 + $0x20] sm:$0xf] %vm2685, %v2606
      %2695 = vst.msk [vmem:[#allocation3 + $0x24] sm:$0xf] %vm2685, %v2608
      %2696 = vst.msk [vmem:[#allocation3 + $0x28] sm:$0xf] %vm2685, %v2610
      %2697 = vst.msk [vmem:[#allocation3 + $0x2c] sm:$0xf] %vm2685, %v2612
      %2698 = vst.msk [vmem:[#allocation3 + $0x30] sm:$0xf] %vm2685, %v2614
      %2699 = vst.msk [vmem:[#allocation3 + $0x34] sm:$0xf] %vm2685, %v2616
      %2700 = vst.msk [vmem:[#allocation3 + $0x38] sm:$0xf] %vm2685, %v2618
      %2701 = vst.msk [vmem:[#allocation3 + $0x3c] sm:$0xf] %vm2685, %v2620
      %2702 = vst.msk [vmem:[#allocation3 + $0x40] sm:$0xf] %vm2685, %v2622
      %2703 = vst.msk [vmem:[#allocation3 + $0x44] sm:$0xf] %vm2685, %v2624
      %2704 = vst.msk [vmem:[#allocation3 + $0x48] sm:$0xf] %vm2685, %v2626
      %2705 = vst.msk [vmem:[#allocation3 + $0x4c] sm:$0xf] %vm2685, %v2628
      %2706 = vst.msk [vmem:[#allocation3 + $0x50] sm:$0xf] %vm2685, %v2630
      %2707 = vst.msk [vmem:[#allocation3 + $0x54] sm:$0xf] %vm2685, %v2632
      %2708 = vst.msk [vmem:[#allocation3 + $0x58] sm:$0xf] %vm2685, %v2634
      %2709 = vst.msk [vmem:[#allocation3 + $0x5c] sm:$0xf] %vm2685, %v2636
      %2710 = vst.msk [vmem:[#allocation3 + $0x60] sm:$0xf] %vm2685, %v2638
      %2711 = vst.msk [vmem:[#allocation3 + $0x64] sm:$0xf] %vm2685, %v2640
      %2712 = vst.msk [vmem:[#allocation3 + $0x68] sm:$0xf] %vm2685, %v2642
      %2713 = vst.msk [vmem:[#allocation3 + $0x6c] sm:$0xf] %vm2685, %v2644
      %2714 = vst.msk [vmem:[#allocation3 + $0x70] sm:$0xf] %vm2685, %v2646
      %2715 = vst.msk [vmem:[#allocation3 + $0x74] sm:$0xf] %vm2685, %v2648
      %2716 = vst.msk [vmem:[#allocation3 + $0x78] sm:$0xf] %vm2685, %v2650
      %2717 = vst.msk [vmem:[#allocation3 + $0x7c] sm:$0xf] %vm2685, %v2652
      %v2718 = vld [vmem:[%s327] sm:$0xe]
      %v2719 = vld [vmem:[%s327 + $0x4] sm:$0xf]
      %v2720 = vld [vmem:[%s327 + $0x8] sm:$0x1]
      %v2721 = vld [vmem:[%s327 + $0xc] sm:$0xe]
      %v2722 = vld [vmem:[%s327 + $0x10] sm:$0xf]
      %v2723 = vld [vmem:[%s327 + $0x14] sm:$0x1]
      %v2724 = vld [vmem:[%s327 + $0x18] sm:$0xe]
      %v2725 = vld [vmem:[%s327 + $0x1c] sm:$0xf]
      %v2726 = vld [vmem:[%s327 + $0x20] sm:$0x1]
      %v2727 = vld [vmem:[%s327 + $0x24] sm:$0xe]
      %v2728 = vld [vmem:[%s327 + $0x28] sm:$0xf]
      %v2729 = vld [vmem:[%s327 + $0x2c] sm:$0x1]
      %v2730 = vld [vmem:[%s327 + $0x30] sm:$0xe]
      %v2731 = vld [vmem:[%s327 + $0x34] sm:$0xf]
      %v2732 = vld [vmem:[%s327 + $0x38] sm:$0x1]
      %v2733 = vld [vmem:[%s327 + $0x3c] sm:$0xe]
      %v2734 = vld [vmem:[%s327 + $0x40] sm:$0xf]
      %v2735 = vld [vmem:[%s327 + $0x44] sm:$0x1]
      %v2736 = vld [vmem:[%s327 + $0x48] sm:$0xe]
      %v2737 = vld [vmem:[%s327 + $0x4c] sm:$0xf]
      %v2738 = vld [vmem:[%s327 + $0x50] sm:$0x1]
      %v2739 = vld [vmem:[%s327 + $0x54] sm:$0xe]
      %v2740 = vld [vmem:[%s327 + $0x58] sm:$0xf]
      %v2741 = vld [vmem:[%s327 + $0x5c] sm:$0x1]
      %v2742 = vld [vmem:[%s327 + $0x60] sm:$0xe]
      %v2743 = vld [vmem:[%s327 + $0x64] sm:$0xf]
      %v2744 = vld [vmem:[%s327 + $0x68] sm:$0x1]
      %v2745 = vld [vmem:[%s327 + $0x6c] sm:$0xe]
      %v2746 = vld [vmem:[%s327 + $0x70] sm:$0xf]
      %v2747 = vld [vmem:[%s327 + $0x74] sm:$0x1]
      %v2748 = vld [vmem:[%s327 + $0x78] sm:$0xe]
      %v2749 = vld [vmem:[%s327 + $0x7c] sm:$0xf]
      %v2750 = vld [vmem:[%s327 + $0x80] sm:$0x1]
      %v2751 = vld [vmem:[%s327 + $0x84] sm:$0xe]
      %v2752 = vld [vmem:[%s327 + $0x88] sm:$0xf]
      %v2753 = vld [vmem:[%s327 + $0x8c] sm:$0x1]
      %v2754 = vld [vmem:[%s327 + $0x90] sm:$0xe]
      %v2755 = vld [vmem:[%s327 + $0x94] sm:$0xf]
      %v2756 = vld [vmem:[%s327 + $0x98] sm:$0x1]
      %v2757 = vld [vmem:[%s327 + $0x9c] sm:$0xe]
      %v2758 = vld [vmem:[%s327 + $0xa0] sm:$0xf]
      %v2759 = vld [vmem:[%s327 + $0xa4] sm:$0x1]
      %v2760 = vld [vmem:[%s327 + $0xa8] sm:$0xe]
      %v2761 = vld [vmem:[%s327 + $0xac] sm:$0xf]
      %v2762 = vld [vmem:[%s327 + $0xb0] sm:$0x1]
      %v2763 = vld [vmem:[%s327 + $0xb4] sm:$0xe]
      %v2764 = vld [vmem:[%s327 + $0xb8] sm:$0xf]
      %v2765 = vld [vmem:[%s327 + $0xbc] sm:$0x1]
      %v2814 = vrot.slane %v2718, 5
      %v2815 = vrot.slane %v2814, 4
      %v2816 = vrot.slane %v2719, 5
      %v2817 = vsel %vm1722, %v2815, %v2816
      %v2818 = vrot.slane %v2816, 4
      %v2819 = vrot.slane %v2720, 5
      %v2820 = vsel %vm1722, %v2818, %v2819
      %v2821 = vrot.slane %v2721, 5
      %v2822 = vrot.slane %v2821, 4
      %v2823 = vrot.slane %v2722, 5
      %v2824 = vsel %vm1722, %v2822, %v2823
      %v2825 = vrot.slane %v2823, 4
      %v2826 = vrot.slane %v2723, 5
      %v2827 = vsel %vm1722, %v2825, %v2826
      %v2828 = vrot.slane %v2724, 5
      %v2829 = vrot.slane %v2828, 4
      %v2830 = vrot.slane %v2725, 5
      %v2831 = vsel %vm1722, %v2829, %v2830
      %v2832 = vrot.slane %v2830, 4
      %v2833 = vrot.slane %v2726, 5
      %v2834 = vsel %vm1722, %v2832, %v2833
      %v2835 = vrot.slane %v2727, 5
      %v2836 = vrot.slane %v2835, 4
      %v2837 = vrot.slane %v2728, 5
      %v2838 = vsel %vm1722, %v2836, %v2837
      %v2839 = vrot.slane %v2837, 4
      %v2840 = vrot.slane %v2729, 5
      %v2841 = vsel %vm1722, %v2839, %v2840
      %v2842 = vrot.slane %v2730, 5
      %v2843 = vrot.slane %v2842, 4
      %v2844 = vrot.slane %v2731, 5
      %v2845 = vsel %vm1722, %v2843, %v2844
      %v2846 = vrot.slane %v2844, 4
      %v2847 = vrot.slane %v2732, 5
      %v2848 = vsel %vm1722, %v2846, %v2847
      %v2849 = vrot.slane %v2733, 5
      %v2850 = vrot.slane %v2849, 4
      %v2851 = vrot.slane %v2734, 5
      %v2852 = vsel %vm1722, %v2850, %v2851
      %v2853 = vrot.slane %v2851, 4
      %v2854 = vrot.slane %v2735, 5
      %v2855 = vsel %vm1722, %v2853, %v2854
      %v2856 = vrot.slane %v2736, 5
      %v2857 = vrot.slane %v2856, 4
      %v2858 = vrot.slane %v2737, 5
      %v2859 = vsel %vm1722, %v2857, %v2858
      %v2860 = vrot.slane %v2858, 4
      %v2861 = vrot.slane %v2738, 5
      %v2862 = vsel %vm1722, %v2860, %v2861
      %v2863 = vrot.slane %v2739, 5
      %v2864 = vrot.slane %v2863, 4
      %v2865 = vrot.slane %v2740, 5
      %v2866 = vsel %vm1722, %v2864, %v2865
      %v2867 = vrot.slane %v2865, 4
      %v2868 = vrot.slane %v2741, 5
      %v2869 = vsel %vm1722, %v2867, %v2868
      %v2870 = vrot.slane %v2742, 5
      %v2871 = vrot.slane %v2870, 4
      %v2872 = vrot.slane %v2743, 5
      %v2873 = vsel %vm1722, %v2871, %v2872
      %v2874 = vrot.slane %v2872, 4
      %v2875 = vrot.slane %v2744, 5
      %v2876 = vsel %vm1722, %v2874, %v2875
      %v2877 = vrot.slane %v2745, 5
      %v2878 = vrot.slane %v2877, 4
      %v2879 = vrot.slane %v2746, 5
      %v2880 = vsel %vm1722, %v2878, %v2879
      %v2881 = vrot.slane %v2879, 4
      %v2882 = vrot.slane %v2747, 5
      %v2883 = vsel %vm1722, %v2881, %v2882
      %v2884 = vrot.slane %v2748, 5
      %v2885 = vrot.slane %v2884, 4
      %v2886 = vrot.slane %v2749, 5
      %v2887 = vsel %vm1722, %v2885, %v2886
      %v2888 = vrot.slane %v2886, 4
      %v2889 = vrot.slane %v2750, 5
      %v2890 = vsel %vm1722, %v2888, %v2889
      %v2891 = vrot.slane %v2751, 5
      %v2892 = vrot.slane %v2891, 4
      %v2893 = vrot.slane %v2752, 5
      %v2894 = vsel %vm1722, %v2892, %v2893
      %v2895 = vrot.slane %v2893, 4
      %v2896 = vrot.slane %v2753, 5
      %v2897 = vsel %vm1722, %v2895, %v2896
      %v2898 = vrot.slane %v2754, 5
      %v2899 = vrot.slane %v2898, 4
      %v2900 = vrot.slane %v2755, 5
      %v2901 = vsel %vm1722, %v2899, %v2900
      %v2902 = vrot.slane %v2900, 4
      %v2903 = vrot.slane %v2756, 5
      %v2904 = vsel %vm1722, %v2902, %v2903
      %v2905 = vrot.slane %v2757, 5
      %v2906 = vrot.slane %v2905, 4
      %v2907 = vrot.slane %v2758, 5
      %v2908 = vsel %vm1722, %v2906, %v2907
      %v2909 = vrot.slane %v2907, 4
      %v2910 = vrot.slane %v2759, 5
      %v2911 = vsel %vm1722, %v2909, %v2910
      %v2912 = vrot.slane %v2760, 5
      %v2913 = vrot.slane %v2912, 4
      %v2914 = vrot.slane %v2761, 5
      %v2915 = vsel %vm1722, %v2913, %v2914
      %v2916 = vrot.slane %v2914, 4
      %v2917 = vrot.slane %v2762, 5
      %v2918 = vsel %vm1722, %v2916, %v2917
      %v2919 = vrot.slane %v2763, 5
      %v2920 = vrot.slane %v2919, 4
      %v2921 = vrot.slane %v2764, 5
      %v2922 = vsel %vm1722, %v2920, %v2921
      %v2923 = vrot.slane %v2921, 4
      %v2924 = vrot.slane %v2765, 5
      %v2925 = vsel %vm1722, %v2923, %v2924
      %2926 = vrot.lane.b32.xlu0 %v2817, 40
      %v2927 = vpop.permute.xlu0 %2926
      %2928 = vrot.lane.b32.xlu0 %v2820, 40
      %v2929 = vpop.permute.xlu0 %2928
      %2930 = vrot.lane.b32.xlu0 %v2824, 40
      %v2931 = vpop.permute.xlu0 %2930
      %2932 = vrot.lane.b32.xlu0 %v2827, 40
      %v2933 = vpop.permute.xlu0 %2932
      %2934 = vrot.lane.b32.xlu0 %v2831, 40
      %v2935 = vpop.permute.xlu0 %2934
      %2936 = vrot.lane.b32.xlu0 %v2834, 40
      %v2937 = vpop.permute.xlu0 %2936
      %2938 = vrot.lane.b32.xlu0 %v2838, 40
      %v2939 = vpop.permute.xlu0 %2938
      %2940 = vrot.lane.b32.xlu0 %v2841, 40
      %v2941 = vpop.permute.xlu0 %2940
      %2942 = vrot.lane.b32.xlu0 %v2845, 40
      %v2943 = vpop.permute.xlu0 %2942
      %2944 = vrot.lane.b32.xlu0 %v2848, 40
      %v2945 = vpop.permute.xlu0 %2944
      %2946 = vrot.lane.b32.xlu0 %v2852, 40
      %v2947 = vpop.permute.xlu0 %2946
      %2948 = vrot.lane.b32.xlu0 %v2855, 40
      %v2949 = vpop.permute.xlu0 %2948
      %2950 = vrot.lane.b32.xlu0 %v2859, 40
      %v2951 = vpop.permute.xlu0 %2950
      %2952 = vrot.lane.b32.xlu0 %v2862, 40
      %v2953 = vpop.permute.xlu0 %2952
      %2954 = vrot.lane.b32.xlu0 %v2866, 40
      %v2955 = vpop.permute.xlu0 %2954
      %2956 = vrot.lane.b32.xlu0 %v2869, 40
      %v2957 = vpop.permute.xlu0 %2956
      %2958 = vrot.lane.b32.xlu0 %v2873, 40
      %v2959 = vpop.permute.xlu0 %2958
      %2960 = vrot.lane.b32.xlu0 %v2876, 40
      %v2961 = vpop.permute.xlu0 %2960
      %2962 = vrot.lane.b32.xlu0 %v2880, 40
      %v2963 = vpop.permute.xlu0 %2962
      %2964 = vrot.lane.b32.xlu0 %v2883, 40
      %v2965 = vpop.permute.xlu0 %2964
      %2966 = vrot.lane.b32.xlu0 %v2887, 40
      %v2967 = vpop.permute.xlu0 %2966
      %2968 = vrot.lane.b32.xlu0 %v2890, 40
      %v2969 = vpop.permute.xlu0 %2968
      %2970 = vrot.lane.b32.xlu0 %v2894, 40
      %v2971 = vpop.permute.xlu0 %2970
      %2972 = vrot.lane.b32.xlu0 %v2897, 40
      %v2973 = vpop.permute.xlu0 %2972
      %2974 = vrot.lane.b32.xlu0 %v2901, 40
      %v2975 = vpop.permute.xlu0 %2974
      %2976 = vrot.lane.b32.xlu0 %v2904, 40
      %v2977 = vpop.permute.xlu0 %2976
      %2978 = vrot.lane.b32.xlu0 %v2908, 40
      %v2979 = vpop.permute.xlu0 %2978
      %2980 = vrot.lane.b32.xlu0 %v2911, 40
      %v2981 = vpop.permute.xlu0 %2980
      %2982 = vrot.lane.b32.xlu0 %v2915, 40
      %v2983 = vpop.permute.xlu0 %2982
      %2984 = vrot.lane.b32.xlu0 %v2918, 40
      %v2985 = vpop.permute.xlu0 %2984
      %2986 = vrot.lane.b32.xlu0 %v2922, 40
      %v2987 = vpop.permute.xlu0 %2986
      %2988 = vrot.lane.b32.xlu0 %v2925, 40
      %v2989 = vpop.permute.xlu0 %2988
      %vm3022 = vcmask 388416
      %3023 = vst.msk [vmem:[#allocation3] sm:$0xf] %vm3022, %v2927
      %3024 = vst.msk [vmem:[#allocation3 + $0x4] sm:$0xf] %vm3022, %v2929
      %3025 = vst.msk [vmem:[#allocation3 + $0x8] sm:$0xf] %vm3022, %v2931
      %3026 = vst.msk [vmem:[#allocation3 + $0xc] sm:$0xf] %vm3022, %v2933
      %3027 = vst.msk [vmem:[#allocation3 + $0x10] sm:$0xf] %vm3022, %v2935
      %3028 = vst.msk [vmem:[#allocation3 + $0x14] sm:$0xf] %vm3022, %v2937
      %3029 = vst.msk [vmem:[#allocation3 + $0x18] sm:$0xf] %vm3022, %v2939
      %3030 = vst.msk [vmem:[#allocation3 + $0x1c] sm:$0xf] %vm3022, %v2941
      %3031 = vst.msk [vmem:[#allocation3 + $0x20] sm:$0xf] %vm3022, %v2943
      %3032 = vst.msk [vmem:[#allocation3 + $0x24] sm:$0xf] %vm3022, %v2945
      %3033 = vst.msk [vmem:[#allocation3 + $0x28] sm:$0xf] %vm3022, %v2947
      %3034 = vst.msk [vmem:[#allocation3 + $0x2c] sm:$0xf] %vm3022, %v2949
      %3035 = vst.msk [vmem:[#allocation3 + $0x30] sm:$0xf] %vm3022, %v2951
      %3036 = vst.msk [vmem:[#allocation3 + $0x34] sm:$0xf] %vm3022, %v2953
      %3037 = vst.msk [vmem:[#allocation3 + $0x38] sm:$0xf] %vm3022, %v2955
      %3038 = vst.msk [vmem:[#allocation3 + $0x3c] sm:$0xf] %vm3022, %v2957
      %3039 = vst.msk [vmem:[#allocation3 + $0x40] sm:$0xf] %vm3022, %v2959
      %3040 = vst.msk [vmem:[#allocation3 + $0x44] sm:$0xf] %vm3022, %v2961
      %3041 = vst.msk [vmem:[#allocation3 + $0x48] sm:$0xf] %vm3022, %v2963
      %3042 = vst.msk [vmem:[#allocation3 + $0x4c] sm:$0xf] %vm3022, %v2965
      %3043 = vst.msk [vmem:[#allocation3 + $0x50] sm:$0xf] %vm3022, %v2967
      %3044 = vst.msk [vmem:[#allocation3 + $0x54] sm:$0xf] %vm3022, %v2969
      %3045 = vst.msk [vmem:[#allocation3 + $0x58] sm:$0xf] %vm3022, %v2971
      %3046 = vst.msk [vmem:[#allocation3 + $0x5c] sm:$0xf] %vm3022, %v2973
      %3047 = vst.msk [vmem:[#allocation3 + $0x60] sm:$0xf] %vm3022, %v2975
      %3048 = vst.msk [vmem:[#allocation3 + $0x64] sm:$0xf] %vm3022, %v2977
      %3049 = vst.msk [vmem:[#allocation3 + $0x68] sm:$0xf] %vm3022, %v2979
      %3050 = vst.msk [vmem:[#allocation3 + $0x6c] sm:$0xf] %vm3022, %v2981
      %3051 = vst.msk [vmem:[#allocation3 + $0x70] sm:$0xf] %vm3022, %v2983
      %3052 = vst.msk [vmem:[#allocation3 + $0x74] sm:$0xf] %vm3022, %v2985
      %3053 = vst.msk [vmem:[#allocation3 + $0x78] sm:$0xf] %vm3022, %v2987
      %3054 = vst.msk [vmem:[#allocation3 + $0x7c] sm:$0xf] %vm3022, %v2989
      %s3055 = scalar_lea.vmem [#allocation2], 24
      %v3056 = vld [vmem:[%s3055] sm:$0xf]
      %v3057 = vld [vmem:[%s3055 + $0x4] sm:$0xf]
      %v3058 = vld [vmem:[%s3055 + $0xc] sm:$0xf]
      %v3059 = vld [vmem:[%s3055 + $0x10] sm:$0xf]
      %v3060 = vld [vmem:[%s3055 + $0x18] sm:$0xf]
      %v3061 = vld [vmem:[%s3055 + $0x1c] sm:$0xf]
      %v3062 = vld [vmem:[%s3055 + $0x24] sm:$0xf]
      %v3063 = vld [vmem:[%s3055 + $0x28] sm:$0xf]
      %v3064 = vld [vmem:[%s3055 + $0x30] sm:$0xf]
      %v3065 = vld [vmem:[%s3055 + $0x34] sm:$0xf]
      %v3066 = vld [vmem:[%s3055 + $0x3c] sm:$0xf]
      %v3067 = vld [vmem:[%s3055 + $0x40] sm:$0xf]
      %v3068 = vld [vmem:[%s3055 + $0x48] sm:$0xf]
      %v3069 = vld [vmem:[%s3055 + $0x4c] sm:$0xf]
      %v3070 = vld [vmem:[%s3055 + $0x54] sm:$0xf]
      %v3071 = vld [vmem:[%s3055 + $0x58] sm:$0xf]
      %v3072 = vld [vmem:[%s3055 + $0x60] sm:$0xf]
      %v3073 = vld [vmem:[%s3055 + $0x64] sm:$0xf]
      %v3074 = vld [vmem:[%s3055 + $0x6c] sm:$0xf]
      %v3075 = vld [vmem:[%s3055 + $0x70] sm:$0xf]
      %v3076 = vld [vmem:[%s3055 + $0x78] sm:$0xf]
      %v3077 = vld [vmem:[%s3055 + $0x7c] sm:$0xf]
      %v3078 = vld [vmem:[%s3055 + $0x84] sm:$0xf]
      %v3079 = vld [vmem:[%s3055 + $0x88] sm:$0xf]
      %v3080 = vld [vmem:[%s3055 + $0x90] sm:$0xf]
      %v3081 = vld [vmem:[%s3055 + $0x94] sm:$0xf]
      %v3082 = vld [vmem:[%s3055 + $0x9c] sm:$0xf]
      %v3083 = vld [vmem:[%s3055 + $0xa0] sm:$0xf]
      %v3084 = vld [vmem:[%s3055 + $0xa8] sm:$0xf]
      %v3085 = vld [vmem:[%s3055 + $0xac] sm:$0xf]
      %v3086 = vld [vmem:[%s3055 + $0xb4] sm:$0xf]
      %v3087 = vld [vmem:[%s3055 + $0xb8] sm:$0xf]
      %3120 = vrot.lane.b32.xlu0 %v3056, 48
      %v3121 = vpop.permute.xlu0 %3120
      %3122 = vrot.lane.b32.xlu0 %v3057, 48
      %v3123 = vpop.permute.xlu0 %3122
      %3124 = vrot.lane.b32.xlu0 %v3058, 48
      %v3125 = vpop.permute.xlu0 %3124
      %3126 = vrot.lane.b32.xlu0 %v3059, 48
      %v3127 = vpop.permute.xlu0 %3126
      %3128 = vrot.lane.b32.xlu0 %v3060, 48
      %v3129 = vpop.permute.xlu0 %3128
      %3130 = vrot.lane.b32.xlu0 %v3061, 48
      %v3131 = vpop.permute.xlu0 %3130
      %3132 = vrot.lane.b32.xlu0 %v3062, 48
      %v3133 = vpop.permute.xlu0 %3132
      %3134 = vrot.lane.b32.xlu0 %v3063, 48
      %v3135 = vpop.permute.xlu0 %3134
      %3136 = vrot.lane.b32.xlu0 %v3064, 48
      %v3137 = vpop.permute.xlu0 %3136
      %3138 = vrot.lane.b32.xlu0 %v3065, 48
      %v3139 = vpop.permute.xlu0 %3138
      %3140 = vrot.lane.b32.xlu0 %v3066, 48
      %v3141 = vpop.permute.xlu0 %3140
      %3142 = vrot.lane.b32.xlu0 %v3067, 48
      %v3143 = vpop.permute.xlu0 %3142
      %3144 = vrot.lane.b32.xlu0 %v3068, 48
      %v3145 = vpop.permute.xlu0 %3144
      %3146 = vrot.lane.b32.xlu0 %v3069, 48
      %v3147 = vpop.permute.xlu0 %3146
      %3148 = vrot.lane.b32.xlu0 %v3070, 48
      %v3149 = vpop.permute.xlu0 %3148
      %3150 = vrot.lane.b32.xlu0 %v3071, 48
      %v3151 = vpop.permute.xlu0 %3150
      %3152 = vrot.lane.b32.xlu0 %v3072, 48
      %v3153 = vpop.permute.xlu0 %3152
      %3154 = vrot.lane.b32.xlu0 %v3073, 48
      %v3155 = vpop.permute.xlu0 %3154
      %3156 = vrot.lane.b32.xlu0 %v3074, 48
      %v3157 = vpop.permute.xlu0 %3156
      %3158 = vrot.lane.b32.xlu0 %v3075, 48
      %v3159 = vpop.permute.xlu0 %3158
      %3160 = vrot.lane.b32.xlu0 %v3076, 48
      %v3161 = vpop.permute.xlu0 %3160
      %3162 = vrot.lane.b32.xlu0 %v3077, 48
      %v3163 = vpop.permute.xlu0 %3162
      %3164 = vrot.lane.b32.xlu0 %v3078, 48
      %v3165 = vpop.permute.xlu0 %3164
      %3166 = vrot.lane.b32.xlu0 %v3079, 48
      %v3167 = vpop.permute.xlu0 %3166
      %3168 = vrot.lane.b32.xlu0 %v3080, 48
      %v3169 = vpop.permute.xlu0 %3168
      %3170 = vrot.lane.b32.xlu0 %v3081, 48
      %v3171 = vpop.permute.xlu0 %3170
      %3172 = vrot.lane.b32.xlu0 %v3082, 48
      %v3173 = vpop.permute.xlu0 %3172
      %3174 = vrot.lane.b32.xlu0 %v3083, 48
      %v3175 = vpop.permute.xlu0 %3174
      %3176 = vrot.lane.b32.xlu0 %v3084, 48
      %v3177 = vpop.permute.xlu0 %3176
      %3178 = vrot.lane.b32.xlu0 %v3085, 48
      %v3179 = vpop.permute.xlu0 %3178
      %3180 = vrot.lane.b32.xlu0 %v3086, 48
      %v3181 = vpop.permute.xlu0 %3180
      %3182 = vrot.lane.b32.xlu0 %v3087, 48
      %v3183 = vpop.permute.xlu0 %3182
      %vm3216 = vcmask 454016
      %3217 = vst.msk [vmem:[#allocation3] sm:$0xf] %vm3216, %v3121
      %3218 = vst.msk [vmem:[#allocation3 + $0x4] sm:$0xf] %vm3216, %v3123
      %3219 = vst.msk [vmem:[#allocation3 + $0x8] sm:$0xf] %vm3216, %v3125
      %3220 = vst.msk [vmem:[#allocation3 + $0xc] sm:$0xf] %vm3216, %v3127
      %3221 = vst.msk [vmem:[#allocation3 + $0x10] sm:$0xf] %vm3216, %v3129
      %3222 = vst.msk [vmem:[#allocation3 + $0x14] sm:$0xf] %vm3216, %v3131
      %3223 = vst.msk [vmem:[#allocation3 + $0x18] sm:$0xf] %vm3216, %v3133
      %3224 = vst.msk [vmem:[#allocation3 + $0x1c] sm:$0xf] %vm3216, %v3135
      %3225 = vst.msk [vmem:[#allocation3 + $0x20] sm:$0xf] %vm3216, %v3137
      %3226 = vst.msk [vmem:[#allocation3 + $0x24] sm:$0xf] %vm3216, %v3139
      %3227 = vst.msk [vmem:[#allocation3 + $0x28] sm:$0xf] %vm3216, %v3141
      %3228 = vst.msk [vmem:[#allocation3 + $0x2c] sm:$0xf] %vm3216, %v3143
      %3229 = vst.msk [vmem:[#allocation3 + $0x30] sm:$0xf] %vm3216, %v3145
      %3230 = vst.msk [vmem:[#allocation3 + $0x34] sm:$0xf] %vm3216, %v3147
      %3231 = vst.msk [vmem:[#allocation3 + $0x38] sm:$0xf] %vm3216, %v3149
      %3232 = vst.msk [vmem:[#allocation3 + $0x3c] sm:$0xf] %vm3216, %v3151
      %3233 = vst.msk [vmem:[#allocation3 + $0x40] sm:$0xf] %vm3216, %v3153
      %3234 = vst.msk [vmem:[#allocation3 + $0x44] sm:$0xf] %vm3216, %v3155
      %3235 = vst.msk [vmem:[#allocation3 + $0x48] sm:$0xf] %vm3216, %v3157
      %3236 = vst.msk [vmem:[#allocation3 + $0x4c] sm:$0xf] %vm3216, %v3159
      %3237 = vst.msk [vmem:[#allocation3 + $0x50] sm:$0xf] %vm3216, %v3161
      %3238 = vst.msk [vmem:[#allocation3 + $0x54] sm:$0xf] %vm3216, %v3163
      %3239 = vst.msk [vmem:[#allocation3 + $0x58] sm:$0xf] %vm3216, %v3165
      %3240 = vst.msk [vmem:[#allocation3 + $0x5c] sm:$0xf] %vm3216, %v3167
      %3241 = vst.msk [vmem:[#allocation3 + $0x60] sm:$0xf] %vm3216, %v3169
      %3242 = vst.msk [vmem:[#allocation3 + $0x64] sm:$0xf] %vm3216, %v3171
      %3243 = vst.msk [vmem:[#allocation3 + $0x68] sm:$0xf] %vm3216, %v3173
      %3244 = vst.msk [vmem:[#allocation3 + $0x6c] sm:$0xf] %vm3216, %v3175
      %3245 = vst.msk [vmem:[#allocation3 + $0x70] sm:$0xf] %vm3216, %v3177
      %3246 = vst.msk [vmem:[#allocation3 + $0x74] sm:$0xf] %vm3216, %v3179
      %3247 = vst.msk [vmem:[#allocation3 + $0x78] sm:$0xf] %vm3216, %v3181
      %3248 = vst.msk [vmem:[#allocation3 + $0x7c] sm:$0xf] %vm3216, %v3183
      %v3249 = vld [vmem:[%s3055] sm:$0xf]
      %v3250 = vld [vmem:[%s3055 + $0x4] sm:$0xf]
      %v3251 = vld [vmem:[%s3055 + $0x8] sm:$0x1]
      %v3252 = vld [vmem:[%s3055 + $0xc] sm:$0xf]
      %v3253 = vld [vmem:[%s3055 + $0x10] sm:$0xf]
      %v3254 = vld [vmem:[%s3055 + $0x14] sm:$0x1]
      %v3255 = vld [vmem:[%s3055 + $0x18] sm:$0xf]
      %v3256 = vld [vmem:[%s3055 + $0x1c] sm:$0xf]
      %v3257 = vld [vmem:[%s3055 + $0x20] sm:$0x1]
      %v3258 = vld [vmem:[%s3055 + $0x24] sm:$0xf]
      %v3259 = vld [vmem:[%s3055 + $0x28] sm:$0xf]
      %v3260 = vld [vmem:[%s3055 + $0x2c] sm:$0x1]
      %v3261 = vld [vmem:[%s3055 + $0x30] sm:$0xf]
      %v3262 = vld [vmem:[%s3055 + $0x34] sm:$0xf]
      %v3263 = vld [vmem:[%s3055 + $0x38] sm:$0x1]
      %v3264 = vld [vmem:[%s3055 + $0x3c] sm:$0xf]
      %v3265 = vld [vmem:[%s3055 + $0x40] sm:$0xf]
      %v3266 = vld [vmem:[%s3055 + $0x44] sm:$0x1]
      %v3267 = vld [vmem:[%s3055 + $0x48] sm:$0xf]
      %v3268 = vld [vmem:[%s3055 + $0x4c] sm:$0xf]
      %v3269 = vld [vmem:[%s3055 + $0x50] sm:$0x1]
      %v3270 = vld [vmem:[%s3055 + $0x54] sm:$0xf]
      %v3271 = vld [vmem:[%s3055 + $0x58] sm:$0xf]
      %v3272 = vld [vmem:[%s3055 + $0x5c] sm:$0x1]
      %v3273 = vld [vmem:[%s3055 + $0x60] sm:$0xf]
      %v3274 = vld [vmem:[%s3055 + $0x64] sm:$0xf]
      %v3275 = vld [vmem:[%s3055 + $0x68] sm:$0x1]
      %v3276 = vld [vmem:[%s3055 + $0x6c] sm:$0xf]
      %v3277 = vld [vmem:[%s3055 + $0x70] sm:$0xf]
      %v3278 = vld [vmem:[%s3055 + $0x74] sm:$0x1]
      %v3279 = vld [vmem:[%s3055 + $0x78] sm:$0xf]
      %v3280 = vld [vmem:[%s3055 + $0x7c] sm:$0xf]
      %v3281 = vld [vmem:[%s3055 + $0x80] sm:$0x1]
      %v3282 = vld [vmem:[%s3055 + $0x84] sm:$0xf]
      %v3283 = vld [vmem:[%s3055 + $0x88] sm:$0xf]
      %v3284 = vld [vmem:[%s3055 + $0x8c] sm:$0x1]
      %v3285 = vld [vmem:[%s3055 + $0x90] sm:$0xf]
      %v3286 = vld [vmem:[%s3055 + $0x94] sm:$0xf]
      %v3287 = vld [vmem:[%s3055 + $0x98] sm:$0x1]
      %v3288 = vld [vmem:[%s3055 + $0x9c] sm:$0xf]
      %v3289 = vld [vmem:[%s3055 + $0xa0] sm:$0xf]
      %v3290 = vld [vmem:[%s3055 + $0xa4] sm:$0x1]
      %v3291 = vld [vmem:[%s3055 + $0xa8] sm:$0xf]
      %v3292 = vld [vmem:[%s3055 + $0xac] sm:$0xf]
      %v3293 = vld [vmem:[%s3055 + $0xb0] sm:$0x1]
      %v3294 = vld [vmem:[%s3055 + $0xb4] sm:$0xf]
      %v3295 = vld [vmem:[%s3055 + $0xb8] sm:$0xf]
      %v3296 = vld [vmem:[%s3055 + $0xbc] sm:$0x1]
      %v3298 = vshrl.u32 %v3249, 16
      %v3300 = vrot.slane %v3298, 4
      %v3301 = vshll.u32 %v3249, 16
      %v3303 = vrot.slane %v3301, 5
      %v3304 = vor.u32 %v3300, %v3303
      %v3305 = vrot.slane %v3304, 4
      %v3307 = vshll.u32 %v3250, 16
      %v3309 = vrot.slane %v3307, 5
      %v3310 = vsel %vm1110, %v3305, %v3309
      %v3311 = vshrl.u32 %v3250, 16
      %v3313 = vrot.slane %v3311, 4
      %v3314 = vor.u32 %v3313, %v3309
      %v3315 = vrot.slane %v3314, 4
      %v3317 = vshll.u32 %v3251, 16
      %v3319 = vrot.slane %v3317, 5
      %v3320 = vsel %vm1110, %v3315, %v3319
      %v3322 = vshrl.u32 %v3252, 16
      %v3324 = vrot.slane %v3322, 4
      %v3325 = vshll.u32 %v3252, 16
      %v3327 = vrot.slane %v3325, 5
      %v3328 = vor.u32 %v3324, %v3327
      %v3329 = vrot.slane %v3328, 4
      %v3331 = vshll.u32 %v3253, 16
      %v3333 = vrot.slane %v3331, 5
      %v3334 = vsel %vm1110, %v3329, %v3333
      %v3335 = vshrl.u32 %v3253, 16
      %v3337 = vrot.slane %v3335, 4
      %v3338 = vor.u32 %v3337, %v3333
      %v3339 = vrot.slane %v3338, 4
      %v3341 = vshll.u32 %v3254, 16
      %v3343 = vrot.slane %v3341, 5
      %v3344 = vsel %vm1110, %v3339, %v3343
      %v3346 = vshrl.u32 %v3255, 16
      %v3348 = vrot.slane %v3346, 4
      %v3349 = vshll.u32 %v3255, 16
      %v3351 = vrot.slane %v3349, 5
      %v3352 = vor.u32 %v3348, %v3351
      %v3353 = vrot.slane %v3352, 4
      %v3355 = vshll.u32 %v3256, 16
      %v3357 = vrot.slane %v3355, 5
      %v3358 = vsel %vm1110, %v3353, %v3357
      %v3359 = vshrl.u32 %v3256, 16
      %v3361 = vrot.slane %v3359, 4
      %v3362 = vor.u32 %v3361, %v3357
      %v3363 = vrot.slane %v3362, 4
      %v3365 = vshll.u32 %v3257, 16
      %v3367 = vrot.slane %v3365, 5
      %v3368 = vsel %vm1110, %v3363, %v3367
      %v3370 = vshrl.u32 %v3258, 16
      %v3372 = vrot.slane %v3370, 4
      %v3373 = vshll.u32 %v3258, 16
      %v3375 = vrot.slane %v3373, 5
      %v3376 = vor.u32 %v3372, %v3375
      %v3377 = vrot.slane %v3376, 4
      %v3379 = vshll.u32 %v3259, 16
      %v3381 = vrot.slane %v3379, 5
      %v3382 = vsel %vm1110, %v3377, %v3381
      %v3383 = vshrl.u32 %v3259, 16
      %v3385 = vrot.slane %v3383, 4
      %v3386 = vor.u32 %v3385, %v3381
      %v3387 = vrot.slane %v3386, 4
      %v3389 = vshll.u32 %v3260, 16
      %v3391 = vrot.slane %v3389, 5
      %v3392 = vsel %vm1110, %v3387, %v3391
      %v3394 = vshrl.u32 %v3261, 16
      %v3396 = vrot.slane %v3394, 4
      %v3397 = vshll.u32 %v3261, 16
      %v3399 = vrot.slane %v3397, 5
      %v3400 = vor.u32 %v3396, %v3399
      %v3401 = vrot.slane %v3400, 4
      %v3403 = vshll.u32 %v3262, 16
      %v3405 = vrot.slane %v3403, 5
      %v3406 = vsel %vm1110, %v3401, %v3405
      %v3407 = vshrl.u32 %v3262, 16
      %v3409 = vrot.slane %v3407, 4
      %v3410 = vor.u32 %v3409, %v3405
      %v3411 = vrot.slane %v3410, 4
      %v3413 = vshll.u32 %v3263, 16
      %v3415 = vrot.slane %v3413, 5
      %v3416 = vsel %vm1110, %v3411, %v3415
      %v3418 = vshrl.u32 %v3264, 16
      %v3420 = vrot.slane %v3418, 4
      %v3421 = vshll.u32 %v3264, 16
      %v3423 = vrot.slane %v3421, 5
      %v3424 = vor.u32 %v3420, %v3423
      %v3425 = vrot.slane %v3424, 4
      %v3427 = vshll.u32 %v3265, 16
      %v3429 = vrot.slane %v3427, 5
      %v3430 = vsel %vm1110, %v3425, %v3429
      %v3431 = vshrl.u32 %v3265, 16
      %v3433 = vrot.slane %v3431, 4
      %v3434 = vor.u32 %v3433, %v3429
      %v3435 = vrot.slane %v3434, 4
      %v3437 = vshll.u32 %v3266, 16
      %v3439 = vrot.slane %v3437, 5
      %v3440 = vsel %vm1110, %v3435, %v3439
      %v3442 = vshrl.u32 %v3267, 16
      %v3444 = vrot.slane %v3442, 4
      %v3445 = vshll.u32 %v3267, 16
      %v3447 = vrot.slane %v3445, 5
      %v3448 = vor.u32 %v3444, %v3447
      %v3449 = vrot.slane %v3448, 4
      %v3451 = vshll.u32 %v3268, 16
      %v3453 = vrot.slane %v3451, 5
      %v3454 = vsel %vm1110, %v3449, %v3453
      %v3455 = vshrl.u32 %v3268, 16
      %v3457 = vrot.slane %v3455, 4
      %v3458 = vor.u32 %v3457, %v3453
      %v3459 = vrot.slane %v3458, 4
      %v3461 = vshll.u32 %v3269, 16
      %v3463 = vrot.slane %v3461, 5
      %v3464 = vsel %vm1110, %v3459, %v3463
      %v3466 = vshrl.u32 %v3270, 16
      %v3468 = vrot.slane %v3466, 4
      %v3469 = vshll.u32 %v3270, 16
      %v3471 = vrot.slane %v3469, 5
      %v3472 = vor.u32 %v3468, %v3471
      %v3473 = vrot.slane %v3472, 4
      %v3475 = vshll.u32 %v3271, 16
      %v3477 = vrot.slane %v3475, 5
      %v3478 = vsel %vm1110, %v3473, %v3477
      %v3479 = vshrl.u32 %v3271, 16
      %v3481 = vrot.slane %v3479, 4
      %v3482 = vor.u32 %v3481, %v3477
      %v3483 = vrot.slane %v3482, 4
      %v3485 = vshll.u32 %v3272, 16
      %v3487 = vrot.slane %v3485, 5
      %v3488 = vsel %vm1110, %v3483, %v3487
      %v3490 = vshrl.u32 %v3273, 16
      %v3492 = vrot.slane %v3490, 4
      %v3493 = vshll.u32 %v3273, 16
      %v3495 = vrot.slane %v3493, 5
      %v3496 = vor.u32 %v3492, %v3495
      %v3497 = vrot.slane %v3496, 4
      %v3499 = vshll.u32 %v3274, 16
      %v3501 = vrot.slane %v3499, 5
      %v3502 = vsel %vm1110, %v3497, %v3501
      %v3503 = vshrl.u32 %v3274, 16
      %v3505 = vrot.slane %v3503, 4
      %v3506 = vor.u32 %v3505, %v3501
      %v3507 = vrot.slane %v3506, 4
      %v3509 = vshll.u32 %v3275, 16
      %v3511 = vrot.slane %v3509, 5
      %v3512 = vsel %vm1110, %v3507, %v3511
      %v3514 = vshrl.u32 %v3276, 16
      %v3516 = vrot.slane %v3514, 4
      %v3517 = vshll.u32 %v3276, 16
      %v3519 = vrot.slane %v3517, 5
      %v3520 = vor.u32 %v3516, %v3519
      %v3521 = vrot.slane %v3520, 4
      %v3523 = vshll.u32 %v3277, 16
      %v3525 = vrot.slane %v3523, 5
      %v3526 = vsel %vm1110, %v3521, %v3525
      %v3527 = vshrl.u32 %v3277, 16
      %v3529 = vrot.slane %v3527, 4
      %v3530 = vor.u32 %v3529, %v3525
      %v3531 = vrot.slane %v3530, 4
      %v3533 = vshll.u32 %v3278, 16
      %v3535 = vrot.slane %v3533, 5
      %v3536 = vsel %vm1110, %v3531, %v3535
      %v3538 = vshrl.u32 %v3279, 16
      %v3540 = vrot.slane %v3538, 4
      %v3541 = vshll.u32 %v3279, 16
      %v3543 = vrot.slane %v3541, 5
      %v3544 = vor.u32 %v3540, %v3543
      %v3545 = vrot.slane %v3544, 4
      %v3547 = vshll.u32 %v3280, 16
      %v3549 = vrot.slane %v3547, 5
      %v3550 = vsel %vm1110, %v3545, %v3549
      %v3551 = vshrl.u32 %v3280, 16
      %v3553 = vrot.slane %v3551, 4
      %v3554 = vor.u32 %v3553, %v3549
      %v3555 = vrot.slane %v3554, 4
      %v3557 = vshll.u32 %v3281, 16
      %v3559 = vrot.slane %v3557, 5
      %v3560 = vsel %vm1110, %v3555, %v3559
      %v3562 = vshrl.u32 %v3282, 16
      %v3564 = vrot.slane %v3562, 4
      %v3565 = vshll.u32 %v3282, 16
      %v3567 = vrot.slane %v3565, 5
      %v3568 = vor.u32 %v3564, %v3567
      %v3569 = vrot.slane %v3568, 4
      %v3571 = vshll.u32 %v3283, 16
      %v3573 = vrot.slane %v3571, 5
      %v3574 = vsel %vm1110, %v3569, %v3573
      %v3575 = vshrl.u32 %v3283, 16
      %v3577 = vrot.slane %v3575, 4
      %v3578 = vor.u32 %v3577, %v3573
      %v3579 = vrot.slane %v3578, 4
      %v3581 = vshll.u32 %v3284, 16
      %v3583 = vrot.slane %v3581, 5
      %v3584 = vsel %vm1110, %v3579, %v3583
      %v3586 = vshrl.u32 %v3285, 16
      %v3588 = vrot.slane %v3586, 4
      %v3589 = vshll.u32 %v3285, 16
      %v3591 = vrot.slane %v3589, 5
      %v3592 = vor.u32 %v3588, %v3591
      %v3593 = vrot.slane %v3592, 4
      %v3595 = vshll.u32 %v3286, 16
      %v3597 = vrot.slane %v3595, 5
      %v3598 = vsel %vm1110, %v3593, %v3597
      %v3599 = vshrl.u32 %v3286, 16
      %v3601 = vrot.slane %v3599, 4
      %v3602 = vor.u32 %v3601, %v3597
      %v3603 = vrot.slane %v3602, 4
      %v3605 = vshll.u32 %v3287, 16
      %v3607 = vrot.slane %v3605, 5
      %v3608 = vsel %vm1110, %v3603, %v3607
      %v3610 = vshrl.u32 %v3288, 16
      %v3612 = vrot.slane %v3610, 4
      %v3613 = vshll.u32 %v3288, 16
      %v3615 = vrot.slane %v3613, 5
      %v3616 = vor.u32 %v3612, %v3615
      %v3617 = vrot.slane %v3616, 4
      %v3619 = vshll.u32 %v3289, 16
      %v3621 = vrot.slane %v3619, 5
      %v3622 = vsel %vm1110, %v3617, %v3621
      %v3623 = vshrl.u32 %v3289, 16
      %v3625 = vrot.slane %v3623, 4
      %v3626 = vor.u32 %v3625, %v3621
      %v3627 = vrot.slane %v3626, 4
      %v3629 = vshll.u32 %v3290, 16
      %v3631 = vrot.slane %v3629, 5
      %v3632 = vsel %vm1110, %v3627, %v3631
      %v3634 = vshrl.u32 %v3291, 16
      %v3636 = vrot.slane %v3634, 4
      %v3637 = vshll.u32 %v3291, 16
      %v3639 = vrot.slane %v3637, 5
      %v3640 = vor.u32 %v3636, %v3639
      %v3641 = vrot.slane %v3640, 4
      %v3643 = vshll.u32 %v3292, 16
      %v3645 = vrot.slane %v3643, 5
      %v3646 = vsel %vm1110, %v3641, %v3645
      %v3647 = vshrl.u32 %v3292, 16
      %v3649 = vrot.slane %v3647, 4
      %v3650 = vor.u32 %v3649, %v3645
      %v3651 = vrot.slane %v3650, 4
      %v3653 = vshll.u32 %v3293, 16
      %v3655 = vrot.slane %v3653, 5
      %v3656 = vsel %vm1110, %v3651, %v3655
      %v3658 = vshrl.u32 %v3294, 16
      %v3660 = vrot.slane %v3658, 4
      %v3661 = vshll.u32 %v3294, 16
      %v3663 = vrot.slane %v3661, 5
      %v3664 = vor.u32 %v3660, %v3663
      %v3665 = vrot.slane %v3664, 4
      %v3667 = vshll.u32 %v3295, 16
      %v3669 = vrot.slane %v3667, 5
      %v3670 = vsel %vm1110, %v3665, %v3669
      %v3671 = vshrl.u32 %v3295, 16
      %v3673 = vrot.slane %v3671, 4
      %v3674 = vor.u32 %v3673, %v3669
      %v3675 = vrot.slane %v3674, 4
      %v3677 = vshll.u32 %v3296, 16
      %v3679 = vrot.slane %v3677, 5
      %v3680 = vsel %vm1110, %v3675, %v3679
      %3681 = vrot.lane.b32.xlu0 %v3310, 56
      %v3682 = vpop.permute.xlu0 %3681
      %3683 = vrot.lane.b32.xlu0 %v3320, 56
      %v3684 = vpop.permute.xlu0 %3683
      %3685 = vrot.lane.b32.xlu0 %v3334, 56
      %v3686 = vpop.permute.xlu0 %3685
      %3687 = vrot.lane.b32.xlu0 %v3344, 56
      %v3688 = vpop.permute.xlu0 %3687
      %3689 = vrot.lane.b32.xlu0 %v3358, 56
      %v3690 = vpop.permute.xlu0 %3689
      %3691 = vrot.lane.b32.xlu0 %v3368, 56
      %v3692 = vpop.permute.xlu0 %3691
      %3693 = vrot.lane.b32.xlu0 %v3382, 56
      %v3694 = vpop.permute.xlu0 %3693
      %3695 = vrot.lane.b32.xlu0 %v3392, 56
      %v3696 = vpop.permute.xlu0 %3695
      %3697 = vrot.lane.b32.xlu0 %v3406, 56
      %v3698 = vpop.permute.xlu0 %3697
      %3699 = vrot.lane.b32.xlu0 %v3416, 56
      %v3700 = vpop.permute.xlu0 %3699
      %3701 = vrot.lane.b32.xlu0 %v3430, 56
      %v3702 = vpop.permute.xlu0 %3701
      %3703 = vrot.lane.b32.xlu0 %v3440, 56
      %v3704 = vpop.permute.xlu0 %3703
      %3705 = vrot.lane.b32.xlu0 %v3454, 56
      %v3706 = vpop.permute.xlu0 %3705
      %3707 = vrot.lane.b32.xlu0 %v3464, 56
      %v3708 = vpop.permute.xlu0 %3707
      %3709 = vrot.lane.b32.xlu0 %v3478, 56
      %v3710 = vpop.permute.xlu0 %3709
      %3711 = vrot.lane.b32.xlu0 %v3488, 56
      %v3712 = vpop.permute.xlu0 %3711
      %3713 = vrot.lane.b32.xlu0 %v3502, 56
      %v3714 = vpop.permute.xlu0 %3713
      %3715 = vrot.lane.b32.xlu0 %v3512, 56
      %v3716 = vpop.permute.xlu0 %3715
      %3717 = vrot.lane.b32.xlu0 %v3526, 56
      %v3718 = vpop.permute.xlu0 %3717
      %3719 = vrot.lane.b32.xlu0 %v3536, 56
      %v3720 = vpop.permute.xlu0 %3719
      %3721 = vrot.lane.b32.xlu0 %v3550, 56
      %v3722 = vpop.permute.xlu0 %3721
      %3723 = vrot.lane.b32.xlu0 %v3560, 56
      %v3724 = vpop.permute.xlu0 %3723
      %3725 = vrot.lane.b32.xlu0 %v3574, 56
      %v3726 = vpop.permute.xlu0 %3725
      %3727 = vrot.lane.b32.xlu0 %v3584, 56
      %v3728 = vpop.permute.xlu0 %3727
      %3729 = vrot.lane.b32.xlu0 %v3598, 56
      %v3730 = vpop.permute.xlu0 %3729
      %3731 = vrot.lane.b32.xlu0 %v3608, 56
      %v3732 = vpop.permute.xlu0 %3731
      %3733 = vrot.lane.b32.xlu0 %v3622, 56
      %v3734 = vpop.permute.xlu0 %3733
      %3735 = vrot.lane.b32.xlu0 %v3632, 56
      %v3736 = vpop.permute.xlu0 %3735
      %3737 = vrot.lane.b32.xlu0 %v3646, 56
      %v3738 = vpop.permute.xlu0 %3737
      %3739 = vrot.lane.b32.xlu0 %v3656, 56
      %v3740 = vpop.permute.xlu0 %3739
      %3741 = vrot.lane.b32.xlu0 %v3670, 56
      %v3742 = vpop.permute.xlu0 %3741
      %3743 = vrot.lane.b32.xlu0 %v3680, 56
      %v3744 = vpop.permute.xlu0 %3743
      %vm3777 = vcmask 519616
      %3778 = vst.msk [vmem:[#allocation3] sm:$0xf] %vm3777, %v3682
      %3779 = vst.msk [vmem:[#allocation3 + $0x4] sm:$0xf] %vm3777, %v3684
      %3780 = vst.msk [vmem:[#allocation3 + $0x8] sm:$0xf] %vm3777, %v3686
      %3781 = vst.msk [vmem:[#allocation3 + $0xc] sm:$0xf] %vm3777, %v3688
      %3782 = vst.msk [vmem:[#allocation3 + $0x10] sm:$0xf] %vm3777, %v3690
      %3783 = vst.msk [vmem:[#allocation3 + $0x14] sm:$0xf] %vm3777, %v3692
      %3784 = vst.msk [vmem:[#allocation3 + $0x18] sm:$0xf] %vm3777, %v3694
      %3785 = vst.msk [vmem:[#allocation3 + $0x1c] sm:$0xf] %vm3777, %v3696
      %3786 = vst.msk [vmem:[#allocation3 + $0x20] sm:$0xf] %vm3777, %v3698
      %3787 = vst.msk [vmem:[#allocation3 + $0x24] sm:$0xf] %vm3777, %v3700
      %3788 = vst.msk [vmem:[#allocation3 + $0x28] sm:$0xf] %vm3777, %v3702
      %3789 = vst.msk [vmem:[#allocation3 + $0x2c] sm:$0xf] %vm3777, %v3704
      %3790 = vst.msk [vmem:[#allocation3 + $0x30] sm:$0xf] %vm3777, %v3706
      %3791 = vst.msk [vmem:[#allocation3 + $0x34] sm:$0xf] %vm3777, %v3708
      %3792 = vst.msk [vmem:[#allocation3 + $0x38] sm:$0xf] %vm3777, %v3710
      %3793 = vst.msk [vmem:[#allocation3 + $0x3c] sm:$0xf] %vm3777, %v3712
      %3794 = vst.msk [vmem:[#allocation3 + $0x40] sm:$0xf] %vm3777, %v3714
      %3795 = vst.msk [vmem:[#allocation3 + $0x44] sm:$0xf] %vm3777, %v3716
      %3796 = vst.msk [vmem:[#allocation3 + $0x48] sm:$0xf] %vm3777, %v3718
      %3797 = vst.msk [vmem:[#allocation3 + $0x4c] sm:$0xf] %vm3777, %v3720
      %3798 = vst.msk [vmem:[#allocation3 + $0x50] sm:$0xf] %vm3777, %v3722
      %3799 = vst.msk [vmem:[#allocation3 + $0x54] sm:$0xf] %vm3777, %v3724
      %3800 = vst.msk [vmem:[#allocation3 + $0x58] sm:$0xf] %vm3777, %v3726
      %3801 = vst.msk [vmem:[#allocation3 + $0x5c] sm:$0xf] %vm3777, %v3728
      %3802 = vst.msk [vmem:[#allocation3 + $0x60] sm:$0xf] %vm3777, %v3730
      %3803 = vst.msk [vmem:[#allocation3 + $0x64] sm:$0xf] %vm3777, %v3732
      %3804 = vst.msk [vmem:[#allocation3 + $0x68] sm:$0xf] %vm3777, %v3734
      %3805 = vst.msk [vmem:[#allocation3 + $0x6c] sm:$0xf] %vm3777, %v3736
      %3806 = vst.msk [vmem:[#allocation3 + $0x70] sm:$0xf] %vm3777, %v3738
      %3807 = vst.msk [vmem:[#allocation3 + $0x74] sm:$0xf] %vm3777, %v3740
      %3808 = vst.msk [vmem:[#allocation3 + $0x78] sm:$0xf] %vm3777, %v3742
      %3809 = vst.msk [vmem:[#allocation3 + $0x7c] sm:$0xf] %vm3777, %v3744
      %v3810 = vld [vmem:[%s3055] sm:$0xe]
      %v3811 = vld [vmem:[%s3055 + $0x4] sm:$0xf]
      %v3812 = vld [vmem:[%s3055 + $0x8] sm:$0x1]
      %v3813 = vld [vmem:[%s3055 + $0xc] sm:$0xe]
      %v3814 = vld [vmem:[%s3055 + $0x10] sm:$0xf]
      %v3815 = vld [vmem:[%s3055 + $0x14] sm:$0x1]
      %v3816 = vld [vmem:[%s3055 + $0x18] sm:$0xe]
      %v3817 = vld [vmem:[%s3055 + $0x1c] sm:$0xf]
      %v3818 = vld [vmem:[%s3055 + $0x20] sm:$0x1]
      %v3819 = vld [vmem:[%s3055 + $0x24] sm:$0xe]
      %v3820 = vld [vmem:[%s3055 + $0x28] sm:$0xf]
      %v3821 = vld [vmem:[%s3055 + $0x2c] sm:$0x1]
      %v3822 = vld [vmem:[%s3055 + $0x30] sm:$0xe]
      %v3823 = vld [vmem:[%s3055 + $0x34] sm:$0xf]
      %v3824 = vld [vmem:[%s3055 + $0x38] sm:$0x1]
      %v3825 = vld [vmem:[%s3055 + $0x3c] sm:$0xe]
      %v3826 = vld [vmem:[%s3055 + $0x40] sm:$0xf]
      %v3827 = vld [vmem:[%s3055 + $0x44] sm:$0x1]
      %v3828 = vld [vmem:[%s3055 + $0x48] sm:$0xe]
      %v3829 = vld [vmem:[%s3055 + $0x4c] sm:$0xf]
      %v3830 = vld [vmem:[%s3055 + $0x50] sm:$0x1]
      %v3831 = vld [vmem:[%s3055 + $0x54] sm:$0xe]
      %v3832 = vld [vmem:[%s3055 + $0x58] sm:$0xf]
      %v3833 = vld [vmem:[%s3055 + $0x5c] sm:$0x1]
      %v3834 = vld [vmem:[%s3055 + $0x60] sm:$0xe]
      %v3835 = vld [vmem:[%s3055 + $0x64] sm:$0xf]
      %v3836 = vld [vmem:[%s3055 + $0x68] sm:$0x1]
      %v3837 = vld [vmem:[%s3055 + $0x6c] sm:$0xe]
      %v3838 = vld [vmem:[%s3055 + $0x70] sm:$0xf]
      %v3839 = vld [vmem:[%s3055 + $0x74] sm:$0x1]
      %v3840 = vld [vmem:[%s3055 + $0x78] sm:$0xe]
      %v3841 = vld [vmem:[%s3055 + $0x7c] sm:$0xf]
      %v3842 = vld [vmem:[%s3055 + $0x80] sm:$0x1]
      %v3843 = vld [vmem:[%s3055 + $0x84] sm:$0xe]
      %v3844 = vld [vmem:[%s3055 + $0x88] sm:$0xf]
      %v3845 = vld [vmem:[%s3055 + $0x8c] sm:$0x1]
      %v3846 = vld [vmem:[%s3055 + $0x90] sm:$0xe]
      %v3847 = vld [vmem:[%s3055 + $0x94] sm:$0xf]
      %v3848 = vld [vmem:[%s3055 + $0x98] sm:$0x1]
      %v3849 = vld [vmem:[%s3055 + $0x9c] sm:$0xe]
      %v3850 = vld [vmem:[%s3055 + $0xa0] sm:$0xf]
      %v3851 = vld [vmem:[%s3055 + $0xa4] sm:$0x1]
      %v3852 = vld [vmem:[%s3055 + $0xa8] sm:$0xe]
      %v3853 = vld [vmem:[%s3055 + $0xac] sm:$0xf]
      %v3854 = vld [vmem:[%s3055 + $0xb0] sm:$0x1]
      %v3855 = vld [vmem:[%s3055 + $0xb4] sm:$0xe]
      %v3856 = vld [vmem:[%s3055 + $0xb8] sm:$0xf]
      %v3857 = vld [vmem:[%s3055 + $0xbc] sm:$0x1]
      %v3906 = vrot.slane %v3810, 5
      %v3907 = vrot.slane %v3906, 4
      %v3908 = vrot.slane %v3811, 5
      %v3909 = vsel %vm1722, %v3907, %v3908
      %v3910 = vrot.slane %v3908, 4
      %v3911 = vrot.slane %v3812, 5
      %v3912 = vsel %vm1722, %v3910, %v3911
      %v3913 = vrot.slane %v3813, 5
      %v3914 = vrot.slane %v3913, 4
      %v3915 = vrot.slane %v3814, 5
      %v3916 = vsel %vm1722, %v3914, %v3915
      %v3917 = vrot.slane %v3915, 4
      %v3918 = vrot.slane %v3815, 5
      %v3919 = vsel %vm1722, %v3917, %v3918
      %v3920 = vrot.slane %v3816, 5
      %v3921 = vrot.slane %v3920, 4
      %v3922 = vrot.slane %v3817, 5
      %v3923 = vsel %vm1722, %v3921, %v3922
      %v3924 = vrot.slane %v3922, 4
      %v3925 = vrot.slane %v3818, 5
      %v3926 = vsel %vm1722, %v3924, %v3925
      %v3927 = vrot.slane %v3819, 5
      %v3928 = vrot.slane %v3927, 4
      %v3929 = vrot.slane %v3820, 5
      %v3930 = vsel %vm1722, %v3928, %v3929
      %v3931 = vrot.slane %v3929, 4
      %v3932 = vrot.slane %v3821, 5
      %v3933 = vsel %vm1722, %v3931, %v3932
      %v3934 = vrot.slane %v3822, 5
      %v3935 = vrot.slane %v3934, 4
      %v3936 = vrot.slane %v3823, 5
      %v3937 = vsel %vm1722, %v3935, %v3936
      %v3938 = vrot.slane %v3936, 4
      %v3939 = vrot.slane %v3824, 5
      %v3940 = vsel %vm1722, %v3938, %v3939
      %v3941 = vrot.slane %v3825, 5
      %v3942 = vrot.slane %v3941, 4
      %v3943 = vrot.slane %v3826, 5
      %v3944 = vsel %vm1722, %v3942, %v3943
      %v3945 = vrot.slane %v3943, 4
      %v3946 = vrot.slane %v3827, 5
      %v3947 = vsel %vm1722, %v3945, %v3946
      %v3948 = vrot.slane %v3828, 5
      %v3949 = vrot.slane %v3948, 4
      %v3950 = vrot.slane %v3829, 5
      %v3951 = vsel %vm1722, %v3949, %v3950
      %v3952 = vrot.slane %v3950, 4
      %v3953 = vrot.slane %v3830, 5
      %v3954 = vsel %vm1722, %v3952, %v3953
      %v3955 = vrot.slane %v3831, 5
      %v3956 = vrot.slane %v3955, 4
      %v3957 = vrot.slane %v3832, 5
      %v3958 = vsel %vm1722, %v3956, %v3957
      %v3959 = vrot.slane %v3957, 4
      %v3960 = vrot.slane %v3833, 5
      %v3961 = vsel %vm1722, %v3959, %v3960
      %v3962 = vrot.slane %v3834, 5
      %v3963 = vrot.slane %v3962, 4
      %v3964 = vrot.slane %v3835, 5
      %v3965 = vsel %vm1722, %v3963, %v3964
      %v3966 = vrot.slane %v3964, 4
      %v3967 = vrot.slane %v3836, 5
      %v3968 = vsel %vm1722, %v3966, %v3967
      %v3969 = vrot.slane %v3837, 5
      %v3970 = vrot.slane %v3969, 4
      %v3971 = vrot.slane %v3838, 5
      %v3972 = vsel %vm1722, %v3970, %v3971
      %v3973 = vrot.slane %v3971, 4
      %v3974 = vrot.slane %v3839, 5
      %v3975 = vsel %vm1722, %v3973, %v3974
      %v3976 = vrot.slane %v3840, 5
      %v3977 = vrot.slane %v3976, 4
      %v3978 = vrot.slane %v3841, 5
      %v3979 = vsel %vm1722, %v3977, %v3978
      %v3980 = vrot.slane %v3978, 4
      %v3981 = vrot.slane %v3842, 5
      %v3982 = vsel %vm1722, %v3980, %v3981
      %v3983 = vrot.slane %v3843, 5
      %v3984 = vrot.slane %v3983, 4
      %v3985 = vrot.slane %v3844, 5
      %v3986 = vsel %vm1722, %v3984, %v3985
      %v3987 = vrot.slane %v3985, 4
      %v3988 = vrot.slane %v3845, 5
      %v3989 = vsel %vm1722, %v3987, %v3988
      %v3990 = vrot.slane %v3846, 5
      %v3991 = vrot.slane %v3990, 4
      %v3992 = vrot.slane %v3847, 5
      %v3993 = vsel %vm1722, %v3991, %v3992
      %v3994 = vrot.slane %v3992, 4
      %v3995 = vrot.slane %v3848, 5
      %v3996 = vsel %vm1722, %v3994, %v3995
      %v3997 = vrot.slane %v3849, 5
      %v3998 = vrot.slane %v3997, 4
      %v3999 = vrot.slane %v3850, 5
      %v4000 = vsel %vm1722, %v3998, %v3999
      %v4001 = vrot.slane %v3999, 4
      %v4002 = vrot.slane %v3851, 5
      %v4003 = vsel %vm1722, %v4001, %v4002
      %v4004 = vrot.slane %v3852, 5
      %v4005 = vrot.slane %v4004, 4
      %v4006 = vrot.slane %v3853, 5
      %v4007 = vsel %vm1722, %v4005, %v4006
      %v4008 = vrot.slane %v4006, 4
      %v4009 = vrot.slane %v3854, 5
      %v4010 = vsel %vm1722, %v4008, %v4009
      %v4011 = vrot.slane %v3855, 5
      %v4012 = vrot.slane %v4011, 4
      %v4013 = vrot.slane %v3856, 5
      %v4014 = vsel %vm1722, %v4012, %v4013
      %v4015 = vrot.slane %v4013, 4
      %v4016 = vrot.slane %v3857, 5
      %v4017 = vsel %vm1722, %v4015, %v4016
      %4018 = vrot.lane.b32.xlu0 %v3909, 64
      %v4019 = vpop.permute.xlu0 %4018
      %4020 = vrot.lane.b32.xlu0 %v3912, 64
      %v4021 = vpop.permute.xlu0 %4020
      %4022 = vrot.lane.b32.xlu0 %v3916, 64
      %v4023 = vpop.permute.xlu0 %4022
      %4024 = vrot.lane.b32.xlu0 %v3919, 64
      %v4025 = vpop.permute.xlu0 %4024
      %4026 = vrot.lane.b32.xlu0 %v3923, 64
      %v4027 = vpop.permute.xlu0 %4026
      %4028 = vrot.lane.b32.xlu0 %v3926, 64
      %v4029 = vpop.permute.xlu0 %4028
      %4030 = vrot.lane.b32.xlu0 %v3930, 64
      %v4031 = vpop.permute.xlu0 %4030
      %4032 = vrot.lane.b32.xlu0 %v3933, 64
      %v4033 = vpop.permute.xlu0 %4032
      %4034 = vrot.lane.b32.xlu0 %v3937, 64
      %v4035 = vpop.permute.xlu0 %4034
      %4036 = vrot.lane.b32.xlu0 %v3940, 64
      %v4037 = vpop.permute.xlu0 %4036
      %4038 = vrot.lane.b32.xlu0 %v3944, 64
      %v4039 = vpop.permute.xlu0 %4038
      %4040 = vrot.lane.b32.xlu0 %v3947, 64
      %v4041 = vpop.permute.xlu0 %4040
      %4042 = vrot.lane.b32.xlu0 %v3951, 64
      %v4043 = vpop.permute.xlu0 %4042
      %4044 = vrot.lane.b32.xlu0 %v3954, 64
      %v4045 = vpop.permute.xlu0 %4044
      %4046 = vrot.lane.b32.xlu0 %v3958, 64
      %v4047 = vpop.permute.xlu0 %4046
      %4048 = vrot.lane.b32.xlu0 %v3961, 64
      %v4049 = vpop.permute.xlu0 %4048
      %4050 = vrot.lane.b32.xlu0 %v3965, 64
      %v4051 = vpop.permute.xlu0 %4050
      %4052 = vrot.lane.b32.xlu0 %v3968, 64
      %v4053 = vpop.permute.xlu0 %4052
      %4054 = vrot.lane.b32.xlu0 %v3972, 64
      %v4055 = vpop.permute.xlu0 %4054
      %4056 = vrot.lane.b32.xlu0 %v3975, 64
      %v4057 = vpop.permute.xlu0 %4056
      %4058 = vrot.lane.b32.xlu0 %v3979, 64
      %v4059 = vpop.permute.xlu0 %4058
      %4060 = vrot.lane.b32.xlu0 %v3982, 64
      %v4061 = vpop.permute.xlu0 %4060
      %4062 = vrot.lane.b32.xlu0 %v3986, 64
      %v4063 = vpop.permute.xlu0 %4062
      %4064 = vrot.lane.b32.xlu0 %v3989, 64
      %v4065 = vpop.permute.xlu0 %4064
      %4066 = vrot.lane.b32.xlu0 %v3993, 64
      %v4067 = vpop.permute.xlu0 %4066
      %4068 = vrot.lane.b32.xlu0 %v3996, 64
      %v4069 = vpop.permute.xlu0 %4068
      %4070 = vrot.lane.b32.xlu0 %v4000, 64
      %v4071 = vpop.permute.xlu0 %4070
      %4072 = vrot.lane.b32.xlu0 %v4003, 64
      %v4073 = vpop.permute.xlu0 %4072
      %4074 = vrot.lane.b32.xlu0 %v4007, 64
      %v4075 = vpop.permute.xlu0 %4074
      %4076 = vrot.lane.b32.xlu0 %v4010, 64
      %v4077 = vpop.permute.xlu0 %4076
      %4078 = vrot.lane.b32.xlu0 %v4014, 64
      %v4079 = vpop.permute.xlu0 %4078
      %4080 = vrot.lane.b32.xlu0 %v4017, 64
      %v4081 = vpop.permute.xlu0 %4080
      %vm4114 = vcmask 585216
      %4115 = vst.msk [vmem:[#allocation3] sm:$0xf] %vm4114, %v4019
      %4116 = vst.msk [vmem:[#allocation3 + $0x4] sm:$0xf] %vm4114, %v4021
      %4117 = vst.msk [vmem:[#allocation3 + $0x8] sm:$0xf] %vm4114, %v4023
      %4118 = vst.msk [vmem:[#allocation3 + $0xc] sm:$0xf] %vm4114, %v4025
      %4119 = vst.msk [vmem:[#allocation3 + $0x10] sm:$0xf] %vm4114, %v4027
      %4120 = vst.msk [vmem:[#allocation3 + $0x14] sm:$0xf] %vm4114, %v4029
      %4121 = vst.msk [vmem:[#allocation3 + $0x18] sm:$0xf] %vm4114, %v4031
      %4122 = vst.msk [vmem:[#allocation3 + $0x1c] sm:$0xf] %vm4114, %v4033
      %4123 = vst.msk [vmem:[#allocation3 + $0x20] sm:$0xf] %vm4114, %v4035
      %4124 = vst.msk [vmem:[#allocation3 + $0x24] sm:$0xf] %vm4114, %v4037
      %4125 = vst.msk [vmem:[#allocation3 + $0x28] sm:$0xf] %vm4114, %v4039
      %4126 = vst.msk [vmem:[#allocation3 + $0x2c] sm:$0xf] %vm4114, %v4041
      %4127 = vst.msk [vmem:[#allocation3 + $0x30] sm:$0xf] %vm4114, %v4043
      %4128 = vst.msk [vmem:[#allocation3 + $0x34] sm:$0xf] %vm4114, %v4045
      %4129 = vst.msk [vmem:[#allocation3 + $0x38] sm:$0xf] %vm4114, %v4047
      %4130 = vst.msk [vmem:[#allocation3 + $0x3c] sm:$0xf] %vm4114, %v4049
      %4131 = vst.msk [vmem:[#allocation3 + $0x40] sm:$0xf] %vm4114, %v4051
      %4132 = vst.msk [vmem:[#allocation3 + $0x44] sm:$0xf] %vm4114, %v4053
      %4133 = vst.msk [vmem:[#allocation3 + $0x48] sm:$0xf] %vm4114, %v4055
      %4134 = vst.msk [vmem:[#allocation3 + $0x4c] sm:$0xf] %vm4114, %v4057
      %4135 = vst.msk [vmem:[#allocation3 + $0x50] sm:$0xf] %vm4114, %v4059
      %4136 = vst.msk [vmem:[#allocation3 + $0x54] sm:$0xf] %vm4114, %v4061
      %4137 = vst.msk [vmem:[#allocation3 + $0x58] sm:$0xf] %vm4114, %v4063
      %4138 = vst.msk [vmem:[#allocation3 + $0x5c] sm:$0xf] %vm4114, %v4065
      %4139 = vst.msk [vmem:[#allocation3 + $0x60] sm:$0xf] %vm4114, %v4067
      %4140 = vst.msk [vmem:[#allocation3 + $0x64] sm:$0xf] %vm4114, %v4069
      %4141 = vst.msk [vmem:[#allocation3 + $0x68] sm:$0xf] %vm4114, %v4071
      %4142 = vst.msk [vmem:[#allocation3 + $0x6c] sm:$0xf] %vm4114, %v4073
      %4143 = vst.msk [vmem:[#allocation3 + $0x70] sm:$0xf] %vm4114, %v4075
      %4144 = vst.msk [vmem:[#allocation3 + $0x74] sm:$0xf] %vm4114, %v4077
      %4145 = vst.msk [vmem:[#allocation3 + $0x78] sm:$0xf] %vm4114, %v4079
      %4146 = vst.msk [vmem:[#allocation3 + $0x7c] sm:$0xf] %vm4114, %v4081
      %v4147 = vld [vmem:[#allocation3] sm:$0xf]
      %v4148 = vld [vmem:[#allocation3 + $0x4] sm:$0xf]
      %v4149 = vld [vmem:[#allocation3 + $0x8] sm:$0xf]
      %v4150 = vld [vmem:[#allocation3 + $0xc] sm:$0xf]
      %v4151 = vld [vmem:[#allocation3 + $0x10] sm:$0xf]
      %v4152 = vld [vmem:[#allocation3 + $0x14] sm:$0xf]
      %v4153 = vld [vmem:[#allocation3 + $0x18] sm:$0xf]
      %v4154 = vld [vmem:[#allocation3 + $0x1c] sm:$0xf]
      %v4155 = vld [vmem:[#allocation3 + $0x20] sm:$0xf]
      %v4156 = vld [vmem:[#allocation3 + $0x24] sm:$0xf]
      %v4157 = vld [vmem:[#allocation3 + $0x28] sm:$0xf]
      %v4158 = vld [vmem:[#allocation3 + $0x2c] sm:$0xf]
      %v4159 = vld [vmem:[#allocation3 + $0x30] sm:$0xf]
      %v4160 = vld [vmem:[#allocation3 + $0x34] sm:$0xf]
      %v4161 = vld [vmem:[#allocation3 + $0x38] sm:$0xf]
      %v4162 = vld [vmem:[#allocation3 + $0x3c] sm:$0xf]
      %v4163 = vld [vmem:[#allocation3 + $0x40] sm:$0xf]
      %v4164 = vld [vmem:[#allocation3 + $0x44] sm:$0xf]
      %v4165 = vld [vmem:[#allocation3 + $0x48] sm:$0xf]
      %v4166 = vld [vmem:[#allocation3 + $0x4c] sm:$0xf]
      %v4167 = vld [vmem:[#allocation3 + $0x50] sm:$0xf]
      %v4168 = vld [vmem:[#allocation3 + $0x54] sm:$0xf]
      %v4169 = vld [vmem:[#allocation3 + $0x58] sm:$0xf]
      %v4170 = vld [vmem:[#allocation3 + $0x5c] sm:$0xf]
      %v4171 = vld [vmem:[#allocation3 + $0x60] sm:$0xf]
      %v4172 = vld [vmem:[#allocation3 + $0x64] sm:$0xf]
      %v4173 = vld [vmem:[#allocation3 + $0x68] sm:$0xf]
      %v4174 = vld [vmem:[#allocation3 + $0x6c] sm:$0xf]
      %v4175 = vld [vmem:[#allocation3 + $0x70] sm:$0xf]
      %v4176 = vld [vmem:[#allocation3 + $0x74] sm:$0xf]
      %v4177 = vld [vmem:[#allocation3 + $0x78] sm:$0xf]
      %v4178 = vld [vmem:[#allocation3 + $0x7c] sm:$0xf]
      %v4179 = vld [vmem:[%s1] sm:$0xf]
      %v4180 = vld [vmem:[%s1 + $0x4] sm:$0xf]
      %v4181 = vld [vmem:[%s1 + $0x8] sm:$0xf]
      %v4182 = vld [vmem:[%s1 + $0xc] sm:$0xf]
      %v4183 = vld [vmem:[%s1 + $0x10] sm:$0xf]
      %v4184 = vld [vmem:[%s1 + $0x14] sm:$0xf]
      %v4185 = vld [vmem:[%s1 + $0x18] sm:$0xf]
      %v4186 = vld [vmem:[%s1 + $0x1c] sm:$0xf]
      %v4187 = vld [vmem:[%s1 + $0x20] sm:$0xf]
      %v4189 = vlaneseq
      %v4190 = vshrl.u32 %v4189, 7
      %v4191 = vsub.s32 0, %v4190
      %v4192 = vrot.slane %v461, %v4191
      %v4226 = vunpack.c.l.b16 %v4147
      %v4227 = vunpack.c.l.b16 %v4148
      %v4228 = vunpack.c.l.b16 %v4149
      %v4229 = vunpack.c.l.b16 %v4150
      %v4230 = vunpack.c.l.b16 %v4151
      %v4231 = vunpack.c.l.b16 %v4152
      %v4232 = vunpack.c.l.b16 %v4153
      %v4233 = vunpack.c.l.b16 %v4154
      %v4234 = vunpack.c.l.b16 %v4155
      %v4235 = vunpack.c.l.b16 %v4156
      %v4236 = vunpack.c.l.b16 %v4157
      %v4237 = vunpack.c.l.b16 %v4158
      %v4238 = vunpack.c.l.b16 %v4159
      %v4239 = vunpack.c.l.b16 %v4160
      %v4240 = vunpack.c.l.b16 %v4161
      %v4241 = vunpack.c.l.b16 %v4162
      %v4242 = vunpack.c.l.b16 %v4163
      %v4243 = vunpack.c.l.b16 %v4164
      %v4244 = vunpack.c.l.b16 %v4165
      %v4245 = vunpack.c.l.b16 %v4166
      %v4246 = vunpack.c.l.b16 %v4167
      %v4247 = vunpack.c.l.b16 %v4168
      %v4248 = vunpack.c.l.b16 %v4169
      %v4249 = vunpack.c.l.b16 %v4170
      %v4250 = vunpack.c.l.b16 %v4171
      %v4251 = vunpack.c.l.b16 %v4172
      %v4252 = vunpack.c.l.b16 %v4173
      %v4253 = vunpack.c.l.b16 %v4174
      %v4254 = vunpack.c.l.b16 %v4175
      %v4255 = vunpack.c.l.b16 %v4176
      %v4256 = vunpack.c.l.b16 %v4177
      %v4257 = vunpack.c.l.b16 %v4178
      %v4258 = vpack.c.b16 %v4227, %v4226
      %v4259 = vpack.c.b16 %v4229, %v4228
      %v4260 = vpack.c.b16 %v4231, %v4230
      %v4261 = vpack.c.b16 %v4233, %v4232
      %v4262 = vpack.c.b16 %v4235, %v4234
      %v4263 = vpack.c.b16 %v4237, %v4236
      %v4264 = vpack.c.b16 %v4239, %v4238
      %v4265 = vpack.c.b16 %v4241, %v4240
      %v4266 = vpack.c.b16 %v4243, %v4242
      %v4267 = vpack.c.b16 %v4245, %v4244
      %v4268 = vpack.c.b16 %v4247, %v4246
      %v4269 = vpack.c.b16 %v4249, %v4248
      %v4270 = vpack.c.b16 %v4251, %v4250
      %v4271 = vpack.c.b16 %v4253, %v4252
      %v4272 = vpack.c.b16 %v4255, %v4254
      %v4273 = vpack.c.b16 %v4257, %v4256
      %v4283 = vunpack.c.l.b16 %v4179
      %v4284 = vunpack.c.l.b16 %v4180
      %v4285 = vunpack.c.l.b16 %v4181
      %v4286 = vunpack.c.l.b16 %v4182
      %v4287 = vunpack.c.l.b16 %v4183
      %v4288 = vunpack.c.l.b16 %v4184
      %v4289 = vunpack.c.l.b16 %v4185
      %v4290 = vunpack.c.l.b16 %v4186
      %v4291 = vunpack.c.l.b16 %v4187
      %v4292 = vpack.c.b16 %v4284, %v4283
      %v4293 = vpack.c.b16 %v4286, %v4285
      %v4294 = vpack.c.b16 %v4288, %v4287
      %v4295 = vpack.c.b16 %v4290, %v4289
      %v4296 = vpack.c.b16 %v4291, %v4291
      %vm4301 = vcmask 588800
      %v4303 = vsel %vm4301, %v4258, 0
      %v4306 = vsel %vm4301, %v4259, 0
      %v4309 = vsel %vm4301, %v4260, 0
      %v4312 = vsel %vm4301, %v4261, 0
      %v4315 = vsel %vm4301, %v4262, 0
      %v4318 = vsel %vm4301, %v4263, 0
      %v4321 = vsel %vm4301, %v4264, 0
      %v4324 = vsel %vm4301, %v4265, 0
      %v4327 = vsel %vm4301, %v4266, 0
      %v4330 = vsel %vm4301, %v4267, 0
      %v4333 = vsel %vm4301, %v4268, 0
      %v4336 = vsel %vm4301, %v4269, 0
      %v4339 = vsel %vm4301, %v4270, 0
      %v4342 = vsel %vm4301, %v4271, 0
      %v4345 = vsel %vm4301, %v4272, 0
      %v4348 = vsel %vm4301, %v4273, 0
      %vm4350 = vcmask 1043456
      %v4352 = vsel %vm4350, %v4296, 0
      %4354 = vmatprep.subr.bf16.mxu0 0
      %4355 = vmatpush1.bf16.msra.mxu0 0
      %4356 = vmatprep.subr.bf16.mxu0 0
      %4357 = vmatpush1.bf16.msra.mxu0 0
      %4358 = vmatprep.subr.bf16.mxu0 0
      %4359 = vmatpush1.bf16.msra.mxu0 0
      %4360 = vmatprep.subr.bf16.mxu0 0
      %4361 = vmatpush1.bf16.msra.mxu0 %v4352
      %4362 = vmatprep.subr.bf16.mxu0 0
      %4363 = vmatpush1.bf16.msra.mxu0 %v4295
      %4364 = vmatprep.subr.bf16.mxu0 0
      %4365 = vmatpush1.bf16.msra.mxu0 %v4294
      %4366 = vmatprep.subr.bf16.mxu0 0
      %4367 = vmatpush1.bf16.msra.mxu0 %v4293
      %4368 = vmatprep.subr.bf16.mxu0 0
      %4369 = vmatpush1.bf16.msra.mxu0 %v4292
      %4370 = vmatprep.subr.bf16.mxu0 0
      %4371 = vmatpush2.bf16.msra.mxu0 0
      %4372 = vmatprep.subr.bf16.mxu0 0
      %4373 = vmatpush2.bf16.msra.mxu0 0
      %4374 = vmatprep.subr.bf16.mxu0 0
      %4375 = vmatpush2.bf16.msra.mxu0 0
      %4376 = vmatprep.subr.bf16.mxu0 0
      %4377 = vmatpush2.bf16.msra.mxu0 0
      %4378 = vmatprep.subr.bf16.mxu0 0
      %4379 = vmatpush2.bf16.msra.mxu0 0
      %4380 = vmatprep.subr.bf16.mxu0 0
      %4381 = vmatpush2.bf16.msra.mxu0 0
      %4382 = vmatprep.subr.bf16.mxu0 0
      %4383 = vmatpush2.bf16.msra.mxu0 0
      %4384 = vmatprep.subr.bf16.mxu0 0
      %4385 = vmatpush2.bf16.msra.mxu0 0
      %4386 = vmatprep.mubr.bf16.mxu0 0
      %4387 = vmatmul.mubr.bf16.gmra.mxu0 %v4303
      %v4388 = vpop.f32.mrf.mxu0
      %v4389 = vadd.f32 %v4192, %v4388
      %v4390 = vpop.f32.mrf.mxu0
      %v4391 = vpop.f32.mrf.mxu0
      %v4392 = vadd.f32 %v4192, %v4391
      %v4393 = vpop.f32.mrf.mxu0
      %4394 = vmatprep.mubr.bf16.mxu0 0
      %4395 = vmatmul.mubr.bf16.gmra.mxu0 %v4306
      %v4396 = vpop.f32.mrf.mxu0
      %v4397 = vadd.f32 %v4192, %v4396
      %v4398 = vpop.f32.mrf.mxu0
      %v4399 = vpop.f32.mrf.mxu0
      %v4400 = vadd.f32 %v4192, %v4399
      %v4401 = vpop.f32.mrf.mxu0
      %4402 = vmatprep.mubr.bf16.mxu0 0
      %4403 = vmatmul.mubr.bf16.gmra.mxu0 %v4309
      %v4404 = vpop.f32.mrf.mxu0
      %v4405 = vadd.f32 %v4192, %v4404
      %v4406 = vpop.f32.mrf.mxu0
      %v4407 = vpop.f32.mrf.mxu0
      %v4408 = vadd.f32 %v4192, %v4407
      %v4409 = vpop.f32.mrf.mxu0
      %4410 = vmatprep.mubr.bf16.mxu0 0
      %4411 = vmatmul.mubr.bf16.gmra.mxu0 %v4312
      %v4412 = vpop.f32.mrf.mxu0
      %v4413 = vadd.f32 %v4192, %v4412
      %v4414 = vpop.f32.mrf.mxu0
      %v4415 = vpop.f32.mrf.mxu0
      %v4416 = vadd.f32 %v4192, %v4415
      %v4417 = vpop.f32.mrf.mxu0
      %4418 = vmatprep.mubr.bf16.mxu0 0
      %4419 = vmatmul.mubr.bf16.gmra.mxu0 %v4315
      %v4420 = vpop.f32.mrf.mxu0
      %v4421 = vadd.f32 %v4192, %v4420
      %v4422 = vpop.f32.mrf.mxu0
      %v4423 = vpop.f32.mrf.mxu0
      %v4424 = vadd.f32 %v4192, %v4423
      %v4425 = vpop.f32.mrf.mxu0
      %4426 = vmatprep.mubr.bf16.mxu0 0
      %4427 = vmatmul.mubr.bf16.gmra.mxu0 %v4318
      %v4428 = vpop.f32.mrf.mxu0
      %v4429 = vadd.f32 %v4192, %v4428
      %v4430 = vpop.f32.mrf.mxu0
      %v4431 = vpop.f32.mrf.mxu0
      %v4432 = vadd.f32 %v4192, %v4431
      %v4433 = vpop.f32.mrf.mxu0
      %4434 = vmatprep.mubr.bf16.mxu0 0
      %4435 = vmatmul.mubr.bf16.gmra.mxu0 %v4321
      %v4436 = vpop.f32.mrf.mxu0
      %v4437 = vadd.f32 %v4192, %v4436
      %v4438 = vpop.f32.mrf.mxu0
      %v4439 = vpop.f32.mrf.mxu0
      %v4440 = vadd.f32 %v4192, %v4439
      %v4441 = vpop.f32.mrf.mxu0
      %4442 = vmatprep.mubr.bf16.mxu0 0
      %4443 = vmatmul.mubr.bf16.gmra.mxu0 %v4324
      %v4444 = vpop.f32.mrf.mxu0
      %v4445 = vadd.f32 %v4192, %v4444
      %v4446 = vpop.f32.mrf.mxu0
      %v4447 = vpop.f32.mrf.mxu0
      %v4448 = vadd.f32 %v4192, %v4447
      %v4449 = vpop.f32.mrf.mxu0
      %4450 = vmatprep.mubr.bf16.mxu0 0
      %4451 = vmatmul.mubr.bf16.gmra.mxu0 %v4327
      %v4452 = vpop.f32.mrf.mxu0
      %v4453 = vadd.f32 %v4192, %v4452
      %v4454 = vpop.f32.mrf.mxu0
      %v4455 = vpop.f32.mrf.mxu0
      %v4456 = vadd.f32 %v4192, %v4455
      %v4457 = vpop.f32.mrf.mxu0
      %4458 = vmatprep.mubr.bf16.mxu0 0
      %4459 = vmatmul.mubr.bf16.gmra.mxu0 %v4330
      %v4460 = vpop.f32.mrf.mxu0
      %v4461 = vadd.f32 %v4192, %v4460
      %v4462 = vpop.f32.mrf.mxu0
      %v4463 = vpop.f32.mrf.mxu0
      %v4464 = vadd.f32 %v4192, %v4463
      %v4465 = vpop.f32.mrf.mxu0
      %4466 = vmatprep.mubr.bf16.mxu0 0
      %4467 = vmatmul.mubr.bf16.gmra.mxu0 %v4333
      %v4468 = vpop.f32.mrf.mxu0
      %v4469 = vadd.f32 %v4192, %v4468
      %v4470 = vpop.f32.mrf.mxu0
      %v4471 = vpop.f32.mrf.mxu0
      %v4472 = vadd.f32 %v4192, %v4471
      %v4473 = vpop.f32.mrf.mxu0
      %4474 = vmatprep.mubr.bf16.mxu0 0
      %4475 = vmatmul.mubr.bf16.gmra.mxu0 %v4336
      %v4476 = vpop.f32.mrf.mxu0
      %v4477 = vadd.f32 %v4192, %v4476
      %v4478 = vpop.f32.mrf.mxu0
      %v4479 = vpop.f32.mrf.mxu0
      %v4480 = vadd.f32 %v4192, %v4479
      %v4481 = vpop.f32.mrf.mxu0
      %4482 = vmatprep.mubr.bf16.mxu0 0
      %4483 = vmatmul.mubr.bf16.gmra.mxu0 %v4339
      %v4484 = vpop.f32.mrf.mxu0
      %v4485 = vadd.f32 %v4192, %v4484
      %v4486 = vpop.f32.mrf.mxu0
      %v4487 = vpop.f32.mrf.mxu0
      %v4488 = vadd.f32 %v4192, %v4487
      %v4489 = vpop.f32.mrf.mxu0
      %4490 = vmatprep.mubr.bf16.mxu0 0
      %4491 = vmatmul.mubr.bf16.gmra.mxu0 %v4342
      %v4492 = vpop.f32.mrf.mxu0
      %v4493 = vadd.f32 %v4192, %v4492
      %v4494 = vpop.f32.mrf.mxu0
      %v4495 = vpop.f32.mrf.mxu0
      %v4496 = vadd.f32 %v4192, %v4495
      %v4497 = vpop.f32.mrf.mxu0
      %4498 = vmatprep.mubr.bf16.mxu0 0
      %4499 = vmatmul.mubr.bf16.gmra.mxu0 %v4345
      %v4500 = vpop.f32.mrf.mxu0
      %v4501 = vadd.f32 %v4192, %v4500
      %v4502 = vpop.f32.mrf.mxu0
      %v4503 = vpop.f32.mrf.mxu0
      %v4504 = vadd.f32 %v4192, %v4503
      %v4505 = vpop.f32.mrf.mxu0
      %4506 = vmatprep.mubr.bf16.mxu0 0
      %4507 = vmatmul.mubr.bf16.gmra.mxu0 %v4348
      %v4508 = vpop.f32.mrf.mxu0
      %v4509 = vadd.f32 %v4192, %v4508
      %v4510 = vpop.f32.mrf.mxu0
      %v4511 = vpop.f32.mrf.mxu0
      %v4512 = vadd.f32 %v4192, %v4511
      %v4513 = vpop.f32.mrf.mxu0
      %4514 = vdwg.mxu0
      %vm4515 = vcmp.ge.f32.partialorder %v4389, 0.0
      %vm4516 = vcmp.ge.f32.partialorder %v4392, 0.0
      %vm4517 = vcmp.ge.f32.partialorder %v4397, 0.0
      %vm4518 = vcmp.ge.f32.partialorder %v4400, 0.0
      %vm4519 = vcmp.ge.f32.partialorder %v4405, 0.0
      %vm4520 = vcmp.ge.f32.partialorder %v4408, 0.0
      %vm4521 = vcmp.ge.f32.partialorder %v4413, 0.0
      %vm4522 = vcmp.ge.f32.partialorder %v4416, 0.0
      %vm4523 = vcmp.ge.f32.partialorder %v4421, 0.0
      %vm4524 = vcmp.ge.f32.partialorder %v4424, 0.0
      %vm4525 = vcmp.ge.f32.partialorder %v4429, 0.0
      %vm4526 = vcmp.ge.f32.partialorder %v4432, 0.0
      %vm4527 = vcmp.ge.f32.partialorder %v4437, 0.0
      %vm4528 = vcmp.ge.f32.partialorder %v4440, 0.0
      %vm4529 = vcmp.ge.f32.partialorder %v4445, 0.0
      %vm4530 = vcmp.ge.f32.partialorder %v4448, 0.0
      %vm4531 = vcmp.ge.f32.partialorder %v4453, 0.0
      %vm4532 = vcmp.ge.f32.partialorder %v4456, 0.0
      %vm4533 = vcmp.ge.f32.partialorder %v4461, 0.0
      %vm4534 = vcmp.ge.f32.partialorder %v4464, 0.0
      %vm4535 = vcmp.ge.f32.partialorder %v4469, 0.0
      %vm4536 = vcmp.ge.f32.partialorder %v4472, 0.0
      %vm4537 = vcmp.ge.f32.partialorder %v4477, 0.0
      %vm4538 = vcmp.ge.f32.partialorder %v4480, 0.0
      %vm4539 = vcmp.ge.f32.partialorder %v4485, 0.0
      %vm4540 = vcmp.ge.f32.partialorder %v4488, 0.0
      %vm4541 = vcmp.ge.f32.partialorder %v4493, 0.0
      %vm4542 = vcmp.ge.f32.partialorder %v4496, 0.0
      %vm4543 = vcmp.ge.f32.partialorder %v4501, 0.0
      %vm4544 = vcmp.ge.f32.partialorder %v4504, 0.0
      %vm4545 = vcmp.ge.f32.partialorder %v4509, 0.0
      %vm4546 = vcmp.ge.f32.partialorder %v4512, 0.0
      %v4547 = vmul.f32 %v4389, 0.01
      %v4548 = vmul.f32 %v4392, 0.01
      %v4549 = vmul.f32 %v4397, 0.01
      %v4550 = vmul.f32 %v4400, 0.01
      %v4551 = vmul.f32 %v4405, 0.01
      %v4552 = vmul.f32 %v4408, 0.01
      %v4553 = vmul.f32 %v4413, 0.01
      %v4554 = vmul.f32 %v4416, 0.01
      %v4555 = vmul.f32 %v4421, 0.01
      %v4556 = vmul.f32 %v4424, 0.01
      %v4557 = vmul.f32 %v4429, 0.01
      %v4558 = vmul.f32 %v4432, 0.01
      %v4559 = vmul.f32 %v4437, 0.01
      %v4560 = vmul.f32 %v4440, 0.01
      %v4561 = vmul.f32 %v4445, 0.01
      %v4562 = vmul.f32 %v4448, 0.01
      %v4563 = vmul.f32 %v4453, 0.01
      %v4564 = vmul.f32 %v4456, 0.01
      %v4565 = vmul.f32 %v4461, 0.01
      %v4566 = vmul.f32 %v4464, 0.01
      %v4567 = vmul.f32 %v4469, 0.01
      %v4568 = vmul.f32 %v4472, 0.01
      %v4569 = vmul.f32 %v4477, 0.01
      %v4570 = vmul.f32 %v4480, 0.01
      %v4571 = vmul.f32 %v4485, 0.01
      %v4572 = vmul.f32 %v4488, 0.01
      %v4573 = vmul.f32 %v4493, 0.01
      %v4574 = vmul.f32 %v4496, 0.01
      %v4575 = vmul.f32 %v4501, 0.01
      %v4576 = vmul.f32 %v4504, 0.01
      %v4577 = vmul.f32 %v4509, 0.01
      %v4578 = vmul.f32 %v4512, 0.01
      %v4579 = vsel %vm4515, %v4389, %v4547
      %v4580 = vsel %vm4516, %v4392, %v4548
      %v4581 = vsel %vm4517, %v4397, %v4549
      %v4582 = vsel %vm4518, %v4400, %v4550
      %v4583 = vsel %vm4519, %v4405, %v4551
      %v4584 = vsel %vm4520, %v4408, %v4552
      %v4585 = vsel %vm4521, %v4413, %v4553
      %v4586 = vsel %vm4522, %v4416, %v4554
      %v4587 = vsel %vm4523, %v4421, %v4555
      %v4588 = vsel %vm4524, %v4424, %v4556
      %v4589 = vsel %vm4525, %v4429, %v4557
      %v4590 = vsel %vm4526, %v4432, %v4558
      %v4591 = vsel %vm4527, %v4437, %v4559
      %v4592 = vsel %vm4528, %v4440, %v4560
      %v4593 = vsel %vm4529, %v4445, %v4561
      %v4594 = vsel %vm4530, %v4448, %v4562
      %v4595 = vsel %vm4531, %v4453, %v4563
      %v4596 = vsel %vm4532, %v4456, %v4564
      %v4597 = vsel %vm4533, %v4461, %v4565
      %v4598 = vsel %vm4534, %v4464, %v4566
      %v4599 = vsel %vm4535, %v4469, %v4567
      %v4600 = vsel %vm4536, %v4472, %v4568
      %v4601 = vsel %vm4537, %v4477, %v4569
      %v4602 = vsel %vm4538, %v4480, %v4570
      %v4603 = vsel %vm4539, %v4485, %v4571
      %v4604 = vsel %vm4540, %v4488, %v4572
      %v4605 = vsel %vm4541, %v4493, %v4573
      %v4606 = vsel %vm4542, %v4496, %v4574
      %v4607 = vsel %vm4543, %v4501, %v4575
      %v4608 = vsel %vm4544, %v4504, %v4576
      %v4609 = vsel %vm4545, %v4509, %v4577
      %v4610 = vsel %vm4546, %v4512, %v4578
      %v4611 = vadd.f32 %v429, %v4579
      %v4612 = vadd.f32 %v430, %v4580
      %v4613 = vadd.f32 %v431, %v4581
      %v4614 = vadd.f32 %v432, %v4582
      %v4615 = vadd.f32 %v433, %v4583
      %v4616 = vadd.f32 %v434, %v4584
      %v4617 = vadd.f32 %v435, %v4585
      %v4618 = vadd.f32 %v436, %v4586
      %v4619 = vadd.f32 %v437, %v4587
      %v4620 = vadd.f32 %v438, %v4588
      %v4621 = vadd.f32 %v439, %v4589
      %v4622 = vadd.f32 %v440, %v4590
      %v4623 = vadd.f32 %v441, %v4591
      %v4624 = vadd.f32 %v442, %v4592
      %v4625 = vadd.f32 %v443, %v4593
      %v4626 = vadd.f32 %v444, %v4594
      %v4627 = vadd.f32 %v445, %v4595
      %v4628 = vadd.f32 %v446, %v4596
      %v4629 = vadd.f32 %v447, %v4597
      %v4630 = vadd.f32 %v448, %v4598
      %v4631 = vadd.f32 %v449, %v4599
      %v4632 = vadd.f32 %v450, %v4600
      %v4633 = vadd.f32 %v451, %v4601
      %v4634 = vadd.f32 %v452, %v4602
      %v4635 = vadd.f32 %v453, %v4603
      %v4636 = vadd.f32 %v454, %v4604
      %v4637 = vadd.f32 %v455, %v4605
      %v4638 = vadd.f32 %v456, %v4606
      %v4639 = vadd.f32 %v457, %v4607
      %v4640 = vadd.f32 %v458, %v4608
      %v4641 = vadd.f32 %v459, %v4609
      %v4642 = vadd.f32 %v460, %v4610
      %v4643 = vpack.c.bf16 %v4612, %v4611
      %v4644 = vpack.c.bf16 %v4614, %v4613
      %v4645 = vpack.c.bf16 %v4616, %v4615
      %v4646 = vpack.c.bf16 %v4618, %v4617
      %v4647 = vpack.c.bf16 %v4620, %v4619
      %v4648 = vpack.c.bf16 %v4622, %v4621
      %v4649 = vpack.c.bf16 %v4624, %v4623
      %v4650 = vpack.c.bf16 %v4626, %v4625
      %v4651 = vpack.c.bf16 %v4628, %v4627
      %v4652 = vpack.c.bf16 %v4630, %v4629
      %v4653 = vpack.c.bf16 %v4632, %v4631
      %v4654 = vpack.c.bf16 %v4634, %v4633
      %v4655 = vpack.c.bf16 %v4636, %v4635
      %v4656 = vpack.c.bf16 %v4638, %v4637
      %v4657 = vpack.c.bf16 %v4640, %v4639
      %v4658 = vpack.c.bf16 %v4642, %v4641
      %v4659 = vld [vmem:[%s3] sm:$0xf]
      %v4661 = vlaneseq
      %v4662 = vshrl.u32 %v4661, 7
      %v4663 = vsub.s32 0, %v4662
      %v4664 = vrot.slane %v462, %v4663
      %vm4666 = vcmask 64512
      %v4668 = vsel %vm4666, %v4643, 0
      %v4671 = vsel %vm4666, %v4644, 0
      %v4674 = vsel %vm4666, %v4645, 0
      %v4677 = vsel %vm4666, %v4646, 0
      %v4680 = vsel %vm4666, %v4647, 0
      %v4683 = vsel %vm4666, %v4648, 0
      %v4686 = vsel %vm4666, %v4649, 0
      %v4689 = vsel %vm4666, %v4650, 0
      %v4692 = vsel %vm4666, %v4651, 0
      %v4695 = vsel %vm4666, %v4652, 0
      %v4698 = vsel %vm4666, %v4653, 0
      %v4701 = vsel %vm4666, %v4654, 0
      %v4704 = vsel %vm4666, %v4655, 0
      %v4707 = vsel %vm4666, %v4656, 0
      %v4710 = vsel %vm4666, %v4657, 0
      %v4713 = vsel %vm4666, %v4658, 0
      %v4716 = vsel %vm4350, %v4659, 0
      %4718 = vmatprep.subr.bf16.mxu0 0
      %4719 = vmatpush1.bf16.msra.mxu0 0
      %4720 = vmatprep.subr.bf16.mxu0 0
      %4721 = vmatpush1.bf16.msra.mxu0 0
      %4722 = vmatprep.subr.bf16.mxu0 0
      %4723 = vmatpush1.bf16.msra.mxu0 0
      %4724 = vmatprep.subr.bf16.mxu0 0
      %4725 = vmatpush1.bf16.msra.mxu0 0
      %4726 = vmatprep.subr.bf16.mxu0 0
      %4727 = vmatpush1.bf16.msra.mxu0 0
      %4728 = vmatprep.subr.bf16.mxu0 0
      %4729 = vmatpush1.bf16.msra.mxu0 0
      %4730 = vmatprep.subr.bf16.mxu0 0
      %4731 = vmatpush1.bf16.msra.mxu0 0
      %4732 = vmatprep.subr.bf16.mxu0 0
      %4733 = vmatpush1.bf16.msra.mxu0 %v4716
      %4734 = vmatprep.subr.bf16.mxu0 0
      %4735 = vmatpush2.bf16.msra.mxu0 0
      %4736 = vmatprep.subr.bf16.mxu0 0
      %4737 = vmatpush2.bf16.msra.mxu0 0
      %4738 = vmatprep.subr.bf16.mxu0 0
      %4739 = vmatpush2.bf16.msra.mxu0 0
      %4740 = vmatprep.subr.bf16.mxu0 0
      %4741 = vmatpush2.bf16.msra.mxu0 0
      %4742 = vmatprep.subr.bf16.mxu0 0
      %4743 = vmatpush2.bf16.msra.mxu0 0
      %4744 = vmatprep.subr.bf16.mxu0 0
      %4745 = vmatpush2.bf16.msra.mxu0 0
      %4746 = vmatprep.subr.bf16.mxu0 0
      %4747 = vmatpush2.bf16.msra.mxu0 0
      %4748 = vmatprep.subr.bf16.mxu0 0
      %4749 = vmatpush2.bf16.msra.mxu0 0
      %4750 = vmatprep.mubr.bf16.mxu0 0
      %4751 = vmatmul.mubr.bf16.gmra.mxu0 %v4668
      %v4752 = vpop.f32.mrf.mxu0
      %v4753 = vadd.f32 %v4664, %v4752
      %v4754 = vpop.f32.mrf.mxu0
      %v4755 = vpop.f32.mrf.mxu0
      %v4756 = vadd.f32 %v4664, %v4755
      %v4757 = vpop.f32.mrf.mxu0
      %4758 = vmatprep.mubr.bf16.mxu0 0
      %4759 = vmatmul.mubr.bf16.gmra.mxu0 %v4671
      %v4760 = vpop.f32.mrf.mxu0
      %v4761 = vadd.f32 %v4664, %v4760
      %v4762 = vpop.f32.mrf.mxu0
      %v4763 = vpop.f32.mrf.mxu0
      %v4764 = vadd.f32 %v4664, %v4763
      %v4765 = vpop.f32.mrf.mxu0
      %4766 = vmatprep.mubr.bf16.mxu0 0
      %4767 = vmatmul.mubr.bf16.gmra.mxu0 %v4674
      %v4768 = vpop.f32.mrf.mxu0
      %v4769 = vadd.f32 %v4664, %v4768
      %v4770 = vpop.f32.mrf.mxu0
      %v4771 = vpop.f32.mrf.mxu0
      %v4772 = vadd.f32 %v4664, %v4771
      %v4773 = vpop.f32.mrf.mxu0
      %4774 = vmatprep.mubr.bf16.mxu0 0
      %4775 = vmatmul.mubr.bf16.gmra.mxu0 %v4677
      %v4776 = vpop.f32.mrf.mxu0
      %v4777 = vadd.f32 %v4664, %v4776
      %v4778 = vpop.f32.mrf.mxu0
      %v4779 = vpop.f32.mrf.mxu0
      %v4780 = vadd.f32 %v4664, %v4779
      %v4781 = vpop.f32.mrf.mxu0
      %4782 = vmatprep.mubr.bf16.mxu0 0
      %4783 = vmatmul.mubr.bf16.gmra.mxu0 %v4680
      %v4784 = vpop.f32.mrf.mxu0
      %v4785 = vadd.f32 %v4664, %v4784
      %v4786 = vpop.f32.mrf.mxu0
      %v4787 = vpop.f32.mrf.mxu0
      %v4788 = vadd.f32 %v4664, %v4787
      %v4789 = vpop.f32.mrf.mxu0
      %4790 = vmatprep.mubr.bf16.mxu0 0
      %4791 = vmatmul.mubr.bf16.gmra.mxu0 %v4683
      %v4792 = vpop.f32.mrf.mxu0
      %v4793 = vadd.f32 %v4664, %v4792
      %v4794 = vpop.f32.mrf.mxu0
      %v4795 = vpop.f32.mrf.mxu0
      %v4796 = vadd.f32 %v4664, %v4795
      %v4797 = vpop.f32.mrf.mxu0
      %4798 = vmatprep.mubr.bf16.mxu0 0
      %4799 = vmatmul.mubr.bf16.gmra.mxu0 %v4686
      %v4800 = vpop.f32.mrf.mxu0
      %v4801 = vadd.f32 %v4664, %v4800
      %v4802 = vpop.f32.mrf.mxu0
      %v4803 = vpop.f32.mrf.mxu0
      %v4804 = vadd.f32 %v4664, %v4803
      %v4805 = vpop.f32.mrf.mxu0
      %4806 = vmatprep.mubr.bf16.mxu0 0
      %4807 = vmatmul.mubr.bf16.gmra.mxu0 %v4689
      %v4808 = vpop.f32.mrf.mxu0
      %v4809 = vadd.f32 %v4664, %v4808
      %v4810 = vpop.f32.mrf.mxu0
      %v4811 = vpop.f32.mrf.mxu0
      %v4812 = vadd.f32 %v4664, %v4811
      %v4813 = vpop.f32.mrf.mxu0
      %4814 = vmatprep.mubr.bf16.mxu0 0
      %4815 = vmatmul.mubr.bf16.gmra.mxu0 %v4692
      %v4816 = vpop.f32.mrf.mxu0
      %v4817 = vadd.f32 %v4664, %v4816
      %v4818 = vpop.f32.mrf.mxu0
      %v4819 = vpop.f32.mrf.mxu0
      %v4820 = vadd.f32 %v4664, %v4819
      %v4821 = vpop.f32.mrf.mxu0
      %4822 = vmatprep.mubr.bf16.mxu0 0
      %4823 = vmatmul.mubr.bf16.gmra.mxu0 %v4695
      %v4824 = vpop.f32.mrf.mxu0
      %v4825 = vadd.f32 %v4664, %v4824
      %v4826 = vpop.f32.mrf.mxu0
      %v4827 = vpop.f32.mrf.mxu0
      %v4828 = vadd.f32 %v4664, %v4827
      %v4829 = vpop.f32.mrf.mxu0
      %4830 = vmatprep.mubr.bf16.mxu0 0
      %4831 = vmatmul.mubr.bf16.gmra.mxu0 %v4698
      %v4832 = vpop.f32.mrf.mxu0
      %v4833 = vadd.f32 %v4664, %v4832
      %v4834 = vpop.f32.mrf.mxu0
      %v4835 = vpop.f32.mrf.mxu0
      %v4836 = vadd.f32 %v4664, %v4835
      %v4837 = vpop.f32.mrf.mxu0
      %4838 = vmatprep.mubr.bf16.mxu0 0
      %4839 = vmatmul.mubr.bf16.gmra.mxu0 %v4701
      %v4840 = vpop.f32.mrf.mxu0
      %v4841 = vadd.f32 %v4664, %v4840
      %v4842 = vpop.f32.mrf.mxu0
      %v4843 = vpop.f32.mrf.mxu0
      %v4844 = vadd.f32 %v4664, %v4843
      %v4845 = vpop.f32.mrf.mxu0
      %4846 = vmatprep.mubr.bf16.mxu0 0
      %4847 = vmatmul.mubr.bf16.gmra.mxu0 %v4704
      %v4848 = vpop.f32.mrf.mxu0
      %v4849 = vadd.f32 %v4664, %v4848
      %v4850 = vpop.f32.mrf.mxu0
      %v4851 = vpop.f32.mrf.mxu0
      %v4852 = vadd.f32 %v4664, %v4851
      %v4853 = vpop.f32.mrf.mxu0
      %4854 = vmatprep.mubr.bf16.mxu0 0
      %4855 = vmatmul.mubr.bf16.gmra.mxu0 %v4707
      %v4856 = vpop.f32.mrf.mxu0
      %v4857 = vadd.f32 %v4664, %v4856
      %v4858 = vpop.f32.mrf.mxu0
      %v4859 = vpop.f32.mrf.mxu0
      %v4860 = vadd.f32 %v4664, %v4859
      %v4861 = vpop.f32.mrf.mxu0
      %4862 = vmatprep.mubr.bf16.mxu0 0
      %4863 = vmatmul.mubr.bf16.gmra.mxu0 %v4710
      %v4864 = vpop.f32.mrf.mxu0
      %v4865 = vadd.f32 %v4664, %v4864
      %v4866 = vpop.f32.mrf.mxu0
      %v4867 = vpop.f32.mrf.mxu0
      %v4868 = vadd.f32 %v4664, %v4867
      %v4869 = vpop.f32.mrf.mxu0
      %4870 = vmatprep.mubr.bf16.mxu0 0
      %4871 = vmatmul.mubr.bf16.gmra.mxu0 %v4713
      %v4872 = vpop.f32.mrf.mxu0
      %v4873 = vadd.f32 %v4664, %v4872
      %v4874 = vpop.f32.mrf.mxu0
      %v4875 = vpop.f32.mrf.mxu0
      %v4876 = vadd.f32 %v4664, %v4875
      %v4877 = vpop.f32.mrf.mxu0
      %4878 = vdwg.mxu0
      %v4879 = vpack.c.bf16 %v4756, %v4753
      %v4880 = vpack.c.bf16 %v4764, %v4761
      %v4881 = vpack.c.bf16 %v4772, %v4769
      %v4882 = vpack.c.bf16 %v4780, %v4777
      %v4883 = vpack.c.bf16 %v4788, %v4785
      %v4884 = vpack.c.bf16 %v4796, %v4793
      %v4885 = vpack.c.bf16 %v4804, %v4801
      %v4886 = vpack.c.bf16 %v4812, %v4809
      %v4887 = vpack.c.bf16 %v4820, %v4817
      %v4888 = vpack.c.bf16 %v4828, %v4825
      %v4889 = vpack.c.bf16 %v4836, %v4833
      %v4890 = vpack.c.bf16 %v4844, %v4841
      %v4891 = vpack.c.bf16 %v4852, %v4849
      %v4892 = vpack.c.bf16 %v4860, %v4857
      %v4893 = vpack.c.bf16 %v4868, %v4865
      %v4894 = vpack.c.bf16 %v4876, %v4873
      %v4911 = vunpack.c.l.b16 %v4879
      %v4912 = vunpack.c.h.b16 %v4879
      %v4913 = vunpack.c.l.b16 %v4880
      %v4914 = vunpack.c.h.b16 %v4880
      %v4915 = vunpack.c.l.b16 %v4881
      %v4916 = vunpack.c.h.b16 %v4881
      %v4917 = vunpack.c.l.b16 %v4882
      %v4918 = vunpack.c.h.b16 %v4882
      %v4919 = vunpack.c.l.b16 %v4883
      %v4920 = vunpack.c.h.b16 %v4883
      %v4921 = vunpack.c.l.b16 %v4884
      %v4922 = vunpack.c.h.b16 %v4884
      %v4923 = vunpack.c.l.b16 %v4885
      %v4924 = vunpack.c.h.b16 %v4885
      %v4925 = vunpack.c.l.b16 %v4886
      %v4926 = vunpack.c.h.b16 %v4886
      %v4927 = vunpack.c.l.b16 %v4887
      %v4928 = vunpack.c.h.b16 %v4887
      %v4929 = vunpack.c.l.b16 %v4888
      %v4930 = vunpack.c.h.b16 %v4888
      %v4931 = vunpack.c.l.b16 %v4889
      %v4932 = vunpack.c.h.b16 %v4889
      %v4933 = vunpack.c.l.b16 %v4890
      %v4934 = vunpack.c.h.b16 %v4890
      %v4935 = vunpack.c.l.b16 %v4891
      %v4936 = vunpack.c.h.b16 %v4891
      %v4937 = vunpack.c.l.b16 %v4892
      %v4938 = vunpack.c.h.b16 %v4892
      %v4939 = vunpack.c.l.b16 %v4893
      %v4940 = vunpack.c.h.b16 %v4893
      %v4941 = vunpack.c.l.b16 %v4894
      %v4942 = vunpack.c.h.b16 %v4894
      %v4943 = vpack.c.b16 %v4911, %v4911
      %v4944 = vpack.c.b16 %v4912, %v4912
      %v4945 = vpack.c.b16 %v4913, %v4913
      %v4946 = vpack.c.b16 %v4914, %v4914
      %v4947 = vpack.c.b16 %v4915, %v4915
      %v4948 = vpack.c.b16 %v4916, %v4916
      %v4949 = vpack.c.b16 %v4917, %v4917
      %v4950 = vpack.c.b16 %v4918, %v4918
      %v4951 = vpack.c.b16 %v4919, %v4919
      %v4952 = vpack.c.b16 %v4920, %v4920
      %v4953 = vpack.c.b16 %v4921, %v4921
      %v4954 = vpack.c.b16 %v4922, %v4922
      %v4955 = vpack.c.b16 %v4923, %v4923
      %v4956 = vpack.c.b16 %v4924, %v4924
      %v4957 = vpack.c.b16 %v4925, %v4925
      %v4958 = vpack.c.b16 %v4926, %v4926
      %v4959 = vpack.c.b16 %v4927, %v4927
      %v4960 = vpack.c.b16 %v4928, %v4928
      %v4961 = vpack.c.b16 %v4929, %v4929
      %v4962 = vpack.c.b16 %v4930, %v4930
      %v4963 = vpack.c.b16 %v4931, %v4931
      %v4964 = vpack.c.b16 %v4932, %v4932
      %v4965 = vpack.c.b16 %v4933, %v4933
      %v4966 = vpack.c.b16 %v4934, %v4934
      %v4967 = vpack.c.b16 %v4935, %v4935
      %v4968 = vpack.c.b16 %v4936, %v4936
      %v4969 = vpack.c.b16 %v4937, %v4937
      %v4970 = vpack.c.b16 %v4938, %v4938
      %v4971 = vpack.c.b16 %v4939, %v4939
      %v4972 = vpack.c.b16 %v4940, %v4940
      %v4973 = vpack.c.b16 %v4941, %v4941
      %v4974 = vpack.c.b16 %v4942, %v4942
      %v4976 = vshrl.u32 %v4943, 16
      %v4978 = vrot.slane %v4976, 7
      %v4979 = vshll.u32 %v4943, 16
      %v4981 = vor.u32 %v4978, %v4979
      %v4982 = vrot.slane %v4978, 4
      %v4984 = vshrl.u32 %v4944, 16
      %v4986 = vrot.slane %v4984, 7
      %v4987 = vshll.u32 %v4944, 16
      %v4989 = vor.u32 %v4986, %v4987
      %v4990 = vsel %vm561, %v4982, %v4989
      %v4991 = vrot.slane %v4986, 4
      %v4993 = vshrl.u32 %v4945, 16
      %v4995 = vrot.slane %v4993, 7
      %v4996 = vshll.u32 %v4945, 16
      %v4998 = vor.u32 %v4995, %v4996
      %v4999 = vrot.slane %v4995, 4
      %v5001 = vshrl.u32 %v4946, 16
      %v5003 = vrot.slane %v5001, 7
      %v5004 = vshll.u32 %v4946, 16
      %v5006 = vor.u32 %v5003, %v5004
      %v5007 = vsel %vm561, %v4999, %v5006
      %v5008 = vrot.slane %v5003, 4
      %v5010 = vshrl.u32 %v4947, 16
      %v5012 = vrot.slane %v5010, 7
      %v5013 = vshll.u32 %v4947, 16
      %v5015 = vor.u32 %v5012, %v5013
      %v5016 = vrot.slane %v5012, 4
      %v5018 = vshrl.u32 %v4948, 16
      %v5020 = vrot.slane %v5018, 7
      %v5021 = vshll.u32 %v4948, 16
      %v5023 = vor.u32 %v5020, %v5021
      %v5024 = vsel %vm561, %v5016, %v5023
      %v5025 = vrot.slane %v5020, 4
      %v5027 = vshrl.u32 %v4949, 16
      %v5029 = vrot.slane %v5027, 7
      %v5030 = vshll.u32 %v4949, 16
      %v5032 = vor.u32 %v5029, %v5030
      %v5033 = vrot.slane %v5029, 4
      %v5035 = vshrl.u32 %v4950, 16
      %v5037 = vrot.slane %v5035, 7
      %v5038 = vshll.u32 %v4950, 16
      %v5040 = vor.u32 %v5037, %v5038
      %v5041 = vsel %vm561, %v5033, %v5040
      %v5042 = vrot.slane %v5037, 4
      %v5044 = vshrl.u32 %v4951, 16
      %v5046 = vrot.slane %v5044, 7
      %v5047 = vshll.u32 %v4951, 16
      %v5049 = vor.u32 %v5046, %v5047
      %v5050 = vrot.slane %v5046, 4
      %v5052 = vshrl.u32 %v4952, 16
      %v5054 = vrot.slane %v5052, 7
      %v5055 = vshll.u32 %v4952, 16
      %v5057 = vor.u32 %v5054, %v5055
      %v5058 = vsel %vm561, %v5050, %v5057
      %v5059 = vrot.slane %v5054, 4
      %v5061 = vshrl.u32 %v4953, 16
      %v5063 = vrot.slane %v5061, 7
      %v5064 = vshll.u32 %v4953, 16
      %v5066 = vor.u32 %v5063, %v5064
      %v5067 = vrot.slane %v5063, 4
      %v5069 = vshrl.u32 %v4954, 16
      %v5071 = vrot.slane %v5069, 7
      %v5072 = vshll.u32 %v4954, 16
      %v5074 = vor.u32 %v5071, %v5072
      %v5075 = vsel %vm561, %v5067, %v5074
      %v5076 = vrot.slane %v5071, 4
      %v5078 = vshrl.u32 %v4955, 16
      %v5080 = vrot.slane %v5078, 7
      %v5081 = vshll.u32 %v4955, 16
      %v5083 = vor.u32 %v5080, %v5081
      %v5084 = vrot.slane %v5080, 4
      %v5086 = vshrl.u32 %v4956, 16
      %v5088 = vrot.slane %v5086, 7
      %v5089 = vshll.u32 %v4956, 16
      %v5091 = vor.u32 %v5088, %v5089
      %v5092 = vsel %vm561, %v5084, %v5091
      %v5093 = vrot.slane %v5088, 4
      %v5095 = vshrl.u32 %v4957, 16
      %v5097 = vrot.slane %v5095, 7
      %v5098 = vshll.u32 %v4957, 16
      %v5100 = vor.u32 %v5097, %v5098
      %v5101 = vrot.slane %v5097, 4
      %v5103 = vshrl.u32 %v4958, 16
      %v5105 = vrot.slane %v5103, 7
      %v5106 = vshll.u32 %v4958, 16
      %v5108 = vor.u32 %v5105, %v5106
      %v5109 = vsel %vm561, %v5101, %v5108
      %v5110 = vrot.slane %v5105, 4
      %v5112 = vshrl.u32 %v4959, 16
      %v5114 = vrot.slane %v5112, 7
      %v5115 = vshll.u32 %v4959, 16
      %v5117 = vor.u32 %v5114, %v5115
      %v5118 = vrot.slane %v5114, 4
      %v5120 = vshrl.u32 %v4960, 16
      %v5122 = vrot.slane %v5120, 7
      %v5123 = vshll.u32 %v4960, 16
      %v5125 = vor.u32 %v5122, %v5123
      %v5126 = vsel %vm561, %v5118, %v5125
      %v5127 = vrot.slane %v5122, 4
      %v5129 = vshrl.u32 %v4961, 16
      %v5131 = vrot.slane %v5129, 7
      %v5132 = vshll.u32 %v4961, 16
      %v5134 = vor.u32 %v5131, %v5132
      %v5135 = vrot.slane %v5131, 4
      %v5137 = vshrl.u32 %v4962, 16
      %v5139 = vrot.slane %v5137, 7
      %v5140 = vshll.u32 %v4962, 16
      %v5142 = vor.u32 %v5139, %v5140
      %v5143 = vsel %vm561, %v5135, %v5142
      %v5144 = vrot.slane %v5139, 4
      %v5146 = vshrl.u32 %v4963, 16
      %v5148 = vrot.slane %v5146, 7
      %v5149 = vshll.u32 %v4963, 16
      %v5151 = vor.u32 %v5148, %v5149
      %v5152 = vrot.slane %v5148, 4
      %v5154 = vshrl.u32 %v4964, 16
      %v5156 = vrot.slane %v5154, 7
      %v5157 = vshll.u32 %v4964, 16
      %v5159 = vor.u32 %v5156, %v5157
      %v5160 = vsel %vm561, %v5152, %v5159
      %v5161 = vrot.slane %v5156, 4
      %v5163 = vshrl.u32 %v4965, 16
      %v5165 = vrot.slane %v5163, 7
      %v5166 = vshll.u32 %v4965, 16
      %v5168 = vor.u32 %v5165, %v5166
      %v5169 = vrot.slane %v5165, 4
      %v5171 = vshrl.u32 %v4966, 16
      %v5173 = vrot.slane %v5171, 7
      %v5174 = vshll.u32 %v4966, 16
      %v5176 = vor.u32 %v5173, %v5174
      %v5177 = vsel %vm561, %v5169, %v5176
      %v5178 = vrot.slane %v5173, 4
      %v5180 = vshrl.u32 %v4967, 16
      %v5182 = vrot.slane %v5180, 7
      %v5183 = vshll.u32 %v4967, 16
      %v5185 = vor.u32 %v5182, %v5183
      %v5186 = vrot.slane %v5182, 4
      %v5188 = vshrl.u32 %v4968, 16
      %v5190 = vrot.slane %v5188, 7
      %v5191 = vshll.u32 %v4968, 16
      %v5193 = vor.u32 %v5190, %v5191
      %v5194 = vsel %vm561, %v5186, %v5193
      %v5195 = vrot.slane %v5190, 4
      %v5197 = vshrl.u32 %v4969, 16
      %v5199 = vrot.slane %v5197, 7
      %v5200 = vshll.u32 %v4969, 16
      %v5202 = vor.u32 %v5199, %v5200
      %v5203 = vrot.slane %v5199, 4
      %v5205 = vshrl.u32 %v4970, 16
      %v5207 = vrot.slane %v5205, 7
      %v5208 = vshll.u32 %v4970, 16
      %v5210 = vor.u32 %v5207, %v5208
      %v5211 = vsel %vm561, %v5203, %v5210
      %v5212 = vrot.slane %v5207, 4
      %v5214 = vshrl.u32 %v4971, 16
      %v5216 = vrot.slane %v5214, 7
      %v5217 = vshll.u32 %v4971, 16
      %v5219 = vor.u32 %v5216, %v5217
      %v5220 = vrot.slane %v5216, 4
      %v5222 = vshrl.u32 %v4972, 16
      %v5224 = vrot.slane %v5222, 7
      %v5225 = vshll.u32 %v4972, 16
      %v5227 = vor.u32 %v5224, %v5225
      %v5228 = vsel %vm561, %v5220, %v5227
      %v5229 = vrot.slane %v5224, 4
      %v5231 = vshrl.u32 %v4973, 16
      %v5233 = vrot.slane %v5231, 7
      %v5234 = vshll.u32 %v4973, 16
      %v5236 = vor.u32 %v5233, %v5234
      %v5237 = vrot.slane %v5233, 4
      %v5239 = vshrl.u32 %v4974, 16
      %v5241 = vrot.slane %v5239, 7
      %v5242 = vshll.u32 %v4974, 16
      %v5244 = vor.u32 %v5241, %v5242
      %v5245 = vsel %vm561, %v5237, %v5244
      %v5246 = vrot.slane %v5241, 4
      %v5295 = vld [vmem:[%s327] sm:$0xf]
      %v5296 = vsel %vm883, %v4981, %v5295
      %5297 = vst [vmem:[%s327] sm:$0xf] %v5296
      %5298 = vst.msk [vmem:[%s327 + $0x4] sm:$0xf] %vm318, %v4990
      %v5299 = vld [vmem:[%s327 + $0x8] sm:$0x1]
      %v5300 = vsel %vm330, %v4991, %v5299
      %5301 = vst [vmem:[%s327 + $0x8] sm:$0x1] %v5300
      %v5302 = vld [vmem:[%s327 + $0xc] sm:$0xf]
      %v5303 = vsel %vm883, %v4998, %v5302
      %5304 = vst [vmem:[%s327 + $0xc] sm:$0xf] %v5303
      %5305 = vst.msk [vmem:[%s327 + $0x10] sm:$0xf] %vm318, %v5007
      %v5306 = vld [vmem:[%s327 + $0x14] sm:$0x1]
      %v5307 = vsel %vm330, %v5008, %v5306
      %5308 = vst [vmem:[%s327 + $0x14] sm:$0x1] %v5307
      %v5309 = vld [vmem:[%s327 + $0x18] sm:$0xf]
      %v5310 = vsel %vm883, %v5015, %v5309
      %5311 = vst [vmem:[%s327 + $0x18] sm:$0xf] %v5310
      %5312 = vst.msk [vmem:[%s327 + $0x1c] sm:$0xf] %vm318, %v5024
      %v5313 = vld [vmem:[%s327 + $0x20] sm:$0x1]
      %v5314 = vsel %vm330, %v5025, %v5313
      %5315 = vst [vmem:[%s327 + $0x20] sm:$0x1] %v5314
      %v5316 = vld [vmem:[%s327 + $0x24] sm:$0xf]
      %v5317 = vsel %vm883, %v5032, %v5316
      %5318 = vst [vmem:[%s327 + $0x24] sm:$0xf] %v5317
      %5319 = vst.msk [vmem:[%s327 + $0x28] sm:$0xf] %vm318, %v5041
      %v5320 = vld [vmem:[%s327 + $0x2c] sm:$0x1]
      %v5321 = vsel %vm330, %v5042, %v5320
      %5322 = vst [vmem:[%s327 + $0x2c] sm:$0x1] %v5321
      %v5323 = vld [vmem:[%s327 + $0x30] sm:$0xf]
      %v5324 = vsel %vm883, %v5049, %v5323
      %5325 = vst [vmem:[%s327 + $0x30] sm:$0xf] %v5324
      %5326 = vst.msk [vmem:[%s327 + $0x34] sm:$0xf] %vm318, %v5058
      %v5327 = vld [vmem:[%s327 + $0x38] sm:$0x1]
      %v5328 = vsel %vm330, %v5059, %v5327
      %5329 = vst [vmem:[%s327 + $0x38] sm:$0x1] %v5328
      %v5330 = vld [vmem:[%s327 + $0x3c] sm:$0xf]
      %v5331 = vsel %vm883, %v5066, %v5330
      %5332 = vst [vmem:[%s327 + $0x3c] sm:$0xf] %v5331
      %5333 = vst.msk [vmem:[%s327 + $0x40] sm:$0xf] %vm318, %v5075
      %v5334 = vld [vmem:[%s327 + $0x44] sm:$0x1]
      %v5335 = vsel %vm330, %v5076, %v5334
      %5336 = vst [vmem:[%s327 + $0x44] sm:$0x1] %v5335
      %v5337 = vld [vmem:[%s327 + $0x48] sm:$0xf]
      %v5338 = vsel %vm883, %v5083, %v5337
      %5339 = vst [vmem:[%s327 + $0x48] sm:$0xf] %v5338
      %5340 = vst.msk [vmem:[%s327 + $0x4c] sm:$0xf] %vm318, %v5092
      %v5341 = vld [vmem:[%s327 + $0x50] sm:$0x1]
      %v5342 = vsel %vm330, %v5093, %v5341
      %5343 = vst [vmem:[%s327 + $0x50] sm:$0x1] %v5342
      %v5344 = vld [vmem:[%s327 + $0x54] sm:$0xf]
      %v5345 = vsel %vm883, %v5100, %v5344
      %5346 = vst [vmem:[%s327 + $0x54] sm:$0xf] %v5345
      %5347 = vst.msk [vmem:[%s327 + $0x58] sm:$0xf] %vm318, %v5109
      %v5348 = vld [vmem:[%s327 + $0x5c] sm:$0x1]
      %v5349 = vsel %vm330, %v5110, %v5348
      %5350 = vst [vmem:[%s327 + $0x5c] sm:$0x1] %v5349
      %v5351 = vld [vmem:[%s327 + $0x60] sm:$0xf]
      %v5352 = vsel %vm883, %v5117, %v5351
      %5353 = vst [vmem:[%s327 + $0x60] sm:$0xf] %v5352
      %5354 = vst.msk [vmem:[%s327 + $0x64] sm:$0xf] %vm318, %v5126
      %v5355 = vld [vmem:[%s327 + $0x68] sm:$0x1]
      %v5356 = vsel %vm330, %v5127, %v5355
      %5357 = vst [vmem:[%s327 + $0x68] sm:$0x1] %v5356
      %v5358 = vld [vmem:[%s327 + $0x6c] sm:$0xf]
      %v5359 = vsel %vm883, %v5134, %v5358
      %5360 = vst [vmem:[%s327 + $0x6c] sm:$0xf] %v5359
      %5361 = vst.msk [vmem:[%s327 + $0x70] sm:$0xf] %vm318, %v5143
      %v5362 = vld [vmem:[%s327 + $0x74] sm:$0x1]
      %v5363 = vsel %vm330, %v5144, %v5362
      %5364 = vst [vmem:[%s327 + $0x74] sm:$0x1] %v5363
      %v5365 = vld [vmem:[%s327 + $0x78] sm:$0xf]
      %v5366 = vsel %vm883, %v5151, %v5365
      %5367 = vst [vmem:[%s327 + $0x78] sm:$0xf] %v5366
      %5368 = vst.msk [vmem:[%s327 + $0x7c] sm:$0xf] %vm318, %v5160
      %v5369 = vld [vmem:[%s327 + $0x80] sm:$0x1]
      %v5370 = vsel %vm330, %v5161, %v5369
      %5371 = vst [vmem:[%s327 + $0x80] sm:$0x1] %v5370
      %v5372 = vld [vmem:[%s327 + $0x84] sm:$0xf]
      %v5373 = vsel %vm883, %v5168, %v5372
      %5374 = vst [vmem:[%s327 + $0x84] sm:$0xf] %v5373
      %5375 = vst.msk [vmem:[%s327 + $0x88] sm:$0xf] %vm318, %v5177
      %v5376 = vld [vmem:[%s327 + $0x8c] sm:$0x1]
      %v5377 = vsel %vm330, %v5178, %v5376
      %5378 = vst [vmem:[%s327 + $0x8c] sm:$0x1] %v5377
      %v5379 = vld [vmem:[%s327 + $0x90] sm:$0xf]
      %v5380 = vsel %vm883, %v5185, %v5379
      %5381 = vst [vmem:[%s327 + $0x90] sm:$0xf] %v5380
      %5382 = vst.msk [vmem:[%s327 + $0x94] sm:$0xf] %vm318, %v5194
      %v5383 = vld [vmem:[%s327 + $0x98] sm:$0x1]
      %v5384 = vsel %vm330, %v5195, %v5383
      %5385 = vst [vmem:[%s327 + $0x98] sm:$0x1] %v5384
      %v5386 = vld [vmem:[%s327 + $0x9c] sm:$0xf]
      %v5387 = vsel %vm883, %v5202, %v5386
      %5388 = vst [vmem:[%s327 + $0x9c] sm:$0xf] %v5387
      %5389 = vst.msk [vmem:[%s327 + $0xa0] sm:$0xf] %vm318, %v5211
      %v5390 = vld [vmem:[%s327 + $0xa4] sm:$0x1]
      %v5391 = vsel %vm330, %v5212, %v5390
      %5392 = vst [vmem:[%s327 + $0xa4] sm:$0x1] %v5391
      %v5393 = vld [vmem:[%s327 + $0xa8] sm:$0xf]
      %v5394 = vsel %vm883, %v5219, %v5393
      %5395 = vst [vmem:[%s327 + $0xa8] sm:$0xf] %v5394
      %5396 = vst.msk [vmem:[%s327 + $0xac] sm:$0xf] %vm318, %v5228
      %v5397 = vld [vmem:[%s327 + $0xb0] sm:$0x1]
      %v5398 = vsel %vm330, %v5229, %v5397
      %5399 = vst [vmem:[%s327 + $0xb0] sm:$0x1] %v5398
      %v5400 = vld [vmem:[%s327 + $0xb4] sm:$0xf]
      %v5401 = vsel %vm883, %v5236, %v5400
      %5402 = vst [vmem:[%s327 + $0xb4] sm:$0xf] %v5401
      %5403 = vst.msk [vmem:[%s327 + $0xb8] sm:$0xf] %vm318, %v5245
      %v5404 = vld [vmem:[%s327 + $0xbc] sm:$0x1]
      %v5405 = vsel %vm330, %v5246, %v5404
      %5406 = vst [vmem:[%s327 + $0xbc] sm:$0x1] %v5405
      %v5407 = vld [vmem:[#allocation2] sm:$0xf]
      %v5408 = vld [vmem:[#allocation2 + $0x4] sm:$0xf]
      %v5409 = vld [vmem:[#allocation2 + $0xc] sm:$0xf]
      %v5410 = vld [vmem:[#allocation2 + $0x10] sm:$0xf]
      %v5411 = vld [vmem:[#allocation2 + $0x18] sm:$0xf]
      %v5412 = vld [vmem:[#allocation2 + $0x1c] sm:$0xf]
      %v5413 = vld [vmem:[#allocation2 + $0x24] sm:$0xf]
      %v5414 = vld [vmem:[#allocation2 + $0x28] sm:$0xf]
      %v5415 = vld [vmem:[#allocation2 + $0x30] sm:$0xf]
      %v5416 = vld [vmem:[#allocation2 + $0x34] sm:$0xf]
      %v5417 = vld [vmem:[#allocation2 + $0x3c] sm:$0xf]
      %v5418 = vld [vmem:[#allocation2 + $0x40] sm:$0xf]
      %v5419 = vld [vmem:[#allocation2 + $0x48] sm:$0xf]
      %v5420 = vld [vmem:[#allocation2 + $0x4c] sm:$0xf]
      %v5421 = vld [vmem:[#allocation2 + $0x54] sm:$0xf]
      %v5422 = vld [vmem:[#allocation2 + $0x58] sm:$0xf]
      %v5423 = vld [vmem:[#allocation2 + $0x60] sm:$0xf]
      %v5424 = vld [vmem:[#allocation2 + $0x64] sm:$0xf]
      %v5425 = vld [vmem:[#allocation2 + $0x6c] sm:$0xf]
      %v5426 = vld [vmem:[#allocation2 + $0x70] sm:$0xf]
      %v5427 = vld [vmem:[#allocation2 + $0x78] sm:$0xf]
      %v5428 = vld [vmem:[#allocation2 + $0x7c] sm:$0xf]
      %v5429 = vld [vmem:[#allocation2 + $0x84] sm:$0xf]
      %v5430 = vld [vmem:[#allocation2 + $0x88] sm:$0xf]
      %v5431 = vld [vmem:[#allocation2 + $0x90] sm:$0xf]
      %v5432 = vld [vmem:[#allocation2 + $0x94] sm:$0xf]
      %v5433 = vld [vmem:[#allocation2 + $0x9c] sm:$0xf]
      %v5434 = vld [vmem:[#allocation2 + $0xa0] sm:$0xf]
      %v5435 = vld [vmem:[#allocation2 + $0xa8] sm:$0xf]
      %v5436 = vld [vmem:[#allocation2 + $0xac] sm:$0xf]
      %v5437 = vld [vmem:[#allocation2 + $0xb4] sm:$0xf]
      %v5438 = vld [vmem:[#allocation2 + $0xb8] sm:$0xf]
      %5439 = vst.msk [vmem:[#allocation3] sm:$0xf] %vm318, %v5407
      %5440 = vst.msk [vmem:[#allocation3 + $0x4] sm:$0xf] %vm318, %v5408
      %5441 = vst.msk [vmem:[#allocation3 + $0x8] sm:$0xf] %vm318, %v5409
      %5442 = vst.msk [vmem:[#allocation3 + $0xc] sm:$0xf] %vm318, %v5410
      %5443 = vst.msk [vmem:[#allocation3 + $0x10] sm:$0xf] %vm318, %v5411
      %5444 = vst.msk [vmem:[#allocation3 + $0x14] sm:$0xf] %vm318, %v5412
      %5445 = vst.msk [vmem:[#allocation3 + $0x18] sm:$0xf] %vm318, %v5413
      %5446 = vst.msk [vmem:[#allocation3 + $0x1c] sm:$0xf] %vm318, %v5414
      %5447 = vst.msk [vmem:[#allocation3 + $0x20] sm:$0xf] %vm318, %v5415
      %5448 = vst.msk [vmem:[#allocation3 + $0x24] sm:$0xf] %vm318, %v5416
      %5449 = vst.msk [vmem:[#allocation3 + $0x28] sm:$0xf] %vm318, %v5417
      %5450 = vst.msk [vmem:[#allocation3 + $0x2c] sm:$0xf] %vm318, %v5418
      %5451 = vst.msk [vmem:[#allocation3 + $0x30] sm:$0xf] %vm318, %v5419
      %5452 = vst.msk [vmem:[#allocation3 + $0x34] sm:$0xf] %vm318, %v5420
      %5453 = vst.msk [vmem:[#allocation3 + $0x38] sm:$0xf] %vm318, %v5421
      %5454 = vst.msk [vmem:[#allocation3 + $0x3c] sm:$0xf] %vm318, %v5422
      %5455 = vst.msk [vmem:[#allocation3 + $0x40] sm:$0xf] %vm318, %v5423
      %5456 = vst.msk [vmem:[#allocation3 + $0x44] sm:$0xf] %vm318, %v5424
      %5457 = vst.msk [vmem:[#allocation3 + $0x48] sm:$0xf] %vm318, %v5425
      %5458 = vst.msk [vmem:[#allocation3 + $0x4c] sm:$0xf] %vm318, %v5426
      %5459 = vst.msk [vmem:[#allocation3 + $0x50] sm:$0xf] %vm318, %v5427
      %5460 = vst.msk [vmem:[#allocation3 + $0x54] sm:$0xf] %vm318, %v5428
      %5461 = vst.msk [vmem:[#allocation3 + $0x58] sm:$0xf] %vm318, %v5429
      %5462 = vst.msk [vmem:[#allocation3 + $0x5c] sm:$0xf] %vm318, %v5430
      %5463 = vst.msk [vmem:[#allocation3 + $0x60] sm:$0xf] %vm318, %v5431
      %5464 = vst.msk [vmem:[#allocation3 + $0x64] sm:$0xf] %vm318, %v5432
      %5465 = vst.msk [vmem:[#allocation3 + $0x68] sm:$0xf] %vm318, %v5433
      %5466 = vst.msk [vmem:[#allocation3 + $0x6c] sm:$0xf] %vm318, %v5434
      %5467 = vst.msk [vmem:[#allocation3 + $0x70] sm:$0xf] %vm318, %v5435
      %5468 = vst.msk [vmem:[#allocation3 + $0x74] sm:$0xf] %vm318, %v5436
      %5469 = vst.msk [vmem:[#allocation3 + $0x78] sm:$0xf] %vm318, %v5437
      %5470 = vst.msk [vmem:[#allocation3 + $0x7c] sm:$0xf] %vm318, %v5438
      %v5471 = vld [vmem:[#allocation2] sm:$0xf]
      %v5472 = vld [vmem:[#allocation2 + $0x4] sm:$0xf]
      %v5473 = vld [vmem:[#allocation2 + $0x8] sm:$0x1]
      %v5474 = vld [vmem:[#allocation2 + $0xc] sm:$0xf]
      %v5475 = vld [vmem:[#allocation2 + $0x10] sm:$0xf]
      %v5476 = vld [vmem:[#allocation2 + $0x14] sm:$0x1]
      %v5477 = vld [vmem:[#allocation2 + $0x18] sm:$0xf]
      %v5478 = vld [vmem:[#allocation2 + $0x1c] sm:$0xf]
      %v5479 = vld [vmem:[#allocation2 + $0x20] sm:$0x1]
      %v5480 = vld [vmem:[#allocation2 + $0x24] sm:$0xf]
      %v5481 = vld [vmem:[#allocation2 + $0x28] sm:$0xf]
      %v5482 = vld [vmem:[#allocation2 + $0x2c] sm:$0x1]
      %v5483 = vld [vmem:[#allocation2 + $0x30] sm:$0xf]
      %v5484 = vld [vmem:[#allocation2 + $0x34] sm:$0xf]
      %v5485 = vld [vmem:[#allocation2 + $0x38] sm:$0x1]
      %v5486 = vld [vmem:[#allocation2 + $0x3c] sm:$0xf]
      %v5487 = vld [vmem:[#allocation2 + $0x40] sm:$0xf]
      %v5488 = vld [vmem:[#allocation2 + $0x44] sm:$0x1]
      %v5489 = vld [vmem:[#allocation2 + $0x48] sm:$0xf]
      %v5490 = vld [vmem:[#allocation2 + $0x4c] sm:$0xf]
      %v5491 = vld [vmem:[#allocation2 + $0x50] sm:$0x1]
      %v5492 = vld [vmem:[#allocation2 + $0x54] sm:$0xf]
      %v5493 = vld [vmem:[#allocation2 + $0x58] sm:$0xf]
      %v5494 = vld [vmem:[#allocation2 + $0x5c] sm:$0x1]
      %v5495 = vld [vmem:[#allocation2 + $0x60] sm:$0xf]
      %v5496 = vld [vmem:[#allocation2 + $0x64] sm:$0xf]
      %v5497 = vld [vmem:[#allocation2 + $0x68] sm:$0x1]
      %v5498 = vld [vmem:[#allocation2 + $0x6c] sm:$0xf]
      %v5499 = vld [vmem:[#allocation2 + $0x70] sm:$0xf]
      %v5500 = vld [vmem:[#allocation2 + $0x74] sm:$0x1]
      %v5501 = vld [vmem:[#allocation2 + $0x78] sm:$0xf]
      %v5502 = vld [vmem:[#allocation2 + $0x7c] sm:$0xf]
      %v5503 = vld [vmem:[#allocation2 + $0x80] sm:$0x1]
      %v5504 = vld [vmem:[#allocation2 + $0x84] sm:$0xf]
      %v5505 = vld [vmem:[#allocation2 + $0x88] sm:$0xf]
      %v5506 = vld [vmem:[#allocation2 + $0x8c] sm:$0x1]
      %v5507 = vld [vmem:[#allocation2 + $0x90] sm:$0xf]
      %v5508 = vld [vmem:[#allocation2 + $0x94] sm:$0xf]
      %v5509 = vld [vmem:[#allocation2 + $0x98] sm:$0x1]
      %v5510 = vld [vmem:[#allocation2 + $0x9c] sm:$0xf]
      %v5511 = vld [vmem:[#allocation2 + $0xa0] sm:$0xf]
      %v5512 = vld [vmem:[#allocation2 + $0xa4] sm:$0x1]
      %v5513 = vld [vmem:[#allocation2 + $0xa8] sm:$0xf]
      %v5514 = vld [vmem:[#allocation2 + $0xac] sm:$0xf]
      %v5515 = vld [vmem:[#allocation2 + $0xb0] sm:$0x1]
      %v5516 = vld [vmem:[#allocation2 + $0xb4] sm:$0xf]
      %v5517 = vld [vmem:[#allocation2 + $0xb8] sm:$0xf]
      %v5518 = vld [vmem:[#allocation2 + $0xbc] sm:$0x1]
      %v5520 = vshrl.u32 %v5471, 16
      %v5522 = vrot.slane %v5520, 4
      %v5523 = vshll.u32 %v5471, 16
      %v5525 = vrot.slane %v5523, 5
      %v5526 = vor.u32 %v5522, %v5525
      %v5527 = vrot.slane %v5526, 4
      %v5529 = vshll.u32 %v5472, 16
      %v5531 = vrot.slane %v5529, 5
      %v5532 = vsel %vm1110, %v5527, %v5531
      %v5533 = vshrl.u32 %v5472, 16
      %v5535 = vrot.slane %v5533, 4
      %v5536 = vor.u32 %v5535, %v5531
      %v5537 = vrot.slane %v5536, 4
      %v5539 = vshll.u32 %v5473, 16
      %v5541 = vrot.slane %v5539, 5
      %v5542 = vsel %vm1110, %v5537, %v5541
      %v5544 = vshrl.u32 %v5474, 16
      %v5546 = vrot.slane %v5544, 4
      %v5547 = vshll.u32 %v5474, 16
      %v5549 = vrot.slane %v5547, 5
      %v5550 = vor.u32 %v5546, %v5549
      %v5551 = vrot.slane %v5550, 4
      %v5553 = vshll.u32 %v5475, 16
      %v5555 = vrot.slane %v5553, 5
      %v5556 = vsel %vm1110, %v5551, %v5555
      %v5557 = vshrl.u32 %v5475, 16
      %v5559 = vrot.slane %v5557, 4
      %v5560 = vor.u32 %v5559, %v5555
      %v5561 = vrot.slane %v5560, 4
      %v5563 = vshll.u32 %v5476, 16
      %v5565 = vrot.slane %v5563, 5
      %v5566 = vsel %vm1110, %v5561, %v5565
      %v5568 = vshrl.u32 %v5477, 16
      %v5570 = vrot.slane %v5568, 4
      %v5571 = vshll.u32 %v5477, 16
      %v5573 = vrot.slane %v5571, 5
      %v5574 = vor.u32 %v5570, %v5573
      %v5575 = vrot.slane %v5574, 4
      %v5577 = vshll.u32 %v5478, 16
      %v5579 = vrot.slane %v5577, 5
      %v5580 = vsel %vm1110, %v5575, %v5579
      %v5581 = vshrl.u32 %v5478, 16
      %v5583 = vrot.slane %v5581, 4
      %v5584 = vor.u32 %v5583, %v5579
      %v5585 = vrot.slane %v5584, 4
      %v5587 = vshll.u32 %v5479, 16
      %v5589 = vrot.slane %v5587, 5
      %v5590 = vsel %vm1110, %v5585, %v5589
      %v5592 = vshrl.u32 %v5480, 16
      %v5594 = vrot.slane %v5592, 4
      %v5595 = vshll.u32 %v5480, 16
      %v5597 = vrot.slane %v5595, 5
      %v5598 = vor.u32 %v5594, %v5597
      %v5599 = vrot.slane %v5598, 4
      %v5601 = vshll.u32 %v5481, 16
      %v5603 = vrot.slane %v5601, 5
      %v5604 = vsel %vm1110, %v5599, %v5603
      %v5605 = vshrl.u32 %v5481, 16
      %v5607 = vrot.slane %v5605, 4
      %v5608 = vor.u32 %v5607, %v5603
      %v5609 = vrot.slane %v5608, 4
      %v5611 = vshll.u32 %v5482, 16
      %v5613 = vrot.slane %v5611, 5
      %v5614 = vsel %vm1110, %v5609, %v5613
      %v5616 = vshrl.u32 %v5483, 16
      %v5618 = vrot.slane %v5616, 4
      %v5619 = vshll.u32 %v5483, 16
      %v5621 = vrot.slane %v5619, 5
      %v5622 = vor.u32 %v5618, %v5621
      %v5623 = vrot.slane %v5622, 4
      %v5625 = vshll.u32 %v5484, 16
      %v5627 = vrot.slane %v5625, 5
      %v5628 = vsel %vm1110, %v5623, %v5627
      %v5629 = vshrl.u32 %v5484, 16
      %v5631 = vrot.slane %v5629, 4
      %v5632 = vor.u32 %v5631, %v5627
      %v5633 = vrot.slane %v5632, 4
      %v5635 = vshll.u32 %v5485, 16
      %v5637 = vrot.slane %v5635, 5
      %v5638 = vsel %vm1110, %v5633, %v5637
      %v5640 = vshrl.u32 %v5486, 16
      %v5642 = vrot.slane %v5640, 4
      %v5643 = vshll.u32 %v5486, 16
      %v5645 = vrot.slane %v5643, 5
      %v5646 = vor.u32 %v5642, %v5645
      %v5647 = vrot.slane %v5646, 4
      %v5649 = vshll.u32 %v5487, 16
      %v5651 = vrot.slane %v5649, 5
      %v5652 = vsel %vm1110, %v5647, %v5651
      %v5653 = vshrl.u32 %v5487, 16
      %v5655 = vrot.slane %v5653, 4
      %v5656 = vor.u32 %v5655, %v5651
      %v5657 = vrot.slane %v5656, 4
      %v5659 = vshll.u32 %v5488, 16
      %v5661 = vrot.slane %v5659, 5
      %v5662 = vsel %vm1110, %v5657, %v5661
      %v5664 = vshrl.u32 %v5489, 16
      %v5666 = vrot.slane %v5664, 4
      %v5667 = vshll.u32 %v5489, 16
      %v5669 = vrot.slane %v5667, 5
      %v5670 = vor.u32 %v5666, %v5669
      %v5671 = vrot.slane %v5670, 4
      %v5673 = vshll.u32 %v5490, 16
      %v5675 = vrot.slane %v5673, 5
      %v5676 = vsel %vm1110, %v5671, %v5675
      %v5677 = vshrl.u32 %v5490, 16
      %v5679 = vrot.slane %v5677, 4
      %v5680 = vor.u32 %v5679, %v5675
      %v5681 = vrot.slane %v5680, 4
      %v5683 = vshll.u32 %v5491, 16
      %v5685 = vrot.slane %v5683, 5
      %v5686 = vsel %vm1110, %v5681, %v5685
      %v5688 = vshrl.u32 %v5492, 16
      %v5690 = vrot.slane %v5688, 4
      %v5691 = vshll.u32 %v5492, 16
      %v5693 = vrot.slane %v5691, 5
      %v5694 = vor.u32 %v5690, %v5693
      %v5695 = vrot.slane %v5694, 4
      %v5697 = vshll.u32 %v5493, 16
      %v5699 = vrot.slane %v5697, 5
      %v5700 = vsel %vm1110, %v5695, %v5699
      %v5701 = vshrl.u32 %v5493, 16
      %v5703 = vrot.slane %v5701, 4
      %v5704 = vor.u32 %v5703, %v5699
      %v5705 = vrot.slane %v5704, 4
      %v5707 = vshll.u32 %v5494, 16
      %v5709 = vrot.slane %v5707, 5
      %v5710 = vsel %vm1110, %v5705, %v5709
      %v5712 = vshrl.u32 %v5495, 16
      %v5714 = vrot.slane %v5712, 4
      %v5715 = vshll.u32 %v5495, 16
      %v5717 = vrot.slane %v5715, 5
      %v5718 = vor.u32 %v5714, %v5717
      %v5719 = vrot.slane %v5718, 4
      %v5721 = vshll.u32 %v5496, 16
      %v5723 = vrot.slane %v5721, 5
      %v5724 = vsel %vm1110, %v5719, %v5723
      %v5725 = vshrl.u32 %v5496, 16
      %v5727 = vrot.slane %v5725, 4
      %v5728 = vor.u32 %v5727, %v5723
      %v5729 = vrot.slane %v5728, 4
      %v5731 = vshll.u32 %v5497, 16
      %v5733 = vrot.slane %v5731, 5
      %v5734 = vsel %vm1110, %v5729, %v5733
      %v5736 = vshrl.u32 %v5498, 16
      %v5738 = vrot.slane %v5736, 4
      %v5739 = vshll.u32 %v5498, 16
      %v5741 = vrot.slane %v5739, 5
      %v5742 = vor.u32 %v5738, %v5741
      %v5743 = vrot.slane %v5742, 4
      %v5745 = vshll.u32 %v5499, 16
      %v5747 = vrot.slane %v5745, 5
      %v5748 = vsel %vm1110, %v5743, %v5747
      %v5749 = vshrl.u32 %v5499, 16
      %v5751 = vrot.slane %v5749, 4
      %v5752 = vor.u32 %v5751, %v5747
      %v5753 = vrot.slane %v5752, 4
      %v5755 = vshll.u32 %v5500, 16
      %v5757 = vrot.slane %v5755, 5
      %v5758 = vsel %vm1110, %v5753, %v5757
      %v5760 = vshrl.u32 %v5501, 16
      %v5762 = vrot.slane %v5760, 4
      %v5763 = vshll.u32 %v5501, 16
      %v5765 = vrot.slane %v5763, 5
      %v5766 = vor.u32 %v5762, %v5765
      %v5767 = vrot.slane %v5766, 4
      %v5769 = vshll.u32 %v5502, 16
      %v5771 = vrot.slane %v5769, 5
      %v5772 = vsel %vm1110, %v5767, %v5771
      %v5773 = vshrl.u32 %v5502, 16
      %v5775 = vrot.slane %v5773, 4
      %v5776 = vor.u32 %v5775, %v5771
      %v5777 = vrot.slane %v5776, 4
      %v5779 = vshll.u32 %v5503, 16
      %v5781 = vrot.slane %v5779, 5
      %v5782 = vsel %vm1110, %v5777, %v5781
      %v5784 = vshrl.u32 %v5504, 16
      %v5786 = vrot.slane %v5784, 4
      %v5787 = vshll.u32 %v5504, 16
      %v5789 = vrot.slane %v5787, 5
      %v5790 = vor.u32 %v5786, %v5789
      %v5791 = vrot.slane %v5790, 4
      %v5793 = vshll.u32 %v5505, 16
      %v5795 = vrot.slane %v5793, 5
      %v5796 = vsel %vm1110, %v5791, %v5795
      %v5797 = vshrl.u32 %v5505, 16
      %v5799 = vrot.slane %v5797, 4
      %v5800 = vor.u32 %v5799, %v5795
      %v5801 = vrot.slane %v5800, 4
      %v5803 = vshll.u32 %v5506, 16
      %v5805 = vrot.slane %v5803, 5
      %v5806 = vsel %vm1110, %v5801, %v5805
      %v5808 = vshrl.u32 %v5507, 16
      %v5810 = vrot.slane %v5808, 4
      %v5811 = vshll.u32 %v5507, 16
      %v5813 = vrot.slane %v5811, 5
      %v5814 = vor.u32 %v5810, %v5813
      %v5815 = vrot.slane %v5814, 4
      %v5817 = vshll.u32 %v5508, 16
      %v5819 = vrot.slane %v5817, 5
      %v5820 = vsel %vm1110, %v5815, %v5819
      %v5821 = vshrl.u32 %v5508, 16
      %v5823 = vrot.slane %v5821, 4
      %v5824 = vor.u32 %v5823, %v5819
      %v5825 = vrot.slane %v5824, 4
      %v5827 = vshll.u32 %v5509, 16
      %v5829 = vrot.slane %v5827, 5
      %v5830 = vsel %vm1110, %v5825, %v5829
      %v5832 = vshrl.u32 %v5510, 16
      %v5834 = vrot.slane %v5832, 4
      %v5835 = vshll.u32 %v5510, 16
      %v5837 = vrot.slane %v5835, 5
      %v5838 = vor.u32 %v5834, %v5837
      %v5839 = vrot.slane %v5838, 4
      %v5841 = vshll.u32 %v5511, 16
      %v5843 = vrot.slane %v5841, 5
      %v5844 = vsel %vm1110, %v5839, %v5843
      %v5845 = vshrl.u32 %v5511, 16
      %v5847 = vrot.slane %v5845, 4
      %v5848 = vor.u32 %v5847, %v5843
      %v5849 = vrot.slane %v5848, 4
      %v5851 = vshll.u32 %v5512, 16
      %v5853 = vrot.slane %v5851, 5
      %v5854 = vsel %vm1110, %v5849, %v5853
      %v5856 = vshrl.u32 %v5513, 16
      %v5858 = vrot.slane %v5856, 4
      %v5859 = vshll.u32 %v5513, 16
      %v5861 = vrot.slane %v5859, 5
      %v5862 = vor.u32 %v5858, %v5861
      %v5863 = vrot.slane %v5862, 4
      %v5865 = vshll.u32 %v5514, 16
      %v5867 = vrot.slane %v5865, 5
      %v5868 = vsel %vm1110, %v5863, %v5867
      %v5869 = vshrl.u32 %v5514, 16
      %v5871 = vrot.slane %v5869, 4
      %v5872 = vor.u32 %v5871, %v5867
      %v5873 = vrot.slane %v5872, 4
      %v5875 = vshll.u32 %v5515, 16
      %v5877 = vrot.slane %v5875, 5
      %v5878 = vsel %vm1110, %v5873, %v5877
      %v5880 = vshrl.u32 %v5516, 16
      %v5882 = vrot.slane %v5880, 4
      %v5883 = vshll.u32 %v5516, 16
      %v5885 = vrot.slane %v5883, 5
      %v5886 = vor.u32 %v5882, %v5885
      %v5887 = vrot.slane %v5886, 4
      %v5889 = vshll.u32 %v5517, 16
      %v5891 = vrot.slane %v5889, 5
      %v5892 = vsel %vm1110, %v5887, %v5891
      %v5893 = vshrl.u32 %v5517, 16
      %v5895 = vrot.slane %v5893, 4
      %v5896 = vor.u32 %v5895, %v5891
      %v5897 = vrot.slane %v5896, 4
      %v5899 = vshll.u32 %v5518, 16
      %v5901 = vrot.slane %v5899, 5
      %v5902 = vsel %vm1110, %v5897, %v5901
      %5903 = vrot.lane.b32.xlu0 %v5532, 8
      %v5904 = vpop.permute.xlu0 %5903
      %5905 = vrot.lane.b32.xlu0 %v5542, 8
      %v5906 = vpop.permute.xlu0 %5905
      %5907 = vrot.lane.b32.xlu0 %v5556, 8
      %v5908 = vpop.permute.xlu0 %5907
      %5909 = vrot.lane.b32.xlu0 %v5566, 8
      %v5910 = vpop.permute.xlu0 %5909
      %5911 = vrot.lane.b32.xlu0 %v5580, 8
      %v5912 = vpop.permute.xlu0 %5911
      %5913 = vrot.lane.b32.xlu0 %v5590, 8
      %v5914 = vpop.permute.xlu0 %5913
      %5915 = vrot.lane.b32.xlu0 %v5604, 8
      %v5916 = vpop.permute.xlu0 %5915
      %5917 = vrot.lane.b32.xlu0 %v5614, 8
      %v5918 = vpop.permute.xlu0 %5917
      %5919 = vrot.lane.b32.xlu0 %v5628, 8
      %v5920 = vpop.permute.xlu0 %5919
      %5921 = vrot.lane.b32.xlu0 %v5638, 8
      %v5922 = vpop.permute.xlu0 %5921
      %5923 = vrot.lane.b32.xlu0 %v5652, 8
      %v5924 = vpop.permute.xlu0 %5923
      %5925 = vrot.lane.b32.xlu0 %v5662, 8
      %v5926 = vpop.permute.xlu0 %5925
      %5927 = vrot.lane.b32.xlu0 %v5676, 8
      %v5928 = vpop.permute.xlu0 %5927
      %5929 = vrot.lane.b32.xlu0 %v5686, 8
      %v5930 = vpop.permute.xlu0 %5929
      %5931 = vrot.lane.b32.xlu0 %v5700, 8
      %v5932 = vpop.permute.xlu0 %5931
      %5933 = vrot.lane.b32.xlu0 %v5710, 8
      %v5934 = vpop.permute.xlu0 %5933
      %5935 = vrot.lane.b32.xlu0 %v5724, 8
      %v5936 = vpop.permute.xlu0 %5935
      %5937 = vrot.lane.b32.xlu0 %v5734, 8
      %v5938 = vpop.permute.xlu0 %5937
      %5939 = vrot.lane.b32.xlu0 %v5748, 8
      %v5940 = vpop.permute.xlu0 %5939
      %5941 = vrot.lane.b32.xlu0 %v5758, 8
      %v5942 = vpop.permute.xlu0 %5941
      %5943 = vrot.lane.b32.xlu0 %v5772, 8
      %v5944 = vpop.permute.xlu0 %5943
      %5945 = vrot.lane.b32.xlu0 %v5782, 8
      %v5946 = vpop.permute.xlu0 %5945
      %5947 = vrot.lane.b32.xlu0 %v5796, 8
      %v5948 = vpop.permute.xlu0 %5947
      %5949 = vrot.lane.b32.xlu0 %v5806, 8
      %v5950 = vpop.permute.xlu0 %5949
      %5951 = vrot.lane.b32.xlu0 %v5820, 8
      %v5952 = vpop.permute.xlu0 %5951
      %5953 = vrot.lane.b32.xlu0 %v5830, 8
      %v5954 = vpop.permute.xlu0 %5953
      %5955 = vrot.lane.b32.xlu0 %v5844, 8
      %v5956 = vpop.permute.xlu0 %5955
      %5957 = vrot.lane.b32.xlu0 %v5854, 8
      %v5958 = vpop.permute.xlu0 %5957
      %5959 = vrot.lane.b32.xlu0 %v5868, 8
      %v5960 = vpop.permute.xlu0 %5959
      %5961 = vrot.lane.b32.xlu0 %v5878, 8
      %v5962 = vpop.permute.xlu0 %5961
      %5963 = vrot.lane.b32.xlu0 %v5892, 8
      %v5964 = vpop.permute.xlu0 %5963
      %5965 = vrot.lane.b32.xlu0 %v5902, 8
      %v5966 = vpop.permute.xlu0 %5965
      %5999 = vst.msk [vmem:[#allocation3] sm:$0xf] %vm1591, %v5904
      %6000 = vst.msk [vmem:[#allocation3 + $0x4] sm:$0xf] %vm1591, %v5906
      %6001 = vst.msk [vmem:[#allocation3 + $0x8] sm:$0xf] %vm1591, %v5908
      %6002 = vst.msk [vmem:[#allocation3 + $0xc] sm:$0xf] %vm1591, %v5910
      %6003 = vst.msk [vmem:[#allocation3 + $0x10] sm:$0xf] %vm1591, %v5912
      %6004 = vst.msk [vmem:[#allocation3 + $0x14] sm:$0xf] %vm1591, %v5914
      %6005 = vst.msk [vmem:[#allocation3 + $0x18] sm:$0xf] %vm1591, %v5916
      %6006 = vst.msk [vmem:[#allocation3 + $0x1c] sm:$0xf] %vm1591, %v5918
      %6007 = vst.msk [vmem:[#allocation3 + $0x20] sm:$0xf] %vm1591, %v5920
      %6008 = vst.msk [vmem:[#allocation3 + $0x24] sm:$0xf] %vm1591, %v5922
      %6009 = vst.msk [vmem:[#allocation3 + $0x28] sm:$0xf] %vm1591, %v5924
      %6010 = vst.msk [vmem:[#allocation3 + $0x2c] sm:$0xf] %vm1591, %v5926
      %6011 = vst.msk [vmem:[#allocation3 + $0x30] sm:$0xf] %vm1591, %v5928
      %6012 = vst.msk [vmem:[#allocation3 + $0x34] sm:$0xf] %vm1591, %v5930
      %6013 = vst.msk [vmem:[#allocation3 + $0x38] sm:$0xf] %vm1591, %v5932
      %6014 = vst.msk [vmem:[#allocation3 + $0x3c] sm:$0xf] %vm1591, %v5934
      %6015 = vst.msk [vmem:[#allocation3 + $0x40] sm:$0xf] %vm1591, %v5936
      %6016 = vst.msk [vmem:[#allocation3 + $0x44] sm:$0xf] %vm1591, %v5938
      %6017 = vst.msk [vmem:[#allocation3 + $0x48] sm:$0xf] %vm1591, %v5940
      %6018 = vst.msk [vmem:[#allocation3 + $0x4c] sm:$0xf] %vm1591, %v5942
      %6019 = vst.msk [vmem:[#allocation3 + $0x50] sm:$0xf] %vm1591, %v5944
      %6020 = vst.msk [vmem:[#allocation3 + $0x54] sm:$0xf] %vm1591, %v5946
      %6021 = vst.msk [vmem:[#allocation3 + $0x58] sm:$0xf] %vm1591, %v5948
      %6022 = vst.msk [vmem:[#allocation3 + $0x5c] sm:$0xf] %vm1591, %v5950
      %6023 = vst.msk [vmem:[#allocation3 + $0x60] sm:$0xf] %vm1591, %v5952
      %6024 = vst.msk [vmem:[#allocation3 + $0x64] sm:$0xf] %vm1591, %v5954
      %6025 = vst.msk [vmem:[#allocation3 + $0x68] sm:$0xf] %vm1591, %v5956
      %6026 = vst.msk [vmem:[#allocation3 + $0x6c] sm:$0xf] %vm1591, %v5958
      %6027 = vst.msk [vmem:[#allocation3 + $0x70] sm:$0xf] %vm1591, %v5960
      %6028 = vst.msk [vmem:[#allocation3 + $0x74] sm:$0xf] %vm1591, %v5962
      %6029 = vst.msk [vmem:[#allocation3 + $0x78] sm:$0xf] %vm1591, %v5964
      %6030 = vst.msk [vmem:[#allocation3 + $0x7c] sm:$0xf] %vm1591, %v5966
      %v6031 = vld [vmem:[#allocation2] sm:$0xe]
      %v6032 = vld [vmem:[#allocation2 + $0x4] sm:$0xf]
      %v6033 = vld [vmem:[#allocation2 + $0x8] sm:$0x1]
      %v6034 = vld [vmem:[#allocation2 + $0xc] sm:$0xe]
      %v6035 = vld [vmem:[#allocation2 + $0x10] sm:$0xf]
      %v6036 = vld [vmem:[#allocation2 + $0x14] sm:$0x1]
      %v6037 = vld [vmem:[#allocation2 + $0x18] sm:$0xe]
      %v6038 = vld [vmem:[#allocation2 + $0x1c] sm:$0xf]
      %v6039 = vld [vmem:[#allocation2 + $0x20] sm:$0x1]
      %v6040 = vld [vmem:[#allocation2 + $0x24] sm:$0xe]
      %v6041 = vld [vmem:[#allocation2 + $0x28] sm:$0xf]
      %v6042 = vld [vmem:[#allocation2 + $0x2c] sm:$0x1]
      %v6043 = vld [vmem:[#allocation2 + $0x30] sm:$0xe]
      %v6044 = vld [vmem:[#allocation2 + $0x34] sm:$0xf]
      %v6045 = vld [vmem:[#allocation2 + $0x38] sm:$0x1]
      %v6046 = vld [vmem:[#allocation2 + $0x3c] sm:$0xe]
      %v6047 = vld [vmem:[#allocation2 + $0x40] sm:$0xf]
      %v6048 = vld [vmem:[#allocation2 + $0x44] sm:$0x1]
      %v6049 = vld [vmem:[#allocation2 + $0x48] sm:$0xe]
      %v6050 = vld [vmem:[#allocation2 + $0x4c] sm:$0xf]
      %v6051 = vld [vmem:[#allocation2 + $0x50] sm:$0x1]
      %v6052 = vld [vmem:[#allocation2 + $0x54] sm:$0xe]
      %v6053 = vld [vmem:[#allocation2 + $0x58] sm:$0xf]
      %v6054 = vld [vmem:[#allocation2 + $0x5c] sm:$0x1]
      %v6055 = vld [vmem:[#allocation2 + $0x60] sm:$0xe]
      %v6056 = vld [vmem:[#allocation2 + $0x64] sm:$0xf]
      %v6057 = vld [vmem:[#allocation2 + $0x68] sm:$0x1]
      %v6058 = vld [vmem:[#allocation2 + $0x6c] sm:$0xe]
      %v6059 = vld [vmem:[#allocation2 + $0x70] sm:$0xf]
      %v6060 = vld [vmem:[#allocation2 + $0x74] sm:$0x1]
      %v6061 = vld [vmem:[#allocation2 + $0x78] sm:$0xe]
      %v6062 = vld [vmem:[#allocation2 + $0x7c] sm:$0xf]
      %v6063 = vld [vmem:[#allocation2 + $0x80] sm:$0x1]
      %v6064 = vld [vmem:[#allocation2 + $0x84] sm:$0xe]
      %v6065 = vld [vmem:[#allocation2 + $0x88] sm:$0xf]
      %v6066 = vld [vmem:[#allocation2 + $0x8c] sm:$0x1]
      %v6067 = vld [vmem:[#allocation2 + $0x90] sm:$0xe]
      %v6068 = vld [vmem:[#allocation2 + $0x94] sm:$0xf]
      %v6069 = vld [vmem:[#allocation2 + $0x98] sm:$0x1]
      %v6070 = vld [vmem:[#allocation2 + $0x9c] sm:$0xe]
      %v6071 = vld [vmem:[#allocation2 + $0xa0] sm:$0xf]
      %v6072 = vld [vmem:[#allocation2 + $0xa4] sm:$0x1]
      %v6073 = vld [vmem:[#allocation2 + $0xa8] sm:$0xe]
      %v6074 = vld [vmem:[#allocation2 + $0xac] sm:$0xf]
      %v6075 = vld [vmem:[#allocation2 + $0xb0] sm:$0x1]
      %v6076 = vld [vmem:[#allocation2 + $0xb4] sm:$0xe]
      %v6077 = vld [vmem:[#allocation2 + $0xb8] sm:$0xf]
      %v6078 = vld [vmem:[#allocation2 + $0xbc] sm:$0x1]
      %v6127 = vrot.slane %v6031, 5
      %v6128 = vrot.slane %v6127, 4
      %v6129 = vrot.slane %v6032, 5
      %v6130 = vsel %vm1722, %v6128, %v6129
      %v6131 = vrot.slane %v6129, 4
      %v6132 = vrot.slane %v6033, 5
      %v6133 = vsel %vm1722, %v6131, %v6132
      %v6134 = vrot.slane %v6034, 5
      %v6135 = vrot.slane %v6134, 4
      %v6136 = vrot.slane %v6035, 5
      %v6137 = vsel %vm1722, %v6135, %v6136
      %v6138 = vrot.slane %v6136, 4
      %v6139 = vrot.slane %v6036, 5
      %v6140 = vsel %vm1722, %v6138, %v6139
      %v6141 = vrot.slane %v6037, 5
      %v6142 = vrot.slane %v6141, 4
      %v6143 = vrot.slane %v6038, 5
      %v6144 = vsel %vm1722, %v6142, %v6143
      %v6145 = vrot.slane %v6143, 4
      %v6146 = vrot.slane %v6039, 5
      %v6147 = vsel %vm1722, %v6145, %v6146
      %v6148 = vrot.slane %v6040, 5
      %v6149 = vrot.slane %v6148, 4
      %v6150 = vrot.slane %v6041, 5
      %v6151 = vsel %vm1722, %v6149, %v6150
      %v6152 = vrot.slane %v6150, 4
      %v6153 = vrot.slane %v6042, 5
      %v6154 = vsel %vm1722, %v6152, %v6153
      %v6155 = vrot.slane %v6043, 5
      %v6156 = vrot.slane %v6155, 4
      %v6157 = vrot.slane %v6044, 5
      %v6158 = vsel %vm1722, %v6156, %v6157
      %v6159 = vrot.slane %v6157, 4
      %v6160 = vrot.slane %v6045, 5
      %v6161 = vsel %vm1722, %v6159, %v6160
      %v6162 = vrot.slane %v6046, 5
      %v6163 = vrot.slane %v6162, 4
      %v6164 = vrot.slane %v6047, 5
      %v6165 = vsel %vm1722, %v6163, %v6164
      %v6166 = vrot.slane %v6164, 4
      %v6167 = vrot.slane %v6048, 5
      %v6168 = vsel %vm1722, %v6166, %v6167
      %v6169 = vrot.slane %v6049, 5
      %v6170 = vrot.slane %v6169, 4
      %v6171 = vrot.slane %v6050, 5
      %v6172 = vsel %vm1722, %v6170, %v6171
      %v6173 = vrot.slane %v6171, 4
      %v6174 = vrot.slane %v6051, 5
      %v6175 = vsel %vm1722, %v6173, %v6174
      %v6176 = vrot.slane %v6052, 5
      %v6177 = vrot.slane %v6176, 4
      %v6178 = vrot.slane %v6053, 5
      %v6179 = vsel %vm1722, %v6177, %v6178
      %v6180 = vrot.slane %v6178, 4
      %v6181 = vrot.slane %v6054, 5
      %v6182 = vsel %vm1722, %v6180, %v6181
      %v6183 = vrot.slane %v6055, 5
      %v6184 = vrot.slane %v6183, 4
      %v6185 = vrot.slane %v6056, 5
      %v6186 = vsel %vm1722, %v6184, %v6185
      %v6187 = vrot.slane %v6185, 4
      %v6188 = vrot.slane %v6057, 5
      %v6189 = vsel %vm1722, %v6187, %v6188
      %v6190 = vrot.slane %v6058, 5
      %v6191 = vrot.slane %v6190, 4
      %v6192 = vrot.slane %v6059, 5
      %v6193 = vsel %vm1722, %v6191, %v6192
      %v6194 = vrot.slane %v6192, 4
      %v6195 = vrot.slane %v6060, 5
      %v6196 = vsel %vm1722, %v6194, %v6195
      %v6197 = vrot.slane %v6061, 5
      %v6198 = vrot.slane %v6197, 4
      %v6199 = vrot.slane %v6062, 5
      %v6200 = vsel %vm1722, %v6198, %v6199
      %v6201 = vrot.slane %v6199, 4
      %v6202 = vrot.slane %v6063, 5
      %v6203 = vsel %vm1722, %v6201, %v6202
      %v6204 = vrot.slane %v6064, 5
      %v6205 = vrot.slane %v6204, 4
      %v6206 = vrot.slane %v6065, 5
      %v6207 = vsel %vm1722, %v6205, %v6206
      %v6208 = vrot.slane %v6206, 4
      %v6209 = vrot.slane %v6066, 5
      %v6210 = vsel %vm1722, %v6208, %v6209
      %v6211 = vrot.slane %v6067, 5
      %v6212 = vrot.slane %v6211, 4
      %v6213 = vrot.slane %v6068, 5
      %v6214 = vsel %vm1722, %v6212, %v6213
      %v6215 = vrot.slane %v6213, 4
      %v6216 = vrot.slane %v6069, 5
      %v6217 = vsel %vm1722, %v6215, %v6216
      %v6218 = vrot.slane %v6070, 5
      %v6219 = vrot.slane %v6218, 4
      %v6220 = vrot.slane %v6071, 5
      %v6221 = vsel %vm1722, %v6219, %v6220
      %v6222 = vrot.slane %v6220, 4
      %v6223 = vrot.slane %v6072, 5
      %v6224 = vsel %vm1722, %v6222, %v6223
      %v6225 = vrot.slane %v6073, 5
      %v6226 = vrot.slane %v6225, 4
      %v6227 = vrot.slane %v6074, 5
      %v6228 = vsel %vm1722, %v6226, %v6227
      %v6229 = vrot.slane %v6227, 4
      %v6230 = vrot.slane %v6075, 5
      %v6231 = vsel %vm1722, %v6229, %v6230
      %v6232 = vrot.slane %v6076, 5
      %v6233 = vrot.slane %v6232, 4
      %v6234 = vrot.slane %v6077, 5
      %v6235 = vsel %vm1722, %v6233, %v6234
      %v6236 = vrot.slane %v6234, 4
      %v6237 = vrot.slane %v6078, 5
      %v6238 = vsel %vm1722, %v6236, %v6237
      %6239 = vrot.lane.b32.xlu0 %v6130, 16
      %v6240 = vpop.permute.xlu0 %6239
      %6241 = vrot.lane.b32.xlu0 %v6133, 16
      %v6242 = vpop.permute.xlu0 %6241
      %6243 = vrot.lane.b32.xlu0 %v6137, 16
      %v6244 = vpop.permute.xlu0 %6243
      %6245 = vrot.lane.b32.xlu0 %v6140, 16
      %v6246 = vpop.permute.xlu0 %6245
      %6247 = vrot.lane.b32.xlu0 %v6144, 16
      %v6248 = vpop.permute.xlu0 %6247
      %6249 = vrot.lane.b32.xlu0 %v6147, 16
      %v6250 = vpop.permute.xlu0 %6249
      %6251 = vrot.lane.b32.xlu0 %v6151, 16
      %v6252 = vpop.permute.xlu0 %6251
      %6253 = vrot.lane.b32.xlu0 %v6154, 16
      %v6254 = vpop.permute.xlu0 %6253
      %6255 = vrot.lane.b32.xlu0 %v6158, 16
      %v6256 = vpop.permute.xlu0 %6255
      %6257 = vrot.lane.b32.xlu0 %v6161, 16
      %v6258 = vpop.permute.xlu0 %6257
      %6259 = vrot.lane.b32.xlu0 %v6165, 16
      %v6260 = vpop.permute.xlu0 %6259
      %6261 = vrot.lane.b32.xlu0 %v6168, 16
      %v6262 = vpop.permute.xlu0 %6261
      %6263 = vrot.lane.b32.xlu0 %v6172, 16
      %v6264 = vpop.permute.xlu0 %6263
      %6265 = vrot.lane.b32.xlu0 %v6175, 16
      %v6266 = vpop.permute.xlu0 %6265
      %6267 = vrot.lane.b32.xlu0 %v6179, 16
      %v6268 = vpop.permute.xlu0 %6267
      %6269 = vrot.lane.b32.xlu0 %v6182, 16
      %v6270 = vpop.permute.xlu0 %6269
      %6271 = vrot.lane.b32.xlu0 %v6186, 16
      %v6272 = vpop.permute.xlu0 %6271
      %6273 = vrot.lane.b32.xlu0 %v6189, 16
      %v6274 = vpop.permute.xlu0 %6273
      %6275 = vrot.lane.b32.xlu0 %v6193, 16
      %v6276 = vpop.permute.xlu0 %6275
      %6277 = vrot.lane.b32.xlu0 %v6196, 16
      %v6278 = vpop.permute.xlu0 %6277
      %6279 = vrot.lane.b32.xlu0 %v6200, 16
      %v6280 = vpop.permute.xlu0 %6279
      %6281 = vrot.lane.b32.xlu0 %v6203, 16
      %v6282 = vpop.permute.xlu0 %6281
      %6283 = vrot.lane.b32.xlu0 %v6207, 16
      %v6284 = vpop.permute.xlu0 %6283
      %6285 = vrot.lane.b32.xlu0 %v6210, 16
      %v6286 = vpop.permute.xlu0 %6285
      %6287 = vrot.lane.b32.xlu0 %v6214, 16
      %v6288 = vpop.permute.xlu0 %6287
      %6289 = vrot.lane.b32.xlu0 %v6217, 16
      %v6290 = vpop.permute.xlu0 %6289
      %6291 = vrot.lane.b32.xlu0 %v6221, 16
      %v6292 = vpop.permute.xlu0 %6291
      %6293 = vrot.lane.b32.xlu0 %v6224, 16
      %v6294 = vpop.permute.xlu0 %6293
      %6295 = vrot.lane.b32.xlu0 %v6228, 16
      %v6296 = vpop.permute.xlu0 %6295
      %6297 = vrot.lane.b32.xlu0 %v6231, 16
      %v6298 = vpop.permute.xlu0 %6297
      %6299 = vrot.lane.b32.xlu0 %v6235, 16
      %v6300 = vpop.permute.xlu0 %6299
      %6301 = vrot.lane.b32.xlu0 %v6238, 16
      %v6302 = vpop.permute.xlu0 %6301
      %6335 = vst.msk [vmem:[#allocation3] sm:$0xf] %vm1931, %v6240
      %6336 = vst.msk [vmem:[#allocation3 + $0x4] sm:$0xf] %vm1931, %v6242
      %6337 = vst.msk [vmem:[#allocation3 + $0x8] sm:$0xf] %vm1931, %v6244
      %6338 = vst.msk [vmem:[#allocation3 + $0xc] sm:$0xf] %vm1931, %v6246
      %6339 = vst.msk [vmem:[#allocation3 + $0x10] sm:$0xf] %vm1931, %v6248
      %6340 = vst.msk [vmem:[#allocation3 + $0x14] sm:$0xf] %vm1931, %v6250
      %6341 = vst.msk [vmem:[#allocation3 + $0x18] sm:$0xf] %vm1931, %v6252
      %6342 = vst.msk [vmem:[#allocation3 + $0x1c] sm:$0xf] %vm1931, %v6254
      %6343 = vst.msk [vmem:[#allocation3 + $0x20] sm:$0xf] %vm1931, %v6256
      %6344 = vst.msk [vmem:[#allocation3 + $0x24] sm:$0xf] %vm1931, %v6258
      %6345 = vst.msk [vmem:[#allocation3 + $0x28] sm:$0xf] %vm1931, %v6260
      %6346 = vst.msk [vmem:[#allocation3 + $0x2c] sm:$0xf] %vm1931, %v6262
      %6347 = vst.msk [vmem:[#allocation3 + $0x30] sm:$0xf] %vm1931, %v6264
      %6348 = vst.msk [vmem:[#allocation3 + $0x34] sm:$0xf] %vm1931, %v6266
      %6349 = vst.msk [vmem:[#allocation3 + $0x38] sm:$0xf] %vm1931, %v6268
      %6350 = vst.msk [vmem:[#allocation3 + $0x3c] sm:$0xf] %vm1931, %v6270
      %6351 = vst.msk [vmem:[#allocation3 + $0x40] sm:$0xf] %vm1931, %v6272
      %6352 = vst.msk [vmem:[#allocation3 + $0x44] sm:$0xf] %vm1931, %v6274
      %6353 = vst.msk [vmem:[#allocation3 + $0x48] sm:$0xf] %vm1931, %v6276
      %6354 = vst.msk [vmem:[#allocation3 + $0x4c] sm:$0xf] %vm1931, %v6278
      %6355 = vst.msk [vmem:[#allocation3 + $0x50] sm:$0xf] %vm1931, %v6280
      %6356 = vst.msk [vmem:[#allocation3 + $0x54] sm:$0xf] %vm1931, %v6282
      %6357 = vst.msk [vmem:[#allocation3 + $0x58] sm:$0xf] %vm1931, %v6284
      %6358 = vst.msk [vmem:[#allocation3 + $0x5c] sm:$0xf] %vm1931, %v6286
      %6359 = vst.msk [vmem:[#allocation3 + $0x60] sm:$0xf] %vm1931, %v6288
      %6360 = vst.msk [vmem:[#allocation3 + $0x64] sm:$0xf] %vm1931, %v6290
      %6361 = vst.msk [vmem:[#allocation3 + $0x68] sm:$0xf] %vm1931, %v6292
      %6362 = vst.msk [vmem:[#allocation3 + $0x6c] sm:$0xf] %vm1931, %v6294
      %6363 = vst.msk [vmem:[#allocation3 + $0x70] sm:$0xf] %vm1931, %v6296
      %6364 = vst.msk [vmem:[#allocation3 + $0x74] sm:$0xf] %vm1931, %v6298
      %6365 = vst.msk [vmem:[#allocation3 + $0x78] sm:$0xf] %vm1931, %v6300
      %6366 = vst.msk [vmem:[#allocation3 + $0x7c] sm:$0xf] %vm1931, %v6302
      %v6367 = vld [vmem:[%s327] sm:$0xf]
      %v6368 = vld [vmem:[%s327 + $0x4] sm:$0xf]
      %v6369 = vld [vmem:[%s327 + $0xc] sm:$0xf]
      %v6370 = vld [vmem:[%s327 + $0x10] sm:$0xf]
      %v6371 = vld [vmem:[%s327 + $0x18] sm:$0xf]
      %v6372 = vld [vmem:[%s327 + $0x1c] sm:$0xf]
      %v6373 = vld [vmem:[%s327 + $0x24] sm:$0xf]
      %v6374 = vld [vmem:[%s327 + $0x28] sm:$0xf]
      %v6375 = vld [vmem:[%s327 + $0x30] sm:$0xf]
      %v6376 = vld [vmem:[%s327 + $0x34] sm:$0xf]
      %v6377 = vld [vmem:[%s327 + $0x3c] sm:$0xf]
      %v6378 = vld [vmem:[%s327 + $0x40] sm:$0xf]
      %v6379 = vld [vmem:[%s327 + $0x48] sm:$0xf]
      %v6380 = vld [vmem:[%s327 + $0x4c] sm:$0xf]
      %v6381 = vld [vmem:[%s327 + $0x54] sm:$0xf]
      %v6382 = vld [vmem:[%s327 + $0x58] sm:$0xf]
      %v6383 = vld [vmem:[%s327 + $0x60] sm:$0xf]
      %v6384 = vld [vmem:[%s327 + $0x64] sm:$0xf]
      %v6385 = vld [vmem:[%s327 + $0x6c] sm:$0xf]
      %v6386 = vld [vmem:[%s327 + $0x70] sm:$0xf]
      %v6387 = vld [vmem:[%s327 + $0x78] sm:$0xf]
      %v6388 = vld [vmem:[%s327 + $0x7c] sm:$0xf]
      %v6389 = vld [vmem:[%s327 + $0x84] sm:$0xf]
      %v6390 = vld [vmem:[%s327 + $0x88] sm:$0xf]
      %v6391 = vld [vmem:[%s327 + $0x90] sm:$0xf]
      %v6392 = vld [vmem:[%s327 + $0x94] sm:$0xf]
      %v6393 = vld [vmem:[%s327 + $0x9c] sm:$0xf]
      %v6394 = vld [vmem:[%s327 + $0xa0] sm:$0xf]
      %v6395 = vld [vmem:[%s327 + $0xa8] sm:$0xf]
      %v6396 = vld [vmem:[%s327 + $0xac] sm:$0xf]
      %v6397 = vld [vmem:[%s327 + $0xb4] sm:$0xf]
      %v6398 = vld [vmem:[%s327 + $0xb8] sm:$0xf]
      %6431 = vrot.lane.b32.xlu0 %v6367, 24
      %v6432 = vpop.permute.xlu0 %6431
      %6433 = vrot.lane.b32.xlu0 %v6368, 24
      %v6434 = vpop.permute.xlu0 %6433
      %6435 = vrot.lane.b32.xlu0 %v6369, 24
      %v6436 = vpop.permute.xlu0 %6435
      %6437 = vrot.lane.b32.xlu0 %v6370, 24
      %v6438 = vpop.permute.xlu0 %6437
      %6439 = vrot.lane.b32.xlu0 %v6371, 24
      %v6440 = vpop.permute.xlu0 %6439
      %6441 = vrot.lane.b32.xlu0 %v6372, 24
      %v6442 = vpop.permute.xlu0 %6441
      %6443 = vrot.lane.b32.xlu0 %v6373, 24
      %v6444 = vpop.permute.xlu0 %6443
      %6445 = vrot.lane.b32.xlu0 %v6374, 24
      %v6446 = vpop.permute.xlu0 %6445
      %6447 = vrot.lane.b32.xlu0 %v6375, 24
      %v6448 = vpop.permute.xlu0 %6447
      %6449 = vrot.lane.b32.xlu0 %v6376, 24
      %v6450 = vpop.permute.xlu0 %6449
      %6451 = vrot.lane.b32.xlu0 %v6377, 24
      %v6452 = vpop.permute.xlu0 %6451
      %6453 = vrot.lane.b32.xlu0 %v6378, 24
      %v6454 = vpop.permute.xlu0 %6453
      %6455 = vrot.lane.b32.xlu0 %v6379, 24
      %v6456 = vpop.permute.xlu0 %6455
      %6457 = vrot.lane.b32.xlu0 %v6380, 24
      %v6458 = vpop.permute.xlu0 %6457
      %6459 = vrot.lane.b32.xlu0 %v6381, 24
      %v6460 = vpop.permute.xlu0 %6459
      %6461 = vrot.lane.b32.xlu0 %v6382, 24
      %v6462 = vpop.permute.xlu0 %6461
      %6463 = vrot.lane.b32.xlu0 %v6383, 24
      %v6464 = vpop.permute.xlu0 %6463
      %6465 = vrot.lane.b32.xlu0 %v6384, 24
      %v6466 = vpop.permute.xlu0 %6465
      %6467 = vrot.lane.b32.xlu0 %v6385, 24
      %v6468 = vpop.permute.xlu0 %6467
      %6469 = vrot.lane.b32.xlu0 %v6386, 24
      %v6470 = vpop.permute.xlu0 %6469
      %6471 = vrot.lane.b32.xlu0 %v6387, 24
      %v6472 = vpop.permute.xlu0 %6471
      %6473 = vrot.lane.b32.xlu0 %v6388, 24
      %v6474 = vpop.permute.xlu0 %6473
      %6475 = vrot.lane.b32.xlu0 %v6389, 24
      %v6476 = vpop.permute.xlu0 %6475
      %6477 = vrot.lane.b32.xlu0 %v6390, 24
      %v6478 = vpop.permute.xlu0 %6477
      %6479 = vrot.lane.b32.xlu0 %v6391, 24
      %v6480 = vpop.permute.xlu0 %6479
      %6481 = vrot.lane.b32.xlu0 %v6392, 24
      %v6482 = vpop.permute.xlu0 %6481
      %6483 = vrot.lane.b32.xlu0 %v6393, 24
      %v6484 = vpop.permute.xlu0 %6483
      %6485 = vrot.lane.b32.xlu0 %v6394, 24
      %v6486 = vpop.permute.xlu0 %6485
      %6487 = vrot.lane.b32.xlu0 %v6395, 24
      %v6488 = vpop.permute.xlu0 %6487
      %6489 = vrot.lane.b32.xlu0 %v6396, 24
      %v6490 = vpop.permute.xlu0 %6489
      %6491 = vrot.lane.b32.xlu0 %v6397, 24
      %v6492 = vpop.permute.xlu0 %6491
      %6493 = vrot.lane.b32.xlu0 %v6398, 24
      %v6494 = vpop.permute.xlu0 %6493
      %6527 = vst.msk [vmem:[#allocation3] sm:$0xf] %vm2124, %v6432
      %6528 = vst.msk [vmem:[#allocation3 + $0x4] sm:$0xf] %vm2124, %v6434
      %6529 = vst.msk [vmem:[#allocation3 + $0x8] sm:$0xf] %vm2124, %v6436
      %6530 = vst.msk [vmem:[#allocation3 + $0xc] sm:$0xf] %vm2124, %v6438
      %6531 = vst.msk [vmem:[#allocation3 + $0x10] sm:$0xf] %vm2124, %v6440
      %6532 = vst.msk [vmem:[#allocation3 + $0x14] sm:$0xf] %vm2124, %v6442
      %6533 = vst.msk [vmem:[#allocation3 + $0x18] sm:$0xf] %vm2124, %v6444
      %6534 = vst.msk [vmem:[#allocation3 + $0x1c] sm:$0xf] %vm2124, %v6446
      %6535 = vst.msk [vmem:[#allocation3 + $0x20] sm:$0xf] %vm2124, %v6448
      %6536 = vst.msk [vmem:[#allocation3 + $0x24] sm:$0xf] %vm2124, %v6450
      %6537 = vst.msk [vmem:[#allocation3 + $0x28] sm:$0xf] %vm2124, %v6452
      %6538 = vst.msk [vmem:[#allocation3 + $0x2c] sm:$0xf] %vm2124, %v6454
      %6539 = vst.msk [vmem:[#allocation3 + $0x30] sm:$0xf] %vm2124, %v6456
      %6540 = vst.msk [vmem:[#allocation3 + $0x34] sm:$0xf] %vm2124, %v6458
      %6541 = vst.msk [vmem:[#allocation3 + $0x38] sm:$0xf] %vm2124, %v6460
      %6542 = vst.msk [vmem:[#allocation3 + $0x3c] sm:$0xf] %vm2124, %v6462
      %6543 = vst.msk [vmem:[#allocation3 + $0x40] sm:$0xf] %vm2124, %v6464
      %6544 = vst.msk [vmem:[#allocation3 + $0x44] sm:$0xf] %vm2124, %v6466
      %6545 = vst.msk [vmem:[#allocation3 + $0x48] sm:$0xf] %vm2124, %v6468
      %6546 = vst.msk [vmem:[#allocation3 + $0x4c] sm:$0xf] %vm2124, %v6470
      %6547 = vst.msk [vmem:[#allocation3 + $0x50] sm:$0xf] %vm2124, %v6472
      %6548 = vst.msk [vmem:[#allocation3 + $0x54] sm:$0xf] %vm2124, %v6474
      %6549 = vst.msk [vmem:[#allocation3 + $0x58] sm:$0xf] %vm2124, %v6476
      %6550 = vst.msk [vmem:[#allocation3 + $0x5c] sm:$0xf] %vm2124, %v6478
      %6551 = vst.msk [vmem:[#allocation3 + $0x60] sm:$0xf] %vm2124, %v6480
      %6552 = vst.msk [vmem:[#allocation3 + $0x64] sm:$0xf] %vm2124, %v6482
      %6553 = vst.msk [vmem:[#allocation3 + $0x68] sm:$0xf] %vm2124, %v6484
      %6554 = vst.msk [vmem:[#allocation3 + $0x6c] sm:$0xf] %vm2124, %v6486
      %6555 = vst.msk [vmem:[#allocation3 + $0x70] sm:$0xf] %vm2124, %v6488
      %6556 = vst.msk [vmem:[#allocation3 + $0x74] sm:$0xf] %vm2124, %v6490
      %6557 = vst.msk [vmem:[#allocation3 + $0x78] sm:$0xf] %vm2124, %v6492
      %6558 = vst.msk [vmem:[#allocation3 + $0x7c] sm:$0xf] %vm2124, %v6494
      %v6559 = vld [vmem:[%s327] sm:$0xf]
      %v6560 = vld [vmem:[%s327 + $0x4] sm:$0xf]
      %v6561 = vld [vmem:[%s327 + $0x8] sm:$0x1]
      %v6562 = vld [vmem:[%s327 + $0xc] sm:$0xf]
      %v6563 = vld [vmem:[%s327 + $0x10] sm:$0xf]
      %v6564 = vld [vmem:[%s327 + $0x14] sm:$0x1]
      %v6565 = vld [vmem:[%s327 + $0x18] sm:$0xf]
      %v6566 = vld [vmem:[%s327 + $0x1c] sm:$0xf]
      %v6567 = vld [vmem:[%s327 + $0x20] sm:$0x1]
      %v6568 = vld [vmem:[%s327 + $0x24] sm:$0xf]
      %v6569 = vld [vmem:[%s327 + $0x28] sm:$0xf]
      %v6570 = vld [vmem:[%s327 + $0x2c] sm:$0x1]
      %v6571 = vld [vmem:[%s327 + $0x30] sm:$0xf]
      %v6572 = vld [vmem:[%s327 + $0x34] sm:$0xf]
      %v6573 = vld [vmem:[%s327 + $0x38] sm:$0x1]
      %v6574 = vld [vmem:[%s327 + $0x3c] sm:$0xf]
      %v6575 = vld [vmem:[%s327 + $0x40] sm:$0xf]
      %v6576 = vld [vmem:[%s327 + $0x44] sm:$0x1]
      %v6577 = vld [vmem:[%s327 + $0x48] sm:$0xf]
      %v6578 = vld [vmem:[%s327 + $0x4c] sm:$0xf]
      %v6579 = vld [vmem:[%s327 + $0x50] sm:$0x1]
      %v6580 = vld [vmem:[%s327 + $0x54] sm:$0xf]
      %v6581 = vld [vmem:[%s327 + $0x58] sm:$0xf]
      %v6582 = vld [vmem:[%s327 + $0x5c] sm:$0x1]
      %v6583 = vld [vmem:[%s327 + $0x60] sm:$0xf]
      %v6584 = vld [vmem:[%s327 + $0x64] sm:$0xf]
      %v6585 = vld [vmem:[%s327 + $0x68] sm:$0x1]
      %v6586 = vld [vmem:[%s327 + $0x6c] sm:$0xf]
      %v6587 = vld [vmem:[%s327 + $0x70] sm:$0xf]
      %v6588 = vld [vmem:[%s327 + $0x74] sm:$0x1]
      %v6589 = vld [vmem:[%s327 + $0x78] sm:$0xf]
      %v6590 = vld [vmem:[%s327 + $0x7c] sm:$0xf]
      %v6591 = vld [vmem:[%s327 + $0x80] sm:$0x1]
      %v6592 = vld [vmem:[%s327 + $0x84] sm:$0xf]
      %v6593 = vld [vmem:[%s327 + $0x88] sm:$0xf]
      %v6594 = vld [vmem:[%s327 + $0x8c] sm:$0x1]
      %v6595 = vld [vmem:[%s327 + $0x90] sm:$0xf]
      %v6596 = vld [vmem:[%s327 + $0x94] sm:$0xf]
      %v6597 = vld [vmem:[%s327 + $0x98] sm:$0x1]
      %v6598 = vld [vmem:[%s327 + $0x9c] sm:$0xf]
      %v6599 = vld [vmem:[%s327 + $0xa0] sm:$0xf]
      %v6600 = vld [vmem:[%s327 + $0xa4] sm:$0x1]
      %v6601 = vld [vmem:[%s327 + $0xa8] sm:$0xf]
      %v6602 = vld [vmem:[%s327 + $0xac] sm:$0xf]
      %v6603 = vld [vmem:[%s327 + $0xb0] sm:$0x1]
      %v6604 = vld [vmem:[%s327 + $0xb4] sm:$0xf]
      %v6605 = vld [vmem:[%s327 + $0xb8] sm:$0xf]
      %v6606 = vld [vmem:[%s327 + $0xbc] sm:$0x1]
      %v6608 = vshrl.u32 %v6559, 16
      %v6610 = vrot.slane %v6608, 4
      %v6611 = vshll.u32 %v6559, 16
      %v6613 = vrot.slane %v6611, 5
      %v6614 = vor.u32 %v6610, %v6613
      %v6615 = vrot.slane %v6614, 4
      %v6617 = vshll.u32 %v6560, 16
      %v6619 = vrot.slane %v6617, 5
      %v6620 = vsel %vm1110, %v6615, %v6619
      %v6621 = vshrl.u32 %v6560, 16
      %v6623 = vrot.slane %v6621, 4
      %v6624 = vor.u32 %v6623, %v6619
      %v6625 = vrot.slane %v6624, 4
      %v6627 = vshll.u32 %v6561, 16
      %v6629 = vrot.slane %v6627, 5
      %v6630 = vsel %vm1110, %v6625, %v6629
      %v6632 = vshrl.u32 %v6562, 16
      %v6634 = vrot.slane %v6632, 4
      %v6635 = vshll.u32 %v6562, 16
      %v6637 = vrot.slane %v6635, 5
      %v6638 = vor.u32 %v6634, %v6637
      %v6639 = vrot.slane %v6638, 4
      %v6641 = vshll.u32 %v6563, 16
      %v6643 = vrot.slane %v6641, 5
      %v6644 = vsel %vm1110, %v6639, %v6643
      %v6645 = vshrl.u32 %v6563, 16
      %v6647 = vrot.slane %v6645, 4
      %v6648 = vor.u32 %v6647, %v6643
      %v6649 = vrot.slane %v6648, 4
      %v6651 = vshll.u32 %v6564, 16
      %v6653 = vrot.slane %v6651, 5
      %v6654 = vsel %vm1110, %v6649, %v6653
      %v6656 = vshrl.u32 %v6565, 16
      %v6658 = vrot.slane %v6656, 4
      %v6659 = vshll.u32 %v6565, 16
      %v6661 = vrot.slane %v6659, 5
      %v6662 = vor.u32 %v6658, %v6661
      %v6663 = vrot.slane %v6662, 4
      %v6665 = vshll.u32 %v6566, 16
      %v6667 = vrot.slane %v6665, 5
      %v6668 = vsel %vm1110, %v6663, %v6667
      %v6669 = vshrl.u32 %v6566, 16
      %v6671 = vrot.slane %v6669, 4
      %v6672 = vor.u32 %v6671, %v6667
      %v6673 = vrot.slane %v6672, 4
      %v6675 = vshll.u32 %v6567, 16
      %v6677 = vrot.slane %v6675, 5
      %v6678 = vsel %vm1110, %v6673, %v6677
      %v6680 = vshrl.u32 %v6568, 16
      %v6682 = vrot.slane %v6680, 4
      %v6683 = vshll.u32 %v6568, 16
      %v6685 = vrot.slane %v6683, 5
      %v6686 = vor.u32 %v6682, %v6685
      %v6687 = vrot.slane %v6686, 4
      %v6689 = vshll.u32 %v6569, 16
      %v6691 = vrot.slane %v6689, 5
      %v6692 = vsel %vm1110, %v6687, %v6691
      %v6693 = vshrl.u32 %v6569, 16
      %v6695 = vrot.slane %v6693, 4
      %v6696 = vor.u32 %v6695, %v6691
      %v6697 = vrot.slane %v6696, 4
      %v6699 = vshll.u32 %v6570, 16
      %v6701 = vrot.slane %v6699, 5
      %v6702 = vsel %vm1110, %v6697, %v6701
      %v6704 = vshrl.u32 %v6571, 16
      %v6706 = vrot.slane %v6704, 4
      %v6707 = vshll.u32 %v6571, 16
      %v6709 = vrot.slane %v6707, 5
      %v6710 = vor.u32 %v6706, %v6709
      %v6711 = vrot.slane %v6710, 4
      %v6713 = vshll.u32 %v6572, 16
      %v6715 = vrot.slane %v6713, 5
      %v6716 = vsel %vm1110, %v6711, %v6715
      %v6717 = vshrl.u32 %v6572, 16
      %v6719 = vrot.slane %v6717, 4
      %v6720 = vor.u32 %v6719, %v6715
      %v6721 = vrot.slane %v6720, 4
      %v6723 = vshll.u32 %v6573, 16
      %v6725 = vrot.slane %v6723, 5
      %v6726 = vsel %vm1110, %v6721, %v6725
      %v6728 = vshrl.u32 %v6574, 16
      %v6730 = vrot.slane %v6728, 4
      %v6731 = vshll.u32 %v6574, 16
      %v6733 = vrot.slane %v6731, 5
      %v6734 = vor.u32 %v6730, %v6733
      %v6735 = vrot.slane %v6734, 4
      %v6737 = vshll.u32 %v6575, 16
      %v6739 = vrot.slane %v6737, 5
      %v6740 = vsel %vm1110, %v6735, %v6739
      %v6741 = vshrl.u32 %v6575, 16
      %v6743 = vrot.slane %v6741, 4
      %v6744 = vor.u32 %v6743, %v6739
      %v6745 = vrot.slane %v6744, 4
      %v6747 = vshll.u32 %v6576, 16
      %v6749 = vrot.slane %v6747, 5
      %v6750 = vsel %vm1110, %v6745, %v6749
      %v6752 = vshrl.u32 %v6577, 16
      %v6754 = vrot.slane %v6752, 4
      %v6755 = vshll.u32 %v6577, 16
      %v6757 = vrot.slane %v6755, 5
      %v6758 = vor.u32 %v6754, %v6757
      %v6759 = vrot.slane %v6758, 4
      %v6761 = vshll.u32 %v6578, 16
      %v6763 = vrot.slane %v6761, 5
      %v6764 = vsel %vm1110, %v6759, %v6763
      %v6765 = vshrl.u32 %v6578, 16
      %v6767 = vrot.slane %v6765, 4
      %v6768 = vor.u32 %v6767, %v6763
      %v6769 = vrot.slane %v6768, 4
      %v6771 = vshll.u32 %v6579, 16
      %v6773 = vrot.slane %v6771, 5
      %v6774 = vsel %vm1110, %v6769, %v6773
      %v6776 = vshrl.u32 %v6580, 16
      %v6778 = vrot.slane %v6776, 4
      %v6779 = vshll.u32 %v6580, 16
      %v6781 = vrot.slane %v6779, 5
      %v6782 = vor.u32 %v6778, %v6781
      %v6783 = vrot.slane %v6782, 4
      %v6785 = vshll.u32 %v6581, 16
      %v6787 = vrot.slane %v6785, 5
      %v6788 = vsel %vm1110, %v6783, %v6787
      %v6789 = vshrl.u32 %v6581, 16
      %v6791 = vrot.slane %v6789, 4
      %v6792 = vor.u32 %v6791, %v6787
      %v6793 = vrot.slane %v6792, 4
      %v6795 = vshll.u32 %v6582, 16
      %v6797 = vrot.slane %v6795, 5
      %v6798 = vsel %vm1110, %v6793, %v6797
      %v6800 = vshrl.u32 %v6583, 16
      %v6802 = vrot.slane %v6800, 4
      %v6803 = vshll.u32 %v6583, 16
      %v6805 = vrot.slane %v6803, 5
      %v6806 = vor.u32 %v6802, %v6805
      %v6807 = vrot.slane %v6806, 4
      %v6809 = vshll.u32 %v6584, 16
      %v6811 = vrot.slane %v6809, 5
      %v6812 = vsel %vm1110, %v6807, %v6811
      %v6813 = vshrl.u32 %v6584, 16
      %v6815 = vrot.slane %v6813, 4
      %v6816 = vor.u32 %v6815, %v6811
      %v6817 = vrot.slane %v6816, 4
      %v6819 = vshll.u32 %v6585, 16
      %v6821 = vrot.slane %v6819, 5
      %v6822 = vsel %vm1110, %v6817, %v6821
      %v6824 = vshrl.u32 %v6586, 16
      %v6826 = vrot.slane %v6824, 4
      %v6827 = vshll.u32 %v6586, 16
      %v6829 = vrot.slane %v6827, 5
      %v6830 = vor.u32 %v6826, %v6829
      %v6831 = vrot.slane %v6830, 4
      %v6833 = vshll.u32 %v6587, 16
      %v6835 = vrot.slane %v6833, 5
      %v6836 = vsel %vm1110, %v6831, %v6835
      %v6837 = vshrl.u32 %v6587, 16
      %v6839 = vrot.slane %v6837, 4
      %v6840 = vor.u32 %v6839, %v6835
      %v6841 = vrot.slane %v6840, 4
      %v6843 = vshll.u32 %v6588, 16
      %v6845 = vrot.slane %v6843, 5
      %v6846 = vsel %vm1110, %v6841, %v6845
      %v6848 = vshrl.u32 %v6589, 16
      %v6850 = vrot.slane %v6848, 4
      %v6851 = vshll.u32 %v6589, 16
      %v6853 = vrot.slane %v6851, 5
      %v6854 = vor.u32 %v6850, %v6853
      %v6855 = vrot.slane %v6854, 4
      %v6857 = vshll.u32 %v6590, 16
      %v6859 = vrot.slane %v6857, 5
      %v6860 = vsel %vm1110, %v6855, %v6859
      %v6861 = vshrl.u32 %v6590, 16
      %v6863 = vrot.slane %v6861, 4
      %v6864 = vor.u32 %v6863, %v6859
      %v6865 = vrot.slane %v6864, 4
      %v6867 = vshll.u32 %v6591, 16
      %v6869 = vrot.slane %v6867, 5
      %v6870 = vsel %vm1110, %v6865, %v6869
      %v6872 = vshrl.u32 %v6592, 16
      %v6874 = vrot.slane %v6872, 4
      %v6875 = vshll.u32 %v6592, 16
      %v6877 = vrot.slane %v6875, 5
      %v6878 = vor.u32 %v6874, %v6877
      %v6879 = vrot.slane %v6878, 4
      %v6881 = vshll.u32 %v6593, 16
      %v6883 = vrot.slane %v6881, 5
      %v6884 = vsel %vm1110, %v6879, %v6883
      %v6885 = vshrl.u32 %v6593, 16
      %v6887 = vrot.slane %v6885, 4
      %v6888 = vor.u32 %v6887, %v6883
      %v6889 = vrot.slane %v6888, 4
      %v6891 = vshll.u32 %v6594, 16
      %v6893 = vrot.slane %v6891, 5
      %v6894 = vsel %vm1110, %v6889, %v6893
      %v6896 = vshrl.u32 %v6595, 16
      %v6898 = vrot.slane %v6896, 4
      %v6899 = vshll.u32 %v6595, 16
      %v6901 = vrot.slane %v6899, 5
      %v6902 = vor.u32 %v6898, %v6901
      %v6903 = vrot.slane %v6902, 4
      %v6905 = vshll.u32 %v6596, 16
      %v6907 = vrot.slane %v6905, 5
      %v6908 = vsel %vm1110, %v6903, %v6907
      %v6909 = vshrl.u32 %v6596, 16
      %v6911 = vrot.slane %v6909, 4
      %v6912 = vor.u32 %v6911, %v6907
      %v6913 = vrot.slane %v6912, 4
      %v6915 = vshll.u32 %v6597, 16
      %v6917 = vrot.slane %v6915, 5
      %v6918 = vsel %vm1110, %v6913, %v6917
      %v6920 = vshrl.u32 %v6598, 16
      %v6922 = vrot.slane %v6920, 4
      %v6923 = vshll.u32 %v6598, 16
      %v6925 = vrot.slane %v6923, 5
      %v6926 = vor.u32 %v6922, %v6925
      %v6927 = vrot.slane %v6926, 4
      %v6929 = vshll.u32 %v6599, 16
      %v6931 = vrot.slane %v6929, 5
      %v6932 = vsel %vm1110, %v6927, %v6931
      %v6933 = vshrl.u32 %v6599, 16
      %v6935 = vrot.slane %v6933, 4
      %v6936 = vor.u32 %v6935, %v6931
      %v6937 = vrot.slane %v6936, 4
      %v6939 = vshll.u32 %v6600, 16
      %v6941 = vrot.slane %v6939, 5
      %v6942 = vsel %vm1110, %v6937, %v6941
      %v6944 = vshrl.u32 %v6601, 16
      %v6946 = vrot.slane %v6944, 4
      %v6947 = vshll.u32 %v6601, 16
      %v6949 = vrot.slane %v6947, 5
      %v6950 = vor.u32 %v6946, %v6949
      %v6951 = vrot.slane %v6950, 4
      %v6953 = vshll.u32 %v6602, 16
      %v6955 = vrot.slane %v6953, 5
      %v6956 = vsel %vm1110, %v6951, %v6955
      %v6957 = vshrl.u32 %v6602, 16
      %v6959 = vrot.slane %v6957, 4
      %v6960 = vor.u32 %v6959, %v6955
      %v6961 = vrot.slane %v6960, 4
      %v6963 = vshll.u32 %v6603, 16
      %v6965 = vrot.slane %v6963, 5
      %v6966 = vsel %vm1110, %v6961, %v6965
      %v6968 = vshrl.u32 %v6604, 16
      %v6970 = vrot.slane %v6968, 4
      %v6971 = vshll.u32 %v6604, 16
      %v6973 = vrot.slane %v6971, 5
      %v6974 = vor.u32 %v6970, %v6973
      %v6975 = vrot.slane %v6974, 4
      %v6977 = vshll.u32 %v6605, 16
      %v6979 = vrot.slane %v6977, 5
      %v6980 = vsel %vm1110, %v6975, %v6979
      %v6981 = vshrl.u32 %v6605, 16
      %v6983 = vrot.slane %v6981, 4
      %v6984 = vor.u32 %v6983, %v6979
      %v6985 = vrot.slane %v6984, 4
      %v6987 = vshll.u32 %v6606, 16
      %v6989 = vrot.slane %v6987, 5
      %v6990 = vsel %vm1110, %v6985, %v6989
      %6991 = vrot.lane.b32.xlu0 %v6620, 32
      %v6992 = vpop.permute.xlu0 %6991
      %6993 = vrot.lane.b32.xlu0 %v6630, 32
      %v6994 = vpop.permute.xlu0 %6993
      %6995 = vrot.lane.b32.xlu0 %v6644, 32
      %v6996 = vpop.permute.xlu0 %6995
      %6997 = vrot.lane.b32.xlu0 %v6654, 32
      %v6998 = vpop.permute.xlu0 %6997
      %6999 = vrot.lane.b32.xlu0 %v6668, 32
      %v7000 = vpop.permute.xlu0 %6999
      %7001 = vrot.lane.b32.xlu0 %v6678, 32
      %v7002 = vpop.permute.xlu0 %7001
      %7003 = vrot.lane.b32.xlu0 %v6692, 32
      %v7004 = vpop.permute.xlu0 %7003
      %7005 = vrot.lane.b32.xlu0 %v6702, 32
      %v7006 = vpop.permute.xlu0 %7005
      %7007 = vrot.lane.b32.xlu0 %v6716, 32
      %v7008 = vpop.permute.xlu0 %7007
      %7009 = vrot.lane.b32.xlu0 %v6726, 32
      %v7010 = vpop.permute.xlu0 %7009
      %7011 = vrot.lane.b32.xlu0 %v6740, 32
      %v7012 = vpop.permute.xlu0 %7011
      %7013 = vrot.lane.b32.xlu0 %v6750, 32
      %v7014 = vpop.permute.xlu0 %7013
      %7015 = vrot.lane.b32.xlu0 %v6764, 32
      %v7016 = vpop.permute.xlu0 %7015
      %7017 = vrot.lane.b32.xlu0 %v6774, 32
      %v7018 = vpop.permute.xlu0 %7017
      %7019 = vrot.lane.b32.xlu0 %v6788, 32
      %v7020 = vpop.permute.xlu0 %7019
      %7021 = vrot.lane.b32.xlu0 %v6798, 32
      %v7022 = vpop.permute.xlu0 %7021
      %7023 = vrot.lane.b32.xlu0 %v6812, 32
      %v7024 = vpop.permute.xlu0 %7023
      %7025 = vrot.lane.b32.xlu0 %v6822, 32
      %v7026 = vpop.permute.xlu0 %7025
      %7027 = vrot.lane.b32.xlu0 %v6836, 32
      %v7028 = vpop.permute.xlu0 %7027
      %7029 = vrot.lane.b32.xlu0 %v6846, 32
      %v7030 = vpop.permute.xlu0 %7029
      %7031 = vrot.lane.b32.xlu0 %v6860, 32
      %v7032 = vpop.permute.xlu0 %7031
      %7033 = vrot.lane.b32.xlu0 %v6870, 32
      %v7034 = vpop.permute.xlu0 %7033
      %7035 = vrot.lane.b32.xlu0 %v6884, 32
      %v7036 = vpop.permute.xlu0 %7035
      %7037 = vrot.lane.b32.xlu0 %v6894, 32
      %v7038 = vpop.permute.xlu0 %7037
      %7039 = vrot.lane.b32.xlu0 %v6908, 32
      %v7040 = vpop.permute.xlu0 %7039
      %7041 = vrot.lane.b32.xlu0 %v6918, 32
      %v7042 = vpop.permute.xlu0 %7041
      %7043 = vrot.lane.b32.xlu0 %v6932, 32
      %v7044 = vpop.permute.xlu0 %7043
      %7045 = vrot.lane.b32.xlu0 %v6942, 32
      %v7046 = vpop.permute.xlu0 %7045
      %7047 = vrot.lane.b32.xlu0 %v6956, 32
      %v7048 = vpop.permute.xlu0 %7047
      %7049 = vrot.lane.b32.xlu0 %v6966, 32
      %v7050 = vpop.permute.xlu0 %7049
      %7051 = vrot.lane.b32.xlu0 %v6980, 32
      %v7052 = vpop.permute.xlu0 %7051
      %7053 = vrot.lane.b32.xlu0 %v6990, 32
      %v7054 = vpop.permute.xlu0 %7053
      %7087 = vst.msk [vmem:[#allocation3] sm:$0xf] %vm2685, %v6992
      %7088 = vst.msk [vmem:[#allocation3 + $0x4] sm:$0xf] %vm2685, %v6994
      %7089 = vst.msk [vmem:[#allocation3 + $0x8] sm:$0xf] %vm2685, %v6996
      %7090 = vst.msk [vmem:[#allocation3 + $0xc] sm:$0xf] %vm2685, %v6998
      %7091 = vst.msk [vmem:[#allocation3 + $0x10] sm:$0xf] %vm2685, %v7000
      %7092 = vst.msk [vmem:[#allocation3 + $0x14] sm:$0xf] %vm2685, %v7002
      %7093 = vst.msk [vmem:[#allocation3 + $0x18] sm:$0xf] %vm2685, %v7004
      %7094 = vst.msk [vmem:[#allocation3 + $0x1c] sm:$0xf] %vm2685, %v7006
      %7095 = vst.msk [vmem:[#allocation3 + $0x20] sm:$0xf] %vm2685, %v7008
      %7096 = vst.msk [vmem:[#allocation3 + $0x24] sm:$0xf] %vm2685, %v7010
      %7097 = vst.msk [vmem:[#allocation3 + $0x28] sm:$0xf] %vm2685, %v7012
      %7098 = vst.msk [vmem:[#allocation3 + $0x2c] sm:$0xf] %vm2685, %v7014
      %7099 = vst.msk [vmem:[#allocation3 + $0x30] sm:$0xf] %vm2685, %v7016
      %7100 = vst.msk [vmem:[#allocation3 + $0x34] sm:$0xf] %vm2685, %v7018
      %7101 = vst.msk [vmem:[#allocation3 + $0x38] sm:$0xf] %vm2685, %v7020
      %7102 = vst.msk [vmem:[#allocation3 + $0x3c] sm:$0xf] %vm2685, %v7022
      %7103 = vst.msk [vmem:[#allocation3 + $0x40] sm:$0xf] %vm2685, %v7024
      %7104 = vst.msk [vmem:[#allocation3 + $0x44] sm:$0xf] %vm2685, %v7026
      %7105 = vst.msk [vmem:[#allocation3 + $0x48] sm:$0xf] %vm2685, %v7028
      %7106 = vst.msk [vmem:[#allocation3 + $0x4c] sm:$0xf] %vm2685, %v7030
      %7107 = vst.msk [vmem:[#allocation3 + $0x50] sm:$0xf] %vm2685, %v7032
      %7108 = vst.msk [vmem:[#allocation3 + $0x54] sm:$0xf] %vm2685, %v7034
      %7109 = vst.msk [vmem:[#allocation3 + $0x58] sm:$0xf] %vm2685, %v7036
      %7110 = vst.msk [vmem:[#allocation3 + $0x5c] sm:$0xf] %vm2685, %v7038
      %7111 = vst.msk [vmem:[#allocation3 + $0x60] sm:$0xf] %vm2685, %v7040
      %7112 = vst.msk [vmem:[#allocation3 + $0x64] sm:$0xf] %vm2685, %v7042
      %7113 = vst.msk [vmem:[#allocation3 + $0x68] sm:$0xf] %vm2685, %v7044
      %7114 = vst.msk [vmem:[#allocation3 + $0x6c] sm:$0xf] %vm2685, %v7046
      %7115 = vst.msk [vmem:[#allocation3 + $0x70] sm:$0xf] %vm2685, %v7048
      %7116 = vst.msk [vmem:[#allocation3 + $0x74] sm:$0xf] %vm2685, %v7050
      %7117 = vst.msk [vmem:[#allocation3 + $0x78] sm:$0xf] %vm2685, %v7052
      %7118 = vst.msk [vmem:[#allocation3 + $0x7c] sm:$0xf] %vm2685, %v7054
      %v7119 = vld [vmem:[%s327] sm:$0xe]
      %v7120 = vld [vmem:[%s327 + $0x4] sm:$0xf]
      %v7121 = vld [vmem:[%s327 + $0x8] sm:$0x1]
      %v7122 = vld [vmem:[%s327 + $0xc] sm:$0xe]
      %v7123 = vld [vmem:[%s327 + $0x10] sm:$0xf]
      %v7124 = vld [vmem:[%s327 + $0x14] sm:$0x1]
      %v7125 = vld [vmem:[%s327 + $0x18] sm:$0xe]
      %v7126 = vld [vmem:[%s327 + $0x1c] sm:$0xf]
      %v7127 = vld [vmem:[%s327 + $0x20] sm:$0x1]
      %v7128 = vld [vmem:[%s327 + $0x24] sm:$0xe]
      %v7129 = vld [vmem:[%s327 + $0x28] sm:$0xf]
      %v7130 = vld [vmem:[%s327 + $0x2c] sm:$0x1]
      %v7131 = vld [vmem:[%s327 + $0x30] sm:$0xe]
      %v7132 = vld [vmem:[%s327 + $0x34] sm:$0xf]
      %v7133 = vld [vmem:[%s327 + $0x38] sm:$0x1]
      %v7134 = vld [vmem:[%s327 + $0x3c] sm:$0xe]
      %v7135 = vld [vmem:[%s327 + $0x40] sm:$0xf]
      %v7136 = vld [vmem:[%s327 + $0x44] sm:$0x1]
      %v7137 = vld [vmem:[%s327 + $0x48] sm:$0xe]
      %v7138 = vld [vmem:[%s327 + $0x4c] sm:$0xf]
      %v7139 = vld [vmem:[%s327 + $0x50] sm:$0x1]
      %v7140 = vld [vmem:[%s327 + $0x54] sm:$0xe]
      %v7141 = vld [vmem:[%s327 + $0x58] sm:$0xf]
      %v7142 = vld [vmem:[%s327 + $0x5c] sm:$0x1]
      %v7143 = vld [vmem:[%s327 + $0x60] sm:$0xe]
      %v7144 = vld [vmem:[%s327 + $0x64] sm:$0xf]
      %v7145 = vld [vmem:[%s327 + $0x68] sm:$0x1]
      %v7146 = vld [vmem:[%s327 + $0x6c] sm:$0xe]
      %v7147 = vld [vmem:[%s327 + $0x70] sm:$0xf]
      %v7148 = vld [vmem:[%s327 + $0x74] sm:$0x1]
      %v7149 = vld [vmem:[%s327 + $0x78] sm:$0xe]
      %v7150 = vld [vmem:[%s327 + $0x7c] sm:$0xf]
      %v7151 = vld [vmem:[%s327 + $0x80] sm:$0x1]
      %v7152 = vld [vmem:[%s327 + $0x84] sm:$0xe]
      %v7153 = vld [vmem:[%s327 + $0x88] sm:$0xf]
      %v7154 = vld [vmem:[%s327 + $0x8c] sm:$0x1]
      %v7155 = vld [vmem:[%s327 + $0x90] sm:$0xe]
      %v7156 = vld [vmem:[%s327 + $0x94] sm:$0xf]
      %v7157 = vld [vmem:[%s327 + $0x98] sm:$0x1]
      %v7158 = vld [vmem:[%s327 + $0x9c] sm:$0xe]
      %v7159 = vld [vmem:[%s327 + $0xa0] sm:$0xf]
      %v7160 = vld [vmem:[%s327 + $0xa4] sm:$0x1]
      %v7161 = vld [vmem:[%s327 + $0xa8] sm:$0xe]
      %v7162 = vld [vmem:[%s327 + $0xac] sm:$0xf]
      %v7163 = vld [vmem:[%s327 + $0xb0] sm:$0x1]
      %v7164 = vld [vmem:[%s327 + $0xb4] sm:$0xe]
      %v7165 = vld [vmem:[%s327 + $0xb8] sm:$0xf]
      %v7166 = vld [vmem:[%s327 + $0xbc] sm:$0x1]
      %v7215 = vrot.slane %v7119, 5
      %v7216 = vrot.slane %v7215, 4
      %v7217 = vrot.slane %v7120, 5
      %v7218 = vsel %vm1722, %v7216, %v7217
      %v7219 = vrot.slane %v7217, 4
      %v7220 = vrot.slane %v7121, 5
      %v7221 = vsel %vm1722, %v7219, %v7220
      %v7222 = vrot.slane %v7122, 5
      %v7223 = vrot.slane %v7222, 4
      %v7224 = vrot.slane %v7123, 5
      %v7225 = vsel %vm1722, %v7223, %v7224
      %v7226 = vrot.slane %v7224, 4
      %v7227 = vrot.slane %v7124, 5
      %v7228 = vsel %vm1722, %v7226, %v7227
      %v7229 = vrot.slane %v7125, 5
      %v7230 = vrot.slane %v7229, 4
      %v7231 = vrot.slane %v7126, 5
      %v7232 = vsel %vm1722, %v7230, %v7231
      %v7233 = vrot.slane %v7231, 4
      %v7234 = vrot.slane %v7127, 5
      %v7235 = vsel %vm1722, %v7233, %v7234
      %v7236 = vrot.slane %v7128, 5
      %v7237 = vrot.slane %v7236, 4
      %v7238 = vrot.slane %v7129, 5
      %v7239 = vsel %vm1722, %v7237, %v7238
      %v7240 = vrot.slane %v7238, 4
      %v7241 = vrot.slane %v7130, 5
      %v7242 = vsel %vm1722, %v7240, %v7241
      %v7243 = vrot.slane %v7131, 5
      %v7244 = vrot.slane %v7243, 4
      %v7245 = vrot.slane %v7132, 5
      %v7246 = vsel %vm1722, %v7244, %v7245
      %v7247 = vrot.slane %v7245, 4
      %v7248 = vrot.slane %v7133, 5
      %v7249 = vsel %vm1722, %v7247, %v7248
      %v7250 = vrot.slane %v7134, 5
      %v7251 = vrot.slane %v7250, 4
      %v7252 = vrot.slane %v7135, 5
      %v7253 = vsel %vm1722, %v7251, %v7252
      %v7254 = vrot.slane %v7252, 4
      %v7255 = vrot.slane %v7136, 5
      %v7256 = vsel %vm1722, %v7254, %v7255
      %v7257 = vrot.slane %v7137, 5
      %v7258 = vrot.slane %v7257, 4
      %v7259 = vrot.slane %v7138, 5
      %v7260 = vsel %vm1722, %v7258, %v7259
      %v7261 = vrot.slane %v7259, 4
      %v7262 = vrot.slane %v7139, 5
      %v7263 = vsel %vm1722, %v7261, %v7262
      %v7264 = vrot.slane %v7140, 5
      %v7265 = vrot.slane %v7264, 4
      %v7266 = vrot.slane %v7141, 5
      %v7267 = vsel %vm1722, %v7265, %v7266
      %v7268 = vrot.slane %v7266, 4
      %v7269 = vrot.slane %v7142, 5
      %v7270 = vsel %vm1722, %v7268, %v7269
      %v7271 = vrot.slane %v7143, 5
      %v7272 = vrot.slane %v7271, 4
      %v7273 = vrot.slane %v7144, 5
      %v7274 = vsel %vm1722, %v7272, %v7273
      %v7275 = vrot.slane %v7273, 4
      %v7276 = vrot.slane %v7145, 5
      %v7277 = vsel %vm1722, %v7275, %v7276
      %v7278 = vrot.slane %v7146, 5
      %v7279 = vrot.slane %v7278, 4
      %v7280 = vrot.slane %v7147, 5
      %v7281 = vsel %vm1722, %v7279, %v7280
      %v7282 = vrot.slane %v7280, 4
      %v7283 = vrot.slane %v7148, 5
      %v7284 = vsel %vm1722, %v7282, %v7283
      %v7285 = vrot.slane %v7149, 5
      %v7286 = vrot.slane %v7285, 4
      %v7287 = vrot.slane %v7150, 5
      %v7288 = vsel %vm1722, %v7286, %v7287
      %v7289 = vrot.slane %v7287, 4
      %v7290 = vrot.slane %v7151, 5
      %v7291 = vsel %vm1722, %v7289, %v7290
      %v7292 = vrot.slane %v7152, 5
      %v7293 = vrot.slane %v7292, 4
      %v7294 = vrot.slane %v7153, 5
      %v7295 = vsel %vm1722, %v7293, %v7294
      %v7296 = vrot.slane %v7294, 4
      %v7297 = vrot.slane %v7154, 5
      %v7298 = vsel %vm1722, %v7296, %v7297
      %v7299 = vrot.slane %v7155, 5
      %v7300 = vrot.slane %v7299, 4
      %v7301 = vrot.slane %v7156, 5
      %v7302 = vsel %vm1722, %v7300, %v7301
      %v7303 = vrot.slane %v7301, 4
      %v7304 = vrot.slane %v7157, 5
      %v7305 = vsel %vm1722, %v7303, %v7304
      %v7306 = vrot.slane %v7158, 5
      %v7307 = vrot.slane %v7306, 4
      %v7308 = vrot.slane %v7159, 5
      %v7309 = vsel %vm1722, %v7307, %v7308
      %v7310 = vrot.slane %v7308, 4
      %v7311 = vrot.slane %v7160, 5
      %v7312 = vsel %vm1722, %v7310, %v7311
      %v7313 = vrot.slane %v7161, 5
      %v7314 = vrot.slane %v7313, 4
      %v7315 = vrot.slane %v7162, 5
      %v7316 = vsel %vm1722, %v7314, %v7315
      %v7317 = vrot.slane %v7315, 4
      %v7318 = vrot.slane %v7163, 5
      %v7319 = vsel %vm1722, %v7317, %v7318
      %v7320 = vrot.slane %v7164, 5
      %v7321 = vrot.slane %v7320, 4
      %v7322 = vrot.slane %v7165, 5
      %v7323 = vsel %vm1722, %v7321, %v7322
      %v7324 = vrot.slane %v7322, 4
      %v7325 = vrot.slane %v7166, 5
      %v7326 = vsel %vm1722, %v7324, %v7325
      %7327 = vrot.lane.b32.xlu0 %v7218, 40
      %v7328 = vpop.permute.xlu0 %7327
      %7329 = vrot.lane.b32.xlu0 %v7221, 40
      %v7330 = vpop.permute.xlu0 %7329
      %7331 = vrot.lane.b32.xlu0 %v7225, 40
      %v7332 = vpop.permute.xlu0 %7331
      %7333 = vrot.lane.b32.xlu0 %v7228, 40
      %v7334 = vpop.permute.xlu0 %7333
      %7335 = vrot.lane.b32.xlu0 %v7232, 40
      %v7336 = vpop.permute.xlu0 %7335
      %7337 = vrot.lane.b32.xlu0 %v7235, 40
      %v7338 = vpop.permute.xlu0 %7337
      %7339 = vrot.lane.b32.xlu0 %v7239, 40
      %v7340 = vpop.permute.xlu0 %7339
      %7341 = vrot.lane.b32.xlu0 %v7242, 40
      %v7342 = vpop.permute.xlu0 %7341
      %7343 = vrot.lane.b32.xlu0 %v7246, 40
      %v7344 = vpop.permute.xlu0 %7343
      %7345 = vrot.lane.b32.xlu0 %v7249, 40
      %v7346 = vpop.permute.xlu0 %7345
      %7347 = vrot.lane.b32.xlu0 %v7253, 40
      %v7348 = vpop.permute.xlu0 %7347
      %7349 = vrot.lane.b32.xlu0 %v7256, 40
      %v7350 = vpop.permute.xlu0 %7349
      %7351 = vrot.lane.b32.xlu0 %v7260, 40
      %v7352 = vpop.permute.xlu0 %7351
      %7353 = vrot.lane.b32.xlu0 %v7263, 40
      %v7354 = vpop.permute.xlu0 %7353
      %7355 = vrot.lane.b32.xlu0 %v7267, 40
      %v7356 = vpop.permute.xlu0 %7355
      %7357 = vrot.lane.b32.xlu0 %v7270, 40
      %v7358 = vpop.permute.xlu0 %7357
      %7359 = vrot.lane.b32.xlu0 %v7274, 40
      %v7360 = vpop.permute.xlu0 %7359
      %7361 = vrot.lane.b32.xlu0 %v7277, 40
      %v7362 = vpop.permute.xlu0 %7361
      %7363 = vrot.lane.b32.xlu0 %v7281, 40
      %v7364 = vpop.permute.xlu0 %7363
      %7365 = vrot.lane.b32.xlu0 %v7284, 40
      %v7366 = vpop.permute.xlu0 %7365
      %7367 = vrot.lane.b32.xlu0 %v7288, 40
      %v7368 = vpop.permute.xlu0 %7367
      %7369 = vrot.lane.b32.xlu0 %v7291, 40
      %v7370 = vpop.permute.xlu0 %7369
      %7371 = vrot.lane.b32.xlu0 %v7295, 40
      %v7372 = vpop.permute.xlu0 %7371
      %7373 = vrot.lane.b32.xlu0 %v7298, 40
      %v7374 = vpop.permute.xlu0 %7373
      %7375 = vrot.lane.b32.xlu0 %v7302, 40
      %v7376 = vpop.permute.xlu0 %7375
      %7377 = vrot.lane.b32.xlu0 %v7305, 40
      %v7378 = vpop.permute.xlu0 %7377
      %7379 = vrot.lane.b32.xlu0 %v7309, 40
      %v7380 = vpop.permute.xlu0 %7379
      %7381 = vrot.lane.b32.xlu0 %v7312, 40
      %v7382 = vpop.permute.xlu0 %7381
      %7383 = vrot.lane.b32.xlu0 %v7316, 40
      %v7384 = vpop.permute.xlu0 %7383
      %7385 = vrot.lane.b32.xlu0 %v7319, 40
      %v7386 = vpop.permute.xlu0 %7385
      %7387 = vrot.lane.b32.xlu0 %v7323, 40
      %v7388 = vpop.permute.xlu0 %7387
      %7389 = vrot.lane.b32.xlu0 %v7326, 40
      %v7390 = vpop.permute.xlu0 %7389
      %7423 = vst.msk [vmem:[#allocation3] sm:$0xf] %vm3022, %v7328
      %7424 = vst.msk [vmem:[#allocation3 + $0x4] sm:$0xf] %vm3022, %v7330
      %7425 = vst.msk [vmem:[#allocation3 + $0x8] sm:$0xf] %vm3022, %v7332
      %7426 = vst.msk [vmem:[#allocation3 + $0xc] sm:$0xf] %vm3022, %v7334
      %7427 = vst.msk [vmem:[#allocation3 + $0x10] sm:$0xf] %vm3022, %v7336
      %7428 = vst.msk [vmem:[#allocation3 + $0x14] sm:$0xf] %vm3022, %v7338
      %7429 = vst.msk [vmem:[#allocation3 + $0x18] sm:$0xf] %vm3022, %v7340
      %7430 = vst.msk [vmem:[#allocation3 + $0x1c] sm:$0xf] %vm3022, %v7342
      %7431 = vst.msk [vmem:[#allocation3 + $0x20] sm:$0xf] %vm3022, %v7344
      %7432 = vst.msk [vmem:[#allocation3 + $0x24] sm:$0xf] %vm3022, %v7346
      %7433 = vst.msk [vmem:[#allocation3 + $0x28] sm:$0xf] %vm3022, %v7348
      %7434 = vst.msk [vmem:[#allocation3 + $0x2c] sm:$0xf] %vm3022, %v7350
      %7435 = vst.msk [vmem:[#allocation3 + $0x30] sm:$0xf] %vm3022, %v7352
      %7436 = vst.msk [vmem:[#allocation3 + $0x34] sm:$0xf] %vm3022, %v7354
      %7437 = vst.msk [vmem:[#allocation3 + $0x38] sm:$0xf] %vm3022, %v7356
      %7438 = vst.msk [vmem:[#allocation3 + $0x3c] sm:$0xf] %vm3022, %v7358
      %7439 = vst.msk [vmem:[#allocation3 + $0x40] sm:$0xf] %vm3022, %v7360
      %7440 = vst.msk [vmem:[#allocation3 + $0x44] sm:$0xf] %vm3022, %v7362
      %7441 = vst.msk [vmem:[#allocation3 + $0x48] sm:$0xf] %vm3022, %v7364
      %7442 = vst.msk [vmem:[#allocation3 + $0x4c] sm:$0xf] %vm3022, %v7366
      %7443 = vst.msk [vmem:[#allocation3 + $0x50] sm:$0xf] %vm3022, %v7368
      %7444 = vst.msk [vmem:[#allocation3 + $0x54] sm:$0xf] %vm3022, %v7370
      %7445 = vst.msk [vmem:[#allocation3 + $0x58] sm:$0xf] %vm3022, %v7372
      %7446 = vst.msk [vmem:[#allocation3 + $0x5c] sm:$0xf] %vm3022, %v7374
      %7447 = vst.msk [vmem:[#allocation3 + $0x60] sm:$0xf] %vm3022, %v7376
      %7448 = vst.msk [vmem:[#allocation3 + $0x64] sm:$0xf] %vm3022, %v7378
      %7449 = vst.msk [vmem:[#allocation3 + $0x68] sm:$0xf] %vm3022, %v7380
      %7450 = vst.msk [vmem:[#allocation3 + $0x6c] sm:$0xf] %vm3022, %v7382
      %7451 = vst.msk [vmem:[#allocation3 + $0x70] sm:$0xf] %vm3022, %v7384
      %7452 = vst.msk [vmem:[#allocation3 + $0x74] sm:$0xf] %vm3022, %v7386
      %7453 = vst.msk [vmem:[#allocation3 + $0x78] sm:$0xf] %vm3022, %v7388
      %7454 = vst.msk [vmem:[#allocation3 + $0x7c] sm:$0xf] %vm3022, %v7390
      %v7455 = vld [vmem:[%s3055] sm:$0xf]
      %v7456 = vld [vmem:[%s3055 + $0x4] sm:$0xf]
      %v7457 = vld [vmem:[%s3055 + $0xc] sm:$0xf]
      %v7458 = vld [vmem:[%s3055 + $0x10] sm:$0xf]
      %v7459 = vld [vmem:[%s3055 + $0x18] sm:$0xf]
      %v7460 = vld [vmem:[%s3055 + $0x1c] sm:$0xf]
      %v7461 = vld [vmem:[%s3055 + $0x24] sm:$0xf]
      %v7462 = vld [vmem:[%s3055 + $0x28] sm:$0xf]
      %v7463 = vld [vmem:[%s3055 + $0x30] sm:$0xf]
      %v7464 = vld [vmem:[%s3055 + $0x34] sm:$0xf]
      %v7465 = vld [vmem:[%s3055 + $0x3c] sm:$0xf]
      %v7466 = vld [vmem:[%s3055 + $0x40] sm:$0xf]
      %v7467 = vld [vmem:[%s3055 + $0x48] sm:$0xf]
      %v7468 = vld [vmem:[%s3055 + $0x4c] sm:$0xf]
      %v7469 = vld [vmem:[%s3055 + $0x54] sm:$0xf]
      %v7470 = vld [vmem:[%s3055 + $0x58] sm:$0xf]
      %v7471 = vld [vmem:[%s3055 + $0x60] sm:$0xf]
      %v7472 = vld [vmem:[%s3055 + $0x64] sm:$0xf]
      %v7473 = vld [vmem:[%s3055 + $0x6c] sm:$0xf]
      %v7474 = vld [vmem:[%s3055 + $0x70] sm:$0xf]
      %v7475 = vld [vmem:[%s3055 + $0x78] sm:$0xf]
      %v7476 = vld [vmem:[%s3055 + $0x7c] sm:$0xf]
      %v7477 = vld [vmem:[%s3055 + $0x84] sm:$0xf]
      %v7478 = vld [vmem:[%s3055 + $0x88] sm:$0xf]
      %v7479 = vld [vmem:[%s3055 + $0x90] sm:$0xf]
      %v7480 = vld [vmem:[%s3055 + $0x94] sm:$0xf]
      %v7481 = vld [vmem:[%s3055 + $0x9c] sm:$0xf]
      %v7482 = vld [vmem:[%s3055 + $0xa0] sm:$0xf]
      %v7483 = vld [vmem:[%s3055 + $0xa8] sm:$0xf]
      %v7484 = vld [vmem:[%s3055 + $0xac] sm:$0xf]
      %v7485 = vld [vmem:[%s3055 + $0xb4] sm:$0xf]
      %v7486 = vld [vmem:[%s3055 + $0xb8] sm:$0xf]
      %7519 = vrot.lane.b32.xlu0 %v7455, 48
      %v7520 = vpop.permute.xlu0 %7519
      %7521 = vrot.lane.b32.xlu0 %v7456, 48
      %v7522 = vpop.permute.xlu0 %7521
      %7523 = vrot.lane.b32.xlu0 %v7457, 48
      %v7524 = vpop.permute.xlu0 %7523
      %7525 = vrot.lane.b32.xlu0 %v7458, 48
      %v7526 = vpop.permute.xlu0 %7525
      %7527 = vrot.lane.b32.xlu0 %v7459, 48
      %v7528 = vpop.permute.xlu0 %7527
      %7529 = vrot.lane.b32.xlu0 %v7460, 48
      %v7530 = vpop.permute.xlu0 %7529
      %7531 = vrot.lane.b32.xlu0 %v7461, 48
      %v7532 = vpop.permute.xlu0 %7531
      %7533 = vrot.lane.b32.xlu0 %v7462, 48
      %v7534 = vpop.permute.xlu0 %7533
      %7535 = vrot.lane.b32.xlu0 %v7463, 48
      %v7536 = vpop.permute.xlu0 %7535
      %7537 = vrot.lane.b32.xlu0 %v7464, 48
      %v7538 = vpop.permute.xlu0 %7537
      %7539 = vrot.lane.b32.xlu0 %v7465, 48
      %v7540 = vpop.permute.xlu0 %7539
      %7541 = vrot.lane.b32.xlu0 %v7466, 48
      %v7542 = vpop.permute.xlu0 %7541
      %7543 = vrot.lane.b32.xlu0 %v7467, 48
      %v7544 = vpop.permute.xlu0 %7543
      %7545 = vrot.lane.b32.xlu0 %v7468, 48
      %v7546 = vpop.permute.xlu0 %7545
      %7547 = vrot.lane.b32.xlu0 %v7469, 48
      %v7548 = vpop.permute.xlu0 %7547
      %7549 = vrot.lane.b32.xlu0 %v7470, 48
      %v7550 = vpop.permute.xlu0 %7549
      %7551 = vrot.lane.b32.xlu0 %v7471, 48
      %v7552 = vpop.permute.xlu0 %7551
      %7553 = vrot.lane.b32.xlu0 %v7472, 48
      %v7554 = vpop.permute.xlu0 %7553
      %7555 = vrot.lane.b32.xlu0 %v7473, 48
      %v7556 = vpop.permute.xlu0 %7555
      %7557 = vrot.lane.b32.xlu0 %v7474, 48
      %v7558 = vpop.permute.xlu0 %7557
      %7559 = vrot.lane.b32.xlu0 %v7475, 48
      %v7560 = vpop.permute.xlu0 %7559
      %7561 = vrot.lane.b32.xlu0 %v7476, 48
      %v7562 = vpop.permute.xlu0 %7561
      %7563 = vrot.lane.b32.xlu0 %v7477, 48
      %v7564 = vpop.permute.xlu0 %7563
      %7565 = vrot.lane.b32.xlu0 %v7478, 48
      %v7566 = vpop.permute.xlu0 %7565
      %7567 = vrot.lane.b32.xlu0 %v7479, 48
      %v7568 = vpop.permute.xlu0 %7567
      %7569 = vrot.lane.b32.xlu0 %v7480, 48
      %v7570 = vpop.permute.xlu0 %7569
      %7571 = vrot.lane.b32.xlu0 %v7481, 48
      %v7572 = vpop.permute.xlu0 %7571
      %7573 = vrot.lane.b32.xlu0 %v7482, 48
      %v7574 = vpop.permute.xlu0 %7573
      %7575 = vrot.lane.b32.xlu0 %v7483, 48
      %v7576 = vpop.permute.xlu0 %7575
      %7577 = vrot.lane.b32.xlu0 %v7484, 48
      %v7578 = vpop.permute.xlu0 %7577
      %7579 = vrot.lane.b32.xlu0 %v7485, 48
      %v7580 = vpop.permute.xlu0 %7579
      %7581 = vrot.lane.b32.xlu0 %v7486, 48
      %v7582 = vpop.permute.xlu0 %7581
      %7615 = vst.msk [vmem:[#allocation3] sm:$0xf] %vm3216, %v7520
      %7616 = vst.msk [vmem:[#allocation3 + $0x4] sm:$0xf] %vm3216, %v7522
      %7617 = vst.msk [vmem:[#allocation3 + $0x8] sm:$0xf] %vm3216, %v7524
      %7618 = vst.msk [vmem:[#allocation3 + $0xc] sm:$0xf] %vm3216, %v7526
      %7619 = vst.msk [vmem:[#allocation3 + $0x10] sm:$0xf] %vm3216, %v7528
      %7620 = vst.msk [vmem:[#allocation3 + $0x14] sm:$0xf] %vm3216, %v7530
      %7621 = vst.msk [vmem:[#allocation3 + $0x18] sm:$0xf] %vm3216, %v7532
      %7622 = vst.msk [vmem:[#allocation3 + $0x1c] sm:$0xf] %vm3216, %v7534
      %7623 = vst.msk [vmem:[#allocation3 + $0x20] sm:$0xf] %vm3216, %v7536
      %7624 = vst.msk [vmem:[#allocation3 + $0x24] sm:$0xf] %vm3216, %v7538
      %7625 = vst.msk [vmem:[#allocation3 + $0x28] sm:$0xf] %vm3216, %v7540
      %7626 = vst.msk [vmem:[#allocation3 + $0x2c] sm:$0xf] %vm3216, %v7542
      %7627 = vst.msk [vmem:[#allocation3 + $0x30] sm:$0xf] %vm3216, %v7544
      %7628 = vst.msk [vmem:[#allocation3 + $0x34] sm:$0xf] %vm3216, %v7546
      %7629 = vst.msk [vmem:[#allocation3 + $0x38] sm:$0xf] %vm3216, %v7548
      %7630 = vst.msk [vmem:[#allocation3 + $0x3c] sm:$0xf] %vm3216, %v7550
      %7631 = vst.msk [vmem:[#allocation3 + $0x40] sm:$0xf] %vm3216, %v7552
      %7632 = vst.msk [vmem:[#allocation3 + $0x44] sm:$0xf] %vm3216, %v7554
      %7633 = vst.msk [vmem:[#allocation3 + $0x48] sm:$0xf] %vm3216, %v7556
      %7634 = vst.msk [vmem:[#allocation3 + $0x4c] sm:$0xf] %vm3216, %v7558
      %7635 = vst.msk [vmem:[#allocation3 + $0x50] sm:$0xf] %vm3216, %v7560
      %7636 = vst.msk [vmem:[#allocation3 + $0x54] sm:$0xf] %vm3216, %v7562
      %7637 = vst.msk [vmem:[#allocation3 + $0x58] sm:$0xf] %vm3216, %v7564
      %7638 = vst.msk [vmem:[#allocation3 + $0x5c] sm:$0xf] %vm3216, %v7566
      %7639 = vst.msk [vmem:[#allocation3 + $0x60] sm:$0xf] %vm3216, %v7568
      %7640 = vst.msk [vmem:[#allocation3 + $0x64] sm:$0xf] %vm3216, %v7570
      %7641 = vst.msk [vmem:[#allocation3 + $0x68] sm:$0xf] %vm3216, %v7572
      %7642 = vst.msk [vmem:[#allocation3 + $0x6c] sm:$0xf] %vm3216, %v7574
      %7643 = vst.msk [vmem:[#allocation3 + $0x70] sm:$0xf] %vm3216, %v7576
      %7644 = vst.msk [vmem:[#allocation3 + $0x74] sm:$0xf] %vm3216, %v7578
      %7645 = vst.msk [vmem:[#allocation3 + $0x78] sm:$0xf] %vm3216, %v7580
      %7646 = vst.msk [vmem:[#allocation3 + $0x7c] sm:$0xf] %vm3216, %v7582
      %v7647 = vld [vmem:[%s3055] sm:$0xf]
      %v7648 = vld [vmem:[%s3055 + $0x4] sm:$0xf]
      %v7649 = vld [vmem:[%s3055 + $0x8] sm:$0x1]
      %v7650 = vld [vmem:[%s3055 + $0xc] sm:$0xf]
      %v7651 = vld [vmem:[%s3055 + $0x10] sm:$0xf]
      %v7652 = vld [vmem:[%s3055 + $0x14] sm:$0x1]
      %v7653 = vld [vmem:[%s3055 + $0x18] sm:$0xf]
      %v7654 = vld [vmem:[%s3055 + $0x1c] sm:$0xf]
      %v7655 = vld [vmem:[%s3055 + $0x20] sm:$0x1]
      %v7656 = vld [vmem:[%s3055 + $0x24] sm:$0xf]
      %v7657 = vld [vmem:[%s3055 + $0x28] sm:$0xf]
      %v7658 = vld [vmem:[%s3055 + $0x2c] sm:$0x1]
      %v7659 = vld [vmem:[%s3055 + $0x30] sm:$0xf]
      %v7660 = vld [vmem:[%s3055 + $0x34] sm:$0xf]
      %v7661 = vld [vmem:[%s3055 + $0x38] sm:$0x1]
      %v7662 = vld [vmem:[%s3055 + $0x3c] sm:$0xf]
      %v7663 = vld [vmem:[%s3055 + $0x40] sm:$0xf]
      %v7664 = vld [vmem:[%s3055 + $0x44] sm:$0x1]
      %v7665 = vld [vmem:[%s3055 + $0x48] sm:$0xf]
      %v7666 = vld [vmem:[%s3055 + $0x4c] sm:$0xf]
      %v7667 = vld [vmem:[%s3055 + $0x50] sm:$0x1]
      %v7668 = vld [vmem:[%s3055 + $0x54] sm:$0xf]
      %v7669 = vld [vmem:[%s3055 + $0x58] sm:$0xf]
      %v7670 = vld [vmem:[%s3055 + $0x5c] sm:$0x1]
      %v7671 = vld [vmem:[%s3055 + $0x60] sm:$0xf]
      %v7672 = vld [vmem:[%s3055 + $0x64] sm:$0xf]
      %v7673 = vld [vmem:[%s3055 + $0x68] sm:$0x1]
      %v7674 = vld [vmem:[%s3055 + $0x6c] sm:$0xf]
      %v7675 = vld [vmem:[%s3055 + $0x70] sm:$0xf]
      %v7676 = vld [vmem:[%s3055 + $0x74] sm:$0x1]
      %v7677 = vld [vmem:[%s3055 + $0x78] sm:$0xf]
      %v7678 = vld [vmem:[%s3055 + $0x7c] sm:$0xf]
      %v7679 = vld [vmem:[%s3055 + $0x80] sm:$0x1]
      %v7680 = vld [vmem:[%s3055 + $0x84] sm:$0xf]
      %v7681 = vld [vmem:[%s3055 + $0x88] sm:$0xf]
      %v7682 = vld [vmem:[%s3055 + $0x8c] sm:$0x1]
      %v7683 = vld [vmem:[%s3055 + $0x90] sm:$0xf]
      %v7684 = vld [vmem:[%s3055 + $0x94] sm:$0xf]
      %v7685 = vld [vmem:[%s3055 + $0x98] sm:$0x1]
      %v7686 = vld [vmem:[%s3055 + $0x9c] sm:$0xf]
      %v7687 = vld [vmem:[%s3055 + $0xa0] sm:$0xf]
      %v7688 = vld [vmem:[%s3055 + $0xa4] sm:$0x1]
      %v7689 = vld [vmem:[%s3055 + $0xa8] sm:$0xf]
      %v7690 = vld [vmem:[%s3055 + $0xac] sm:$0xf]
      %v7691 = vld [vmem:[%s3055 + $0xb0] sm:$0x1]
      %v7692 = vld [vmem:[%s3055 + $0xb4] sm:$0xf]
      %v7693 = vld [vmem:[%s3055 + $0xb8] sm:$0xf]
      %v7694 = vld [vmem:[%s3055 + $0xbc] sm:$0x1]
      %v7696 = vshrl.u32 %v7647, 16
      %v7698 = vrot.slane %v7696, 4
      %v7699 = vshll.u32 %v7647, 16
      %v7701 = vrot.slane %v7699, 5
      %v7702 = vor.u32 %v7698, %v7701
      %v7703 = vrot.slane %v7702, 4
      %v7705 = vshll.u32 %v7648, 16
      %v7707 = vrot.slane %v7705, 5
      %v7708 = vsel %vm1110, %v7703, %v7707
      %v7709 = vshrl.u32 %v7648, 16
      %v7711 = vrot.slane %v7709, 4
      %v7712 = vor.u32 %v7711, %v7707
      %v7713 = vrot.slane %v7712, 4
      %v7715 = vshll.u32 %v7649, 16
      %v7717 = vrot.slane %v7715, 5
      %v7718 = vsel %vm1110, %v7713, %v7717
      %v7720 = vshrl.u32 %v7650, 16
      %v7722 = vrot.slane %v7720, 4
      %v7723 = vshll.u32 %v7650, 16
      %v7725 = vrot.slane %v7723, 5
      %v7726 = vor.u32 %v7722, %v7725
      %v7727 = vrot.slane %v7726, 4
      %v7729 = vshll.u32 %v7651, 16
      %v7731 = vrot.slane %v7729, 5
      %v7732 = vsel %vm1110, %v7727, %v7731
      %v7733 = vshrl.u32 %v7651, 16
      %v7735 = vrot.slane %v7733, 4
      %v7736 = vor.u32 %v7735, %v7731
      %v7737 = vrot.slane %v7736, 4
      %v7739 = vshll.u32 %v7652, 16
      %v7741 = vrot.slane %v7739, 5
      %v7742 = vsel %vm1110, %v7737, %v7741
      %v7744 = vshrl.u32 %v7653, 16
      %v7746 = vrot.slane %v7744, 4
      %v7747 = vshll.u32 %v7653, 16
      %v7749 = vrot.slane %v7747, 5
      %v7750 = vor.u32 %v7746, %v7749
      %v7751 = vrot.slane %v7750, 4
      %v7753 = vshll.u32 %v7654, 16
      %v7755 = vrot.slane %v7753, 5
      %v7756 = vsel %vm1110, %v7751, %v7755
      %v7757 = vshrl.u32 %v7654, 16
      %v7759 = vrot.slane %v7757, 4
      %v7760 = vor.u32 %v7759, %v7755
      %v7761 = vrot.slane %v7760, 4
      %v7763 = vshll.u32 %v7655, 16
      %v7765 = vrot.slane %v7763, 5
      %v7766 = vsel %vm1110, %v7761, %v7765
      %v7768 = vshrl.u32 %v7656, 16
      %v7770 = vrot.slane %v7768, 4
      %v7771 = vshll.u32 %v7656, 16
      %v7773 = vrot.slane %v7771, 5
      %v7774 = vor.u32 %v7770, %v7773
      %v7775 = vrot.slane %v7774, 4
      %v7777 = vshll.u32 %v7657, 16
      %v7779 = vrot.slane %v7777, 5
      %v7780 = vsel %vm1110, %v7775, %v7779
      %v7781 = vshrl.u32 %v7657, 16
      %v7783 = vrot.slane %v7781, 4
      %v7784 = vor.u32 %v7783, %v7779
      %v7785 = vrot.slane %v7784, 4
      %v7787 = vshll.u32 %v7658, 16
      %v7789 = vrot.slane %v7787, 5
      %v7790 = vsel %vm1110, %v7785, %v7789
      %v7792 = vshrl.u32 %v7659, 16
      %v7794 = vrot.slane %v7792, 4
      %v7795 = vshll.u32 %v7659, 16
      %v7797 = vrot.slane %v7795, 5
      %v7798 = vor.u32 %v7794, %v7797
      %v7799 = vrot.slane %v7798, 4
      %v7801 = vshll.u32 %v7660, 16
      %v7803 = vrot.slane %v7801, 5
      %v7804 = vsel %vm1110, %v7799, %v7803
      %v7805 = vshrl.u32 %v7660, 16
      %v7807 = vrot.slane %v7805, 4
      %v7808 = vor.u32 %v7807, %v7803
      %v7809 = vrot.slane %v7808, 4
      %v7811 = vshll.u32 %v7661, 16
      %v7813 = vrot.slane %v7811, 5
      %v7814 = vsel %vm1110, %v7809, %v7813
      %v7816 = vshrl.u32 %v7662, 16
      %v7818 = vrot.slane %v7816, 4
      %v7819 = vshll.u32 %v7662, 16
      %v7821 = vrot.slane %v7819, 5
      %v7822 = vor.u32 %v7818, %v7821
      %v7823 = vrot.slane %v7822, 4
      %v7825 = vshll.u32 %v7663, 16
      %v7827 = vrot.slane %v7825, 5
      %v7828 = vsel %vm1110, %v7823, %v7827
      %v7829 = vshrl.u32 %v7663, 16
      %v7831 = vrot.slane %v7829, 4
      %v7832 = vor.u32 %v7831, %v7827
      %v7833 = vrot.slane %v7832, 4
      %v7835 = vshll.u32 %v7664, 16
      %v7837 = vrot.slane %v7835, 5
      %v7838 = vsel %vm1110, %v7833, %v7837
      %v7840 = vshrl.u32 %v7665, 16
      %v7842 = vrot.slane %v7840, 4
      %v7843 = vshll.u32 %v7665, 16
      %v7845 = vrot.slane %v7843, 5
      %v7846 = vor.u32 %v7842, %v7845
      %v7847 = vrot.slane %v7846, 4
      %v7849 = vshll.u32 %v7666, 16
      %v7851 = vrot.slane %v7849, 5
      %v7852 = vsel %vm1110, %v7847, %v7851
      %v7853 = vshrl.u32 %v7666, 16
      %v7855 = vrot.slane %v7853, 4
      %v7856 = vor.u32 %v7855, %v7851
      %v7857 = vrot.slane %v7856, 4
      %v7859 = vshll.u32 %v7667, 16
      %v7861 = vrot.slane %v7859, 5
      %v7862 = vsel %vm1110, %v7857, %v7861
      %v7864 = vshrl.u32 %v7668, 16
      %v7866 = vrot.slane %v7864, 4
      %v7867 = vshll.u32 %v7668, 16
      %v7869 = vrot.slane %v7867, 5
      %v7870 = vor.u32 %v7866, %v7869
      %v7871 = vrot.slane %v7870, 4
      %v7873 = vshll.u32 %v7669, 16
      %v7875 = vrot.slane %v7873, 5
      %v7876 = vsel %vm1110, %v7871, %v7875
      %v7877 = vshrl.u32 %v7669, 16
      %v7879 = vrot.slane %v7877, 4
      %v7880 = vor.u32 %v7879, %v7875
      %v7881 = vrot.slane %v7880, 4
      %v7883 = vshll.u32 %v7670, 16
      %v7885 = vrot.slane %v7883, 5
      %v7886 = vsel %vm1110, %v7881, %v7885
      %v7888 = vshrl.u32 %v7671, 16
      %v7890 = vrot.slane %v7888, 4
      %v7891 = vshll.u32 %v7671, 16
      %v7893 = vrot.slane %v7891, 5
      %v7894 = vor.u32 %v7890, %v7893
      %v7895 = vrot.slane %v7894, 4
      %v7897 = vshll.u32 %v7672, 16
      %v7899 = vrot.slane %v7897, 5
      %v7900 = vsel %vm1110, %v7895, %v7899
      %v7901 = vshrl.u32 %v7672, 16
      %v7903 = vrot.slane %v7901, 4
      %v7904 = vor.u32 %v7903, %v7899
      %v7905 = vrot.slane %v7904, 4
      %v7907 = vshll.u32 %v7673, 16
      %v7909 = vrot.slane %v7907, 5
      %v7910 = vsel %vm1110, %v7905, %v7909
      %v7912 = vshrl.u32 %v7674, 16
      %v7914 = vrot.slane %v7912, 4
      %v7915 = vshll.u32 %v7674, 16
      %v7917 = vrot.slane %v7915, 5
      %v7918 = vor.u32 %v7914, %v7917
      %v7919 = vrot.slane %v7918, 4
      %v7921 = vshll.u32 %v7675, 16
      %v7923 = vrot.slane %v7921, 5
      %v7924 = vsel %vm1110, %v7919, %v7923
      %v7925 = vshrl.u32 %v7675, 16
      %v7927 = vrot.slane %v7925, 4
      %v7928 = vor.u32 %v7927, %v7923
      %v7929 = vrot.slane %v7928, 4
      %v7931 = vshll.u32 %v7676, 16
      %v7933 = vrot.slane %v7931, 5
      %v7934 = vsel %vm1110, %v7929, %v7933
      %v7936 = vshrl.u32 %v7677, 16
      %v7938 = vrot.slane %v7936, 4
      %v7939 = vshll.u32 %v7677, 16
      %v7941 = vrot.slane %v7939, 5
      %v7942 = vor.u32 %v7938, %v7941
      %v7943 = vrot.slane %v7942, 4
      %v7945 = vshll.u32 %v7678, 16
      %v7947 = vrot.slane %v7945, 5
      %v7948 = vsel %vm1110, %v7943, %v7947
      %v7949 = vshrl.u32 %v7678, 16
      %v7951 = vrot.slane %v7949, 4
      %v7952 = vor.u32 %v7951, %v7947
      %v7953 = vrot.slane %v7952, 4
      %v7955 = vshll.u32 %v7679, 16
      %v7957 = vrot.slane %v7955, 5
      %v7958 = vsel %vm1110, %v7953, %v7957
      %v7960 = vshrl.u32 %v7680, 16
      %v7962 = vrot.slane %v7960, 4
      %v7963 = vshll.u32 %v7680, 16
      %v7965 = vrot.slane %v7963, 5
      %v7966 = vor.u32 %v7962, %v7965
      %v7967 = vrot.slane %v7966, 4
      %v7969 = vshll.u32 %v7681, 16
      %v7971 = vrot.slane %v7969, 5
      %v7972 = vsel %vm1110, %v7967, %v7971
      %v7973 = vshrl.u32 %v7681, 16
      %v7975 = vrot.slane %v7973, 4
      %v7976 = vor.u32 %v7975, %v7971
      %v7977 = vrot.slane %v7976, 4
      %v7979 = vshll.u32 %v7682, 16
      %v7981 = vrot.slane %v7979, 5
      %v7982 = vsel %vm1110, %v7977, %v7981
      %v7984 = vshrl.u32 %v7683, 16
      %v7986 = vrot.slane %v7984, 4
      %v7987 = vshll.u32 %v7683, 16
      %v7989 = vrot.slane %v7987, 5
      %v7990 = vor.u32 %v7986, %v7989
      %v7991 = vrot.slane %v7990, 4
      %v7993 = vshll.u32 %v7684, 16
      %v7995 = vrot.slane %v7993, 5
      %v7996 = vsel %vm1110, %v7991, %v7995
      %v7997 = vshrl.u32 %v7684, 16
      %v7999 = vrot.slane %v7997, 4
      %v8000 = vor.u32 %v7999, %v7995
      %v8001 = vrot.slane %v8000, 4
      %v8003 = vshll.u32 %v7685, 16
      %v8005 = vrot.slane %v8003, 5
      %v8006 = vsel %vm1110, %v8001, %v8005
      %v8008 = vshrl.u32 %v7686, 16
      %v8010 = vrot.slane %v8008, 4
      %v8011 = vshll.u32 %v7686, 16
      %v8013 = vrot.slane %v8011, 5
      %v8014 = vor.u32 %v8010, %v8013
      %v8015 = vrot.slane %v8014, 4
      %v8017 = vshll.u32 %v7687, 16
      %v8019 = vrot.slane %v8017, 5
      %v8020 = vsel %vm1110, %v8015, %v8019
      %v8021 = vshrl.u32 %v7687, 16
      %v8023 = vrot.slane %v8021, 4
      %v8024 = vor.u32 %v8023, %v8019
      %v8025 = vrot.slane %v8024, 4
      %v8027 = vshll.u32 %v7688, 16
      %v8029 = vrot.slane %v8027, 5
      %v8030 = vsel %vm1110, %v8025, %v8029
      %v8032 = vshrl.u32 %v7689, 16
      %v8034 = vrot.slane %v8032, 4
      %v8035 = vshll.u32 %v7689, 16
      %v8037 = vrot.slane %v8035, 5
      %v8038 = vor.u32 %v8034, %v8037
      %v8039 = vrot.slane %v8038, 4
      %v8041 = vshll.u32 %v7690, 16
      %v8043 = vrot.slane %v8041, 5
      %v8044 = vsel %vm1110, %v8039, %v8043
      %v8045 = vshrl.u32 %v7690, 16
      %v8047 = vrot.slane %v8045, 4
      %v8048 = vor.u32 %v8047, %v8043
      %v8049 = vrot.slane %v8048, 4
      %v8051 = vshll.u32 %v7691, 16
      %v8053 = vrot.slane %v8051, 5
      %v8054 = vsel %vm1110, %v8049, %v8053
      %v8056 = vshrl.u32 %v7692, 16
      %v8058 = vrot.slane %v8056, 4
      %v8059 = vshll.u32 %v7692, 16
      %v8061 = vrot.slane %v8059, 5
      %v8062 = vor.u32 %v8058, %v8061
      %v8063 = vrot.slane %v8062, 4
      %v8065 = vshll.u32 %v7693, 16
      %v8067 = vrot.slane %v8065, 5
      %v8068 = vsel %vm1110, %v8063, %v8067
      %v8069 = vshrl.u32 %v7693, 16
      %v8071 = vrot.slane %v8069, 4
      %v8072 = vor.u32 %v8071, %v8067
      %v8073 = vrot.slane %v8072, 4
      %v8075 = vshll.u32 %v7694, 16
      %v8077 = vrot.slane %v8075, 5
      %v8078 = vsel %vm1110, %v8073, %v8077
      %8079 = vrot.lane.b32.xlu0 %v7708, 56
      %v8080 = vpop.permute.xlu0 %8079
      %8081 = vrot.lane.b32.xlu0 %v7718, 56
      %v8082 = vpop.permute.xlu0 %8081
      %8083 = vrot.lane.b32.xlu0 %v7732, 56
      %v8084 = vpop.permute.xlu0 %8083
      %8085 = vrot.lane.b32.xlu0 %v7742, 56
      %v8086 = vpop.permute.xlu0 %8085
      %8087 = vrot.lane.b32.xlu0 %v7756, 56
      %v8088 = vpop.permute.xlu0 %8087
      %8089 = vrot.lane.b32.xlu0 %v7766, 56
      %v8090 = vpop.permute.xlu0 %8089
      %8091 = vrot.lane.b32.xlu0 %v7780, 56
      %v8092 = vpop.permute.xlu0 %8091
      %8093 = vrot.lane.b32.xlu0 %v7790, 56
      %v8094 = vpop.permute.xlu0 %8093
      %8095 = vrot.lane.b32.xlu0 %v7804, 56
      %v8096 = vpop.permute.xlu0 %8095
      %8097 = vrot.lane.b32.xlu0 %v7814, 56
      %v8098 = vpop.permute.xlu0 %8097
      %8099 = vrot.lane.b32.xlu0 %v7828, 56
      %v8100 = vpop.permute.xlu0 %8099
      %8101 = vrot.lane.b32.xlu0 %v7838, 56
      %v8102 = vpop.permute.xlu0 %8101
      %8103 = vrot.lane.b32.xlu0 %v7852, 56
      %v8104 = vpop.permute.xlu0 %8103
      %8105 = vrot.lane.b32.xlu0 %v7862, 56
      %v8106 = vpop.permute.xlu0 %8105
      %8107 = vrot.lane.b32.xlu0 %v7876, 56
      %v8108 = vpop.permute.xlu0 %8107
      %8109 = vrot.lane.b32.xlu0 %v7886, 56
      %v8110 = vpop.permute.xlu0 %8109
      %8111 = vrot.lane.b32.xlu0 %v7900, 56
      %v8112 = vpop.permute.xlu0 %8111
      %8113 = vrot.lane.b32.xlu0 %v7910, 56
      %v8114 = vpop.permute.xlu0 %8113
      %8115 = vrot.lane.b32.xlu0 %v7924, 56
      %v8116 = vpop.permute.xlu0 %8115
      %8117 = vrot.lane.b32.xlu0 %v7934, 56
      %v8118 = vpop.permute.xlu0 %8117
      %8119 = vrot.lane.b32.xlu0 %v7948, 56
      %v8120 = vpop.permute.xlu0 %8119
      %8121 = vrot.lane.b32.xlu0 %v7958, 56
      %v8122 = vpop.permute.xlu0 %8121
      %8123 = vrot.lane.b32.xlu0 %v7972, 56
      %v8124 = vpop.permute.xlu0 %8123
      %8125 = vrot.lane.b32.xlu0 %v7982, 56
      %v8126 = vpop.permute.xlu0 %8125
      %8127 = vrot.lane.b32.xlu0 %v7996, 56
      %v8128 = vpop.permute.xlu0 %8127
      %8129 = vrot.lane.b32.xlu0 %v8006, 56
      %v8130 = vpop.permute.xlu0 %8129
      %8131 = vrot.lane.b32.xlu0 %v8020, 56
      %v8132 = vpop.permute.xlu0 %8131
      %8133 = vrot.lane.b32.xlu0 %v8030, 56
      %v8134 = vpop.permute.xlu0 %8133
      %8135 = vrot.lane.b32.xlu0 %v8044, 56
      %v8136 = vpop.permute.xlu0 %8135
      %8137 = vrot.lane.b32.xlu0 %v8054, 56
      %v8138 = vpop.permute.xlu0 %8137
      %8139 = vrot.lane.b32.xlu0 %v8068, 56
      %v8140 = vpop.permute.xlu0 %8139
      %8141 = vrot.lane.b32.xlu0 %v8078, 56
      %v8142 = vpop.permute.xlu0 %8141
      %8175 = vst.msk [vmem:[#allocation3] sm:$0xf] %vm3777, %v8080
      %8176 = vst.msk [vmem:[#allocation3 + $0x4] sm:$0xf] %vm3777, %v8082
      %8177 = vst.msk [vmem:[#allocation3 + $0x8] sm:$0xf] %vm3777, %v8084
      %8178 = vst.msk [vmem:[#allocation3 + $0xc] sm:$0xf] %vm3777, %v8086
      %8179 = vst.msk [vmem:[#allocation3 + $0x10] sm:$0xf] %vm3777, %v8088
      %8180 = vst.msk [vmem:[#allocation3 + $0x14] sm:$0xf] %vm3777, %v8090
      %8181 = vst.msk [vmem:[#allocation3 + $0x18] sm:$0xf] %vm3777, %v8092
      %8182 = vst.msk [vmem:[#allocation3 + $0x1c] sm:$0xf] %vm3777, %v8094
      %8183 = vst.msk [vmem:[#allocation3 + $0x20] sm:$0xf] %vm3777, %v8096
      %8184 = vst.msk [vmem:[#allocation3 + $0x24] sm:$0xf] %vm3777, %v8098
      %8185 = vst.msk [vmem:[#allocation3 + $0x28] sm:$0xf] %vm3777, %v8100
      %8186 = vst.msk [vmem:[#allocation3 + $0x2c] sm:$0xf] %vm3777, %v8102
      %8187 = vst.msk [vmem:[#allocation3 + $0x30] sm:$0xf] %vm3777, %v8104
      %8188 = vst.msk [vmem:[#allocation3 + $0x34] sm:$0xf] %vm3777, %v8106
      %8189 = vst.msk [vmem:[#allocation3 + $0x38] sm:$0xf] %vm3777, %v8108
      %8190 = vst.msk [vmem:[#allocation3 + $0x3c] sm:$0xf] %vm3777, %v8110
      %8191 = vst.msk [vmem:[#allocation3 + $0x40] sm:$0xf] %vm3777, %v8112
      %8192 = vst.msk [vmem:[#allocation3 + $0x44] sm:$0xf] %vm3777, %v8114
      %8193 = vst.msk [vmem:[#allocation3 + $0x48] sm:$0xf] %vm3777, %v8116
      %8194 = vst.msk [vmem:[#allocation3 + $0x4c] sm:$0xf] %vm3777, %v8118
      %8195 = vst.msk [vmem:[#allocation3 + $0x50] sm:$0xf] %vm3777, %v8120
      %8196 = vst.msk [vmem:[#allocation3 + $0x54] sm:$0xf] %vm3777, %v8122
      %8197 = vst.msk [vmem:[#allocation3 + $0x58] sm:$0xf] %vm3777, %v8124
      %8198 = vst.msk [vmem:[#allocation3 + $0x5c] sm:$0xf] %vm3777, %v8126
      %8199 = vst.msk [vmem:[#allocation3 + $0x60] sm:$0xf] %vm3777, %v8128
      %8200 = vst.msk [vmem:[#allocation3 + $0x64] sm:$0xf] %vm3777, %v8130
      %8201 = vst.msk [vmem:[#allocation3 + $0x68] sm:$0xf] %vm3777, %v8132
      %8202 = vst.msk [vmem:[#allocation3 + $0x6c] sm:$0xf] %vm3777, %v8134
      %8203 = vst.msk [vmem:[#allocation3 + $0x70] sm:$0xf] %vm3777, %v8136
      %8204 = vst.msk [vmem:[#allocation3 + $0x74] sm:$0xf] %vm3777, %v8138
      %8205 = vst.msk [vmem:[#allocation3 + $0x78] sm:$0xf] %vm3777, %v8140
      %8206 = vst.msk [vmem:[#allocation3 + $0x7c] sm:$0xf] %vm3777, %v8142
      %v8207 = vld [vmem:[%s3055] sm:$0xe]
      %v8208 = vld [vmem:[%s3055 + $0x4] sm:$0xf]
      %v8209 = vld [vmem:[%s3055 + $0x8] sm:$0x1]
      %v8210 = vld [vmem:[%s3055 + $0xc] sm:$0xe]
      %v8211 = vld [vmem:[%s3055 + $0x10] sm:$0xf]
      %v8212 = vld [vmem:[%s3055 + $0x14] sm:$0x1]
      %v8213 = vld [vmem:[%s3055 + $0x18] sm:$0xe]
      %v8214 = vld [vmem:[%s3055 + $0x1c] sm:$0xf]
      %v8215 = vld [vmem:[%s3055 + $0x20] sm:$0x1]
      %v8216 = vld [vmem:[%s3055 + $0x24] sm:$0xe]
      %v8217 = vld [vmem:[%s3055 + $0x28] sm:$0xf]
      %v8218 = vld [vmem:[%s3055 + $0x2c] sm:$0x1]
      %v8219 = vld [vmem:[%s3055 + $0x30] sm:$0xe]
      %v8220 = vld [vmem:[%s3055 + $0x34] sm:$0xf]
      %v8221 = vld [vmem:[%s3055 + $0x38] sm:$0x1]
      %v8222 = vld [vmem:[%s3055 + $0x3c] sm:$0xe]
      %v8223 = vld [vmem:[%s3055 + $0x40] sm:$0xf]
      %v8224 = vld [vmem:[%s3055 + $0x44] sm:$0x1]
      %v8225 = vld [vmem:[%s3055 + $0x48] sm:$0xe]
      %v8226 = vld [vmem:[%s3055 + $0x4c] sm:$0xf]
      %v8227 = vld [vmem:[%s3055 + $0x50] sm:$0x1]
      %v8228 = vld [vmem:[%s3055 + $0x54] sm:$0xe]
      %v8229 = vld [vmem:[%s3055 + $0x58] sm:$0xf]
      %v8230 = vld [vmem:[%s3055 + $0x5c] sm:$0x1]
      %v8231 = vld [vmem:[%s3055 + $0x60] sm:$0xe]
      %v8232 = vld [vmem:[%s3055 + $0x64] sm:$0xf]
      %v8233 = vld [vmem:[%s3055 + $0x68] sm:$0x1]
      %v8234 = vld [vmem:[%s3055 + $0x6c] sm:$0xe]
      %v8235 = vld [vmem:[%s3055 + $0x70] sm:$0xf]
      %v8236 = vld [vmem:[%s3055 + $0x74] sm:$0x1]
      %v8237 = vld [vmem:[%s3055 + $0x78] sm:$0xe]
      %v8238 = vld [vmem:[%s3055 + $0x7c] sm:$0xf]
      %v8239 = vld [vmem:[%s3055 + $0x80] sm:$0x1]
      %v8240 = vld [vmem:[%s3055 + $0x84] sm:$0xe]
      %v8241 = vld [vmem:[%s3055 + $0x88] sm:$0xf]
      %v8242 = vld [vmem:[%s3055 + $0x8c] sm:$0x1]
      %v8243 = vld [vmem:[%s3055 + $0x90] sm:$0xe]
      %v8244 = vld [vmem:[%s3055 + $0x94] sm:$0xf]
      %v8245 = vld [vmem:[%s3055 + $0x98] sm:$0x1]
      %v8246 = vld [vmem:[%s3055 + $0x9c] sm:$0xe]
      %v8247 = vld [vmem:[%s3055 + $0xa0] sm:$0xf]
      %v8248 = vld [vmem:[%s3055 + $0xa4] sm:$0x1]
      %v8249 = vld [vmem:[%s3055 + $0xa8] sm:$0xe]
      %v8250 = vld [vmem:[%s3055 + $0xac] sm:$0xf]
      %v8251 = vld [vmem:[%s3055 + $0xb0] sm:$0x1]
      %v8252 = vld [vmem:[%s3055 + $0xb4] sm:$0xe]
      %v8253 = vld [vmem:[%s3055 + $0xb8] sm:$0xf]
      %v8254 = vld [vmem:[%s3055 + $0xbc] sm:$0x1]
      %v8303 = vrot.slane %v8207, 5
      %v8304 = vrot.slane %v8303, 4
      %v8305 = vrot.slane %v8208, 5
      %v8306 = vsel %vm1722, %v8304, %v8305
      %v8307 = vrot.slane %v8305, 4
      %v8308 = vrot.slane %v8209, 5
      %v8309 = vsel %vm1722, %v8307, %v8308
      %v8310 = vrot.slane %v8210, 5
      %v8311 = vrot.slane %v8310, 4
      %v8312 = vrot.slane %v8211, 5
      %v8313 = vsel %vm1722, %v8311, %v8312
      %v8314 = vrot.slane %v8312, 4
      %v8315 = vrot.slane %v8212, 5
      %v8316 = vsel %vm1722, %v8314, %v8315
      %v8317 = vrot.slane %v8213, 5
      %v8318 = vrot.slane %v8317, 4
      %v8319 = vrot.slane %v8214, 5
      %v8320 = vsel %vm1722, %v8318, %v8319
      %v8321 = vrot.slane %v8319, 4
      %v8322 = vrot.slane %v8215, 5
      %v8323 = vsel %vm1722, %v8321, %v8322
      %v8324 = vrot.slane %v8216, 5
      %v8325 = vrot.slane %v8324, 4
      %v8326 = vrot.slane %v8217, 5
      %v8327 = vsel %vm1722, %v8325, %v8326
      %v8328 = vrot.slane %v8326, 4
      %v8329 = vrot.slane %v8218, 5
      %v8330 = vsel %vm1722, %v8328, %v8329
      %v8331 = vrot.slane %v8219, 5
      %v8332 = vrot.slane %v8331, 4
      %v8333 = vrot.slane %v8220, 5
      %v8334 = vsel %vm1722, %v8332, %v8333
      %v8335 = vrot.slane %v8333, 4
      %v8336 = vrot.slane %v8221, 5
      %v8337 = vsel %vm1722, %v8335, %v8336
      %v8338 = vrot.slane %v8222, 5
      %v8339 = vrot.slane %v8338, 4
      %v8340 = vrot.slane %v8223, 5
      %v8341 = vsel %vm1722, %v8339, %v8340
      %v8342 = vrot.slane %v8340, 4
      %v8343 = vrot.slane %v8224, 5
      %v8344 = vsel %vm1722, %v8342, %v8343
      %v8345 = vrot.slane %v8225, 5
      %v8346 = vrot.slane %v8345, 4
      %v8347 = vrot.slane %v8226, 5
      %v8348 = vsel %vm1722, %v8346, %v8347
      %v8349 = vrot.slane %v8347, 4
      %v8350 = vrot.slane %v8227, 5
      %v8351 = vsel %vm1722, %v8349, %v8350
      %v8352 = vrot.slane %v8228, 5
      %v8353 = vrot.slane %v8352, 4
      %v8354 = vrot.slane %v8229, 5
      %v8355 = vsel %vm1722, %v8353, %v8354
      %v8356 = vrot.slane %v8354, 4
      %v8357 = vrot.slane %v8230, 5
      %v8358 = vsel %vm1722, %v8356, %v8357
      %v8359 = vrot.slane %v8231, 5
      %v8360 = vrot.slane %v8359, 4
      %v8361 = vrot.slane %v8232, 5
      %v8362 = vsel %vm1722, %v8360, %v8361
      %v8363 = vrot.slane %v8361, 4
      %v8364 = vrot.slane %v8233, 5
      %v8365 = vsel %vm1722, %v8363, %v8364
      %v8366 = vrot.slane %v8234, 5
      %v8367 = vrot.slane %v8366, 4
      %v8368 = vrot.slane %v8235, 5
      %v8369 = vsel %vm1722, %v8367, %v8368
      %v8370 = vrot.slane %v8368, 4
      %v8371 = vrot.slane %v8236, 5
      %v8372 = vsel %vm1722, %v8370, %v8371
      %v8373 = vrot.slane %v8237, 5
      %v8374 = vrot.slane %v8373, 4
      %v8375 = vrot.slane %v8238, 5
      %v8376 = vsel %vm1722, %v8374, %v8375
      %v8377 = vrot.slane %v8375, 4
      %v8378 = vrot.slane %v8239, 5
      %v8379 = vsel %vm1722, %v8377, %v8378
      %v8380 = vrot.slane %v8240, 5
      %v8381 = vrot.slane %v8380, 4
      %v8382 = vrot.slane %v8241, 5
      %v8383 = vsel %vm1722, %v8381, %v8382
      %v8384 = vrot.slane %v8382, 4
      %v8385 = vrot.slane %v8242, 5
      %v8386 = vsel %vm1722, %v8384, %v8385
      %v8387 = vrot.slane %v8243, 5
      %v8388 = vrot.slane %v8387, 4
      %v8389 = vrot.slane %v8244, 5
      %v8390 = vsel %vm1722, %v8388, %v8389
      %v8391 = vrot.slane %v8389, 4
      %v8392 = vrot.slane %v8245, 5
      %v8393 = vsel %vm1722, %v8391, %v8392
      %v8394 = vrot.slane %v8246, 5
      %v8395 = vrot.slane %v8394, 4
      %v8396 = vrot.slane %v8247, 5
      %v8397 = vsel %vm1722, %v8395, %v8396
      %v8398 = vrot.slane %v8396, 4
      %v8399 = vrot.slane %v8248, 5
      %v8400 = vsel %vm1722, %v8398, %v8399
      %v8401 = vrot.slane %v8249, 5
      %v8402 = vrot.slane %v8401, 4
      %v8403 = vrot.slane %v8250, 5
      %v8404 = vsel %vm1722, %v8402, %v8403
      %v8405 = vrot.slane %v8403, 4
      %v8406 = vrot.slane %v8251, 5
      %v8407 = vsel %vm1722, %v8405, %v8406
      %v8408 = vrot.slane %v8252, 5
      %v8409 = vrot.slane %v8408, 4
      %v8410 = vrot.slane %v8253, 5
      %v8411 = vsel %vm1722, %v8409, %v8410
      %v8412 = vrot.slane %v8410, 4
      %v8413 = vrot.slane %v8254, 5
      %v8414 = vsel %vm1722, %v8412, %v8413
      %8415 = vrot.lane.b32.xlu0 %v8306, 64
      %v8416 = vpop.permute.xlu0 %8415
      %8417 = vrot.lane.b32.xlu0 %v8309, 64
      %v8418 = vpop.permute.xlu0 %8417
      %8419 = vrot.lane.b32.xlu0 %v8313, 64
      %v8420 = vpop.permute.xlu0 %8419
      %8421 = vrot.lane.b32.xlu0 %v8316, 64
      %v8422 = vpop.permute.xlu0 %8421
      %8423 = vrot.lane.b32.xlu0 %v8320, 64
      %v8424 = vpop.permute.xlu0 %8423
      %8425 = vrot.lane.b32.xlu0 %v8323, 64
      %v8426 = vpop.permute.xlu0 %8425
      %8427 = vrot.lane.b32.xlu0 %v8327, 64
      %v8428 = vpop.permute.xlu0 %8427
      %8429 = vrot.lane.b32.xlu0 %v8330, 64
      %v8430 = vpop.permute.xlu0 %8429
      %8431 = vrot.lane.b32.xlu0 %v8334, 64
      %v8432 = vpop.permute.xlu0 %8431
      %8433 = vrot.lane.b32.xlu0 %v8337, 64
      %v8434 = vpop.permute.xlu0 %8433
      %8435 = vrot.lane.b32.xlu0 %v8341, 64
      %v8436 = vpop.permute.xlu0 %8435
      %8437 = vrot.lane.b32.xlu0 %v8344, 64
      %v8438 = vpop.permute.xlu0 %8437
      %8439 = vrot.lane.b32.xlu0 %v8348, 64
      %v8440 = vpop.permute.xlu0 %8439
      %8441 = vrot.lane.b32.xlu0 %v8351, 64
      %v8442 = vpop.permute.xlu0 %8441
      %8443 = vrot.lane.b32.xlu0 %v8355, 64
      %v8444 = vpop.permute.xlu0 %8443
      %8445 = vrot.lane.b32.xlu0 %v8358, 64
      %v8446 = vpop.permute.xlu0 %8445
      %8447 = vrot.lane.b32.xlu0 %v8362, 64
      %v8448 = vpop.permute.xlu0 %8447
      %8449 = vrot.lane.b32.xlu0 %v8365, 64
      %v8450 = vpop.permute.xlu0 %8449
      %8451 = vrot.lane.b32.xlu0 %v8369, 64
      %v8452 = vpop.permute.xlu0 %8451
      %8453 = vrot.lane.b32.xlu0 %v8372, 64
      %v8454 = vpop.permute.xlu0 %8453
      %8455 = vrot.lane.b32.xlu0 %v8376, 64
      %v8456 = vpop.permute.xlu0 %8455
      %8457 = vrot.lane.b32.xlu0 %v8379, 64
      %v8458 = vpop.permute.xlu0 %8457
      %8459 = vrot.lane.b32.xlu0 %v8383, 64
      %v8460 = vpop.permute.xlu0 %8459
      %8461 = vrot.lane.b32.xlu0 %v8386, 64
      %v8462 = vpop.permute.xlu0 %8461
      %8463 = vrot.lane.b32.xlu0 %v8390, 64
      %v8464 = vpop.permute.xlu0 %8463
      %8465 = vrot.lane.b32.xlu0 %v8393, 64
      %v8466 = vpop.permute.xlu0 %8465
      %8467 = vrot.lane.b32.xlu0 %v8397, 64
      %v8468 = vpop.permute.xlu0 %8467
      %8469 = vrot.lane.b32.xlu0 %v8400, 64
      %v8470 = vpop.permute.xlu0 %8469
      %8471 = vrot.lane.b32.xlu0 %v8404, 64
      %v8472 = vpop.permute.xlu0 %8471
      %8473 = vrot.lane.b32.xlu0 %v8407, 64
      %v8474 = vpop.permute.xlu0 %8473
      %8475 = vrot.lane.b32.xlu0 %v8411, 64
      %v8476 = vpop.permute.xlu0 %8475
      %8477 = vrot.lane.b32.xlu0 %v8414, 64
      %v8478 = vpop.permute.xlu0 %8477
      %8511 = vst.msk [vmem:[#allocation3] sm:$0xf] %vm4114, %v8416
      %8512 = vst.msk [vmem:[#allocation3 + $0x4] sm:$0xf] %vm4114, %v8418
      %8513 = vst.msk [vmem:[#allocation3 + $0x8] sm:$0xf] %vm4114, %v8420
      %8514 = vst.msk [vmem:[#allocation3 + $0xc] sm:$0xf] %vm4114, %v8422
      %8515 = vst.msk [vmem:[#allocation3 + $0x10] sm:$0xf] %vm4114, %v8424
      %8516 = vst.msk [vmem:[#allocation3 + $0x14] sm:$0xf] %vm4114, %v8426
      %8517 = vst.msk [vmem:[#allocation3 + $0x18] sm:$0xf] %vm4114, %v8428
      %8518 = vst.msk [vmem:[#allocation3 + $0x1c] sm:$0xf] %vm4114, %v8430
      %8519 = vst.msk [vmem:[#allocation3 + $0x20] sm:$0xf] %vm4114, %v8432
      %8520 = vst.msk [vmem:[#allocation3 + $0x24] sm:$0xf] %vm4114, %v8434
      %8521 = vst.msk [vmem:[#allocation3 + $0x28] sm:$0xf] %vm4114, %v8436
      %8522 = vst.msk [vmem:[#allocation3 + $0x2c] sm:$0xf] %vm4114, %v8438
      %8523 = vst.msk [vmem:[#allocation3 + $0x30] sm:$0xf] %vm4114, %v8440
      %8524 = vst.msk [vmem:[#allocation3 + $0x34] sm:$0xf] %vm4114, %v8442
      %8525 = vst.msk [vmem:[#allocation3 + $0x38] sm:$0xf] %vm4114, %v8444
      %8526 = vst.msk [vmem:[#allocation3 + $0x3c] sm:$0xf] %vm4114, %v8446
      %8527 = vst.msk [vmem:[#allocation3 + $0x40] sm:$0xf] %vm4114, %v8448
      %8528 = vst.msk [vmem:[#allocation3 + $0x44] sm:$0xf] %vm4114, %v8450
      %8529 = vst.msk [vmem:[#allocation3 + $0x48] sm:$0xf] %vm4114, %v8452
      %8530 = vst.msk [vmem:[#allocation3 + $0x4c] sm:$0xf] %vm4114, %v8454
      %8531 = vst.msk [vmem:[#allocation3 + $0x50] sm:$0xf] %vm4114, %v8456
      %8532 = vst.msk [vmem:[#allocation3 + $0x54] sm:$0xf] %vm4114, %v8458
      %8533 = vst.msk [vmem:[#allocation3 + $0x58] sm:$0xf] %vm4114, %v8460
      %8534 = vst.msk [vmem:[#allocation3 + $0x5c] sm:$0xf] %vm4114, %v8462
      %8535 = vst.msk [vmem:[#allocation3 + $0x60] sm:$0xf] %vm4114, %v8464
      %8536 = vst.msk [vmem:[#allocation3 + $0x64] sm:$0xf] %vm4114, %v8466
      %8537 = vst.msk [vmem:[#allocation3 + $0x68] sm:$0xf] %vm4114, %v8468
      %8538 = vst.msk [vmem:[#allocation3 + $0x6c] sm:$0xf] %vm4114, %v8470
      %8539 = vst.msk [vmem:[#allocation3 + $0x70] sm:$0xf] %vm4114, %v8472
      %8540 = vst.msk [vmem:[#allocation3 + $0x74] sm:$0xf] %vm4114, %v8474
      %8541 = vst.msk [vmem:[#allocation3 + $0x78] sm:$0xf] %vm4114, %v8476
      %8542 = vst.msk [vmem:[#allocation3 + $0x7c] sm:$0xf] %vm4114, %v8478
      %v8543 = vld [vmem:[#allocation3] sm:$0xf]
      %v8544 = vld [vmem:[#allocation3 + $0x4] sm:$0xf]
      %v8545 = vld [vmem:[#allocation3 + $0x8] sm:$0xf]
      %v8546 = vld [vmem:[#allocation3 + $0xc] sm:$0xf]
      %v8547 = vld [vmem:[#allocation3 + $0x10] sm:$0xf]
      %v8548 = vld [vmem:[#allocation3 + $0x14] sm:$0xf]
      %v8549 = vld [vmem:[#allocation3 + $0x18] sm:$0xf]
      %v8550 = vld [vmem:[#allocation3 + $0x1c] sm:$0xf]
      %v8551 = vld [vmem:[#allocation3 + $0x20] sm:$0xf]
      %v8552 = vld [vmem:[#allocation3 + $0x24] sm:$0xf]
      %v8553 = vld [vmem:[#allocation3 + $0x28] sm:$0xf]
      %v8554 = vld [vmem:[#allocation3 + $0x2c] sm:$0xf]
      %v8555 = vld [vmem:[#allocation3 + $0x30] sm:$0xf]
      %v8556 = vld [vmem:[#allocation3 + $0x34] sm:$0xf]
      %v8557 = vld [vmem:[#allocation3 + $0x38] sm:$0xf]
      %v8558 = vld [vmem:[#allocation3 + $0x3c] sm:$0xf]
      %v8559 = vld [vmem:[#allocation3 + $0x40] sm:$0xf]
      %v8560 = vld [vmem:[#allocation3 + $0x44] sm:$0xf]
      %v8561 = vld [vmem:[#allocation3 + $0x48] sm:$0xf]
      %v8562 = vld [vmem:[#allocation3 + $0x4c] sm:$0xf]
      %v8563 = vld [vmem:[#allocation3 + $0x50] sm:$0xf]
      %v8564 = vld [vmem:[#allocation3 + $0x54] sm:$0xf]
      %v8565 = vld [vmem:[#allocation3 + $0x58] sm:$0xf]
      %v8566 = vld [vmem:[#allocation3 + $0x5c] sm:$0xf]
      %v8567 = vld [vmem:[#allocation3 + $0x60] sm:$0xf]
      %v8568 = vld [vmem:[#allocation3 + $0x64] sm:$0xf]
      %v8569 = vld [vmem:[#allocation3 + $0x68] sm:$0xf]
      %v8570 = vld [vmem:[#allocation3 + $0x6c] sm:$0xf]
      %v8571 = vld [vmem:[#allocation3 + $0x70] sm:$0xf]
      %v8572 = vld [vmem:[#allocation3 + $0x74] sm:$0xf]
      %v8573 = vld [vmem:[#allocation3 + $0x78] sm:$0xf]
      %v8574 = vld [vmem:[#allocation3 + $0x7c] sm:$0xf]
      %v8575 = vld [vmem:[%s5] sm:$0xf]
      %v8576 = vld [vmem:[%s5 + $0x4] sm:$0xf]
      %v8577 = vld [vmem:[%s5 + $0x8] sm:$0xf]
      %v8578 = vld [vmem:[%s5 + $0xc] sm:$0xf]
      %v8579 = vld [vmem:[%s5 + $0x10] sm:$0xf]
      %v8580 = vld [vmem:[%s5 + $0x14] sm:$0xf]
      %v8581 = vld [vmem:[%s5 + $0x18] sm:$0xf]
      %v8582 = vld [vmem:[%s5 + $0x1c] sm:$0xf]
      %v8583 = vld [vmem:[%s5 + $0x20] sm:$0xf]
      %v8585 = vlaneseq
      %v8586 = vshrl.u32 %v8585, 7
      %v8587 = vsub.s32 0, %v8586
      %v8588 = vrot.slane %v463, %v8587
      %v8622 = vunpack.c.l.b16 %v8543
      %v8623 = vunpack.c.l.b16 %v8544
      %v8624 = vunpack.c.l.b16 %v8545
      %v8625 = vunpack.c.l.b16 %v8546
      %v8626 = vunpack.c.l.b16 %v8547
      %v8627 = vunpack.c.l.b16 %v8548
      %v8628 = vunpack.c.l.b16 %v8549
      %v8629 = vunpack.c.l.b16 %v8550
      %v8630 = vunpack.c.l.b16 %v8551
      %v8631 = vunpack.c.l.b16 %v8552
      %v8632 = vunpack.c.l.b16 %v8553
      %v8633 = vunpack.c.l.b16 %v8554
      %v8634 = vunpack.c.l.b16 %v8555
      %v8635 = vunpack.c.l.b16 %v8556
      %v8636 = vunpack.c.l.b16 %v8557
      %v8637 = vunpack.c.l.b16 %v8558
      %v8638 = vunpack.c.l.b16 %v8559
      %v8639 = vunpack.c.l.b16 %v8560
      %v8640 = vunpack.c.l.b16 %v8561
      %v8641 = vunpack.c.l.b16 %v8562
      %v8642 = vunpack.c.l.b16 %v8563
      %v8643 = vunpack.c.l.b16 %v8564
      %v8644 = vunpack.c.l.b16 %v8565
      %v8645 = vunpack.c.l.b16 %v8566
      %v8646 = vunpack.c.l.b16 %v8567
      %v8647 = vunpack.c.l.b16 %v8568
      %v8648 = vunpack.c.l.b16 %v8569
      %v8649 = vunpack.c.l.b16 %v8570
      %v8650 = vunpack.c.l.b16 %v8571
      %v8651 = vunpack.c.l.b16 %v8572
      %v8652 = vunpack.c.l.b16 %v8573
      %v8653 = vunpack.c.l.b16 %v8574
      %v8654 = vpack.c.b16 %v8623, %v8622
      %v8655 = vpack.c.b16 %v8625, %v8624
      %v8656 = vpack.c.b16 %v8627, %v8626
      %v8657 = vpack.c.b16 %v8629, %v8628
      %v8658 = vpack.c.b16 %v8631, %v8630
      %v8659 = vpack.c.b16 %v8633, %v8632
      %v8660 = vpack.c.b16 %v8635, %v8634
      %v8661 = vpack.c.b16 %v8637, %v8636
      %v8662 = vpack.c.b16 %v8639, %v8638
      %v8663 = vpack.c.b16 %v8641, %v8640
      %v8664 = vpack.c.b16 %v8643, %v8642
      %v8665 = vpack.c.b16 %v8645, %v8644
      %v8666 = vpack.c.b16 %v8647, %v8646
      %v8667 = vpack.c.b16 %v8649, %v8648
      %v8668 = vpack.c.b16 %v8651, %v8650
      %v8669 = vpack.c.b16 %v8653, %v8652
      %v8679 = vunpack.c.l.b16 %v8575
      %v8680 = vunpack.c.l.b16 %v8576
      %v8681 = vunpack.c.l.b16 %v8577
      %v8682 = vunpack.c.l.b16 %v8578
      %v8683 = vunpack.c.l.b16 %v8579
      %v8684 = vunpack.c.l.b16 %v8580
      %v8685 = vunpack.c.l.b16 %v8581
      %v8686 = vunpack.c.l.b16 %v8582
      %v8687 = vunpack.c.l.b16 %v8583
      %v8688 = vpack.c.b16 %v8680, %v8679
      %v8689 = vpack.c.b16 %v8682, %v8681
      %v8690 = vpack.c.b16 %v8684, %v8683
      %v8691 = vpack.c.b16 %v8686, %v8685
      %v8692 = vpack.c.b16 %v8687, %v8687
      %v8698 = vsel %vm4301, %v8654, 0
      %v8701 = vsel %vm4301, %v8655, 0
      %v8704 = vsel %vm4301, %v8656, 0
      %v8707 = vsel %vm4301, %v8657, 0
      %v8710 = vsel %vm4301, %v8658, 0
      %v8713 = vsel %vm4301, %v8659, 0
      %v8716 = vsel %vm4301, %v8660, 0
      %v8719 = vsel %vm4301, %v8661, 0
      %v8722 = vsel %vm4301, %v8662, 0
      %v8725 = vsel %vm4301, %v8663, 0
      %v8728 = vsel %vm4301, %v8664, 0
      %v8731 = vsel %vm4301, %v8665, 0
      %v8734 = vsel %vm4301, %v8666, 0
      %v8737 = vsel %vm4301, %v8667, 0
      %v8740 = vsel %vm4301, %v8668, 0
      %v8743 = vsel %vm4301, %v8669, 0
      %v8746 = vsel %vm4350, %v8692, 0
      %8748 = vmatprep.subr.bf16.mxu0 0
      %8749 = vmatpush1.bf16.msra.mxu0 0
      %8750 = vmatprep.subr.bf16.mxu0 0
      %8751 = vmatpush1.bf16.msra.mxu0 0
      %8752 = vmatprep.subr.bf16.mxu0 0
      %8753 = vmatpush1.bf16.msra.mxu0 0
      %8754 = vmatprep.subr.bf16.mxu0 0
      %8755 = vmatpush1.bf16.msra.mxu0 %v8746
      %8756 = vmatprep.subr.bf16.mxu0 0
      %8757 = vmatpush1.bf16.msra.mxu0 %v8691
      %8758 = vmatprep.subr.bf16.mxu0 0
      %8759 = vmatpush1.bf16.msra.mxu0 %v8690
      %8760 = vmatprep.subr.bf16.mxu0 0
      %8761 = vmatpush1.bf16.msra.mxu0 %v8689
      %8762 = vmatprep.subr.bf16.mxu0 0
      %8763 = vmatpush1.bf16.msra.mxu0 %v8688
      %8764 = vmatprep.subr.bf16.mxu0 0
      %8765 = vmatpush2.bf16.msra.mxu0 0
      %8766 = vmatprep.subr.bf16.mxu0 0
      %8767 = vmatpush2.bf16.msra.mxu0 0
      %8768 = vmatprep.subr.bf16.mxu0 0
      %8769 = vmatpush2.bf16.msra.mxu0 0
      %8770 = vmatprep.subr.bf16.mxu0 0
      %8771 = vmatpush2.bf16.msra.mxu0 0
      %8772 = vmatprep.subr.bf16.mxu0 0
      %8773 = vmatpush2.bf16.msra.mxu0 0
      %8774 = vmatprep.subr.bf16.mxu0 0
      %8775 = vmatpush2.bf16.msra.mxu0 0
      %8776 = vmatprep.subr.bf16.mxu0 0
      %8777 = vmatpush2.bf16.msra.mxu0 0
      %8778 = vmatprep.subr.bf16.mxu0 0
      %8779 = vmatpush2.bf16.msra.mxu0 0
      %8780 = vmatprep.mubr.bf16.mxu0 0
      %8781 = vmatmul.mubr.bf16.gmra.mxu0 %v8698
      %v8782 = vpop.f32.mrf.mxu0
      %v8783 = vadd.f32 %v8588, %v8782
      %v8784 = vpop.f32.mrf.mxu0
      %v8785 = vpop.f32.mrf.mxu0
      %v8786 = vadd.f32 %v8588, %v8785
      %v8787 = vpop.f32.mrf.mxu0
      %8788 = vmatprep.mubr.bf16.mxu0 0
      %8789 = vmatmul.mubr.bf16.gmra.mxu0 %v8701
      %v8790 = vpop.f32.mrf.mxu0
      %v8791 = vadd.f32 %v8588, %v8790
      %v8792 = vpop.f32.mrf.mxu0
      %v8793 = vpop.f32.mrf.mxu0
      %v8794 = vadd.f32 %v8588, %v8793
      %v8795 = vpop.f32.mrf.mxu0
      %8796 = vmatprep.mubr.bf16.mxu0 0
      %8797 = vmatmul.mubr.bf16.gmra.mxu0 %v8704
      %v8798 = vpop.f32.mrf.mxu0
      %v8799 = vadd.f32 %v8588, %v8798
      %v8800 = vpop.f32.mrf.mxu0
      %v8801 = vpop.f32.mrf.mxu0
      %v8802 = vadd.f32 %v8588, %v8801
      %v8803 = vpop.f32.mrf.mxu0
      %8804 = vmatprep.mubr.bf16.mxu0 0
      %8805 = vmatmul.mubr.bf16.gmra.mxu0 %v8707
      %v8806 = vpop.f32.mrf.mxu0
      %v8807 = vadd.f32 %v8588, %v8806
      %v8808 = vpop.f32.mrf.mxu0
      %v8809 = vpop.f32.mrf.mxu0
      %v8810 = vadd.f32 %v8588, %v8809
      %v8811 = vpop.f32.mrf.mxu0
      %8812 = vmatprep.mubr.bf16.mxu0 0
      %8813 = vmatmul.mubr.bf16.gmra.mxu0 %v8710
      %v8814 = vpop.f32.mrf.mxu0
      %v8815 = vadd.f32 %v8588, %v8814
      %v8816 = vpop.f32.mrf.mxu0
      %v8817 = vpop.f32.mrf.mxu0
      %v8818 = vadd.f32 %v8588, %v8817
      %v8819 = vpop.f32.mrf.mxu0
      %8820 = vmatprep.mubr.bf16.mxu0 0
      %8821 = vmatmul.mubr.bf16.gmra.mxu0 %v8713
      %v8822 = vpop.f32.mrf.mxu0
      %v8823 = vadd.f32 %v8588, %v8822
      %v8824 = vpop.f32.mrf.mxu0
      %v8825 = vpop.f32.mrf.mxu0
      %v8826 = vadd.f32 %v8588, %v8825
      %v8827 = vpop.f32.mrf.mxu0
      %8828 = vmatprep.mubr.bf16.mxu0 0
      %8829 = vmatmul.mubr.bf16.gmra.mxu0 %v8716
      %v8830 = vpop.f32.mrf.mxu0
      %v8831 = vadd.f32 %v8588, %v8830
      %v8832 = vpop.f32.mrf.mxu0
      %v8833 = vpop.f32.mrf.mxu0
      %v8834 = vadd.f32 %v8588, %v8833
      %v8835 = vpop.f32.mrf.mxu0
      %8836 = vmatprep.mubr.bf16.mxu0 0
      %8837 = vmatmul.mubr.bf16.gmra.mxu0 %v8719
      %v8838 = vpop.f32.mrf.mxu0
      %v8839 = vadd.f32 %v8588, %v8838
      %v8840 = vpop.f32.mrf.mxu0
      %v8841 = vpop.f32.mrf.mxu0
      %v8842 = vadd.f32 %v8588, %v8841
      %v8843 = vpop.f32.mrf.mxu0
      %8844 = vmatprep.mubr.bf16.mxu0 0
      %8845 = vmatmul.mubr.bf16.gmra.mxu0 %v8722
      %v8846 = vpop.f32.mrf.mxu0
      %v8847 = vadd.f32 %v8588, %v8846
      %v8848 = vpop.f32.mrf.mxu0
      %v8849 = vpop.f32.mrf.mxu0
      %v8850 = vadd.f32 %v8588, %v8849
      %v8851 = vpop.f32.mrf.mxu0
      %8852 = vmatprep.mubr.bf16.mxu0 0
      %8853 = vmatmul.mubr.bf16.gmra.mxu0 %v8725
      %v8854 = vpop.f32.mrf.mxu0
      %v8855 = vadd.f32 %v8588, %v8854
      %v8856 = vpop.f32.mrf.mxu0
      %v8857 = vpop.f32.mrf.mxu0
      %v8858 = vadd.f32 %v8588, %v8857
      %v8859 = vpop.f32.mrf.mxu0
      %8860 = vmatprep.mubr.bf16.mxu0 0
      %8861 = vmatmul.mubr.bf16.gmra.mxu0 %v8728
      %v8862 = vpop.f32.mrf.mxu0
      %v8863 = vadd.f32 %v8588, %v8862
      %v8864 = vpop.f32.mrf.mxu0
      %v8865 = vpop.f32.mrf.mxu0
      %v8866 = vadd.f32 %v8588, %v8865
      %v8867 = vpop.f32.mrf.mxu0
      %8868 = vmatprep.mubr.bf16.mxu0 0
      %8869 = vmatmul.mubr.bf16.gmra.mxu0 %v8731
      %v8870 = vpop.f32.mrf.mxu0
      %v8871 = vadd.f32 %v8588, %v8870
      %v8872 = vpop.f32.mrf.mxu0
      %v8873 = vpop.f32.mrf.mxu0
      %v8874 = vadd.f32 %v8588, %v8873
      %v8875 = vpop.f32.mrf.mxu0
      %8876 = vmatprep.mubr.bf16.mxu0 0
      %8877 = vmatmul.mubr.bf16.gmra.mxu0 %v8734
      %v8878 = vpop.f32.mrf.mxu0
      %v8879 = vadd.f32 %v8588, %v8878
      %v8880 = vpop.f32.mrf.mxu0
      %v8881 = vpop.f32.mrf.mxu0
      %v8882 = vadd.f32 %v8588, %v8881
      %v8883 = vpop.f32.mrf.mxu0
      %8884 = vmatprep.mubr.bf16.mxu0 0
      %8885 = vmatmul.mubr.bf16.gmra.mxu0 %v8737
      %v8886 = vpop.f32.mrf.mxu0
      %v8887 = vadd.f32 %v8588, %v8886
      %v8888 = vpop.f32.mrf.mxu0
      %v8889 = vpop.f32.mrf.mxu0
      %v8890 = vadd.f32 %v8588, %v8889
      %v8891 = vpop.f32.mrf.mxu0
      %8892 = vmatprep.mubr.bf16.mxu0 0
      %8893 = vmatmul.mubr.bf16.gmra.mxu0 %v8740
      %v8894 = vpop.f32.mrf.mxu0
      %v8895 = vadd.f32 %v8588, %v8894
      %v8896 = vpop.f32.mrf.mxu0
      %v8897 = vpop.f32.mrf.mxu0
      %v8898 = vadd.f32 %v8588, %v8897
      %v8899 = vpop.f32.mrf.mxu0
      %8900 = vmatprep.mubr.bf16.mxu0 0
      %8901 = vmatmul.mubr.bf16.gmra.mxu0 %v8743
      %v8902 = vpop.f32.mrf.mxu0
      %v8903 = vadd.f32 %v8588, %v8902
      %v8904 = vpop.f32.mrf.mxu0
      %v8905 = vpop.f32.mrf.mxu0
      %v8906 = vadd.f32 %v8588, %v8905
      %v8907 = vpop.f32.mrf.mxu0
      %8908 = vdwg.mxu0
      %8909 = vst.msk [vmem:[%s312] sm:$0xff] %vm4666, %v8783
      %8910 = vst.msk [vmem:[%s312 + $0x8] sm:$0xff] %vm4666, %v8786
      %8911 = vst.msk [vmem:[%s312 + $0x10] sm:$0xff] %vm4666, %v8791
      %8912 = vst.msk [vmem:[%s312 + $0x18] sm:$0xff] %vm4666, %v8794
      %8913 = vst.msk [vmem:[%s312 + $0x20] sm:$0xff] %vm4666, %v8799
      %8914 = vst.msk [vmem:[%s312 + $0x28] sm:$0xff] %vm4666, %v8802
      %8915 = vst.msk [vmem:[%s312 + $0x30] sm:$0xff] %vm4666, %v8807
      %8916 = vst.msk [vmem:[%s312 + $0x38] sm:$0xff] %vm4666, %v8810
      %8917 = vst.msk [vmem:[%s312 + $0x40] sm:$0xff] %vm4666, %v8815
      %8918 = vst.msk [vmem:[%s312 + $0x48] sm:$0xff] %vm4666, %v8818
      %8919 = vst.msk [vmem:[%s312 + $0x50] sm:$0xff] %vm4666, %v8823
      %8920 = vst.msk [vmem:[%s312 + $0x58] sm:$0xff] %vm4666, %v8826
      %8921 = vst.msk [vmem:[%s312 + $0x60] sm:$0xff] %vm4666, %v8831
      %8922 = vst.msk [vmem:[%s312 + $0x68] sm:$0xff] %vm4666, %v8834
      %8923 = vst.msk [vmem:[%s312 + $0x70] sm:$0xff] %vm4666, %v8839
      %8924 = vst.msk [vmem:[%s312 + $0x78] sm:$0xff] %vm4666, %v8842
      %8925 = vst.msk [vmem:[%s312 + $0x80] sm:$0xff] %vm4666, %v8847
      %8926 = vst.msk [vmem:[%s312 + $0x88] sm:$0xff] %vm4666, %v8850
      %8927 = vst.msk [vmem:[%s312 + $0x90] sm:$0xff] %vm4666, %v8855
      %8928 = vst.msk [vmem:[%s312 + $0x98] sm:$0xff] %vm4666, %v8858
      %8929 = vst.msk [vmem:[%s312 + $0xa0] sm:$0xff] %vm4666, %v8863
      %8930 = vst.msk [vmem:[%s312 + $0xa8] sm:$0xff] %vm4666, %v8866
      %8931 = vst.msk [vmem:[%s312 + $0xb0] sm:$0xff] %vm4666, %v8871
      %8932 = vst.msk [vmem:[%s312 + $0xb8] sm:$0xff] %vm4666, %v8874
      %8933 = vst.msk [vmem:[%s312 + $0xc0] sm:$0xff] %vm4666, %v8879
      %8934 = vst.msk [vmem:[%s312 + $0xc8] sm:$0xff] %vm4666, %v8882
      %8935 = vst.msk [vmem:[%s312 + $0xd0] sm:$0xff] %vm4666, %v8887
      %8936 = vst.msk [vmem:[%s312 + $0xd8] sm:$0xff] %vm4666, %v8890
      %8937 = vst.msk [vmem:[%s312 + $0xe0] sm:$0xff] %vm4666, %v8895
      %8938 = vst.msk [vmem:[%s312 + $0xe8] sm:$0xff] %vm4666, %v8898
      %8939 = vst.msk [vmem:[%s312 + $0xf0] sm:$0xff] %vm4666, %v8903
      %8940 = vst.msk [vmem:[%s312 + $0xf8] sm:$0xff] %vm4666, %v8906
      %v8941 = vsel %vm4666, %v8783, 0.0
      %v8942 = vsel %vm4666, %v8786, 0.0
      %v8943 = vadd.f32 %v8941, %v8942
      %v8944 = vsel %vm4666, %v8791, 0.0
      %v8945 = vadd.f32 %v8943, %v8944
      %v8946 = vsel %vm4666, %v8794, 0.0
      %v8947 = vadd.f32 %v8945, %v8946
      %v8948 = vsel %vm4666, %v8799, 0.0
      %v8949 = vadd.f32 %v8947, %v8948
      %v8950 = vsel %vm4666, %v8802, 0.0
      %v8951 = vadd.f32 %v8949, %v8950
      %v8952 = vsel %vm4666, %v8807, 0.0
      %v8953 = vadd.f32 %v8951, %v8952
      %v8954 = vsel %vm4666, %v8810, 0.0
      %v8955 = vadd.f32 %v8953, %v8954
      %v8956 = vsel %vm4666, %v8815, 0.0
      %v8957 = vadd.f32 %v8955, %v8956
      %v8958 = vsel %vm4666, %v8818, 0.0
      %v8959 = vadd.f32 %v8957, %v8958
      %v8960 = vsel %vm4666, %v8823, 0.0
      %v8961 = vadd.f32 %v8959, %v8960
      %v8962 = vsel %vm4666, %v8826, 0.0
      %v8963 = vadd.f32 %v8961, %v8962
      %v8964 = vsel %vm4666, %v8831, 0.0
      %v8965 = vadd.f32 %v8963, %v8964
      %v8966 = vsel %vm4666, %v8834, 0.0
      %v8967 = vadd.f32 %v8965, %v8966
      %v8968 = vsel %vm4666, %v8839, 0.0
      %v8969 = vadd.f32 %v8967, %v8968
      %v8970 = vsel %vm4666, %v8842, 0.0
      %v8971 = vadd.f32 %v8969, %v8970
      %v8972 = vsel %vm4666, %v8847, 0.0
      %v8973 = vadd.f32 %v8971, %v8972
      %v8974 = vsel %vm4666, %v8850, 0.0
      %v8975 = vadd.f32 %v8973, %v8974
      %v8976 = vsel %vm4666, %v8855, 0.0
      %v8977 = vadd.f32 %v8975, %v8976
      %v8978 = vsel %vm4666, %v8858, 0.0
      %v8979 = vadd.f32 %v8977, %v8978
      %v8980 = vsel %vm4666, %v8863, 0.0
      %v8981 = vadd.f32 %v8979, %v8980
      %v8982 = vsel %vm4666, %v8866, 0.0
      %v8983 = vadd.f32 %v8981, %v8982
      %v8984 = vsel %vm4666, %v8871, 0.0
      %v8985 = vadd.f32 %v8983, %v8984
      %v8986 = vsel %vm4666, %v8874, 0.0
      %v8987 = vadd.f32 %v8985, %v8986
      %v8988 = vsel %vm4666, %v8879, 0.0
      %v8989 = vadd.f32 %v8987, %v8988
      %v8990 = vsel %vm4666, %v8882, 0.0
      %v8991 = vadd.f32 %v8989, %v8990
      %v8992 = vsel %vm4666, %v8887, 0.0
      %v8993 = vadd.f32 %v8991, %v8992
      %v8994 = vsel %vm4666, %v8890, 0.0
      %v8995 = vadd.f32 %v8993, %v8994
      %v8996 = vsel %vm4666, %v8895, 0.0
      %v8997 = vadd.f32 %v8995, %v8996
      %v8998 = vsel %vm4666, %v8898, 0.0
      %v8999 = vadd.f32 %v8997, %v8998
      %v9000 = vsel %vm4666, %v8903, 0.0
      %v9001 = vadd.f32 %v8999, %v9000
      %v9002 = vsel %vm4666, %v8906, 0.0
      %v9003 = vadd.f32 %v9001, %v9002
      %v9004 = vrot.slane %v9003, 4
      %v9005 = vadd.f32 %v9003, %v9004
      %v9006 = vrot.slane %v9005, 2
      %v9007 = vadd.f32 %v9005, %v9006
      %v9008 = vrot.slane %v9007, 1
      %v9009 = vadd.f32 %v9007, %v9008
      %v9010 = vmul.f32 %v8783, %v8783
      %v9011 = vmul.f32 %v8786, %v8786
      %v9012 = vmul.f32 %v8791, %v8791
      %v9013 = vmul.f32 %v8794, %v8794
      %v9014 = vmul.f32 %v8799, %v8799
      %v9015 = vmul.f32 %v8802, %v8802
      %v9016 = vmul.f32 %v8807, %v8807
      %v9017 = vmul.f32 %v8810, %v8810
      %v9018 = vmul.f32 %v8815, %v8815
      %v9019 = vmul.f32 %v8818, %v8818
      %v9020 = vmul.f32 %v8823, %v8823
      %v9021 = vmul.f32 %v8826, %v8826
      %v9022 = vmul.f32 %v8831, %v8831
      %v9023 = vmul.f32 %v8834, %v8834
      %v9024 = vmul.f32 %v8839, %v8839
      %v9025 = vmul.f32 %v8842, %v8842
      %v9026 = vmul.f32 %v8847, %v8847
      %v9027 = vmul.f32 %v8850, %v8850
      %v9028 = vmul.f32 %v8855, %v8855
      %v9029 = vmul.f32 %v8858, %v8858
      %v9030 = vmul.f32 %v8863, %v8863
      %v9031 = vmul.f32 %v8866, %v8866
      %v9032 = vmul.f32 %v8871, %v8871
      %v9033 = vmul.f32 %v8874, %v8874
      %v9034 = vmul.f32 %v8879, %v8879
      %v9035 = vmul.f32 %v8882, %v8882
      %v9036 = vmul.f32 %v8887, %v8887
      %v9037 = vmul.f32 %v8890, %v8890
      %v9038 = vmul.f32 %v8895, %v8895
      %v9039 = vmul.f32 %v8898, %v8898
      %v9040 = vmul.f32 %v8903, %v8903
      %v9041 = vmul.f32 %v8906, %v8906
      %v9042 = vsel %vm4666, %v9010, 0.0
      %v9043 = vsel %vm4666, %v9011, 0.0
      %v9044 = vadd.f32 %v9042, %v9043
      %v9045 = vsel %vm4666, %v9012, 0.0
      %v9046 = vadd.f32 %v9044, %v9045
      %v9047 = vsel %vm4666, %v9013, 0.0
      %v9048 = vadd.f32 %v9046, %v9047
      %v9049 = vsel %vm4666, %v9014, 0.0
      %v9050 = vadd.f32 %v9048, %v9049
      %v9051 = vsel %vm4666, %v9015, 0.0
      %v9052 = vadd.f32 %v9050, %v9051
      %v9053 = vsel %vm4666, %v9016, 0.0
      %v9054 = vadd.f32 %v9052, %v9053
      %v9055 = vsel %vm4666, %v9017, 0.0
      %v9056 = vadd.f32 %v9054, %v9055
      %v9057 = vsel %vm4666, %v9018, 0.0
      %v9058 = vadd.f32 %v9056, %v9057
      %v9059 = vsel %vm4666, %v9019, 0.0
      %v9060 = vadd.f32 %v9058, %v9059
      %v9061 = vsel %vm4666, %v9020, 0.0
      %v9062 = vadd.f32 %v9060, %v9061
      %v9063 = vsel %vm4666, %v9021, 0.0
      %v9064 = vadd.f32 %v9062, %v9063
      %v9065 = vsel %vm4666, %v9022, 0.0
      %v9066 = vadd.f32 %v9064, %v9065
      %v9067 = vsel %vm4666, %v9023, 0.0
      %v9068 = vadd.f32 %v9066, %v9067
      %v9069 = vsel %vm4666, %v9024, 0.0
      %v9070 = vadd.f32 %v9068, %v9069
      %v9071 = vsel %vm4666, %v9025, 0.0
      %v9072 = vadd.f32 %v9070, %v9071
      %v9073 = vsel %vm4666, %v9026, 0.0
      %v9074 = vadd.f32 %v9072, %v9073
      %v9075 = vsel %vm4666, %v9027, 0.0
      %v9076 = vadd.f32 %v9074, %v9075
      %v9077 = vsel %vm4666, %v9028, 0.0
      %v9078 = vadd.f32 %v9076, %v9077
      %v9079 = vsel %vm4666, %v9029, 0.0
      %v9080 = vadd.f32 %v9078, %v9079
      %v9081 = vsel %vm4666, %v9030, 0.0
      %v9082 = vadd.f32 %v9080, %v9081
      %v9083 = vsel %vm4666, %v9031, 0.0
      %v9084 = vadd.f32 %v9082, %v9083
      %v9085 = vsel %vm4666, %v9032, 0.0
      %v9086 = vadd.f32 %v9084, %v9085
      %v9087 = vsel %vm4666, %v9033, 0.0
      %v9088 = vadd.f32 %v9086, %v9087
      %v9089 = vsel %vm4666, %v9034, 0.0
      %v9090 = vadd.f32 %v9088, %v9089
      %v9091 = vsel %vm4666, %v9035, 0.0
      %v9092 = vadd.f32 %v9090, %v9091
      %v9093 = vsel %vm4666, %v9036, 0.0
      %v9094 = vadd.f32 %v9092, %v9093
      %v9095 = vsel %vm4666, %v9037, 0.0
      %v9096 = vadd.f32 %v9094, %v9095
      %v9097 = vsel %vm4666, %v9038, 0.0
      %v9098 = vadd.f32 %v9096, %v9097
      %v9099 = vsel %vm4666, %v9039, 0.0
      %v9100 = vadd.f32 %v9098, %v9099
      %v9101 = vsel %vm4666, %v9040, 0.0
      %v9102 = vadd.f32 %v9100, %v9101
      %v9103 = vsel %vm4666, %v9041, 0.0
      %v9104 = vadd.f32 %v9102, %v9103
      %v9105 = vrot.slane %v9104, 4
      %v9106 = vadd.f32 %v9104, %v9105
      %v9107 = vrot.slane %v9106, 2
      %v9108 = vadd.f32 %v9106, %v9107
      %v9109 = vrot.slane %v9108, 1
      %v9110 = vadd.f32 %v9108, %v9109
      %vm9111 = vcmask 1040384
      %v9112 = vsel %vm9111, %v9009, %v9110
      %vm9113 = vcmask 58368
      %9114 = vst.msk [vmem:[%s316] sm:$0x3] %vm9113, %v9112
      %p9115 = scmp.lt.s32.totalorder %s20, 1
      %s9116 = scalar_select %p9115, %s20, 1
      %s9117 = smul.addr %s9116, 32
      %s9118 = smul.addr %s9117, 8
      %s9119 = scalar_lea.vmem %s7, %s9118
      %p9120 = scmp.lt.s32.totalorder %s20, 1
      %s9121 = scalar_select %p9120, %s20, 1
      %s9122 = smul.addr %s9121, 2
      %s9123 = scalar_lea.vmem %s8, %s9122
      // Predicated region
      $region49: #{tcl_block_forward.2} parent=47 // pred_check
        %p9124 = pneg %p190
      $region50: #{tcl_block_forward.2} parent=47 // pred_check_branch
        %9126 = sbr.rel (%p9124) target = $region52
      $region51: #{tcl_block_forward.2} parent=47 // pred_region
        _
      $region52: #{tcl_block_forward.2} parent=47 // pred_fallthru
        _
      // Predicated region
      $region53: #{tcl_block_forward.2} parent=47 // pred_check
        %p9127 = pneg %p216
      $region54: #{tcl_block_forward.2} parent=47 // pred_check_branch
        %9129 = sbr.rel (%p9127) target = $region56
      $region55: #{tcl_block_forward.2} parent=47 // pred_region
        _
      $region56: #{tcl_block_forward.2} parent=47 // pred_fallthru
        _
    $region48: #{tcl_block_forward.2} parent=5 // pred_fallthru
      _
    %p9130 = scmp.le.s32.totalorder 2, %s15
    // Predicated region
    $region57: #{tcl_block_forward.2} parent=5 // pred_check
      %p9131 = pneg %p9130
    $region58: #{tcl_block_forward.2} parent=5 // pred_check_branch
      %9133 = sbr.rel (%p9131) target = $region60
    $region59: #{tcl_block_forward.2} parent=5 // pred_region
      %s9134 = ssub.s32 %s15, 2
      // Predicated region
      $region61: #{tcl_block_forward.2} parent=59 // pred_check
        %p9135 = pneg %p196
      $region62: #{tcl_block_forward.2} parent=59 // pred_check_branch
        %9137 = sbr.rel (%p9135) target = $region64
      $region63: #{tcl_block_forward.2} parent=59 // pred_region
        %p9138 = scmp.lt.s32.totalorder %s21, 1
        %s9139 = scalar_select %p9138, %s21, 1
        %s9140 = smul.addr %s9139, 32
        %s9141 = smul.addr %s9140, 8
        %s9142 = scalar_lea.vmem %s7, %s9141
      $region64: #{tcl_block_forward.2} parent=59 // pred_fallthru
        _
      // Predicated region
      $region65: #{tcl_block_forward.2} parent=59 // pred_check
        %p9143 = pneg %p222
      $region66: #{tcl_block_forward.2} parent=59 // pred_check_branch
        %9145 = sbr.rel (%p9143) target = $region68
      $region67: #{tcl_block_forward.2} parent=59 // pred_region
        %p9146 = scmp.lt.s32.totalorder %s21, 1
        %s9147 = scalar_select %p9146, %s21, 1
        %s9148 = smul.addr %s9147, 2
        %s9149 = scalar_lea.vmem %s8, %s9148
      $region68: #{tcl_block_forward.2} parent=59 // pred_fallthru
        _
    $region60: #{tcl_block_forward.2} parent=5 // pred_fallthru
      _
  $region6: #{tcl_block_forward.2} parent=0 // loop_footer
    %s19 = sadd.s32 1, %s15
  $region7: #{tcl_block_forward.2} parent=0 // loop_footer_branch
    %14 = sbr.rel target = $region3
  $region8: #{tcl_block_forward.2} parent=0 // loop_exit
    _

</llo_original>
